<compile_context>
chip_gen: v6e
topology: v6e:2x2x1
jax: 0.10.0
libtpu: 0.0.40
codegen_flags: <defaults>
</compile_context>

<pallas_src>
import functools

import jax
import jax.numpy as jnp
from jax.experimental import pallas as pl
from jax.experimental.pallas import tpu as pltpu

NEG_BIG = -1e30


def _gate_math(gates, c, H):
    """PyTorch LSTM gate order (i, f, g, o) -> (h_new, c_new)."""
    i_g = jax.nn.sigmoid(gates[:, 0:H])
    f_g = jax.nn.sigmoid(gates[:, H:2 * H])
    g_g = jnp.tanh(gates[:, 2 * H:3 * H])
    o_g = jax.nn.sigmoid(gates[:, 3 * H:4 * H])
    c_new = f_g * c + i_g * g_g
    h_new = o_g * jnp.tanh(c_new)
    return h_new, c_new


def decoder_kernel(H, Opad, B_real, TC, t_last,
                   # scalar prefetch
                   tf_ref,
                   # inputs
                   enc_ref, y_ref, h0_ref, c0_ref,
                   wih0_inp_ref, wih0_attn_ref, whh0_ref, b0_ref,
                   wih1_ref, whh1_ref, b1_ref,
                   wlin_ref, blin_ref,
                   # outputs (hN/cN also carry the recurrent state across chunks)
                   out_ref, hN_ref, cN_ref,
                   # scratch: layer-0 gate term of the carried decoder input
                   inpgate_sc):
    i = pl.program_id(0)
    last = pl.num_programs(0) - 1
    BP = out_ref.shape[1]
    G = 4 * H

    @pl.when(i == 0)
    def _():
        hN_ref[...] = h0_ref[...]
        cN_ref[...] = c0_ref[...]
        inpgate_sc[...] = jnp.zeros_like(inpgate_sc)   # input_decoder = zeros

    # Loop-invariant weights, loaded once per grid step.
    wih0_inp = wih0_inp_ref[...]
    whh0 = whh0_ref[...]
    wih1 = wih1_ref[...]
    whh1 = whh1_ref[...]
    wlin = wlin_ref[...]
    b1b = jnp.broadcast_to(b1_ref[...], (BP, G))
    blinb = jnp.broadcast_to(blin_ref[...], (BP, Opad))

    # Non-recurrent layer-0 gate contributions, hoisted off the serial chain:
    # one big MXU matmul per chunk each (M = TC*BP), bias b0 folded in once.
    enc_gates = jnp.dot(enc_ref[...].reshape(TC * BP, H), wih0_attn_ref[...],
                        preferred_element_type=jnp.float32) + b0_ref[...]
    lbl_gates = jnp.dot(y_ref[...].reshape(TC * BP, Opad), wih0_inp,
                        preferred_element_type=jnp.float32)

    col_idx = jax.lax.broadcasted_iota(jnp.int32, (BP, Opad), 1)
    row_valid = jax.lax.broadcasted_iota(jnp.int32, (BP, 1), 0) < B_real

    # Recurrent state for this chunk, carried in registers.
    h0c, c0c = hN_ref[0], cN_ref[0]
    h1c, c1c = hN_ref[1], cN_ref[1]
    inp_gate = inpgate_sc[...]

    h0_fin = c0_fin = h1_fin = c1_fin = None

    # Fully-unrolled loop over the TC timesteps resident in this grid step.
    for t in range(TC):
        rows = slice(t * BP, (t + 1) * BP)

        gates0 = (inp_gate + enc_gates[rows]
                  + jnp.dot(h0c, whh0, preferred_element_type=jnp.float32))
        h0c, c0c = _gate_math(gates0, c0c, H)

        gates1 = (jnp.dot(h0c, wih1, preferred_element_type=jnp.float32)
                  + jnp.dot(h1c, whh1, preferred_element_type=jnp.float32)
                  + b1b)
        h1c, c1c = _gate_math(gates1, c1c, H)

        if t == t_last:                       # static: last real timestep
            h0_fin, c0_fin, h1_fin, c1_fin = h0c, c0c, h1c, c1c

        # output projection + log_softmax (Opad is lane-dense, 128-multiple)
        logits = jnp.dot(h1c, wlin, preferred_element_type=jnp.float32) + blinb
        m = jnp.max(logits, axis=1, keepdims=True)
        shifted = logits - m
        log_probs = shifted - jnp.log(jnp.sum(jnp.exp(shifted), axis=1,
                                              keepdims=True))
        out_ref[t] = log_probs

        # Greedy feedback, reproducing the torch quirk onehot[:, top1] = 1:
        # the argmax column of every real row is set for ALL rows, so all rows
        # of `onehot` are identical and its gate term is a single broadcast
        # matvec.  top1 reuses the log_softmax max (first-occurrence tiebreak);
        # padded batch rows are masked out; padded vocab columns sit at -1e30
        # and can never win.
        top1 = jnp.min(jnp.where(logits == m, col_idx, Opad),
                       axis=1, keepdims=True)
        top1 = jnp.where(row_valid, top1, Opad)
        col_mask = jnp.any(col_idx == top1, axis=0, keepdims=True)    # (1, Opad)
        onehot8 = jnp.broadcast_to(col_mask, (8, Opad)).astype(jnp.float32)
        fb_gate = jnp.dot(onehot8, wih0_inp,
                          preferred_element_type=jnp.float32)[0:1]     # (1, 4H)

        tf_i = tf_ref[i * TC + t]                       # SMEM scalar
        inp_gate = jnp.where(tf_i > 0, lbl_gates[rows], fb_gate)

    # persist the carried input-gate term for the next chunk
    inpgate_sc[...] = inp_gate

    if t_last == TC - 1:
        # T is a multiple of TC: chunk-end running state doubles as final state.
        hN_ref[0] = h0c
        hN_ref[1] = h1c
        cN_ref[0] = c0c
        cN_ref[1] = c1c
    else:
        # T padded up to a multiple of TC: the last chunk contains padded
        # steps, so persist the snapshot taken at the last real step instead.
        @pl.when(i < last)
        def _():
            hN_ref[0] = h0c
            hN_ref[1] = h1c
            cN_ref[0] = c0c
            cN_ref[1] = c1c

        @pl.when(i == last)
        def _():
            hN_ref[0] = h0_fin
            hN_ref[1] = h1_fin
            cN_ref[0] = c0_fin
            cN_ref[1] = c1_fin


def lstm_decoder_forward(encoder_outputs_bth, y_bot, h0, c0, params, tf_flags,
                         *, max_chunk=16):
    """Batch-first torch layouts in; time-chunked Pallas decode loop inside."""
    B, T, H = encoder_outputs_bth.shape
    O = params["wlin"].shape[1]
    I = O                                    # input_dim == output_dim here
    L = h0.shape[0]
    G = 4 * H

    TC = min(max_chunk, T)                   # timesteps folded per grid step
    n_chunks = -(-T // TC)
    Tpad = n_chunks * TC                     # T padded to a TC multiple
    BP = ((B + 7) // 8) * 8                  # sublane-align the batch
    Opad = ((O + 127) // 128) * 128          # lane-dense vocab/output dim
    t_last = (T - 1) % TC                    # static index of the last real step

    enc_tbh = jnp.transpose(encoder_outputs_bth, (1, 0, 2)).astype(jnp.float32)
    y_tbo = jnp.transpose(y_bot, (2, 0, 1)).astype(jnp.float32)
    h0f = h0.astype(jnp.float32)
    c0f = c0.astype(jnp.float32)

    enc_tbh = jnp.pad(enc_tbh, ((0, Tpad - T), (0, BP - B), (0, 0)))
    y_tbo = jnp.pad(y_tbo, ((0, Tpad - T), (0, BP - B), (0, Opad - O)))
    h0f = jnp.pad(h0f, ((0, 0), (0, BP - B), (0, 0)))
    c0f = jnp.pad(c0f, ((0, 0), (0, BP - B), (0, 0)))
    tf_pad = jnp.pad(tf_flags.astype(jnp.int32), (0, Tpad - T))

    # Weight prep: split wih0 (removes the per-step lane concat), pre-sum
    # biases, and pad the vocab dim (zero weights, -1e30 bias columns so
    # log_softmax and the greedy argmax are unchanged).
    wih0_inp = jnp.pad(params["wih0"][:I].astype(jnp.float32),
                       ((0, Opad - O), (0, 0)))                      # (Opad, 4H)
    wih0_attn = params["wih0"][I:].astype(jnp.float32)               # (H, 4H)
    b0 = (params["bih0"] + params["bhh0"]).astype(jnp.float32)
    b1 = (params["bih1"] + params["bhh1"]).astype(jnp.float32)
    wlin = jnp.pad(params["wlin"].astype(jnp.float32), ((0, 0), (0, Opad - O)))
    blin = jnp.pad(params["blin"].astype(jnp.float32), ((0, 0), (0, Opad - O)),
                   constant_values=NEG_BIG)

    full2 = lambda i, tf: (0, 0)
    full3 = lambda i, tf: (0, 0, 0)
    step3 = lambda i, tf: (i, 0, 0)

    grid_spec = pltpu.PrefetchScalarGridSpec(
        num_scalar_prefetch=1,
        grid=(n_chunks,),
        in_specs=[
            pl.BlockSpec((TC, BP, H), step3),       # encoder_outputs (time-major)
            pl.BlockSpec((TC, BP, Opad), step3),    # y (time-major, vocab-padded)
            pl.BlockSpec((L, BP, H), full3),        # h0
            pl.BlockSpec((L, BP, H), full3),        # c0
            pl.BlockSpec((Opad, G), full2),         # W_ih layer0, input half
            pl.BlockSpec((H, G), full2),            # W_ih layer0, attention half
            pl.BlockSpec((H, G), full2),            # W_hh layer0
            pl.BlockSpec((1, G), full2),            # b_ih + b_hh layer0
            pl.BlockSpec((H, G), full2),            # W_ih layer1
            pl.BlockSpec((H, G), full2),            # W_hh layer1
            pl.BlockSpec((1, G), full2),            # b_ih + b_hh layer1
            pl.BlockSpec((H, Opad), full2),         # output linear weight
            pl.BlockSpec((1, Opad), full2),         # output linear bias
        ],
        out_specs=[
            pl.BlockSpec((TC, BP, Opad), step3),    # outputs (Tpad, BP, Opad)
            pl.BlockSpec((L, BP, H), full3),        # final h (state carrier)
            pl.BlockSpec((L, BP, H), full3),        # final c (state carrier)
        ],
        scratch_shapes=[
            pltpu.VMEM((BP, G), jnp.float32),       # carried input gate term
        ],
    )

    outputs, h_fin, c_fin = pl.pallas_call(
        functools.partial(decoder_kernel, H, Opad, B, TC, t_last),
        grid_spec=grid_spec,
        out_shape=(
            jax.ShapeDtypeStruct((Tpad, BP, Opad), jnp.float32),
            jax.ShapeDtypeStruct((L, BP, H), jnp.float32),
            jax.ShapeDtypeStruct((L, BP, H), jnp.float32),
        ),
        compiler_params=pltpu.CompilerParams(
            dimension_semantics=("arbitrary",)),    # sequential time recurrence
    )(tf_pad,
      enc_tbh, y_tbo, h0f, c0f,
      wih0_inp, wih0_attn, params["whh0"].astype(jnp.float32), b0,
      params["wih1"].astype(jnp.float32), params["whh1"].astype(jnp.float32), b1,
      wlin, blin)

    return outputs[:T, :B, :O], (h_fin[:, :B, :], c_fin[:, :B, :])


def reference_forward(enc_bth, y_bot, h0, c0, p, tf_flags):
    """Pure-JAX reference replicating the torch forward (common path).

    Keeps the faithful attention softmax path (which the kernel omits as a
    mathematically exact no-op) so the check also validates that removal.
    """
    B, T, H = enc_bth.shape
    O = p["wlin"].shape[1]

    def cell(x, hh, cc, wih, whh, bih, bhh):
        g = jnp.dot(x, wih) + jnp.dot(hh, whh) + bih + bhh
        ii = jax.nn.sigmoid(g[:, 0:H])
        ff = jax.nn.sigmoid(g[:, H:2 * H])
        gg = jnp.tanh(g[:, 2 * H:3 * H])
        oo = jax.nn.sigmoid(g[:, 3 * H:4 * H])
        cn = ff * cc + ii * gg
        return oo * jnp.tanh(cn), cn

    h = [h0[0], h0[1]]
    c = [c0[0], c0[1]]
    inp = jnp.zeros((B, O), jnp.float32)
    outs = []
    for i in range(T):
        enc_i = enc_bth[:, i, :]
        attn_logit = jnp.dot(jnp.concatenate([enc_i, h[0]], axis=1),
                             p["w_attn"]) + p["b_attn"]
        attn_w = jax.nn.softmax(attn_logit, axis=1)       # (B,1) -> all ones
        x = jnp.concatenate([inp, attn_w * enc_i], axis=1)
        h0n, c0n = cell(x, h[0], c[0], p["wih0"], p["whh0"], p["bih0"], p["bhh0"])
        h1n, c1n = cell(h0n, h[1], c[1], p["wih1"], p["whh1"], p["bih1"], p["bhh1"])
        h, c = [h0n, h1n], [c0n, c1n]
        log_probs = jax.nn.log_softmax(jnp.dot(h1n, p["wlin"]) + p["blin"], axis=1)
        outs.append(log_probs)
        top1 = jnp.argmax(log_probs, axis=1)
        col_mask = jnp.any(jnp.arange(O)[None, :] == top1[:, None], axis=0)
        onehot = jnp.broadcast_to(col_mask[None, :], (B, O)).astype(jnp.float32)
        label = y_bot[:, :, i]
        inp = jnp.where(tf_flags[i] > 0, label, onehot)
    return jnp.stack(outs, 0), jnp.stack(h, 0), jnp.stack(c, 0)


if __name__ == "__main__":
    # small shapes consistent with the module (input_dim == output_dim)
    B, H, O, L, T = 4, 32, 8, 2, 10
    I = O

    key = jax.random.PRNGKey(0)
    keys = jax.random.split(key, 20)
    bound = 1.0 / jnp.sqrt(jnp.float32(H))

    def u(k, shape):
        return jax.random.uniform(k, shape, jnp.float32, -bound, bound)

    params = dict(
        # attn params exist on the module; the kernel provably does not need
        # them (softmax of one logit == 1), the reference still uses them.
        w_attn=u(keys[0], (2 * H, 1)), b_attn=u(keys[1], (1, 1)),
        wih0=u(keys[2], (I + H, 4 * H)), whh0=u(keys[3], (H, 4 * H)),
        bih0=u(keys[4], (1, 4 * H)), bhh0=u(keys[5], (1, 4 * H)),
        wih1=u(keys[6], (H, 4 * H)), whh1=u(keys[7], (H, 4 * H)),
        bih1=u(keys[8], (1, 4 * H)), bhh1=u(keys[9], (1, 4 * H)),
        wlin=u(keys[10], (H, O)), blin=u(keys[11], (1, O)),
    )

    encoder_outputs = jax.random.normal(keys[12], (B, T, H), jnp.float32)   # (B, T, H)
    y_classes = jax.random.randint(keys[13], (B, T), 0, O)
    y = jax.nn.one_hot(y_classes, O, axis=1).astype(jnp.float32)            # (B, O, T)
    h0 = jax.random.normal(keys[14], (L, B, H), jnp.float32)
    c0 = jax.random.normal(keys[15], (L, B, H), jnp.float32)

    # deterministic per-step teacher-forcing flags exercising both branches
    tf_flags = jnp.array([1, 0, 1, 1, 0, 0, 1, 0, 1, 0], jnp.int32)

    ref_out, ref_h, ref_c = reference_forward(encoder_outputs, y, h0, c0,
                                              params, tf_flags)

    # max_chunk=16 -> single chunk (T % TC == 0 fast path)
    # max_chunk=4  -> 3 chunks, T padded to 12 (cross-chunk carry + snapshot path)
    for mc in (16, 4):
        outputs, (h_fin, c_fin) = lstm_decoder_forward(
            encoder_outputs, y, h0, c0, params, tf_flags, max_chunk=mc)
        jax.block_until_ready((outputs, h_fin, c_fin))
        assert outputs.shape == (T, B, O) and h_fin.shape == (L, B, H)
        assert jnp.allclose(outputs, ref_out, atol=2e-3, rtol=2e-3)
        assert jnp.allclose(h_fin, ref_h, atol=2e-3, rtol=2e-3)
        assert jnp.allclose(c_fin, ref_c, atol=2e-3, rtol=2e-3)

    print("KERNEL_OK")
</pallas_src>

<mosaic_0001>
module attributes {stable_mosaic.version = 11 : i64} {
  func.func @decoder_kernel(%arg0: i32, %arg1: memref<10xi32, #tpu.memory_space<smem>>, %arg2: memref<10x8x32xf32, #tpu.memory_space<vmem>>, %arg3: memref<10x8x128xf32, #tpu.memory_space<vmem>>, %arg4: memref<2x8x32xf32, #tpu.memory_space<vmem>>, %arg5: memref<2x8x32xf32, #tpu.memory_space<vmem>>, %arg6: memref<128x128xf32, #tpu.memory_space<vmem>>, %arg7: memref<32x128xf32, #tpu.memory_space<vmem>>, %arg8: memref<32x128xf32, #tpu.memory_space<vmem>>, %arg9: memref<1x128xf32, #tpu.memory_space<vmem>>, %arg10: memref<32x128xf32, #tpu.memory_space<vmem>>, %arg11: memref<32x128xf32, #tpu.memory_space<vmem>>, %arg12: memref<1x128xf32, #tpu.memory_space<vmem>>, %arg13: memref<32x128xf32, #tpu.memory_space<vmem>>, %arg14: memref<1x128xf32, #tpu.memory_space<vmem>>, %arg15: memref<10x8x128xf32, #tpu.memory_space<vmem>>, %arg16: memref<2x8x32xf32, #tpu.memory_space<vmem>>, %arg17: memref<2x8x32xf32, #tpu.memory_space<vmem>>, %arg18: memref<8x128xf32, #tpu.memory_space<vmem>>) attributes {dimension_semantics = [#tpu.dimension_semantics<arbitrary>], iteration_bounds = array<i64: 1>, scalar_prefetch = 1 : i64, scratch_operands = 1 : i64, tpu.core_type = #tpu.core_type<tc>, window_params = [{transform_indices = @transform_0, window_bounds = array<i64: 10, 8, 32>}, {transform_indices = @transform_1, window_bounds = array<i64: 10, 8, 128>}, {pipeline_mode = #tpu.pipeline_mode<synchronous>, transform_indices = @transform_2, window_bounds = array<i64: 2, 8, 32>}, {pipeline_mode = #tpu.pipeline_mode<synchronous>, transform_indices = @transform_3, window_bounds = array<i64: 2, 8, 32>}, {pipeline_mode = #tpu.pipeline_mode<synchronous>, transform_indices = @transform_4, window_bounds = array<i64: 128, 128>}, {pipeline_mode = #tpu.pipeline_mode<synchronous>, transform_indices = @transform_5, window_bounds = array<i64: 32, 128>}, {pipeline_mode = #tpu.pipeline_mode<synchronous>, transform_indices = @transform_6, window_bounds = array<i64: 32, 128>}, {pipeline_mode = #tpu.pipeline_mode<synchronous>, transform_indices = @transform_7, window_bounds = array<i64: 1, 128>}, {pipeline_mode = #tpu.pipeline_mode<synchronous>, transform_indices = @transform_8, window_bounds = array<i64: 32, 128>}, {pipeline_mode = #tpu.pipeline_mode<synchronous>, transform_indices = @transform_9, window_bounds = array<i64: 32, 128>}, {pipeline_mode = #tpu.pipeline_mode<synchronous>, transform_indices = @transform_10, window_bounds = array<i64: 1, 128>}, {pipeline_mode = #tpu.pipeline_mode<synchronous>, transform_indices = @transform_11, window_bounds = array<i64: 32, 128>}, {pipeline_mode = #tpu.pipeline_mode<synchronous>, transform_indices = @transform_12, window_bounds = array<i64: 1, 128>}, {transform_indices = @transform_13, window_bounds = array<i64: 10, 8, 128>}, {pipeline_mode = #tpu.pipeline_mode<synchronous>, transform_indices = @transform_14, window_bounds = array<i64: 2, 8, 32>}, {pipeline_mode = #tpu.pipeline_mode<synchronous>, transform_indices = @transform_15, window_bounds = array<i64: 2, 8, 32>}]} {
    %c0_i32 = arith.constant 0 : i32
    %0 = arith.cmpi eq, %arg0, %c0_i32 : i32
    %1 = arith.extui %0 : i1 to i32
    %c0_i32_0 = arith.constant 0 : i32
    %2 = arith.cmpi ne, %1, %c0_i32_0 : i32
    scf.if %2 {
      %c0_294 = arith.constant 0 : index
      %c0_295 = arith.constant 0 : index
      %c0_296 = arith.constant 0 : index
      %1100 = vector.load %arg4[%c0_294, %c0_295, %c0_296] : memref<2x8x32xf32, #tpu.memory_space<vmem>>, vector<2x8x32xf32>
      %c0_297 = arith.constant 0 : index
      %c0_298 = arith.constant 0 : index
      %c0_299 = arith.constant 0 : index
      %1101 = vector.load %arg16[%c0_297, %c0_298, %c0_299] : memref<2x8x32xf32, #tpu.memory_space<vmem>>, vector<2x8x32xf32>
      tpu.vector_store %arg16[%c0_297, %c0_298, %c0_299], %1100 {strides = array<i32>} : memref<2x8x32xf32, #tpu.memory_space<vmem>>, vector<2x8x32xf32>,
      %c0_300 = arith.constant 0 : index
      %c0_301 = arith.constant 0 : index
      %c0_302 = arith.constant 0 : index
      %1102 = vector.load %arg5[%c0_300, %c0_301, %c0_302] : memref<2x8x32xf32, #tpu.memory_space<vmem>>, vector<2x8x32xf32>
      %c0_303 = arith.constant 0 : index
      %c0_304 = arith.constant 0 : index
      %c0_305 = arith.constant 0 : index
      %1103 = vector.load %arg17[%c0_303, %c0_304, %c0_305] : memref<2x8x32xf32, #tpu.memory_space<vmem>>, vector<2x8x32xf32>
      tpu.vector_store %arg17[%c0_303, %c0_304, %c0_305], %1102 {strides = array<i32>} : memref<2x8x32xf32, #tpu.memory_space<vmem>>, vector<2x8x32xf32>,
      %cst_306 = arith.constant 0.000000e+00 : f32
      %1104 = vector.broadcast %cst_306 : f32 to vector<8x128xf32>
      %c0_307 = arith.constant 0 : index
      %c0_308 = arith.constant 0 : index
      %1105 = vector.load %arg18[%c0_307, %c0_308] : memref<8x128xf32, #tpu.memory_space<vmem>>, vector<8x128xf32>
      tpu.vector_store %arg18[%c0_307, %c0_308], %1104 {strides = array<i32>} : memref<8x128xf32, #tpu.memory_space<vmem>>, vector<8x128xf32>,
    } else {
    }
    %c0 = arith.constant 0 : index
    %c0_1 = arith.constant 0 : index
    %3 = vector.load %arg6[%c0, %c0_1] : memref<128x128xf32, #tpu.memory_space<vmem>>, vector<128x128xf32>
    %c0_2 = arith.constant 0 : index
    %c0_3 = arith.constant 0 : index
    %4 = vector.load %arg8[%c0_2, %c0_3] : memref<32x128xf32, #tpu.memory_space<vmem>>, vector<32x128xf32>
    %c0_4 = arith.constant 0 : index
    %c0_5 = arith.constant 0 : index
    %5 = vector.load %arg10[%c0_4, %c0_5] : memref<32x128xf32, #tpu.memory_space<vmem>>, vector<32x128xf32>
    %c0_6 = arith.constant 0 : index
    %c0_7 = arith.constant 0 : index
    %6 = vector.load %arg11[%c0_6, %c0_7] : memref<32x128xf32, #tpu.memory_space<vmem>>, vector<32x128xf32>
    %c0_8 = arith.constant 0 : index
    %c0_9 = arith.constant 0 : index
    %7 = vector.load %arg13[%c0_8, %c0_9] : memref<32x128xf32, #tpu.memory_space<vmem>>, vector<32x128xf32>
    %c0_10 = arith.constant 0 : index
    %c0_11 = arith.constant 0 : index
    %8 = vector.load %arg12[%c0_10, %c0_11] : memref<1x128xf32, #tpu.memory_space<vmem>>, vector<1x128xf32>
    %9 = vector.shape_cast %8 : vector<1x128xf32> to vector<1x128xf32>
    %10 = vector.broadcast %9 : vector<1x128xf32> to vector<8x128xf32>
    %c0_12 = arith.constant 0 : index
    %c0_13 = arith.constant 0 : index
    %11 = vector.load %arg14[%c0_12, %c0_13] : memref<1x128xf32, #tpu.memory_space<vmem>>, vector<1x128xf32>
    %12 = vector.shape_cast %11 : vector<1x128xf32> to vector<1x128xf32>
    %13 = vector.broadcast %12 : vector<1x128xf32> to vector<8x128xf32>
    %c0_14 = arith.constant 0 : index
    %c0_15 = arith.constant 0 : index
    %c0_16 = arith.constant 0 : index
    %14 = vector.load %arg2[%c0_14, %c0_15, %c0_16] : memref<10x8x32xf32, #tpu.memory_space<vmem>>, vector<10x8x32xf32>
    %15 = vector.shape_cast %14 : vector<10x8x32xf32> to vector<80x32xf32>
    %c0_17 = arith.constant 0 : index
    %c0_18 = arith.constant 0 : index
    %16 = vector.load %arg7[%c0_17, %c0_18] : memref<32x128xf32, #tpu.memory_space<vmem>>, vector<32x128xf32>
    %cst = arith.constant dense<0.000000e+00> : vector<80x128xf32>
    %17 = tpu.matmul %15, %16, %cst {dimension_numbers = #tpu.dot_dimension_numbers<[1], [0], [0], [1], [0, 0, 1, 1], [], []>} : vector<80x32xf32>, vector<32x128xf32>, vector<80x128xf32> -> vector<80x128xf32>
    %c0_19 = arith.constant 0 : index
    %c0_20 = arith.constant 0 : index
    %18 = vector.load %arg9[%c0_19, %c0_20] : memref<1x128xf32, #tpu.memory_space<vmem>>, vector<1x128xf32>
    %19 = vector.broadcast %18 : vector<1x128xf32> to vector<80x128xf32>
    %20 = arith.addf %17, %19 : vector<80x128xf32>
    %c0_21 = arith.constant 0 : index
    %c0_22 = arith.constant 0 : index
    %c0_23 = arith.constant 0 : index
    %21 = vector.load %arg3[%c0_21, %c0_22, %c0_23] : memref<10x8x128xf32, #tpu.memory_space<vmem>>, vector<10x8x128xf32>
    %22 = vector.shape_cast %21 : vector<10x8x128xf32> to vector<80x128xf32>
    %cst_24 = arith.constant dense<0.000000e+00> : vector<80x128xf32>
    %23 = tpu.matmul %22, %3, %cst_24 {dimension_numbers = #tpu.dot_dimension_numbers<[1], [0], [0], [1], [0, 0, 1, 1], [], []>} : vector<80x128xf32>, vector<128x128xf32>, vector<80x128xf32> -> vector<80x128xf32>
    %24 = tpu.iota {dimensions = array<i32: 1>} : vector<8x128xi32>
    %25 = tpu.iota {dimensions = array<i32: 0>} : vector<8x1xi32>
    %c4_i32 = arith.constant 4 : i32
    %26 = vector.broadcast %c4_i32 : i32 to vector<8x1xi32>
    %27 = arith.cmpi slt, %25, %26 : vector<8x1xi32>
    %c0_25 = arith.constant 0 : index
    %c0_26 = arith.constant 0 : index
    %c0_27 = arith.constant 0 : index
    %28 = vector.load %arg16[%c0_25, %c0_26, %c0_27] : memref<2x8x32xf32, #tpu.memory_space<vmem>>, vector<1x8x32xf32>
    %29 = vector.shape_cast %28 : vector<1x8x32xf32> to vector<8x32xf32>
    %c0_28 = arith.constant 0 : index
    %c0_29 = arith.constant 0 : index
    %c0_30 = arith.constant 0 : index
    %30 = vector.load %arg17[%c0_28, %c0_29, %c0_30] : memref<2x8x32xf32, #tpu.memory_space<vmem>>, vector<1x8x32xf32>
    %31 = vector.shape_cast %30 : vector<1x8x32xf32> to vector<8x32xf32>
    %c1 = arith.constant 1 : index
    %c0_31 = arith.constant 0 : index
    %c0_32 = arith.constant 0 : index
    %32 = vector.load %arg16[%c1, %c0_31, %c0_32] : memref<2x8x32xf32, #tpu.memory_space<vmem>>, vector<1x8x32xf32>
    %33 = vector.shape_cast %32 : vector<1x8x32xf32> to vector<8x32xf32>
    %c1_33 = arith.constant 1 : index
    %c0_34 = arith.constant 0 : index
    %c0_35 = arith.constant 0 : index
    %34 = vector.load %arg17[%c1_33, %c0_34, %c0_35] : memref<2x8x32xf32, #tpu.memory_space<vmem>>, vector<1x8x32xf32>
    %35 = vector.shape_cast %34 : vector<1x8x32xf32> to vector<8x32xf32>
    %c0_36 = arith.constant 0 : index
    %c0_37 = arith.constant 0 : index
    %36 = vector.load %arg18[%c0_36, %c0_37] : memref<8x128xf32, #tpu.memory_space<vmem>>, vector<8x128xf32>
    %37 = vector.extract_strided_slice %20 {offsets = [0, 0], sizes = [8, 128], strides = [1, 1]} : vector<80x128xf32> to vector<8x128xf32>
    %38 = arith.addf %36, %37 : vector<8x128xf32>
    %cst_38 = arith.constant dense<0.000000e+00> : vector<8x128xf32>
    %39 = tpu.matmul %29, %4, %cst_38 {dimension_numbers = #tpu.dot_dimension_numbers<[1], [0], [0], [1], [0, 0, 1, 1], [], []>} : vector<8x32xf32>, vector<32x128xf32>, vector<8x128xf32> -> vector<8x128xf32>
    %40 = arith.addf %38, %39 : vector<8x128xf32>
    %41 = vector.extract_strided_slice %40 {offsets = [0, 0], sizes = [8, 32], strides = [1, 1]} : vector<8x128xf32> to vector<8x32xf32>
    %42 = arith.negf %41 : vector<8x32xf32>
    %43 = math.exp %42 : vector<8x32xf32>
    %cst_39 = arith.constant 1.000000e+00 : f32
    %44 = vector.broadcast %cst_39 : f32 to vector<8x32xf32>
    %45 = arith.addf %44, %43 : vector<8x32xf32>
    %46 = arith.divf %44, %45 : vector<8x32xf32>
    %47 = vector.extract_strided_slice %40 {offsets = [0, 32], sizes = [8, 32], strides = [1, 1]} : vector<8x128xf32> to vector<8x32xf32>
    %48 = arith.negf %47 : vector<8x32xf32>
    %49 = math.exp %48 : vector<8x32xf32>
    %cst_40 = arith.constant 1.000000e+00 : f32
    %50 = vector.broadcast %cst_40 : f32 to vector<8x32xf32>
    %51 = arith.addf %50, %49 : vector<8x32xf32>
    %52 = arith.divf %50, %51 : vector<8x32xf32>
    %53 = vector.extract_strided_slice %40 {offsets = [0, 64], sizes = [8, 32], strides = [1, 1]} : vector<8x128xf32> to vector<8x32xf32>
    %54 = math.tanh %53 : vector<8x32xf32>
    %55 = vector.extract_strided_slice %40 {offsets = [0, 96], sizes = [8, 32], strides = [1, 1]} : vector<8x128xf32> to vector<8x32xf32>
    %56 = arith.negf %55 : vector<8x32xf32>
    %57 = math.exp %56 : vector<8x32xf32>
    %cst_41 = arith.constant 1.000000e+00 : f32
    %58 = vector.broadcast %cst_41 : f32 to vector<8x32xf32>
    %59 = arith.addf %58, %57 : vector<8x32xf32>
    %60 = arith.divf %58, %59 : vector<8x32xf32>
    %61 = arith.mulf %52, %31 : vector<8x32xf32>
    %62 = arith.mulf %46, %54 : vector<8x32xf32>
    %63 = arith.addf %61, %62 : vector<8x32xf32>
    %64 = math.tanh %63 : vector<8x32xf32>
    %65 = arith.mulf %60, %64 : vector<8x32xf32>
    %cst_42 = arith.constant dense<0.000000e+00> : vector<8x128xf32>
    %66 = tpu.matmul %65, %5, %cst_42 {dimension_numbers = #tpu.dot_dimension_numbers<[1], [0], [0], [1], [0, 0, 1, 1], [], []>} : vector<8x32xf32>, vector<32x128xf32>, vector<8x128xf32> -> vector<8x128xf32>
    %cst_43 = arith.constant dense<0.000000e+00> : vector<8x128xf32>
    %67 = tpu.matmul %33, %6, %cst_43 {dimension_numbers = #tpu.dot_dimension_numbers<[1], [0], [0], [1], [0, 0, 1, 1], [], []>} : vector<8x32xf32>, vector<32x128xf32>, vector<8x128xf32> -> vector<8x128xf32>
    %68 = arith.addf %66, %67 : vector<8x128xf32>
    %69 = arith.addf %68, %10 : vector<8x128xf32>
    %70 = vector.extract_strided_slice %69 {offsets = [0, 0], sizes = [8, 32], strides = [1, 1]} : vector<8x128xf32> to vector<8x32xf32>
    %71 = arith.negf %70 : vector<8x32xf32>
    %72 = math.exp %71 : vector<8x32xf32>
    %cst_44 = arith.constant 1.000000e+00 : f32
    %73 = vector.broadcast %cst_44 : f32 to vector<8x32xf32>
    %74 = arith.addf %73, %72 : vector<8x32xf32>
    %75 = arith.divf %73, %74 : vector<8x32xf32>
    %76 = vector.extract_strided_slice %69 {offsets = [0, 32], sizes = [8, 32], strides = [1, 1]} : vector<8x128xf32> to vector<8x32xf32>
    %77 = arith.negf %76 : vector<8x32xf32>
    %78 = math.exp %77 : vector<8x32xf32>
    %cst_45 = arith.constant 1.000000e+00 : f32
    %79 = vector.broadcast %cst_45 : f32 to vector<8x32xf32>
    %80 = arith.addf %79, %78 : vector<8x32xf32>
    %81 = arith.divf %79, %80 : vector<8x32xf32>
    %82 = vector.extract_strided_slice %69 {offsets = [0, 64], sizes = [8, 32], strides = [1, 1]} : vector<8x128xf32> to vector<8x32xf32>
    %83 = math.tanh %82 : vector<8x32xf32>
    %84 = vector.extract_strided_slice %69 {offsets = [0, 96], sizes = [8, 32], strides = [1, 1]} : vector<8x128xf32> to vector<8x32xf32>
    %85 = arith.negf %84 : vector<8x32xf32>
    %86 = math.exp %85 : vector<8x32xf32>
    %cst_46 = arith.constant 1.000000e+00 : f32
    %87 = vector.broadcast %cst_46 : f32 to vector<8x32xf32>
    %88 = arith.addf %87, %86 : vector<8x32xf32>
    %89 = arith.divf %87, %88 : vector<8x32xf32>
    %90 = arith.mulf %81, %35 : vector<8x32xf32>
    %91 = arith.mulf %75, %83 : vector<8x32xf32>
    %92 = arith.addf %90, %91 : vector<8x32xf32>
    %93 = math.tanh %92 : vector<8x32xf32>
    %94 = arith.mulf %89, %93 : vector<8x32xf32>
    %cst_47 = arith.constant dense<0.000000e+00> : vector<8x128xf32>
    %95 = tpu.matmul %94, %7, %cst_47 {dimension_numbers = #tpu.dot_dimension_numbers<[1], [0], [0], [1], [0, 0, 1, 1], [], []>} : vector<8x32xf32>, vector<32x128xf32>, vector<8x128xf32> -> vector<8x128xf32>
    %96 = arith.addf %95, %13 : vector<8x128xf32>
    %cst_48 = arith.constant dense<0xFF800000> : vector<8xf32>
    %97 = vector.multi_reduction <maximumf>, %96, %cst_48 [1] : vector<8x128xf32> to vector<8xf32>
    %98 = vector.shape_cast %97 : vector<8xf32> to vector<8x1xf32>
    %99 = vector.broadcast %98 : vector<8x1xf32> to vector<8x128xf32>
    %100 = arith.subf %96, %99 : vector<8x128xf32>
    %101 = math.exp %100 : vector<8x128xf32>
    %cst_49 = arith.constant dense<0.000000e+00> : vector<8xf32>
    %102 = vector.multi_reduction <add>, %101, %cst_49 [1] : vector<8x128xf32> to vector<8xf32>
    %103 = vector.shape_cast %102 : vector<8xf32> to vector<8x1xf32>
    %104 = math.log %103 : vector<8x1xf32>
    %105 = vector.broadcast %104 : vector<8x1xf32> to vector<8x128xf32>
    %106 = arith.subf %100, %105 : vector<8x128xf32>
    %c0_50 = arith.constant 0 : index
    %c0_51 = arith.constant 0 : index
    %c0_52 = arith.constant 0 : index
    %107 = vector.load %arg15[%c0_50, %c0_51, %c0_52] : memref<10x8x128xf32, #tpu.memory_space<vmem>>, vector<1x8x128xf32>
    %108 = vector.shape_cast %107 : vector<1x8x128xf32> to vector<8x128xf32>
    %109 = vector.shape_cast %106 : vector<8x128xf32> to vector<1x8x128xf32>
    tpu.vector_store %arg15[%c0_50, %c0_51, %c0_52], %109 {strides = array<i32>} : memref<10x8x128xf32, #tpu.memory_space<vmem>>, vector<1x8x128xf32>,
    %110 = vector.broadcast %98 : vector<8x1xf32> to vector<8x128xf32>
    %111 = arith.cmpf oeq, %96, %110 : vector<8x128xf32>
    %c128_i32 = arith.constant 128 : i32
    %112 = vector.broadcast %c128_i32 : i32 to vector<8x128xi32>
    %113 = arith.select %111, %24, %112 : vector<8x128xi1>, vector<8x128xi32>
    %cst_53 = arith.constant dense<2147483647> : vector<8xi32>
    %114 = vector.multi_reduction <minsi>, %113, %cst_53 [1] : vector<8x128xi32> to vector<8xi32>
    %115 = vector.shape_cast %114 : vector<8xi32> to vector<8x1xi32>
    %c128_i32_54 = arith.constant 128 : i32
    %116 = vector.broadcast %c128_i32_54 : i32 to vector<8x1xi32>
    %117 = arith.select %27, %115, %116 : vector<8x1xi1>, vector<8x1xi32>
    %118 = vector.broadcast %117 : vector<8x1xi32> to vector<8x128xi32>
    %119 = arith.cmpi eq, %24, %118 : vector<8x128xi32>
    %cst_55 = arith.constant 1.000000e+00 : f32
    %cst_56 = arith.constant 0.000000e+00 : f32
    %120 = vector.broadcast %cst_55 : f32 to vector<8x128xf32>
    %121 = vector.broadcast %cst_56 : f32 to vector<8x128xf32>
    %122 = arith.select %119, %120, %121 : vector<8x128xi1>, vector<8x128xf32>
    %cst_57 = arith.constant dense<0xFF800000> : vector<128xf32>
    %123 = vector.multi_reduction <maximumf>, %122, %cst_57 [0] : vector<8x128xf32> to vector<128xf32>
    %cst_58 = arith.constant 0.000000e+00 : f32
    %124 = vector.broadcast %cst_58 : f32 to vector<128xf32>
    %125 = arith.cmpf ogt, %123, %124 : vector<128xf32>
    %126 = vector.shape_cast %125 : vector<128xi1> to vector<1x128xi1>
    %127 = vector.shape_cast %126 : vector<1x128xi1> to vector<1x128xi1>
    %128 = vector.broadcast %127 : vector<1x128xi1> to vector<8x128xi1>
    %129 = arith.extui %128 : vector<8x128xi1> to vector<8x128xi32>
    %130 = arith.sitofp %129 : vector<8x128xi32> to vector<8x128xf32>
    %cst_59 = arith.constant dense<0.000000e+00> : vector<8x128xf32>
    %131 = tpu.matmul %130, %3, %cst_59 {dimension_numbers = #tpu.dot_dimension_numbers<[1], [0], [0], [1], [0, 0, 1, 1], [], []>} : vector<8x128xf32>, vector<128x128xf32>, vector<8x128xf32> -> vector<8x128xf32>
    %132 = vector.extract_strided_slice %131 {offsets = [0, 0], sizes = [1, 128], strides = [1, 1]} : vector<8x128xf32> to vector<1x128xf32>
    %c10_i32 = arith.constant 10 : i32
    %133 = arith.muli %arg0, %c10_i32 : i32
    %c0_i32_60 = arith.constant 0 : i32
    %134 = arith.addi %133, %c0_i32_60 : i32
    %135 = arith.index_cast %134 : i32 to index
    %136 = memref.load %arg1[%135] : memref<10xi32, #tpu.memory_space<smem>>
    %c0_i32_61 = arith.constant 0 : i32
    %137 = arith.cmpi sgt, %136, %c0_i32_61 : i32
    %138 = vector.extract_strided_slice %23 {offsets = [0, 0], sizes = [8, 128], strides = [1, 1]} : vector<80x128xf32> to vector<8x128xf32>
    %139 = vector.shape_cast %132 : vector<1x128xf32> to vector<1x128xf32>
    %140 = vector.broadcast %139 : vector<1x128xf32> to vector<8x128xf32>
    %141 = arith.select %137, %138, %140 : vector<8x128xf32>
    %142 = vector.extract_strided_slice %20 {offsets = [8, 0], sizes = [8, 128], strides = [1, 1]} : vector<80x128xf32> to vector<8x128xf32>
    %143 = arith.addf %141, %142 : vector<8x128xf32>
    %cst_62 = arith.constant dense<0.000000e+00> : vector<8x128xf32>
    %144 = tpu.matmul %65, %4, %cst_62 {dimension_numbers = #tpu.dot_dimension_numbers<[1], [0], [0], [1], [0, 0, 1, 1], [], []>} : vector<8x32xf32>, vector<32x128xf32>, vector<8x128xf32> -> vector<8x128xf32>
    %145 = arith.addf %143, %144 : vector<8x128xf32>
    %146 = vector.extract_strided_slice %145 {offsets = [0, 0], sizes = [8, 32], strides = [1, 1]} : vector<8x128xf32> to vector<8x32xf32>
    %147 = arith.negf %146 : vector<8x32xf32>
    %148 = math.exp %147 : vector<8x32xf32>
    %cst_63 = arith.constant 1.000000e+00 : f32
    %149 = vector.broadcast %cst_63 : f32 to vector<8x32xf32>
    %150 = arith.addf %149, %148 : vector<8x32xf32>
    %151 = arith.divf %149, %150 : vector<8x32xf32>
    %152 = vector.extract_strided_slice %145 {offsets = [0, 32], sizes = [8, 32], strides = [1, 1]} : vector<8x128xf32> to vector<8x32xf32>
    %153 = arith.negf %152 : vector<8x32xf32>
    %154 = math.exp %153 : vector<8x32xf32>
    %cst_64 = arith.constant 1.000000e+00 : f32
    %155 = vector.broadcast %cst_64 : f32 to vector<8x32xf32>
    %156 = arith.addf %155, %154 : vector<8x32xf32>
    %157 = arith.divf %155, %156 : vector<8x32xf32>
    %158 = vector.extract_strided_slice %145 {offsets = [0, 64], sizes = [8, 32], strides = [1, 1]} : vector<8x128xf32> to vector<8x32xf32>
    %159 = math.tanh %158 : vector<8x32xf32>
    %160 = vector.extract_strided_slice %145 {offsets = [0, 96], sizes = [8, 32], strides = [1, 1]} : vector<8x128xf32> to vector<8x32xf32>
    %161 = arith.negf %160 : vector<8x32xf32>
    %162 = math.exp %161 : vector<8x32xf32>
    %cst_65 = arith.constant 1.000000e+00 : f32
    %163 = vector.broadcast %cst_65 : f32 to vector<8x32xf32>
    %164 = arith.addf %163, %162 : vector<8x32xf32>
    %165 = arith.divf %163, %164 : vector<8x32xf32>
    %166 = arith.mulf %157, %63 : vector<8x32xf32>
    %167 = arith.mulf %151, %159 : vector<8x32xf32>
    %168 = arith.addf %166, %167 : vector<8x32xf32>
    %169 = math.tanh %168 : vector<8x32xf32>
    %170 = arith.mulf %165, %169 : vector<8x32xf32>
    %cst_66 = arith.constant dense<0.000000e+00> : vector<8x128xf32>
    %171 = tpu.matmul %170, %5, %cst_66 {dimension_numbers = #tpu.dot_dimension_numbers<[1], [0], [0], [1], [0, 0, 1, 1], [], []>} : vector<8x32xf32>, vector<32x128xf32>, vector<8x128xf32> -> vector<8x128xf32>
    %cst_67 = arith.constant dense<0.000000e+00> : vector<8x128xf32>
    %172 = tpu.matmul %94, %6, %cst_67 {dimension_numbers = #tpu.dot_dimension_numbers<[1], [0], [0], [1], [0, 0, 1, 1], [], []>} : vector<8x32xf32>, vector<32x128xf32>, vector<8x128xf32> -> vector<8x128xf32>
    %173 = arith.addf %171, %172 : vector<8x128xf32>
    %174 = arith.addf %173, %10 : vector<8x128xf32>
    %175 = vector.extract_strided_slice %174 {offsets = [0, 0], sizes = [8, 32], strides = [1, 1]} : vector<8x128xf32> to vector<8x32xf32>
    %176 = arith.negf %175 : vector<8x32xf32>
    %177 = math.exp %176 : vector<8x32xf32>
    %cst_68 = arith.constant 1.000000e+00 : f32
    %178 = vector.broadcast %cst_68 : f32 to vector<8x32xf32>
    %179 = arith.addf %178, %177 : vector<8x32xf32>
    %180 = arith.divf %178, %179 : vector<8x32xf32>
    %181 = vector.extract_strided_slice %174 {offsets = [0, 32], sizes = [8, 32], strides = [1, 1]} : vector<8x128xf32> to vector<8x32xf32>
    %182 = arith.negf %181 : vector<8x32xf32>
    %183 = math.exp %182 : vector<8x32xf32>
    %cst_69 = arith.constant 1.000000e+00 : f32
    %184 = vector.broadcast %cst_69 : f32 to vector<8x32xf32>
    %185 = arith.addf %184, %183 : vector<8x32xf32>
    %186 = arith.divf %184, %185 : vector<8x32xf32>
    %187 = vector.extract_strided_slice %174 {offsets = [0, 64], sizes = [8, 32], strides = [1, 1]} : vector<8x128xf32> to vector<8x32xf32>
    %188 = math.tanh %187 : vector<8x32xf32>
    %189 = vector.extract_strided_slice %174 {offsets = [0, 96], sizes = [8, 32], strides = [1, 1]} : vector<8x128xf32> to vector<8x32xf32>
    %190 = arith.negf %189 : vector<8x32xf32>
    %191 = math.exp %190 : vector<8x32xf32>
    %cst_70 = arith.constant 1.000000e+00 : f32
    %192 = vector.broadcast %cst_70 : f32 to vector<8x32xf32>
    %193 = arith.addf %192, %191 : vector<8x32xf32>
    %194 = arith.divf %192, %193 : vector<8x32xf32>
    %195 = arith.mulf %186, %92 : vector<8x32xf32>
    %196 = arith.mulf %180, %188 : vector<8x32xf32>
    %197 = arith.addf %195, %196 : vector<8x32xf32>
    %198 = math.tanh %197 : vector<8x32xf32>
    %199 = arith.mulf %194, %198 : vector<8x32xf32>
    %cst_71 = arith.constant dense<0.000000e+00> : vector<8x128xf32>
    %200 = tpu.matmul %199, %7, %cst_71 {dimension_numbers = #tpu.dot_dimension_numbers<[1], [0], [0], [1], [0, 0, 1, 1], [], []>} : vector<8x32xf32>, vector<32x128xf32>, vector<8x128xf32> -> vector<8x128xf32>
    %201 = arith.addf %200, %13 : vector<8x128xf32>
    %cst_72 = arith.constant dense<0xFF800000> : vector<8xf32>
    %202 = vector.multi_reduction <maximumf>, %201, %cst_72 [1] : vector<8x128xf32> to vector<8xf32>
    %203 = vector.shape_cast %202 : vector<8xf32> to vector<8x1xf32>
    %204 = vector.broadcast %203 : vector<8x1xf32> to vector<8x128xf32>
    %205 = arith.subf %201, %204 : vector<8x128xf32>
    %206 = math.exp %205 : vector<8x128xf32>
    %cst_73 = arith.constant dense<0.000000e+00> : vector<8xf32>
    %207 = vector.multi_reduction <add>, %206, %cst_73 [1] : vector<8x128xf32> to vector<8xf32>
    %208 = vector.shape_cast %207 : vector<8xf32> to vector<8x1xf32>
    %209 = math.log %208 : vector<8x1xf32>
    %210 = vector.broadcast %209 : vector<8x1xf32> to vector<8x128xf32>
    %211 = arith.subf %205, %210 : vector<8x128xf32>
    %c1_74 = arith.constant 1 : index
    %c0_75 = arith.constant 0 : index
    %c0_76 = arith.constant 0 : index
    %212 = vector.load %arg15[%c1_74, %c0_75, %c0_76] : memref<10x8x128xf32, #tpu.memory_space<vmem>>, vector<1x8x128xf32>
    %213 = vector.shape_cast %212 : vector<1x8x128xf32> to vector<8x128xf32>
    %214 = vector.shape_cast %211 : vector<8x128xf32> to vector<1x8x128xf32>
    tpu.vector_store %arg15[%c1_74, %c0_75, %c0_76], %214 {strides = array<i32>} : memref<10x8x128xf32, #tpu.memory_space<vmem>>, vector<1x8x128xf32>,
    %215 = vector.broadcast %203 : vector<8x1xf32> to vector<8x128xf32>
    %216 = arith.cmpf oeq, %201, %215 : vector<8x128xf32>
    %c128_i32_77 = arith.constant 128 : i32
    %217 = vector.broadcast %c128_i32_77 : i32 to vector<8x128xi32>
    %218 = arith.select %216, %24, %217 : vector<8x128xi1>, vector<8x128xi32>
    %cst_78 = arith.constant dense<2147483647> : vector<8xi32>
    %219 = vector.multi_reduction <minsi>, %218, %cst_78 [1] : vector<8x128xi32> to vector<8xi32>
    %220 = vector.shape_cast %219 : vector<8xi32> to vector<8x1xi32>
    %c128_i32_79 = arith.constant 128 : i32
    %221 = vector.broadcast %c128_i32_79 : i32 to vector<8x1xi32>
    %222 = arith.select %27, %220, %221 : vector<8x1xi1>, vector<8x1xi32>
    %223 = vector.broadcast %222 : vector<8x1xi32> to vector<8x128xi32>
    %224 = arith.cmpi eq, %24, %223 : vector<8x128xi32>
    %cst_80 = arith.constant 1.000000e+00 : f32
    %cst_81 = arith.constant 0.000000e+00 : f32
    %225 = vector.broadcast %cst_80 : f32 to vector<8x128xf32>
    %226 = vector.broadcast %cst_81 : f32 to vector<8x128xf32>
    %227 = arith.select %224, %225, %226 : vector<8x128xi1>, vector<8x128xf32>
    %cst_82 = arith.constant dense<0xFF800000> : vector<128xf32>
    %228 = vector.multi_reduction <maximumf>, %227, %cst_82 [0] : vector<8x128xf32> to vector<128xf32>
    %cst_83 = arith.constant 0.000000e+00 : f32
    %229 = vector.broadcast %cst_83 : f32 to vector<128xf32>
    %230 = arith.cmpf ogt, %228, %229 : vector<128xf32>
    %231 = vector.shape_cast %230 : vector<128xi1> to vector<1x128xi1>
    %232 = vector.shape_cast %231 : vector<1x128xi1> to vector<1x128xi1>
    %233 = vector.broadcast %232 : vector<1x128xi1> to vector<8x128xi1>
    %234 = arith.extui %233 : vector<8x128xi1> to vector<8x128xi32>
    %235 = arith.sitofp %234 : vector<8x128xi32> to vector<8x128xf32>
    %cst_84 = arith.constant dense<0.000000e+00> : vector<8x128xf32>
    %236 = tpu.matmul %235, %3, %cst_84 {dimension_numbers = #tpu.dot_dimension_numbers<[1], [0], [0], [1], [0, 0, 1, 1], [], []>} : vector<8x128xf32>, vector<128x128xf32>, vector<8x128xf32> -> vector<8x128xf32>
    %237 = vector.extract_strided_slice %236 {offsets = [0, 0], sizes = [1, 128], strides = [1, 1]} : vector<8x128xf32> to vector<1x128xf32>
    %c10_i32_85 = arith.constant 10 : i32
    %238 = arith.muli %arg0, %c10_i32_85 : i32
    %c1_i32 = arith.constant 1 : i32
    %239 = arith.addi %238, %c1_i32 : i32
    %240 = arith.index_cast %239 : i32 to index
    %241 = memref.load %arg1[%240] : memref<10xi32, #tpu.memory_space<smem>>
    %c0_i32_86 = arith.constant 0 : i32
    %242 = arith.cmpi sgt, %241, %c0_i32_86 : i32
    %243 = vector.extract_strided_slice %23 {offsets = [8, 0], sizes = [8, 128], strides = [1, 1]} : vector<80x128xf32> to vector<8x128xf32>
    %244 = vector.shape_cast %237 : vector<1x128xf32> to vector<1x128xf32>
    %245 = vector.broadcast %244 : vector<1x128xf32> to vector<8x128xf32>
    %246 = arith.select %242, %243, %245 : vector<8x128xf32>
    %247 = vector.extract_strided_slice %20 {offsets = [16, 0], sizes = [8, 128], strides = [1, 1]} : vector<80x128xf32> to vector<8x128xf32>
    %248 = arith.addf %246, %247 : vector<8x128xf32>
    %cst_87 = arith.constant dense<0.000000e+00> : vector<8x128xf32>
    %249 = tpu.matmul %170, %4, %cst_87 {dimension_numbers = #tpu.dot_dimension_numbers<[1], [0], [0], [1], [0, 0, 1, 1], [], []>} : vector<8x32xf32>, vector<32x128xf32>, vector<8x128xf32> -> vector<8x128xf32>
    %250 = arith.addf %248, %249 : vector<8x128xf32>
    %251 = vector.extract_strided_slice %250 {offsets = [0, 0], sizes = [8, 32], strides = [1, 1]} : vector<8x128xf32> to vector<8x32xf32>
    %252 = arith.negf %251 : vector<8x32xf32>
    %253 = math.exp %252 : vector<8x32xf32>
    %cst_88 = arith.constant 1.000000e+00 : f32
    %254 = vector.broadcast %cst_88 : f32 to vector<8x32xf32>
    %255 = arith.addf %254, %253 : vector<8x32xf32>
    %256 = arith.divf %254, %255 : vector<8x32xf32>
    %257 = vector.extract_strided_slice %250 {offsets = [0, 32], sizes = [8, 32], strides = [1, 1]} : vector<8x128xf32> to vector<8x32xf32>
    %258 = arith.negf %257 : vector<8x32xf32>
    %259 = math.exp %258 : vector<8x32xf32>
    %cst_89 = arith.constant 1.000000e+00 : f32
    %260 = vector.broadcast %cst_89 : f32 to vector<8x32xf32>
    %261 = arith.addf %260, %259 : vector<8x32xf32>
    %262 = arith.divf %260, %261 : vector<8x32xf32>
    %263 = vector.extract_strided_slice %250 {offsets = [0, 64], sizes = [8, 32], strides = [1, 1]} : vector<8x128xf32> to vector<8x32xf32>
    %264 = math.tanh %263 : vector<8x32xf32>
    %265 = vector.extract_strided_slice %250 {offsets = [0, 96], sizes = [8, 32], strides = [1, 1]} : vector<8x128xf32> to vector<8x32xf32>
    %266 = arith.negf %265 : vector<8x32xf32>
    %267 = math.exp %266 : vector<8x32xf32>
    %cst_90 = arith.constant 1.000000e+00 : f32
    %268 = vector.broadcast %cst_90 : f32 to vector<8x32xf32>
    %269 = arith.addf %268, %267 : vector<8x32xf32>
    %270 = arith.divf %268, %269 : vector<8x32xf32>
    %271 = arith.mulf %262, %168 : vector<8x32xf32>
    %272 = arith.mulf %256, %264 : vector<8x32xf32>
    %273 = arith.addf %271, %272 : vector<8x32xf32>
    %274 = math.tanh %273 : vector<8x32xf32>
    %275 = arith.mulf %270, %274 : vector<8x32xf32>
    %cst_91 = arith.constant dense<0.000000e+00> : vector<8x128xf32>
    %276 = tpu.matmul %275, %5, %cst_91 {dimension_numbers = #tpu.dot_dimension_numbers<[1], [0], [0], [1], [0, 0, 1, 1], [], []>} : vector<8x32xf32>, vector<32x128xf32>, vector<8x128xf32> -> vector<8x128xf32>
    %cst_92 = arith.constant dense<0.000000e+00> : vector<8x128xf32>
    %277 = tpu.matmul %199, %6, %cst_92 {dimension_numbers = #tpu.dot_dimension_numbers<[1], [0], [0], [1], [0, 0, 1, 1], [], []>} : vector<8x32xf32>, vector<32x128xf32>, vector<8x128xf32> -> vector<8x128xf32>
    %278 = arith.addf %276, %277 : vector<8x128xf32>
    %279 = arith.addf %278, %10 : vector<8x128xf32>
    %280 = vector.extract_strided_slice %279 {offsets = [0, 0], sizes = [8, 32], strides = [1, 1]} : vector<8x128xf32> to vector<8x32xf32>
    %281 = arith.negf %280 : vector<8x32xf32>
    %282 = math.exp %281 : vector<8x32xf32>
    %cst_93 = arith.constant 1.000000e+00 : f32
    %283 = vector.broadcast %cst_93 : f32 to vector<8x32xf32>
    %284 = arith.addf %283, %282 : vector<8x32xf32>
    %285 = arith.divf %283, %284 : vector<8x32xf32>
    %286 = vector.extract_strided_slice %279 {offsets = [0, 32], sizes = [8, 32], strides = [1, 1]} : vector<8x128xf32> to vector<8x32xf32>
    %287 = arith.negf %286 : vector<8x32xf32>
    %288 = math.exp %287 : vector<8x32xf32>
    %cst_94 = arith.constant 1.000000e+00 : f32
    %289 = vector.broadcast %cst_94 : f32 to vector<8x32xf32>
    %290 = arith.addf %289, %288 : vector<8x32xf32>
    %291 = arith.divf %289, %290 : vector<8x32xf32>
    %292 = vector.extract_strided_slice %279 {offsets = [0, 64], sizes = [8, 32], strides = [1, 1]} : vector<8x128xf32> to vector<8x32xf32>
    %293 = math.tanh %292 : vector<8x32xf32>
    %294 = vector.extract_strided_slice %279 {offsets = [0, 96], sizes = [8, 32], strides = [1, 1]} : vector<8x128xf32> to vector<8x32xf32>
    %295 = arith.negf %294 : vector<8x32xf32>
    %296 = math.exp %295 : vector<8x32xf32>
    %cst_95 = arith.constant 1.000000e+00 : f32
    %297 = vector.broadcast %cst_95 : f32 to vector<8x32xf32>
    %298 = arith.addf %297, %296 : vector<8x32xf32>
    %299 = arith.divf %297, %298 : vector<8x32xf32>
    %300 = arith.mulf %291, %197 : vector<8x32xf32>
    %301 = arith.mulf %285, %293 : vector<8x32xf32>
    %302 = arith.addf %300, %301 : vector<8x32xf32>
    %303 = math.tanh %302 : vector<8x32xf32>
    %304 = arith.mulf %299, %303 : vector<8x32xf32>
    %cst_96 = arith.constant dense<0.000000e+00> : vector<8x128xf32>
    %305 = tpu.matmul %304, %7, %cst_96 {dimension_numbers = #tpu.dot_dimension_numbers<[1], [0], [0], [1], [0, 0, 1, 1], [], []>} : vector<8x32xf32>, vector<32x128xf32>, vector<8x128xf32> -> vector<8x128xf32>
    %306 = arith.addf %305, %13 : vector<8x128xf32>
    %cst_97 = arith.constant dense<0xFF800000> : vector<8xf32>
    %307 = vector.multi_reduction <maximumf>, %306, %cst_97 [1] : vector<8x128xf32> to vector<8xf32>
    %308 = vector.shape_cast %307 : vector<8xf32> to vector<8x1xf32>
    %309 = vector.broadcast %308 : vector<8x1xf32> to vector<8x128xf32>
    %310 = arith.subf %306, %309 : vector<8x128xf32>
    %311 = math.exp %310 : vector<8x128xf32>
    %cst_98 = arith.constant dense<0.000000e+00> : vector<8xf32>
    %312 = vector.multi_reduction <add>, %311, %cst_98 [1] : vector<8x128xf32> to vector<8xf32>
    %313 = vector.shape_cast %312 : vector<8xf32> to vector<8x1xf32>
    %314 = math.log %313 : vector<8x1xf32>
    %315 = vector.broadcast %314 : vector<8x1xf32> to vector<8x128xf32>
    %316 = arith.subf %310, %315 : vector<8x128xf32>
    %c2 = arith.constant 2 : index
    %c0_99 = arith.constant 0 : index
    %c0_100 = arith.constant 0 : index
    %317 = vector.load %arg15[%c2, %c0_99, %c0_100] : memref<10x8x128xf32, #tpu.memory_space<vmem>>, vector<1x8x128xf32>
    %318 = vector.shape_cast %317 : vector<1x8x128xf32> to vector<8x128xf32>
    %319 = vector.shape_cast %316 : vector<8x128xf32> to vector<1x8x128xf32>
    tpu.vector_store %arg15[%c2, %c0_99, %c0_100], %319 {strides = array<i32>} : memref<10x8x128xf32, #tpu.memory_space<vmem>>, vector<1x8x128xf32>,
    %320 = vector.broadcast %308 : vector<8x1xf32> to vector<8x128xf32>
    %321 = arith.cmpf oeq, %306, %320 : vector<8x128xf32>
    %c128_i32_101 = arith.constant 128 : i32
    %322 = vector.broadcast %c128_i32_101 : i32 to vector<8x128xi32>
    %323 = arith.select %321, %24, %322 : vector<8x128xi1>, vector<8x128xi32>
    %cst_102 = arith.constant dense<2147483647> : vector<8xi32>
    %324 = vector.multi_reduction <minsi>, %323, %cst_102 [1] : vector<8x128xi32> to vector<8xi32>
    %325 = vector.shape_cast %324 : vector<8xi32> to vector<8x1xi32>
    %c128_i32_103 = arith.constant 128 : i32
    %326 = vector.broadcast %c128_i32_103 : i32 to vector<8x1xi32>
    %327 = arith.select %27, %325, %326 : vector<8x1xi1>, vector<8x1xi32>
    %328 = vector.broadcast %327 : vector<8x1xi32> to vector<8x128xi32>
    %329 = arith.cmpi eq, %24, %328 : vector<8x128xi32>
    %cst_104 = arith.constant 1.000000e+00 : f32
    %cst_105 = arith.constant 0.000000e+00 : f32
    %330 = vector.broadcast %cst_104 : f32 to vector<8x128xf32>
    %331 = vector.broadcast %cst_105 : f32 to vector<8x128xf32>
    %332 = arith.select %329, %330, %331 : vector<8x128xi1>, vector<8x128xf32>
    %cst_106 = arith.constant dense<0xFF800000> : vector<128xf32>
    %333 = vector.multi_reduction <maximumf>, %332, %cst_106 [0] : vector<8x128xf32> to vector<128xf32>
    %cst_107 = arith.constant 0.000000e+00 : f32
    %334 = vector.broadcast %cst_107 : f32 to vector<128xf32>
    %335 = arith.cmpf ogt, %333, %334 : vector<128xf32>
    %336 = vector.shape_cast %335 : vector<128xi1> to vector<1x128xi1>
    %337 = vector.shape_cast %336 : vector<1x128xi1> to vector<1x128xi1>
    %338 = vector.broadcast %337 : vector<1x128xi1> to vector<8x128xi1>
    %339 = arith.extui %338 : vector<8x128xi1> to vector<8x128xi32>
    %340 = arith.sitofp %339 : vector<8x128xi32> to vector<8x128xf32>
    %cst_108 = arith.constant dense<0.000000e+00> : vector<8x128xf32>
    %341 = tpu.matmul %340, %3, %cst_108 {dimension_numbers = #tpu.dot_dimension_numbers<[1], [0], [0], [1], [0, 0, 1, 1], [], []>} : vector<8x128xf32>, vector<128x128xf32>, vector<8x128xf32> -> vector<8x128xf32>
    %342 = vector.extract_strided_slice %341 {offsets = [0, 0], sizes = [1, 128], strides = [1, 1]} : vector<8x128xf32> to vector<1x128xf32>
    %c10_i32_109 = arith.constant 10 : i32
    %343 = arith.muli %arg0, %c10_i32_109 : i32
    %c2_i32 = arith.constant 2 : i32
    %344 = arith.addi %343, %c2_i32 : i32
    %345 = arith.index_cast %344 : i32 to index
    %346 = memref.load %arg1[%345] : memref<10xi32, #tpu.memory_space<smem>>
    %c0_i32_110 = arith.constant 0 : i32
    %347 = arith.cmpi sgt, %346, %c0_i32_110 : i32
    %348 = vector.extract_strided_slice %23 {offsets = [16, 0], sizes = [8, 128], strides = [1, 1]} : vector<80x128xf32> to vector<8x128xf32>
    %349 = vector.shape_cast %342 : vector<1x128xf32> to vector<1x128xf32>
    %350 = vector.broadcast %349 : vector<1x128xf32> to vector<8x128xf32>
    %351 = arith.select %347, %348, %350 : vector<8x128xf32>
    %352 = vector.extract_strided_slice %20 {offsets = [24, 0], sizes = [8, 128], strides = [1, 1]} : vector<80x128xf32> to vector<8x128xf32>
    %353 = arith.addf %351, %352 : vector<8x128xf32>
    %cst_111 = arith.constant dense<0.000000e+00> : vector<8x128xf32>
    %354 = tpu.matmul %275, %4, %cst_111 {dimension_numbers = #tpu.dot_dimension_numbers<[1], [0], [0], [1], [0, 0, 1, 1], [], []>} : vector<8x32xf32>, vector<32x128xf32>, vector<8x128xf32> -> vector<8x128xf32>
    %355 = arith.addf %353, %354 : vector<8x128xf32>
    %356 = vector.extract_strided_slice %355 {offsets = [0, 0], sizes = [8, 32], strides = [1, 1]} : vector<8x128xf32> to vector<8x32xf32>
    %357 = arith.negf %356 : vector<8x32xf32>
    %358 = math.exp %357 : vector<8x32xf32>
    %cst_112 = arith.constant 1.000000e+00 : f32
    %359 = vector.broadcast %cst_112 : f32 to vector<8x32xf32>
    %360 = arith.addf %359, %358 : vector<8x32xf32>
    %361 = arith.divf %359, %360 : vector<8x32xf32>
    %362 = vector.extract_strided_slice %355 {offsets = [0, 32], sizes = [8, 32], strides = [1, 1]} : vector<8x128xf32> to vector<8x32xf32>
    %363 = arith.negf %362 : vector<8x32xf32>
    %364 = math.exp %363 : vector<8x32xf32>
    %cst_113 = arith.constant 1.000000e+00 : f32
    %365 = vector.broadcast %cst_113 : f32 to vector<8x32xf32>
    %366 = arith.addf %365, %364 : vector<8x32xf32>
    %367 = arith.divf %365, %366 : vector<8x32xf32>
    %368 = vector.extract_strided_slice %355 {offsets = [0, 64], sizes = [8, 32], strides = [1, 1]} : vector<8x128xf32> to vector<8x32xf32>
    %369 = math.tanh %368 : vector<8x32xf32>
    %370 = vector.extract_strided_slice %355 {offsets = [0, 96], sizes = [8, 32], strides = [1, 1]} : vector<8x128xf32> to vector<8x32xf32>
    %371 = arith.negf %370 : vector<8x32xf32>
    %372 = math.exp %371 : vector<8x32xf32>
    %cst_114 = arith.constant 1.000000e+00 : f32
    %373 = vector.broadcast %cst_114 : f32 to vector<8x32xf32>
    %374 = arith.addf %373, %372 : vector<8x32xf32>
    %375 = arith.divf %373, %374 : vector<8x32xf32>
    %376 = arith.mulf %367, %273 : vector<8x32xf32>
    %377 = arith.mulf %361, %369 : vector<8x32xf32>
    %378 = arith.addf %376, %377 : vector<8x32xf32>
    %379 = math.tanh %378 : vector<8x32xf32>
    %380 = arith.mulf %375, %379 : vector<8x32xf32>
    %cst_115 = arith.constant dense<0.000000e+00> : vector<8x128xf32>
    %381 = tpu.matmul %380, %5, %cst_115 {dimension_numbers = #tpu.dot_dimension_numbers<[1], [0], [0], [1], [0, 0, 1, 1], [], []>} : vector<8x32xf32>, vector<32x128xf32>, vector<8x128xf32> -> vector<8x128xf32>
    %cst_116 = arith.constant dense<0.000000e+00> : vector<8x128xf32>
    %382 = tpu.matmul %304, %6, %cst_116 {dimension_numbers = #tpu.dot_dimension_numbers<[1], [0], [0], [1], [0, 0, 1, 1], [], []>} : vector<8x32xf32>, vector<32x128xf32>, vector<8x128xf32> -> vector<8x128xf32>
    %383 = arith.addf %381, %382 : vector<8x128xf32>
    %384 = arith.addf %383, %10 : vector<8x128xf32>
    %385 = vector.extract_strided_slice %384 {offsets = [0, 0], sizes = [8, 32], strides = [1, 1]} : vector<8x128xf32> to vector<8x32xf32>
    %386 = arith.negf %385 : vector<8x32xf32>
    %387 = math.exp %386 : vector<8x32xf32>
    %cst_117 = arith.constant 1.000000e+00 : f32
    %388 = vector.broadcast %cst_117 : f32 to vector<8x32xf32>
    %389 = arith.addf %388, %387 : vector<8x32xf32>
    %390 = arith.divf %388, %389 : vector<8x32xf32>
    %391 = vector.extract_strided_slice %384 {offsets = [0, 32], sizes = [8, 32], strides = [1, 1]} : vector<8x128xf32> to vector<8x32xf32>
    %392 = arith.negf %391 : vector<8x32xf32>
    %393 = math.exp %392 : vector<8x32xf32>
    %cst_118 = arith.constant 1.000000e+00 : f32
    %394 = vector.broadcast %cst_118 : f32 to vector<8x32xf32>
    %395 = arith.addf %394, %393 : vector<8x32xf32>
    %396 = arith.divf %394, %395 : vector<8x32xf32>
    %397 = vector.extract_strided_slice %384 {offsets = [0, 64], sizes = [8, 32], strides = [1, 1]} : vector<8x128xf32> to vector<8x32xf32>
    %398 = math.tanh %397 : vector<8x32xf32>
    %399 = vector.extract_strided_slice %384 {offsets = [0, 96], sizes = [8, 32], strides = [1, 1]} : vector<8x128xf32> to vector<8x32xf32>
    %400 = arith.negf %399 : vector<8x32xf32>
    %401 = math.exp %400 : vector<8x32xf32>
    %cst_119 = arith.constant 1.000000e+00 : f32
    %402 = vector.broadcast %cst_119 : f32 to vector<8x32xf32>
    %403 = arith.addf %402, %401 : vector<8x32xf32>
    %404 = arith.divf %402, %403 : vector<8x32xf32>
    %405 = arith.mulf %396, %302 : vector<8x32xf32>
    %406 = arith.mulf %390, %398 : vector<8x32xf32>
    %407 = arith.addf %405, %406 : vector<8x32xf32>
    %408 = math.tanh %407 : vector<8x32xf32>
    %409 = arith.mulf %404, %408 : vector<8x32xf32>
    %cst_120 = arith.constant dense<0.000000e+00> : vector<8x128xf32>
    %410 = tpu.matmul %409, %7, %cst_120 {dimension_numbers = #tpu.dot_dimension_numbers<[1], [0], [0], [1], [0, 0, 1, 1], [], []>} : vector<8x32xf32>, vector<32x128xf32>, vector<8x128xf32> -> vector<8x128xf32>
    %411 = arith.addf %410, %13 : vector<8x128xf32>
    %cst_121 = arith.constant dense<0xFF800000> : vector<8xf32>
    %412 = vector.multi_reduction <maximumf>, %411, %cst_121 [1] : vector<8x128xf32> to vector<8xf32>
    %413 = vector.shape_cast %412 : vector<8xf32> to vector<8x1xf32>
    %414 = vector.broadcast %413 : vector<8x1xf32> to vector<8x128xf32>
    %415 = arith.subf %411, %414 : vector<8x128xf32>
    %416 = math.exp %415 : vector<8x128xf32>
    %cst_122 = arith.constant dense<0.000000e+00> : vector<8xf32>
    %417 = vector.multi_reduction <add>, %416, %cst_122 [1] : vector<8x128xf32> to vector<8xf32>
    %418 = vector.shape_cast %417 : vector<8xf32> to vector<8x1xf32>
    %419 = math.log %418 : vector<8x1xf32>
    %420 = vector.broadcast %419 : vector<8x1xf32> to vector<8x128xf32>
    %421 = arith.subf %415, %420 : vector<8x128xf32>
    %c3 = arith.constant 3 : index
    %c0_123 = arith.constant 0 : index
    %c0_124 = arith.constant 0 : index
    %422 = vector.load %arg15[%c3, %c0_123, %c0_124] : memref<10x8x128xf32, #tpu.memory_space<vmem>>, vector<1x8x128xf32>
    %423 = vector.shape_cast %422 : vector<1x8x128xf32> to vector<8x128xf32>
    %424 = vector.shape_cast %421 : vector<8x128xf32> to vector<1x8x128xf32>
    tpu.vector_store %arg15[%c3, %c0_123, %c0_124], %424 {strides = array<i32>} : memref<10x8x128xf32, #tpu.memory_space<vmem>>, vector<1x8x128xf32>,
    %425 = vector.broadcast %413 : vector<8x1xf32> to vector<8x128xf32>
    %426 = arith.cmpf oeq, %411, %425 : vector<8x128xf32>
    %c128_i32_125 = arith.constant 128 : i32
    %427 = vector.broadcast %c128_i32_125 : i32 to vector<8x128xi32>
    %428 = arith.select %426, %24, %427 : vector<8x128xi1>, vector<8x128xi32>
    %cst_126 = arith.constant dense<2147483647> : vector<8xi32>
    %429 = vector.multi_reduction <minsi>, %428, %cst_126 [1] : vector<8x128xi32> to vector<8xi32>
    %430 = vector.shape_cast %429 : vector<8xi32> to vector<8x1xi32>
    %c128_i32_127 = arith.constant 128 : i32
    %431 = vector.broadcast %c128_i32_127 : i32 to vector<8x1xi32>
    %432 = arith.select %27, %430, %431 : vector<8x1xi1>, vector<8x1xi32>
    %433 = vector.broadcast %432 : vector<8x1xi32> to vector<8x128xi32>
    %434 = arith.cmpi eq, %24, %433 : vector<8x128xi32>
    %cst_128 = arith.constant 1.000000e+00 : f32
    %cst_129 = arith.constant 0.000000e+00 : f32
    %435 = vector.broadcast %cst_128 : f32 to vector<8x128xf32>
    %436 = vector.broadcast %cst_129 : f32 to vector<8x128xf32>
    %437 = arith.select %434, %435, %436 : vector<8x128xi1>, vector<8x128xf32>
    %cst_130 = arith.constant dense<0xFF800000> : vector<128xf32>
    %438 = vector.multi_reduction <maximumf>, %437, %cst_130 [0] : vector<8x128xf32> to vector<128xf32>
    %cst_131 = arith.constant 0.000000e+00 : f32
    %439 = vector.broadcast %cst_131 : f32 to vector<128xf32>
    %440 = arith.cmpf ogt, %438, %439 : vector<128xf32>
    %441 = vector.shape_cast %440 : vector<128xi1> to vector<1x128xi1>
    %442 = vector.shape_cast %441 : vector<1x128xi1> to vector<1x128xi1>
    %443 = vector.broadcast %442 : vector<1x128xi1> to vector<8x128xi1>
    %444 = arith.extui %443 : vector<8x128xi1> to vector<8x128xi32>
    %445 = arith.sitofp %444 : vector<8x128xi32> to vector<8x128xf32>
    %cst_132 = arith.constant dense<0.000000e+00> : vector<8x128xf32>
    %446 = tpu.matmul %445, %3, %cst_132 {dimension_numbers = #tpu.dot_dimension_numbers<[1], [0], [0], [1], [0, 0, 1, 1], [], []>} : vector<8x128xf32>, vector<128x128xf32>, vector<8x128xf32> -> vector<8x128xf32>
    %447 = vector.extract_strided_slice %446 {offsets = [0, 0], sizes = [1, 128], strides = [1, 1]} : vector<8x128xf32> to vector<1x128xf32>
    %c10_i32_133 = arith.constant 10 : i32
    %448 = arith.muli %arg0, %c10_i32_133 : i32
    %c3_i32 = arith.constant 3 : i32
    %449 = arith.addi %448, %c3_i32 : i32
    %450 = arith.index_cast %449 : i32 to index
    %451 = memref.load %arg1[%450] : memref<10xi32, #tpu.memory_space<smem>>
    %c0_i32_134 = arith.constant 0 : i32
    %452 = arith.cmpi sgt, %451, %c0_i32_134 : i32
    %453 = vector.extract_strided_slice %23 {offsets = [24, 0], sizes = [8, 128], strides = [1, 1]} : vector<80x128xf32> to vector<8x128xf32>
    %454 = vector.shape_cast %447 : vector<1x128xf32> to vector<1x128xf32>
    %455 = vector.broadcast %454 : vector<1x128xf32> to vector<8x128xf32>
    %456 = arith.select %452, %453, %455 : vector<8x128xf32>
    %457 = vector.extract_strided_slice %20 {offsets = [32, 0], sizes = [8, 128], strides = [1, 1]} : vector<80x128xf32> to vector<8x128xf32>
    %458 = arith.addf %456, %457 : vector<8x128xf32>
    %cst_135 = arith.constant dense<0.000000e+00> : vector<8x128xf32>
    %459 = tpu.matmul %380, %4, %cst_135 {dimension_numbers = #tpu.dot_dimension_numbers<[1], [0], [0], [1], [0, 0, 1, 1], [], []>} : vector<8x32xf32>, vector<32x128xf32>, vector<8x128xf32> -> vector<8x128xf32>
    %460 = arith.addf %458, %459 : vector<8x128xf32>
    %461 = vector.extract_strided_slice %460 {offsets = [0, 0], sizes = [8, 32], strides = [1, 1]} : vector<8x128xf32> to vector<8x32xf32>
    %462 = arith.negf %461 : vector<8x32xf32>
    %463 = math.exp %462 : vector<8x32xf32>
    %cst_136 = arith.constant 1.000000e+00 : f32
    %464 = vector.broadcast %cst_136 : f32 to vector<8x32xf32>
    %465 = arith.addf %464, %463 : vector<8x32xf32>
    %466 = arith.divf %464, %465 : vector<8x32xf32>
    %467 = vector.extract_strided_slice %460 {offsets = [0, 32], sizes = [8, 32], strides = [1, 1]} : vector<8x128xf32> to vector<8x32xf32>
    %468 = arith.negf %467 : vector<8x32xf32>
    %469 = math.exp %468 : vector<8x32xf32>
    %cst_137 = arith.constant 1.000000e+00 : f32
    %470 = vector.broadcast %cst_137 : f32 to vector<8x32xf32>
    %471 = arith.addf %470, %469 : vector<8x32xf32>
    %472 = arith.divf %470, %471 : vector<8x32xf32>
    %473 = vector.extract_strided_slice %460 {offsets = [0, 64], sizes = [8, 32], strides = [1, 1]} : vector<8x128xf32> to vector<8x32xf32>
    %474 = math.tanh %473 : vector<8x32xf32>
    %475 = vector.extract_strided_slice %460 {offsets = [0, 96], sizes = [8, 32], strides = [1, 1]} : vector<8x128xf32> to vector<8x32xf32>
    %476 = arith.negf %475 : vector<8x32xf32>
    %477 = math.exp %476 : vector<8x32xf32>
    %cst_138 = arith.constant 1.000000e+00 : f32
    %478 = vector.broadcast %cst_138 : f32 to vector<8x32xf32>
    %479 = arith.addf %478, %477 : vector<8x32xf32>
    %480 = arith.divf %478, %479 : vector<8x32xf32>
    %481 = arith.mulf %472, %378 : vector<8x32xf32>
    %482 = arith.mulf %466, %474 : vector<8x32xf32>
    %483 = arith.addf %481, %482 : vector<8x32xf32>
    %484 = math.tanh %483 : vector<8x32xf32>
    %485 = arith.mulf %480, %484 : vector<8x32xf32>
    %cst_139 = arith.constant dense<0.000000e+00> : vector<8x128xf32>
    %486 = tpu.matmul %485, %5, %cst_139 {dimension_numbers = #tpu.dot_dimension_numbers<[1], [0], [0], [1], [0, 0, 1, 1], [], []>} : vector<8x32xf32>, vector<32x128xf32>, vector<8x128xf32> -> vector<8x128xf32>
    %cst_140 = arith.constant dense<0.000000e+00> : vector<8x128xf32>
    %487 = tpu.matmul %409, %6, %cst_140 {dimension_numbers = #tpu.dot_dimension_numbers<[1], [0], [0], [1], [0, 0, 1, 1], [], []>} : vector<8x32xf32>, vector<32x128xf32>, vector<8x128xf32> -> vector<8x128xf32>
    %488 = arith.addf %486, %487 : vector<8x128xf32>
    %489 = arith.addf %488, %10 : vector<8x128xf32>
    %490 = vector.extract_strided_slice %489 {offsets = [0, 0], sizes = [8, 32], strides = [1, 1]} : vector<8x128xf32> to vector<8x32xf32>
    %491 = arith.negf %490 : vector<8x32xf32>
    %492 = math.exp %491 : vector<8x32xf32>
    %cst_141 = arith.constant 1.000000e+00 : f32
    %493 = vector.broadcast %cst_141 : f32 to vector<8x32xf32>
    %494 = arith.addf %493, %492 : vector<8x32xf32>
    %495 = arith.divf %493, %494 : vector<8x32xf32>
    %496 = vector.extract_strided_slice %489 {offsets = [0, 32], sizes = [8, 32], strides = [1, 1]} : vector<8x128xf32> to vector<8x32xf32>
    %497 = arith.negf %496 : vector<8x32xf32>
    %498 = math.exp %497 : vector<8x32xf32>
    %cst_142 = arith.constant 1.000000e+00 : f32
    %499 = vector.broadcast %cst_142 : f32 to vector<8x32xf32>
    %500 = arith.addf %499, %498 : vector<8x32xf32>
    %501 = arith.divf %499, %500 : vector<8x32xf32>
    %502 = vector.extract_strided_slice %489 {offsets = [0, 64], sizes = [8, 32], strides = [1, 1]} : vector<8x128xf32> to vector<8x32xf32>
    %503 = math.tanh %502 : vector<8x32xf32>
    %504 = vector.extract_strided_slice %489 {offsets = [0, 96], sizes = [8, 32], strides = [1, 1]} : vector<8x128xf32> to vector<8x32xf32>
    %505 = arith.negf %504 : vector<8x32xf32>
    %506 = math.exp %505 : vector<8x32xf32>
    %cst_143 = arith.constant 1.000000e+00 : f32
    %507 = vector.broadcast %cst_143 : f32 to vector<8x32xf32>
    %508 = arith.addf %507, %506 : vector<8x32xf32>
    %509 = arith.divf %507, %508 : vector<8x32xf32>
    %510 = arith.mulf %501, %407 : vector<8x32xf32>
    %511 = arith.mulf %495, %503 : vector<8x32xf32>
    %512 = arith.addf %510, %511 : vector<8x32xf32>
    %513 = math.tanh %512 : vector<8x32xf32>
    %514 = arith.mulf %509, %513 : vector<8x32xf32>
    %cst_144 = arith.constant dense<0.000000e+00> : vector<8x128xf32>
    %515 = tpu.matmul %514, %7, %cst_144 {dimension_numbers = #tpu.dot_dimension_numbers<[1], [0], [0], [1], [0, 0, 1, 1], [], []>} : vector<8x32xf32>, vector<32x128xf32>, vector<8x128xf32> -> vector<8x128xf32>
    %516 = arith.addf %515, %13 : vector<8x128xf32>
    %cst_145 = arith.constant dense<0xFF800000> : vector<8xf32>
    %517 = vector.multi_reduction <maximumf>, %516, %cst_145 [1] : vector<8x128xf32> to vector<8xf32>
    %518 = vector.shape_cast %517 : vector<8xf32> to vector<8x1xf32>
    %519 = vector.broadcast %518 : vector<8x1xf32> to vector<8x128xf32>
    %520 = arith.subf %516, %519 : vector<8x128xf32>
    %521 = math.exp %520 : vector<8x128xf32>
    %cst_146 = arith.constant dense<0.000000e+00> : vector<8xf32>
    %522 = vector.multi_reduction <add>, %521, %cst_146 [1] : vector<8x128xf32> to vector<8xf32>
    %523 = vector.shape_cast %522 : vector<8xf32> to vector<8x1xf32>
    %524 = math.log %523 : vector<8x1xf32>
    %525 = vector.broadcast %524 : vector<8x1xf32> to vector<8x128xf32>
    %526 = arith.subf %520, %525 : vector<8x128xf32>
    %c4 = arith.constant 4 : index
    %c0_147 = arith.constant 0 : index
    %c0_148 = arith.constant 0 : index
    %527 = vector.load %arg15[%c4, %c0_147, %c0_148] : memref<10x8x128xf32, #tpu.memory_space<vmem>>, vector<1x8x128xf32>
    %528 = vector.shape_cast %527 : vector<1x8x128xf32> to vector<8x128xf32>
    %529 = vector.shape_cast %526 : vector<8x128xf32> to vector<1x8x128xf32>
    tpu.vector_store %arg15[%c4, %c0_147, %c0_148], %529 {strides = array<i32>} : memref<10x8x128xf32, #tpu.memory_space<vmem>>, vector<1x8x128xf32>,
    %530 = vector.broadcast %518 : vector<8x1xf32> to vector<8x128xf32>
    %531 = arith.cmpf oeq, %516, %530 : vector<8x128xf32>
    %c128_i32_149 = arith.constant 128 : i32
    %532 = vector.broadcast %c128_i32_149 : i32 to vector<8x128xi32>
    %533 = arith.select %531, %24, %532 : vector<8x128xi1>, vector<8x128xi32>
    %cst_150 = arith.constant dense<2147483647> : vector<8xi32>
    %534 = vector.multi_reduction <minsi>, %533, %cst_150 [1] : vector<8x128xi32> to vector<8xi32>
    %535 = vector.shape_cast %534 : vector<8xi32> to vector<8x1xi32>
    %c128_i32_151 = arith.constant 128 : i32
    %536 = vector.broadcast %c128_i32_151 : i32 to vector<8x1xi32>
    %537 = arith.select %27, %535, %536 : vector<8x1xi1>, vector<8x1xi32>
    %538 = vector.broadcast %537 : vector<8x1xi32> to vector<8x128xi32>
    %539 = arith.cmpi eq, %24, %538 : vector<8x128xi32>
    %cst_152 = arith.constant 1.000000e+00 : f32
    %cst_153 = arith.constant 0.000000e+00 : f32
    %540 = vector.broadcast %cst_152 : f32 to vector<8x128xf32>
    %541 = vector.broadcast %cst_153 : f32 to vector<8x128xf32>
    %542 = arith.select %539, %540, %541 : vector<8x128xi1>, vector<8x128xf32>
    %cst_154 = arith.constant dense<0xFF800000> : vector<128xf32>
    %543 = vector.multi_reduction <maximumf>, %542, %cst_154 [0] : vector<8x128xf32> to vector<128xf32>
    %cst_155 = arith.constant 0.000000e+00 : f32
    %544 = vector.broadcast %cst_155 : f32 to vector<128xf32>
    %545 = arith.cmpf ogt, %543, %544 : vector<128xf32>
    %546 = vector.shape_cast %545 : vector<128xi1> to vector<1x128xi1>
    %547 = vector.shape_cast %546 : vector<1x128xi1> to vector<1x128xi1>
    %548 = vector.broadcast %547 : vector<1x128xi1> to vector<8x128xi1>
    %549 = arith.extui %548 : vector<8x128xi1> to vector<8x128xi32>
    %550 = arith.sitofp %549 : vector<8x128xi32> to vector<8x128xf32>
    %cst_156 = arith.constant dense<0.000000e+00> : vector<8x128xf32>
    %551 = tpu.matmul %550, %3, %cst_156 {dimension_numbers = #tpu.dot_dimension_numbers<[1], [0], [0], [1], [0, 0, 1, 1], [], []>} : vector<8x128xf32>, vector<128x128xf32>, vector<8x128xf32> -> vector<8x128xf32>
    %552 = vector.extract_strided_slice %551 {offsets = [0, 0], sizes = [1, 128], strides = [1, 1]} : vector<8x128xf32> to vector<1x128xf32>
    %c10_i32_157 = arith.constant 10 : i32
    %553 = arith.muli %arg0, %c10_i32_157 : i32
    %c4_i32_158 = arith.constant 4 : i32
    %554 = arith.addi %553, %c4_i32_158 : i32
    %555 = arith.index_cast %554 : i32 to index
    %556 = memref.load %arg1[%555] : memref<10xi32, #tpu.memory_space<smem>>
    %c0_i32_159 = arith.constant 0 : i32
    %557 = arith.cmpi sgt, %556, %c0_i32_159 : i32
    %558 = vector.extract_strided_slice %23 {offsets = [32, 0], sizes = [8, 128], strides = [1, 1]} : vector<80x128xf32> to vector<8x128xf32>
    %559 = vector.shape_cast %552 : vector<1x128xf32> to vector<1x128xf32>
    %560 = vector.broadcast %559 : vector<1x128xf32> to vector<8x128xf32>
    %561 = arith.select %557, %558, %560 : vector<8x128xf32>
    %562 = vector.extract_strided_slice %20 {offsets = [40, 0], sizes = [8, 128], strides = [1, 1]} : vector<80x128xf32> to vector<8x128xf32>
    %563 = arith.addf %561, %562 : vector<8x128xf32>
    %cst_160 = arith.constant dense<0.000000e+00> : vector<8x128xf32>
    %564 = tpu.matmul %485, %4, %cst_160 {dimension_numbers = #tpu.dot_dimension_numbers<[1], [0], [0], [1], [0, 0, 1, 1], [], []>} : vector<8x32xf32>, vector<32x128xf32>, vector<8x128xf32> -> vector<8x128xf32>
    %565 = arith.addf %563, %564 : vector<8x128xf32>
    %566 = vector.extract_strided_slice %565 {offsets = [0, 0], sizes = [8, 32], strides = [1, 1]} : vector<8x128xf32> to vector<8x32xf32>
    %567 = arith.negf %566 : vector<8x32xf32>
    %568 = math.exp %567 : vector<8x32xf32>
    %cst_161 = arith.constant 1.000000e+00 : f32
    %569 = vector.broadcast %cst_161 : f32 to vector<8x32xf32>
    %570 = arith.addf %569, %568 : vector<8x32xf32>
    %571 = arith.divf %569, %570 : vector<8x32xf32>
    %572 = vector.extract_strided_slice %565 {offsets = [0, 32], sizes = [8, 32], strides = [1, 1]} : vector<8x128xf32> to vector<8x32xf32>
    %573 = arith.negf %572 : vector<8x32xf32>
    %574 = math.exp %573 : vector<8x32xf32>
    %cst_162 = arith.constant 1.000000e+00 : f32
    %575 = vector.broadcast %cst_162 : f32 to vector<8x32xf32>
    %576 = arith.addf %575, %574 : vector<8x32xf32>
    %577 = arith.divf %575, %576 : vector<8x32xf32>
    %578 = vector.extract_strided_slice %565 {offsets = [0, 64], sizes = [8, 32], strides = [1, 1]} : vector<8x128xf32> to vector<8x32xf32>
    %579 = math.tanh %578 : vector<8x32xf32>
    %580 = vector.extract_strided_slice %565 {offsets = [0, 96], sizes = [8, 32], strides = [1, 1]} : vector<8x128xf32> to vector<8x32xf32>
    %581 = arith.negf %580 : vector<8x32xf32>
    %582 = math.exp %581 : vector<8x32xf32>
    %cst_163 = arith.constant 1.000000e+00 : f32
    %583 = vector.broadcast %cst_163 : f32 to vector<8x32xf32>
    %584 = arith.addf %583, %582 : vector<8x32xf32>
    %585 = arith.divf %583, %584 : vector<8x32xf32>
    %586 = arith.mulf %577, %483 : vector<8x32xf32>
    %587 = arith.mulf %571, %579 : vector<8x32xf32>
    %588 = arith.addf %586, %587 : vector<8x32xf32>
    %589 = math.tanh %588 : vector<8x32xf32>
    %590 = arith.mulf %585, %589 : vector<8x32xf32>
    %cst_164 = arith.constant dense<0.000000e+00> : vector<8x128xf32>
    %591 = tpu.matmul %590, %5, %cst_164 {dimension_numbers = #tpu.dot_dimension_numbers<[1], [0], [0], [1], [0, 0, 1, 1], [], []>} : vector<8x32xf32>, vector<32x128xf32>, vector<8x128xf32> -> vector<8x128xf32>
    %cst_165 = arith.constant dense<0.000000e+00> : vector<8x128xf32>
    %592 = tpu.matmul %514, %6, %cst_165 {dimension_numbers = #tpu.dot_dimension_numbers<[1], [0], [0], [1], [0, 0, 1, 1], [], []>} : vector<8x32xf32>, vector<32x128xf32>, vector<8x128xf32> -> vector<8x128xf32>
    %593 = arith.addf %591, %592 : vector<8x128xf32>
    %594 = arith.addf %593, %10 : vector<8x128xf32>
    %595 = vector.extract_strided_slice %594 {offsets = [0, 0], sizes = [8, 32], strides = [1, 1]} : vector<8x128xf32> to vector<8x32xf32>
    %596 = arith.negf %595 : vector<8x32xf32>
    %597 = math.exp %596 : vector<8x32xf32>
    %cst_166 = arith.constant 1.000000e+00 : f32
    %598 = vector.broadcast %cst_166 : f32 to vector<8x32xf32>
    %599 = arith.addf %598, %597 : vector<8x32xf32>
    %600 = arith.divf %598, %599 : vector<8x32xf32>
    %601 = vector.extract_strided_slice %594 {offsets = [0, 32], sizes = [8, 32], strides = [1, 1]} : vector<8x128xf32> to vector<8x32xf32>
    %602 = arith.negf %601 : vector<8x32xf32>
    %603 = math.exp %602 : vector<8x32xf32>
    %cst_167 = arith.constant 1.000000e+00 : f32
    %604 = vector.broadcast %cst_167 : f32 to vector<8x32xf32>
    %605 = arith.addf %604, %603 : vector<8x32xf32>
    %606 = arith.divf %604, %605 : vector<8x32xf32>
    %607 = vector.extract_strided_slice %594 {offsets = [0, 64], sizes = [8, 32], strides = [1, 1]} : vector<8x128xf32> to vector<8x32xf32>
    %608 = math.tanh %607 : vector<8x32xf32>
    %609 = vector.extract_strided_slice %594 {offsets = [0, 96], sizes = [8, 32], strides = [1, 1]} : vector<8x128xf32> to vector<8x32xf32>
    %610 = arith.negf %609 : vector<8x32xf32>
    %611 = math.exp %610 : vector<8x32xf32>
    %cst_168 = arith.constant 1.000000e+00 : f32
    %612 = vector.broadcast %cst_168 : f32 to vector<8x32xf32>
    %613 = arith.addf %612, %611 : vector<8x32xf32>
    %614 = arith.divf %612, %613 : vector<8x32xf32>
    %615 = arith.mulf %606, %512 : vector<8x32xf32>
    %616 = arith.mulf %600, %608 : vector<8x32xf32>
    %617 = arith.addf %615, %616 : vector<8x32xf32>
    %618 = math.tanh %617 : vector<8x32xf32>
    %619 = arith.mulf %614, %618 : vector<8x32xf32>
    %cst_169 = arith.constant dense<0.000000e+00> : vector<8x128xf32>
    %620 = tpu.matmul %619, %7, %cst_169 {dimension_numbers = #tpu.dot_dimension_numbers<[1], [0], [0], [1], [0, 0, 1, 1], [], []>} : vector<8x32xf32>, vector<32x128xf32>, vector<8x128xf32> -> vector<8x128xf32>
    %621 = arith.addf %620, %13 : vector<8x128xf32>
    %cst_170 = arith.constant dense<0xFF800000> : vector<8xf32>
    %622 = vector.multi_reduction <maximumf>, %621, %cst_170 [1] : vector<8x128xf32> to vector<8xf32>
    %623 = vector.shape_cast %622 : vector<8xf32> to vector<8x1xf32>
    %624 = vector.broadcast %623 : vector<8x1xf32> to vector<8x128xf32>
    %625 = arith.subf %621, %624 : vector<8x128xf32>
    %626 = math.exp %625 : vector<8x128xf32>
    %cst_171 = arith.constant dense<0.000000e+00> : vector<8xf32>
    %627 = vector.multi_reduction <add>, %626, %cst_171 [1] : vector<8x128xf32> to vector<8xf32>
    %628 = vector.shape_cast %627 : vector<8xf32> to vector<8x1xf32>
    %629 = math.log %628 : vector<8x1xf32>
    %630 = vector.broadcast %629 : vector<8x1xf32> to vector<8x128xf32>
    %631 = arith.subf %625, %630 : vector<8x128xf32>
    %c5 = arith.constant 5 : index
    %c0_172 = arith.constant 0 : index
    %c0_173 = arith.constant 0 : index
    %632 = vector.load %arg15[%c5, %c0_172, %c0_173] : memref<10x8x128xf32, #tpu.memory_space<vmem>>, vector<1x8x128xf32>
    %633 = vector.shape_cast %632 : vector<1x8x128xf32> to vector<8x128xf32>
    %634 = vector.shape_cast %631 : vector<8x128xf32> to vector<1x8x128xf32>
    tpu.vector_store %arg15[%c5, %c0_172, %c0_173], %634 {strides = array<i32>} : memref<10x8x128xf32, #tpu.memory_space<vmem>>, vector<1x8x128xf32>,
    %635 = vector.broadcast %623 : vector<8x1xf32> to vector<8x128xf32>
    %636 = arith.cmpf oeq, %621, %635 : vector<8x128xf32>
    %c128_i32_174 = arith.constant 128 : i32
    %637 = vector.broadcast %c128_i32_174 : i32 to vector<8x128xi32>
    %638 = arith.select %636, %24, %637 : vector<8x128xi1>, vector<8x128xi32>
    %cst_175 = arith.constant dense<2147483647> : vector<8xi32>
    %639 = vector.multi_reduction <minsi>, %638, %cst_175 [1] : vector<8x128xi32> to vector<8xi32>
    %640 = vector.shape_cast %639 : vector<8xi32> to vector<8x1xi32>
    %c128_i32_176 = arith.constant 128 : i32
    %641 = vector.broadcast %c128_i32_176 : i32 to vector<8x1xi32>
    %642 = arith.select %27, %640, %641 : vector<8x1xi1>, vector<8x1xi32>
    %643 = vector.broadcast %642 : vector<8x1xi32> to vector<8x128xi32>
    %644 = arith.cmpi eq, %24, %643 : vector<8x128xi32>
    %cst_177 = arith.constant 1.000000e+00 : f32
    %cst_178 = arith.constant 0.000000e+00 : f32
    %645 = vector.broadcast %cst_177 : f32 to vector<8x128xf32>
    %646 = vector.broadcast %cst_178 : f32 to vector<8x128xf32>
    %647 = arith.select %644, %645, %646 : vector<8x128xi1>, vector<8x128xf32>
    %cst_179 = arith.constant dense<0xFF800000> : vector<128xf32>
    %648 = vector.multi_reduction <maximumf>, %647, %cst_179 [0] : vector<8x128xf32> to vector<128xf32>
    %cst_180 = arith.constant 0.000000e+00 : f32
    %649 = vector.broadcast %cst_180 : f32 to vector<128xf32>
    %650 = arith.cmpf ogt, %648, %649 : vector<128xf32>
    %651 = vector.shape_cast %650 : vector<128xi1> to vector<1x128xi1>
    %652 = vector.shape_cast %651 : vector<1x128xi1> to vector<1x128xi1>
    %653 = vector.broadcast %652 : vector<1x128xi1> to vector<8x128xi1>
    %654 = arith.extui %653 : vector<8x128xi1> to vector<8x128xi32>
    %655 = arith.sitofp %654 : vector<8x128xi32> to vector<8x128xf32>
    %cst_181 = arith.constant dense<0.000000e+00> : vector<8x128xf32>
    %656 = tpu.matmul %655, %3, %cst_181 {dimension_numbers = #tpu.dot_dimension_numbers<[1], [0], [0], [1], [0, 0, 1, 1], [], []>} : vector<8x128xf32>, vector<128x128xf32>, vector<8x128xf32> -> vector<8x128xf32>
    %657 = vector.extract_strided_slice %656 {offsets = [0, 0], sizes = [1, 128], strides = [1, 1]} : vector<8x128xf32> to vector<1x128xf32>
    %c10_i32_182 = arith.constant 10 : i32
    %658 = arith.muli %arg0, %c10_i32_182 : i32
    %c5_i32 = arith.constant 5 : i32
    %659 = arith.addi %658, %c5_i32 : i32
    %660 = arith.index_cast %659 : i32 to index
    %661 = memref.load %arg1[%660] : memref<10xi32, #tpu.memory_space<smem>>
    %c0_i32_183 = arith.constant 0 : i32
    %662 = arith.cmpi sgt, %661, %c0_i32_183 : i32
    %663 = vector.extract_strided_slice %23 {offsets = [40, 0], sizes = [8, 128], strides = [1, 1]} : vector<80x128xf32> to vector<8x128xf32>
    %664 = vector.shape_cast %657 : vector<1x128xf32> to vector<1x128xf32>
    %665 = vector.broadcast %664 : vector<1x128xf32> to vector<8x128xf32>
    %666 = arith.select %662, %663, %665 : vector<8x128xf32>
    %667 = vector.extract_strided_slice %20 {offsets = [48, 0], sizes = [8, 128], strides = [1, 1]} : vector<80x128xf32> to vector<8x128xf32>
    %668 = arith.addf %666, %667 : vector<8x128xf32>
    %cst_184 = arith.constant dense<0.000000e+00> : vector<8x128xf32>
    %669 = tpu.matmul %590, %4, %cst_184 {dimension_numbers = #tpu.dot_dimension_numbers<[1], [0], [0], [1], [0, 0, 1, 1], [], []>} : vector<8x32xf32>, vector<32x128xf32>, vector<8x128xf32> -> vector<8x128xf32>
    %670 = arith.addf %668, %669 : vector<8x128xf32>
    %671 = vector.extract_strided_slice %670 {offsets = [0, 0], sizes = [8, 32], strides = [1, 1]} : vector<8x128xf32> to vector<8x32xf32>
    %672 = arith.negf %671 : vector<8x32xf32>
    %673 = math.exp %672 : vector<8x32xf32>
    %cst_185 = arith.constant 1.000000e+00 : f32
    %674 = vector.broadcast %cst_185 : f32 to vector<8x32xf32>
    %675 = arith.addf %674, %673 : vector<8x32xf32>
    %676 = arith.divf %674, %675 : vector<8x32xf32>
    %677 = vector.extract_strided_slice %670 {offsets = [0, 32], sizes = [8, 32], strides = [1, 1]} : vector<8x128xf32> to vector<8x32xf32>
    %678 = arith.negf %677 : vector<8x32xf32>
    %679 = math.exp %678 : vector<8x32xf32>
    %cst_186 = arith.constant 1.000000e+00 : f32
    %680 = vector.broadcast %cst_186 : f32 to vector<8x32xf32>
    %681 = arith.addf %680, %679 : vector<8x32xf32>
    %682 = arith.divf %680, %681 : vector<8x32xf32>
    %683 = vector.extract_strided_slice %670 {offsets = [0, 64], sizes = [8, 32], strides = [1, 1]} : vector<8x128xf32> to vector<8x32xf32>
    %684 = math.tanh %683 : vector<8x32xf32>
    %685 = vector.extract_strided_slice %670 {offsets = [0, 96], sizes = [8, 32], strides = [1, 1]} : vector<8x128xf32> to vector<8x32xf32>
    %686 = arith.negf %685 : vector<8x32xf32>
    %687 = math.exp %686 : vector<8x32xf32>
    %cst_187 = arith.constant 1.000000e+00 : f32
    %688 = vector.broadcast %cst_187 : f32 to vector<8x32xf32>
    %689 = arith.addf %688, %687 : vector<8x32xf32>
    %690 = arith.divf %688, %689 : vector<8x32xf32>
    %691 = arith.mulf %682, %588 : vector<8x32xf32>
    %692 = arith.mulf %676, %684 : vector<8x32xf32>
    %693 = arith.addf %691, %692 : vector<8x32xf32>
    %694 = math.tanh %693 : vector<8x32xf32>
    %695 = arith.mulf %690, %694 : vector<8x32xf32>
    %cst_188 = arith.constant dense<0.000000e+00> : vector<8x128xf32>
    %696 = tpu.matmul %695, %5, %cst_188 {dimension_numbers = #tpu.dot_dimension_numbers<[1], [0], [0], [1], [0, 0, 1, 1], [], []>} : vector<8x32xf32>, vector<32x128xf32>, vector<8x128xf32> -> vector<8x128xf32>
    %cst_189 = arith.constant dense<0.000000e+00> : vector<8x128xf32>
    %697 = tpu.matmul %619, %6, %cst_189 {dimension_numbers = #tpu.dot_dimension_numbers<[1], [0], [0], [1], [0, 0, 1, 1], [], []>} : vector<8x32xf32>, vector<32x128xf32>, vector<8x128xf32> -> vector<8x128xf32>
    %698 = arith.addf %696, %697 : vector<8x128xf32>
    %699 = arith.addf %698, %10 : vector<8x128xf32>
    %700 = vector.extract_strided_slice %699 {offsets = [0, 0], sizes = [8, 32], strides = [1, 1]} : vector<8x128xf32> to vector<8x32xf32>
    %701 = arith.negf %700 : vector<8x32xf32>
    %702 = math.exp %701 : vector<8x32xf32>
    %cst_190 = arith.constant 1.000000e+00 : f32
    %703 = vector.broadcast %cst_190 : f32 to vector<8x32xf32>
    %704 = arith.addf %703, %702 : vector<8x32xf32>
    %705 = arith.divf %703, %704 : vector<8x32xf32>
    %706 = vector.extract_strided_slice %699 {offsets = [0, 32], sizes = [8, 32], strides = [1, 1]} : vector<8x128xf32> to vector<8x32xf32>
    %707 = arith.negf %706 : vector<8x32xf32>
    %708 = math.exp %707 : vector<8x32xf32>
    %cst_191 = arith.constant 1.000000e+00 : f32
    %709 = vector.broadcast %cst_191 : f32 to vector<8x32xf32>
    %710 = arith.addf %709, %708 : vector<8x32xf32>
    %711 = arith.divf %709, %710 : vector<8x32xf32>
    %712 = vector.extract_strided_slice %699 {offsets = [0, 64], sizes = [8, 32], strides = [1, 1]} : vector<8x128xf32> to vector<8x32xf32>
    %713 = math.tanh %712 : vector<8x32xf32>
    %714 = vector.extract_strided_slice %699 {offsets = [0, 96], sizes = [8, 32], strides = [1, 1]} : vector<8x128xf32> to vector<8x32xf32>
    %715 = arith.negf %714 : vector<8x32xf32>
    %716 = math.exp %715 : vector<8x32xf32>
    %cst_192 = arith.constant 1.000000e+00 : f32
    %717 = vector.broadcast %cst_192 : f32 to vector<8x32xf32>
    %718 = arith.addf %717, %716 : vector<8x32xf32>
    %719 = arith.divf %717, %718 : vector<8x32xf32>
    %720 = arith.mulf %711, %617 : vector<8x32xf32>
    %721 = arith.mulf %705, %713 : vector<8x32xf32>
    %722 = arith.addf %720, %721 : vector<8x32xf32>
    %723 = math.tanh %722 : vector<8x32xf32>
    %724 = arith.mulf %719, %723 : vector<8x32xf32>
    %cst_193 = arith.constant dense<0.000000e+00> : vector<8x128xf32>
    %725 = tpu.matmul %724, %7, %cst_193 {dimension_numbers = #tpu.dot_dimension_numbers<[1], [0], [0], [1], [0, 0, 1, 1], [], []>} : vector<8x32xf32>, vector<32x128xf32>, vector<8x128xf32> -> vector<8x128xf32>
    %726 = arith.addf %725, %13 : vector<8x128xf32>
    %cst_194 = arith.constant dense<0xFF800000> : vector<8xf32>
    %727 = vector.multi_reduction <maximumf>, %726, %cst_194 [1] : vector<8x128xf32> to vector<8xf32>
    %728 = vector.shape_cast %727 : vector<8xf32> to vector<8x1xf32>
    %729 = vector.broadcast %728 : vector<8x1xf32> to vector<8x128xf32>
    %730 = arith.subf %726, %729 : vector<8x128xf32>
    %731 = math.exp %730 : vector<8x128xf32>
    %cst_195 = arith.constant dense<0.000000e+00> : vector<8xf32>
    %732 = vector.multi_reduction <add>, %731, %cst_195 [1] : vector<8x128xf32> to vector<8xf32>
    %733 = vector.shape_cast %732 : vector<8xf32> to vector<8x1xf32>
    %734 = math.log %733 : vector<8x1xf32>
    %735 = vector.broadcast %734 : vector<8x1xf32> to vector<8x128xf32>
    %736 = arith.subf %730, %735 : vector<8x128xf32>
    %c6 = arith.constant 6 : index
    %c0_196 = arith.constant 0 : index
    %c0_197 = arith.constant 0 : index
    %737 = vector.load %arg15[%c6, %c0_196, %c0_197] : memref<10x8x128xf32, #tpu.memory_space<vmem>>, vector<1x8x128xf32>
    %738 = vector.shape_cast %737 : vector<1x8x128xf32> to vector<8x128xf32>
    %739 = vector.shape_cast %736 : vector<8x128xf32> to vector<1x8x128xf32>
    tpu.vector_store %arg15[%c6, %c0_196, %c0_197], %739 {strides = array<i32>} : memref<10x8x128xf32, #tpu.memory_space<vmem>>, vector<1x8x128xf32>,
    %740 = vector.broadcast %728 : vector<8x1xf32> to vector<8x128xf32>
    %741 = arith.cmpf oeq, %726, %740 : vector<8x128xf32>
    %c128_i32_198 = arith.constant 128 : i32
    %742 = vector.broadcast %c128_i32_198 : i32 to vector<8x128xi32>
    %743 = arith.select %741, %24, %742 : vector<8x128xi1>, vector<8x128xi32>
    %cst_199 = arith.constant dense<2147483647> : vector<8xi32>
    %744 = vector.multi_reduction <minsi>, %743, %cst_199 [1] : vector<8x128xi32> to vector<8xi32>
    %745 = vector.shape_cast %744 : vector<8xi32> to vector<8x1xi32>
    %c128_i32_200 = arith.constant 128 : i32
    %746 = vector.broadcast %c128_i32_200 : i32 to vector<8x1xi32>
    %747 = arith.select %27, %745, %746 : vector<8x1xi1>, vector<8x1xi32>
    %748 = vector.broadcast %747 : vector<8x1xi32> to vector<8x128xi32>
    %749 = arith.cmpi eq, %24, %748 : vector<8x128xi32>
    %cst_201 = arith.constant 1.000000e+00 : f32
    %cst_202 = arith.constant 0.000000e+00 : f32
    %750 = vector.broadcast %cst_201 : f32 to vector<8x128xf32>
    %751 = vector.broadcast %cst_202 : f32 to vector<8x128xf32>
    %752 = arith.select %749, %750, %751 : vector<8x128xi1>, vector<8x128xf32>
    %cst_203 = arith.constant dense<0xFF800000> : vector<128xf32>
    %753 = vector.multi_reduction <maximumf>, %752, %cst_203 [0] : vector<8x128xf32> to vector<128xf32>
    %cst_204 = arith.constant 0.000000e+00 : f32
    %754 = vector.broadcast %cst_204 : f32 to vector<128xf32>
    %755 = arith.cmpf ogt, %753, %754 : vector<128xf32>
    %756 = vector.shape_cast %755 : vector<128xi1> to vector<1x128xi1>
    %757 = vector.shape_cast %756 : vector<1x128xi1> to vector<1x128xi1>
    %758 = vector.broadcast %757 : vector<1x128xi1> to vector<8x128xi1>
    %759 = arith.extui %758 : vector<8x128xi1> to vector<8x128xi32>
    %760 = arith.sitofp %759 : vector<8x128xi32> to vector<8x128xf32>
    %cst_205 = arith.constant dense<0.000000e+00> : vector<8x128xf32>
    %761 = tpu.matmul %760, %3, %cst_205 {dimension_numbers = #tpu.dot_dimension_numbers<[1], [0], [0], [1], [0, 0, 1, 1], [], []>} : vector<8x128xf32>, vector<128x128xf32>, vector<8x128xf32> -> vector<8x128xf32>
    %762 = vector.extract_strided_slice %761 {offsets = [0, 0], sizes = [1, 128], strides = [1, 1]} : vector<8x128xf32> to vector<1x128xf32>
    %c10_i32_206 = arith.constant 10 : i32
    %763 = arith.muli %arg0, %c10_i32_206 : i32
    %c6_i32 = arith.constant 6 : i32
    %764 = arith.addi %763, %c6_i32 : i32
    %765 = arith.index_cast %764 : i32 to index
    %766 = memref.load %arg1[%765] : memref<10xi32, #tpu.memory_space<smem>>
    %c0_i32_207 = arith.constant 0 : i32
    %767 = arith.cmpi sgt, %766, %c0_i32_207 : i32
    %768 = vector.extract_strided_slice %23 {offsets = [48, 0], sizes = [8, 128], strides = [1, 1]} : vector<80x128xf32> to vector<8x128xf32>
    %769 = vector.shape_cast %762 : vector<1x128xf32> to vector<1x128xf32>
    %770 = vector.broadcast %769 : vector<1x128xf32> to vector<8x128xf32>
    %771 = arith.select %767, %768, %770 : vector<8x128xf32>
    %772 = vector.extract_strided_slice %20 {offsets = [56, 0], sizes = [8, 128], strides = [1, 1]} : vector<80x128xf32> to vector<8x128xf32>
    %773 = arith.addf %771, %772 : vector<8x128xf32>
    %cst_208 = arith.constant dense<0.000000e+00> : vector<8x128xf32>
    %774 = tpu.matmul %695, %4, %cst_208 {dimension_numbers = #tpu.dot_dimension_numbers<[1], [0], [0], [1], [0, 0, 1, 1], [], []>} : vector<8x32xf32>, vector<32x128xf32>, vector<8x128xf32> -> vector<8x128xf32>
    %775 = arith.addf %773, %774 : vector<8x128xf32>
    %776 = vector.extract_strided_slice %775 {offsets = [0, 0], sizes = [8, 32], strides = [1, 1]} : vector<8x128xf32> to vector<8x32xf32>
    %777 = arith.negf %776 : vector<8x32xf32>
    %778 = math.exp %777 : vector<8x32xf32>
    %cst_209 = arith.constant 1.000000e+00 : f32
    %779 = vector.broadcast %cst_209 : f32 to vector<8x32xf32>
    %780 = arith.addf %779, %778 : vector<8x32xf32>
    %781 = arith.divf %779, %780 : vector<8x32xf32>
    %782 = vector.extract_strided_slice %775 {offsets = [0, 32], sizes = [8, 32], strides = [1, 1]} : vector<8x128xf32> to vector<8x32xf32>
    %783 = arith.negf %782 : vector<8x32xf32>
    %784 = math.exp %783 : vector<8x32xf32>
    %cst_210 = arith.constant 1.000000e+00 : f32
    %785 = vector.broadcast %cst_210 : f32 to vector<8x32xf32>
    %786 = arith.addf %785, %784 : vector<8x32xf32>
    %787 = arith.divf %785, %786 : vector<8x32xf32>
    %788 = vector.extract_strided_slice %775 {offsets = [0, 64], sizes = [8, 32], strides = [1, 1]} : vector<8x128xf32> to vector<8x32xf32>
    %789 = math.tanh %788 : vector<8x32xf32>
    %790 = vector.extract_strided_slice %775 {offsets = [0, 96], sizes = [8, 32], strides = [1, 1]} : vector<8x128xf32> to vector<8x32xf32>
    %791 = arith.negf %790 : vector<8x32xf32>
    %792 = math.exp %791 : vector<8x32xf32>
    %cst_211 = arith.constant 1.000000e+00 : f32
    %793 = vector.broadcast %cst_211 : f32 to vector<8x32xf32>
    %794 = arith.addf %793, %792 : vector<8x32xf32>
    %795 = arith.divf %793, %794 : vector<8x32xf32>
    %796 = arith.mulf %787, %693 : vector<8x32xf32>
    %797 = arith.mulf %781, %789 : vector<8x32xf32>
    %798 = arith.addf %796, %797 : vector<8x32xf32>
    %799 = math.tanh %798 : vector<8x32xf32>
    %800 = arith.mulf %795, %799 : vector<8x32xf32>
    %cst_212 = arith.constant dense<0.000000e+00> : vector<8x128xf32>
    %801 = tpu.matmul %800, %5, %cst_212 {dimension_numbers = #tpu.dot_dimension_numbers<[1], [0], [0], [1], [0, 0, 1, 1], [], []>} : vector<8x32xf32>, vector<32x128xf32>, vector<8x128xf32> -> vector<8x128xf32>
    %cst_213 = arith.constant dense<0.000000e+00> : vector<8x128xf32>
    %802 = tpu.matmul %724, %6, %cst_213 {dimension_numbers = #tpu.dot_dimension_numbers<[1], [0], [0], [1], [0, 0, 1, 1], [], []>} : vector<8x32xf32>, vector<32x128xf32>, vector<8x128xf32> -> vector<8x128xf32>
    %803 = arith.addf %801, %802 : vector<8x128xf32>
    %804 = arith.addf %803, %10 : vector<8x128xf32>
    %805 = vector.extract_strided_slice %804 {offsets = [0, 0], sizes = [8, 32], strides = [1, 1]} : vector<8x128xf32> to vector<8x32xf32>
    %806 = arith.negf %805 : vector<8x32xf32>
    %807 = math.exp %806 : vector<8x32xf32>
    %cst_214 = arith.constant 1.000000e+00 : f32
    %808 = vector.broadcast %cst_214 : f32 to vector<8x32xf32>
    %809 = arith.addf %808, %807 : vector<8x32xf32>
    %810 = arith.divf %808, %809 : vector<8x32xf32>
    %811 = vector.extract_strided_slice %804 {offsets = [0, 32], sizes = [8, 32], strides = [1, 1]} : vector<8x128xf32> to vector<8x32xf32>
    %812 = arith.negf %811 : vector<8x32xf32>
    %813 = math.exp %812 : vector<8x32xf32>
    %cst_215 = arith.constant 1.000000e+00 : f32
    %814 = vector.broadcast %cst_215 : f32 to vector<8x32xf32>
    %815 = arith.addf %814, %813 : vector<8x32xf32>
    %816 = arith.divf %814, %815 : vector<8x32xf32>
    %817 = vector.extract_strided_slice %804 {offsets = [0, 64], sizes = [8, 32], strides = [1, 1]} : vector<8x128xf32> to vector<8x32xf32>
    %818 = math.tanh %817 : vector<8x32xf32>
    %819 = vector.extract_strided_slice %804 {offsets = [0, 96], sizes = [8, 32], strides = [1, 1]} : vector<8x128xf32> to vector<8x32xf32>
    %820 = arith.negf %819 : vector<8x32xf32>
    %821 = math.exp %820 : vector<8x32xf32>
    %cst_216 = arith.constant 1.000000e+00 : f32
    %822 = vector.broadcast %cst_216 : f32 to vector<8x32xf32>
    %823 = arith.addf %822, %821 : vector<8x32xf32>
    %824 = arith.divf %822, %823 : vector<8x32xf32>
    %825 = arith.mulf %816, %722 : vector<8x32xf32>
    %826 = arith.mulf %810, %818 : vector<8x32xf32>
    %827 = arith.addf %825, %826 : vector<8x32xf32>
    %828 = math.tanh %827 : vector<8x32xf32>
    %829 = arith.mulf %824, %828 : vector<8x32xf32>
    %cst_217 = arith.constant dense<0.000000e+00> : vector<8x128xf32>
    %830 = tpu.matmul %829, %7, %cst_217 {dimension_numbers = #tpu.dot_dimension_numbers<[1], [0], [0], [1], [0, 0, 1, 1], [], []>} : vector<8x32xf32>, vector<32x128xf32>, vector<8x128xf32> -> vector<8x128xf32>
    %831 = arith.addf %830, %13 : vector<8x128xf32>
    %cst_218 = arith.constant dense<0xFF800000> : vector<8xf32>
    %832 = vector.multi_reduction <maximumf>, %831, %cst_218 [1] : vector<8x128xf32> to vector<8xf32>
    %833 = vector.shape_cast %832 : vector<8xf32> to vector<8x1xf32>
    %834 = vector.broadcast %833 : vector<8x1xf32> to vector<8x128xf32>
    %835 = arith.subf %831, %834 : vector<8x128xf32>
    %836 = math.exp %835 : vector<8x128xf32>
    %cst_219 = arith.constant dense<0.000000e+00> : vector<8xf32>
    %837 = vector.multi_reduction <add>, %836, %cst_219 [1] : vector<8x128xf32> to vector<8xf32>
    %838 = vector.shape_cast %837 : vector<8xf32> to vector<8x1xf32>
    %839 = math.log %838 : vector<8x1xf32>
    %840 = vector.broadcast %839 : vector<8x1xf32> to vector<8x128xf32>
    %841 = arith.subf %835, %840 : vector<8x128xf32>
    %c7 = arith.constant 7 : index
    %c0_220 = arith.constant 0 : index
    %c0_221 = arith.constant 0 : index
    %842 = vector.load %arg15[%c7, %c0_220, %c0_221] : memref<10x8x128xf32, #tpu.memory_space<vmem>>, vector<1x8x128xf32>
    %843 = vector.shape_cast %842 : vector<1x8x128xf32> to vector<8x128xf32>
    %844 = vector.shape_cast %841 : vector<8x128xf32> to vector<1x8x128xf32>
    tpu.vector_store %arg15[%c7, %c0_220, %c0_221], %844 {strides = array<i32>} : memref<10x8x128xf32, #tpu.memory_space<vmem>>, vector<1x8x128xf32>,
    %845 = vector.broadcast %833 : vector<8x1xf32> to vector<8x128xf32>
    %846 = arith.cmpf oeq, %831, %845 : vector<8x128xf32>
    %c128_i32_222 = arith.constant 128 : i32
    %847 = vector.broadcast %c128_i32_222 : i32 to vector<8x128xi32>
    %848 = arith.select %846, %24, %847 : vector<8x128xi1>, vector<8x128xi32>
    %cst_223 = arith.constant dense<2147483647> : vector<8xi32>
    %849 = vector.multi_reduction <minsi>, %848, %cst_223 [1] : vector<8x128xi32> to vector<8xi32>
    %850 = vector.shape_cast %849 : vector<8xi32> to vector<8x1xi32>
    %c128_i32_224 = arith.constant 128 : i32
    %851 = vector.broadcast %c128_i32_224 : i32 to vector<8x1xi32>
    %852 = arith.select %27, %850, %851 : vector<8x1xi1>, vector<8x1xi32>
    %853 = vector.broadcast %852 : vector<8x1xi32> to vector<8x128xi32>
    %854 = arith.cmpi eq, %24, %853 : vector<8x128xi32>
    %cst_225 = arith.constant 1.000000e+00 : f32
    %cst_226 = arith.constant 0.000000e+00 : f32
    %855 = vector.broadcast %cst_225 : f32 to vector<8x128xf32>
    %856 = vector.broadcast %cst_226 : f32 to vector<8x128xf32>
    %857 = arith.select %854, %855, %856 : vector<8x128xi1>, vector<8x128xf32>
    %cst_227 = arith.constant dense<0xFF800000> : vector<128xf32>
    %858 = vector.multi_reduction <maximumf>, %857, %cst_227 [0] : vector<8x128xf32> to vector<128xf32>
    %cst_228 = arith.constant 0.000000e+00 : f32
    %859 = vector.broadcast %cst_228 : f32 to vector<128xf32>
    %860 = arith.cmpf ogt, %858, %859 : vector<128xf32>
    %861 = vector.shape_cast %860 : vector<128xi1> to vector<1x128xi1>
    %862 = vector.shape_cast %861 : vector<1x128xi1> to vector<1x128xi1>
    %863 = vector.broadcast %862 : vector<1x128xi1> to vector<8x128xi1>
    %864 = arith.extui %863 : vector<8x128xi1> to vector<8x128xi32>
    %865 = arith.sitofp %864 : vector<8x128xi32> to vector<8x128xf32>
    %cst_229 = arith.constant dense<0.000000e+00> : vector<8x128xf32>
    %866 = tpu.matmul %865, %3, %cst_229 {dimension_numbers = #tpu.dot_dimension_numbers<[1], [0], [0], [1], [0, 0, 1, 1], [], []>} : vector<8x128xf32>, vector<128x128xf32>, vector<8x128xf32> -> vector<8x128xf32>
    %867 = vector.extract_strided_slice %866 {offsets = [0, 0], sizes = [1, 128], strides = [1, 1]} : vector<8x128xf32> to vector<1x128xf32>
    %c10_i32_230 = arith.constant 10 : i32
    %868 = arith.muli %arg0, %c10_i32_230 : i32
    %c7_i32 = arith.constant 7 : i32
    %869 = arith.addi %868, %c7_i32 : i32
    %870 = arith.index_cast %869 : i32 to index
    %871 = memref.load %arg1[%870] : memref<10xi32, #tpu.memory_space<smem>>
    %c0_i32_231 = arith.constant 0 : i32
    %872 = arith.cmpi sgt, %871, %c0_i32_231 : i32
    %873 = vector.extract_strided_slice %23 {offsets = [56, 0], sizes = [8, 128], strides = [1, 1]} : vector<80x128xf32> to vector<8x128xf32>
    %874 = vector.shape_cast %867 : vector<1x128xf32> to vector<1x128xf32>
    %875 = vector.broadcast %874 : vector<1x128xf32> to vector<8x128xf32>
    %876 = arith.select %872, %873, %875 : vector<8x128xf32>
    %877 = vector.extract_strided_slice %20 {offsets = [64, 0], sizes = [8, 128], strides = [1, 1]} : vector<80x128xf32> to vector<8x128xf32>
    %878 = arith.addf %876, %877 : vector<8x128xf32>
    %cst_232 = arith.constant dense<0.000000e+00> : vector<8x128xf32>
    %879 = tpu.matmul %800, %4, %cst_232 {dimension_numbers = #tpu.dot_dimension_numbers<[1], [0], [0], [1], [0, 0, 1, 1], [], []>} : vector<8x32xf32>, vector<32x128xf32>, vector<8x128xf32> -> vector<8x128xf32>
    %880 = arith.addf %878, %879 : vector<8x128xf32>
    %881 = vector.extract_strided_slice %880 {offsets = [0, 0], sizes = [8, 32], strides = [1, 1]} : vector<8x128xf32> to vector<8x32xf32>
    %882 = arith.negf %881 : vector<8x32xf32>
    %883 = math.exp %882 : vector<8x32xf32>
    %cst_233 = arith.constant 1.000000e+00 : f32
    %884 = vector.broadcast %cst_233 : f32 to vector<8x32xf32>
    %885 = arith.addf %884, %883 : vector<8x32xf32>
    %886 = arith.divf %884, %885 : vector<8x32xf32>
    %887 = vector.extract_strided_slice %880 {offsets = [0, 32], sizes = [8, 32], strides = [1, 1]} : vector<8x128xf32> to vector<8x32xf32>
    %888 = arith.negf %887 : vector<8x32xf32>
    %889 = math.exp %888 : vector<8x32xf32>
    %cst_234 = arith.constant 1.000000e+00 : f32
    %890 = vector.broadcast %cst_234 : f32 to vector<8x32xf32>
    %891 = arith.addf %890, %889 : vector<8x32xf32>
    %892 = arith.divf %890, %891 : vector<8x32xf32>
    %893 = vector.extract_strided_slice %880 {offsets = [0, 64], sizes = [8, 32], strides = [1, 1]} : vector<8x128xf32> to vector<8x32xf32>
    %894 = math.tanh %893 : vector<8x32xf32>
    %895 = vector.extract_strided_slice %880 {offsets = [0, 96], sizes = [8, 32], strides = [1, 1]} : vector<8x128xf32> to vector<8x32xf32>
    %896 = arith.negf %895 : vector<8x32xf32>
    %897 = math.exp %896 : vector<8x32xf32>
    %cst_235 = arith.constant 1.000000e+00 : f32
    %898 = vector.broadcast %cst_235 : f32 to vector<8x32xf32>
    %899 = arith.addf %898, %897 : vector<8x32xf32>
    %900 = arith.divf %898, %899 : vector<8x32xf32>
    %901 = arith.mulf %892, %798 : vector<8x32xf32>
    %902 = arith.mulf %886, %894 : vector<8x32xf32>
    %903 = arith.addf %901, %902 : vector<8x32xf32>
    %904 = math.tanh %903 : vector<8x32xf32>
    %905 = arith.mulf %900, %904 : vector<8x32xf32>
    %cst_236 = arith.constant dense<0.000000e+00> : vector<8x128xf32>
    %906 = tpu.matmul %905, %5, %cst_236 {dimension_numbers = #tpu.dot_dimension_numbers<[1], [0], [0], [1], [0, 0, 1, 1], [], []>} : vector<8x32xf32>, vector<32x128xf32>, vector<8x128xf32> -> vector<8x128xf32>
    %cst_237 = arith.constant dense<0.000000e+00> : vector<8x128xf32>
    %907 = tpu.matmul %829, %6, %cst_237 {dimension_numbers = #tpu.dot_dimension_numbers<[1], [0], [0], [1], [0, 0, 1, 1], [], []>} : vector<8x32xf32>, vector<32x128xf32>, vector<8x128xf32> -> vector<8x128xf32>
    %908 = arith.addf %906, %907 : vector<8x128xf32>
    %909 = arith.addf %908, %10 : vector<8x128xf32>
    %910 = vector.extract_strided_slice %909 {offsets = [0, 0], sizes = [8, 32], strides = [1, 1]} : vector<8x128xf32> to vector<8x32xf32>
    %911 = arith.negf %910 : vector<8x32xf32>
    %912 = math.exp %911 : vector<8x32xf32>
    %cst_238 = arith.constant 1.000000e+00 : f32
    %913 = vector.broadcast %cst_238 : f32 to vector<8x32xf32>
    %914 = arith.addf %913, %912 : vector<8x32xf32>
    %915 = arith.divf %913, %914 : vector<8x32xf32>
    %916 = vector.extract_strided_slice %909 {offsets = [0, 32], sizes = [8, 32], strides = [1, 1]} : vector<8x128xf32> to vector<8x32xf32>
    %917 = arith.negf %916 : vector<8x32xf32>
    %918 = math.exp %917 : vector<8x32xf32>
    %cst_239 = arith.constant 1.000000e+00 : f32
    %919 = vector.broadcast %cst_239 : f32 to vector<8x32xf32>
    %920 = arith.addf %919, %918 : vector<8x32xf32>
    %921 = arith.divf %919, %920 : vector<8x32xf32>
    %922 = vector.extract_strided_slice %909 {offsets = [0, 64], sizes = [8, 32], strides = [1, 1]} : vector<8x128xf32> to vector<8x32xf32>
    %923 = math.tanh %922 : vector<8x32xf32>
    %924 = vector.extract_strided_slice %909 {offsets = [0, 96], sizes = [8, 32], strides = [1, 1]} : vector<8x128xf32> to vector<8x32xf32>
    %925 = arith.negf %924 : vector<8x32xf32>
    %926 = math.exp %925 : vector<8x32xf32>
    %cst_240 = arith.constant 1.000000e+00 : f32
    %927 = vector.broadcast %cst_240 : f32 to vector<8x32xf32>
    %928 = arith.addf %927, %926 : vector<8x32xf32>
    %929 = arith.divf %927, %928 : vector<8x32xf32>
    %930 = arith.mulf %921, %827 : vector<8x32xf32>
    %931 = arith.mulf %915, %923 : vector<8x32xf32>
    %932 = arith.addf %930, %931 : vector<8x32xf32>
    %933 = math.tanh %932 : vector<8x32xf32>
    %934 = arith.mulf %929, %933 : vector<8x32xf32>
    %cst_241 = arith.constant dense<0.000000e+00> : vector<8x128xf32>
    %935 = tpu.matmul %934, %7, %cst_241 {dimension_numbers = #tpu.dot_dimension_numbers<[1], [0], [0], [1], [0, 0, 1, 1], [], []>} : vector<8x32xf32>, vector<32x128xf32>, vector<8x128xf32> -> vector<8x128xf32>
    %936 = arith.addf %935, %13 : vector<8x128xf32>
    %cst_242 = arith.constant dense<0xFF800000> : vector<8xf32>
    %937 = vector.multi_reduction <maximumf>, %936, %cst_242 [1] : vector<8x128xf32> to vector<8xf32>
    %938 = vector.shape_cast %937 : vector<8xf32> to vector<8x1xf32>
    %939 = vector.broadcast %938 : vector<8x1xf32> to vector<8x128xf32>
    %940 = arith.subf %936, %939 : vector<8x128xf32>
    %941 = math.exp %940 : vector<8x128xf32>
    %cst_243 = arith.constant dense<0.000000e+00> : vector<8xf32>
    %942 = vector.multi_reduction <add>, %941, %cst_243 [1] : vector<8x128xf32> to vector<8xf32>
    %943 = vector.shape_cast %942 : vector<8xf32> to vector<8x1xf32>
    %944 = math.log %943 : vector<8x1xf32>
    %945 = vector.broadcast %944 : vector<8x1xf32> to vector<8x128xf32>
    %946 = arith.subf %940, %945 : vector<8x128xf32>
    %c8 = arith.constant 8 : index
    %c0_244 = arith.constant 0 : index
    %c0_245 = arith.constant 0 : index
    %947 = vector.load %arg15[%c8, %c0_244, %c0_245] : memref<10x8x128xf32, #tpu.memory_space<vmem>>, vector<1x8x128xf32>
    %948 = vector.shape_cast %947 : vector<1x8x128xf32> to vector<8x128xf32>
    %949 = vector.shape_cast %946 : vector<8x128xf32> to vector<1x8x128xf32>
    tpu.vector_store %arg15[%c8, %c0_244, %c0_245], %949 {strides = array<i32>} : memref<10x8x128xf32, #tpu.memory_space<vmem>>, vector<1x8x128xf32>,
    %950 = vector.broadcast %938 : vector<8x1xf32> to vector<8x128xf32>
    %951 = arith.cmpf oeq, %936, %950 : vector<8x128xf32>
    %c128_i32_246 = arith.constant 128 : i32
    %952 = vector.broadcast %c128_i32_246 : i32 to vector<8x128xi32>
    %953 = arith.select %951, %24, %952 : vector<8x128xi1>, vector<8x128xi32>
    %cst_247 = arith.constant dense<2147483647> : vector<8xi32>
    %954 = vector.multi_reduction <minsi>, %953, %cst_247 [1] : vector<8x128xi32> to vector<8xi32>
    %955 = vector.shape_cast %954 : vector<8xi32> to vector<8x1xi32>
    %c128_i32_248 = arith.constant 128 : i32
    %956 = vector.broadcast %c128_i32_248 : i32 to vector<8x1xi32>
    %957 = arith.select %27, %955, %956 : vector<8x1xi1>, vector<8x1xi32>
    %958 = vector.broadcast %957 : vector<8x1xi32> to vector<8x128xi32>
    %959 = arith.cmpi eq, %24, %958 : vector<8x128xi32>
    %cst_249 = arith.constant 1.000000e+00 : f32
    %cst_250 = arith.constant 0.000000e+00 : f32
    %960 = vector.broadcast %cst_249 : f32 to vector<8x128xf32>
    %961 = vector.broadcast %cst_250 : f32 to vector<8x128xf32>
    %962 = arith.select %959, %960, %961 : vector<8x128xi1>, vector<8x128xf32>
    %cst_251 = arith.constant dense<0xFF800000> : vector<128xf32>
    %963 = vector.multi_reduction <maximumf>, %962, %cst_251 [0] : vector<8x128xf32> to vector<128xf32>
    %cst_252 = arith.constant 0.000000e+00 : f32
    %964 = vector.broadcast %cst_252 : f32 to vector<128xf32>
    %965 = arith.cmpf ogt, %963, %964 : vector<128xf32>
    %966 = vector.shape_cast %965 : vector<128xi1> to vector<1x128xi1>
    %967 = vector.shape_cast %966 : vector<1x128xi1> to vector<1x128xi1>
    %968 = vector.broadcast %967 : vector<1x128xi1> to vector<8x128xi1>
    %969 = arith.extui %968 : vector<8x128xi1> to vector<8x128xi32>
    %970 = arith.sitofp %969 : vector<8x128xi32> to vector<8x128xf32>
    %cst_253 = arith.constant dense<0.000000e+00> : vector<8x128xf32>
    %971 = tpu.matmul %970, %3, %cst_253 {dimension_numbers = #tpu.dot_dimension_numbers<[1], [0], [0], [1], [0, 0, 1, 1], [], []>} : vector<8x128xf32>, vector<128x128xf32>, vector<8x128xf32> -> vector<8x128xf32>
    %972 = vector.extract_strided_slice %971 {offsets = [0, 0], sizes = [1, 128], strides = [1, 1]} : vector<8x128xf32> to vector<1x128xf32>
    %c10_i32_254 = arith.constant 10 : i32
    %973 = arith.muli %arg0, %c10_i32_254 : i32
    %c8_i32 = arith.constant 8 : i32
    %974 = arith.addi %973, %c8_i32 : i32
    %975 = arith.index_cast %974 : i32 to index
    %976 = memref.load %arg1[%975] : memref<10xi32, #tpu.memory_space<smem>>
    %c0_i32_255 = arith.constant 0 : i32
    %977 = arith.cmpi sgt, %976, %c0_i32_255 : i32
    %978 = vector.extract_strided_slice %23 {offsets = [64, 0], sizes = [8, 128], strides = [1, 1]} : vector<80x128xf32> to vector<8x128xf32>
    %979 = vector.shape_cast %972 : vector<1x128xf32> to vector<1x128xf32>
    %980 = vector.broadcast %979 : vector<1x128xf32> to vector<8x128xf32>
    %981 = arith.select %977, %978, %980 : vector<8x128xf32>
    %982 = vector.extract_strided_slice %20 {offsets = [72, 0], sizes = [8, 128], strides = [1, 1]} : vector<80x128xf32> to vector<8x128xf32>
    %983 = arith.addf %981, %982 : vector<8x128xf32>
    %cst_256 = arith.constant dense<0.000000e+00> : vector<8x128xf32>
    %984 = tpu.matmul %905, %4, %cst_256 {dimension_numbers = #tpu.dot_dimension_numbers<[1], [0], [0], [1], [0, 0, 1, 1], [], []>} : vector<8x32xf32>, vector<32x128xf32>, vector<8x128xf32> -> vector<8x128xf32>
    %985 = arith.addf %983, %984 : vector<8x128xf32>
    %986 = vector.extract_strided_slice %985 {offsets = [0, 0], sizes = [8, 32], strides = [1, 1]} : vector<8x128xf32> to vector<8x32xf32>
    %987 = arith.negf %986 : vector<8x32xf32>
    %988 = math.exp %987 : vector<8x32xf32>
    %cst_257 = arith.constant 1.000000e+00 : f32
    %989 = vector.broadcast %cst_257 : f32 to vector<8x32xf32>
    %990 = arith.addf %989, %988 : vector<8x32xf32>
    %991 = arith.divf %989, %990 : vector<8x32xf32>
    %992 = vector.extract_strided_slice %985 {offsets = [0, 32], sizes = [8, 32], strides = [1, 1]} : vector<8x128xf32> to vector<8x32xf32>
    %993 = arith.negf %992 : vector<8x32xf32>
    %994 = math.exp %993 : vector<8x32xf32>
    %cst_258 = arith.constant 1.000000e+00 : f32
    %995 = vector.broadcast %cst_258 : f32 to vector<8x32xf32>
    %996 = arith.addf %995, %994 : vector<8x32xf32>
    %997 = arith.divf %995, %996 : vector<8x32xf32>
    %998 = vector.extract_strided_slice %985 {offsets = [0, 64], sizes = [8, 32], strides = [1, 1]} : vector<8x128xf32> to vector<8x32xf32>
    %999 = math.tanh %998 : vector<8x32xf32>
    %1000 = vector.extract_strided_slice %985 {offsets = [0, 96], sizes = [8, 32], strides = [1, 1]} : vector<8x128xf32> to vector<8x32xf32>
    %1001 = arith.negf %1000 : vector<8x32xf32>
    %1002 = math.exp %1001 : vector<8x32xf32>
    %cst_259 = arith.constant 1.000000e+00 : f32
    %1003 = vector.broadcast %cst_259 : f32 to vector<8x32xf32>
    %1004 = arith.addf %1003, %1002 : vector<8x32xf32>
    %1005 = arith.divf %1003, %1004 : vector<8x32xf32>
    %1006 = arith.mulf %997, %903 : vector<8x32xf32>
    %1007 = arith.mulf %991, %999 : vector<8x32xf32>
    %1008 = arith.addf %1006, %1007 : vector<8x32xf32>
    %1009 = math.tanh %1008 : vector<8x32xf32>
    %1010 = arith.mulf %1005, %1009 : vector<8x32xf32>
    %cst_260 = arith.constant dense<0.000000e+00> : vector<8x128xf32>
    %1011 = tpu.matmul %1010, %5, %cst_260 {dimension_numbers = #tpu.dot_dimension_numbers<[1], [0], [0], [1], [0, 0, 1, 1], [], []>} : vector<8x32xf32>, vector<32x128xf32>, vector<8x128xf32> -> vector<8x128xf32>
    %cst_261 = arith.constant dense<0.000000e+00> : vector<8x128xf32>
    %1012 = tpu.matmul %934, %6, %cst_261 {dimension_numbers = #tpu.dot_dimension_numbers<[1], [0], [0], [1], [0, 0, 1, 1], [], []>} : vector<8x32xf32>, vector<32x128xf32>, vector<8x128xf32> -> vector<8x128xf32>
    %1013 = arith.addf %1011, %1012 : vector<8x128xf32>
    %1014 = arith.addf %1013, %10 : vector<8x128xf32>
    %1015 = vector.extract_strided_slice %1014 {offsets = [0, 0], sizes = [8, 32], strides = [1, 1]} : vector<8x128xf32> to vector<8x32xf32>
    %1016 = arith.negf %1015 : vector<8x32xf32>
    %1017 = math.exp %1016 : vector<8x32xf32>
    %cst_262 = arith.constant 1.000000e+00 : f32
    %1018 = vector.broadcast %cst_262 : f32 to vector<8x32xf32>
    %1019 = arith.addf %1018, %1017 : vector<8x32xf32>
    %1020 = arith.divf %1018, %1019 : vector<8x32xf32>
    %1021 = vector.extract_strided_slice %1014 {offsets = [0, 32], sizes = [8, 32], strides = [1, 1]} : vector<8x128xf32> to vector<8x32xf32>
    %1022 = arith.negf %1021 : vector<8x32xf32>
    %1023 = math.exp %1022 : vector<8x32xf32>
    %cst_263 = arith.constant 1.000000e+00 : f32
    %1024 = vector.broadcast %cst_263 : f32 to vector<8x32xf32>
    %1025 = arith.addf %1024, %1023 : vector<8x32xf32>
    %1026 = arith.divf %1024, %1025 : vector<8x32xf32>
    %1027 = vector.extract_strided_slice %1014 {offsets = [0, 64], sizes = [8, 32], strides = [1, 1]} : vector<8x128xf32> to vector<8x32xf32>
    %1028 = math.tanh %1027 : vector<8x32xf32>
    %1029 = vector.extract_strided_slice %1014 {offsets = [0, 96], sizes = [8, 32], strides = [1, 1]} : vector<8x128xf32> to vector<8x32xf32>
    %1030 = arith.negf %1029 : vector<8x32xf32>
    %1031 = math.exp %1030 : vector<8x32xf32>
    %cst_264 = arith.constant 1.000000e+00 : f32
    %1032 = vector.broadcast %cst_264 : f32 to vector<8x32xf32>
    %1033 = arith.addf %1032, %1031 : vector<8x32xf32>
    %1034 = arith.divf %1032, %1033 : vector<8x32xf32>
    %1035 = arith.mulf %1026, %932 : vector<8x32xf32>
    %1036 = arith.mulf %1020, %1028 : vector<8x32xf32>
    %1037 = arith.addf %1035, %1036 : vector<8x32xf32>
    %1038 = math.tanh %1037 : vector<8x32xf32>
    %1039 = arith.mulf %1034, %1038 : vector<8x32xf32>
    %cst_265 = arith.constant dense<0.000000e+00> : vector<8x128xf32>
    %1040 = tpu.matmul %1039, %7, %cst_265 {dimension_numbers = #tpu.dot_dimension_numbers<[1], [0], [0], [1], [0, 0, 1, 1], [], []>} : vector<8x32xf32>, vector<32x128xf32>, vector<8x128xf32> -> vector<8x128xf32>
    %1041 = arith.addf %1040, %13 : vector<8x128xf32>
    %cst_266 = arith.constant dense<0xFF800000> : vector<8xf32>
    %1042 = vector.multi_reduction <maximumf>, %1041, %cst_266 [1] : vector<8x128xf32> to vector<8xf32>
    %1043 = vector.shape_cast %1042 : vector<8xf32> to vector<8x1xf32>
    %1044 = vector.broadcast %1043 : vector<8x1xf32> to vector<8x128xf32>
    %1045 = arith.subf %1041, %1044 : vector<8x128xf32>
    %1046 = math.exp %1045 : vector<8x128xf32>
    %cst_267 = arith.constant dense<0.000000e+00> : vector<8xf32>
    %1047 = vector.multi_reduction <add>, %1046, %cst_267 [1] : vector<8x128xf32> to vector<8xf32>
    %1048 = vector.shape_cast %1047 : vector<8xf32> to vector<8x1xf32>
    %1049 = math.log %1048 : vector<8x1xf32>
    %1050 = vector.broadcast %1049 : vector<8x1xf32> to vector<8x128xf32>
    %1051 = arith.subf %1045, %1050 : vector<8x128xf32>
    %c9 = arith.constant 9 : index
    %c0_268 = arith.constant 0 : index
    %c0_269 = arith.constant 0 : index
    %1052 = vector.load %arg15[%c9, %c0_268, %c0_269] : memref<10x8x128xf32, #tpu.memory_space<vmem>>, vector<1x8x128xf32>
    %1053 = vector.shape_cast %1052 : vector<1x8x128xf32> to vector<8x128xf32>
    %1054 = vector.shape_cast %1051 : vector<8x128xf32> to vector<1x8x128xf32>
    tpu.vector_store %arg15[%c9, %c0_268, %c0_269], %1054 {strides = array<i32>} : memref<10x8x128xf32, #tpu.memory_space<vmem>>, vector<1x8x128xf32>,
    %1055 = vector.broadcast %1043 : vector<8x1xf32> to vector<8x128xf32>
    %1056 = arith.cmpf oeq, %1041, %1055 : vector<8x128xf32>
    %c128_i32_270 = arith.constant 128 : i32
    %1057 = vector.broadcast %c128_i32_270 : i32 to vector<8x128xi32>
    %1058 = arith.select %1056, %24, %1057 : vector<8x128xi1>, vector<8x128xi32>
    %cst_271 = arith.constant dense<2147483647> : vector<8xi32>
    %1059 = vector.multi_reduction <minsi>, %1058, %cst_271 [1] : vector<8x128xi32> to vector<8xi32>
    %1060 = vector.shape_cast %1059 : vector<8xi32> to vector<8x1xi32>
    %c128_i32_272 = arith.constant 128 : i32
    %1061 = vector.broadcast %c128_i32_272 : i32 to vector<8x1xi32>
    %1062 = arith.select %27, %1060, %1061 : vector<8x1xi1>, vector<8x1xi32>
    %1063 = vector.broadcast %1062 : vector<8x1xi32> to vector<8x128xi32>
    %1064 = arith.cmpi eq, %24, %1063 : vector<8x128xi32>
    %cst_273 = arith.constant 1.000000e+00 : f32
    %cst_274 = arith.constant 0.000000e+00 : f32
    %1065 = vector.broadcast %cst_273 : f32 to vector<8x128xf32>
    %1066 = vector.broadcast %cst_274 : f32 to vector<8x128xf32>
    %1067 = arith.select %1064, %1065, %1066 : vector<8x128xi1>, vector<8x128xf32>
    %cst_275 = arith.constant dense<0xFF800000> : vector<128xf32>
    %1068 = vector.multi_reduction <maximumf>, %1067, %cst_275 [0] : vector<8x128xf32> to vector<128xf32>
    %cst_276 = arith.constant 0.000000e+00 : f32
    %1069 = vector.broadcast %cst_276 : f32 to vector<128xf32>
    %1070 = arith.cmpf ogt, %1068, %1069 : vector<128xf32>
    %1071 = vector.shape_cast %1070 : vector<128xi1> to vector<1x128xi1>
    %1072 = vector.shape_cast %1071 : vector<1x128xi1> to vector<1x128xi1>
    %1073 = vector.broadcast %1072 : vector<1x128xi1> to vector<8x128xi1>
    %1074 = arith.extui %1073 : vector<8x128xi1> to vector<8x128xi32>
    %1075 = arith.sitofp %1074 : vector<8x128xi32> to vector<8x128xf32>
    %cst_277 = arith.constant dense<0.000000e+00> : vector<8x128xf32>
    %1076 = tpu.matmul %1075, %3, %cst_277 {dimension_numbers = #tpu.dot_dimension_numbers<[1], [0], [0], [1], [0, 0, 1, 1], [], []>} : vector<8x128xf32>, vector<128x128xf32>, vector<8x128xf32> -> vector<8x128xf32>
    %1077 = vector.extract_strided_slice %1076 {offsets = [0, 0], sizes = [1, 128], strides = [1, 1]} : vector<8x128xf32> to vector<1x128xf32>
    %c10_i32_278 = arith.constant 10 : i32
    %1078 = arith.muli %arg0, %c10_i32_278 : i32
    %c9_i32 = arith.constant 9 : i32
    %1079 = arith.addi %1078, %c9_i32 : i32
    %1080 = arith.index_cast %1079 : i32 to index
    %1081 = memref.load %arg1[%1080] : memref<10xi32, #tpu.memory_space<smem>>
    %c0_i32_279 = arith.constant 0 : i32
    %1082 = arith.cmpi sgt, %1081, %c0_i32_279 : i32
    %1083 = vector.extract_strided_slice %23 {offsets = [72, 0], sizes = [8, 128], strides = [1, 1]} : vector<80x128xf32> to vector<8x128xf32>
    %1084 = vector.shape_cast %1077 : vector<1x128xf32> to vector<1x128xf32>
    %1085 = vector.broadcast %1084 : vector<1x128xf32> to vector<8x128xf32>
    %1086 = arith.select %1082, %1083, %1085 : vector<8x128xf32>
    %c0_280 = arith.constant 0 : index
    %c0_281 = arith.constant 0 : index
    %1087 = vector.load %arg18[%c0_280, %c0_281] : memref<8x128xf32, #tpu.memory_space<vmem>>, vector<8x128xf32>
    tpu.vector_store %arg18[%c0_280, %c0_281], %1086 {strides = array<i32>} : memref<8x128xf32, #tpu.memory_space<vmem>>, vector<8x128xf32>,
    %c0_282 = arith.constant 0 : index
    %c0_283 = arith.constant 0 : index
    %c0_284 = arith.constant 0 : index
    %1088 = vector.load %arg16[%c0_282, %c0_283, %c0_284] : memref<2x8x32xf32, #tpu.memory_space<vmem>>, vector<1x8x32xf32>
    %1089 = vector.shape_cast %1088 : vector<1x8x32xf32> to vector<8x32xf32>
    %1090 = vector.shape_cast %1010 : vector<8x32xf32> to vector<1x8x32xf32>
    tpu.vector_store %arg16[%c0_282, %c0_283, %c0_284], %1090 {strides = array<i32>} : memref<2x8x32xf32, #tpu.memory_space<vmem>>, vector<1x8x32xf32>,
    %c1_285 = arith.constant 1 : index
    %c0_286 = arith.constant 0 : index
    %c0_287 = arith.constant 0 : index
    %1091 = vector.load %arg16[%c1_285, %c0_286, %c0_287] : memref<2x8x32xf32, #tpu.memory_space<vmem>>, vector<1x8x32xf32>
    %1092 = vector.shape_cast %1091 : vector<1x8x32xf32> to vector<8x32xf32>
    %1093 = vector.shape_cast %1039 : vector<8x32xf32> to vector<1x8x32xf32>
    tpu.vector_store %arg16[%c1_285, %c0_286, %c0_287], %1093 {strides = array<i32>} : memref<2x8x32xf32, #tpu.memory_space<vmem>>, vector<1x8x32xf32>,
    %c0_288 = arith.constant 0 : index
    %c0_289 = arith.constant 0 : index
    %c0_290 = arith.constant 0 : index
    %1094 = vector.load %arg17[%c0_288, %c0_289, %c0_290] : memref<2x8x32xf32, #tpu.memory_space<vmem>>, vector<1x8x32xf32>
    %1095 = vector.shape_cast %1094 : vector<1x8x32xf32> to vector<8x32xf32>
    %1096 = vector.shape_cast %1008 : vector<8x32xf32> to vector<1x8x32xf32>
    tpu.vector_store %arg17[%c0_288, %c0_289, %c0_290], %1096 {strides = array<i32>} : memref<2x8x32xf32, #tpu.memory_space<vmem>>, vector<1x8x32xf32>,
    %c1_291 = arith.constant 1 : index
    %c0_292 = arith.constant 0 : index
    %c0_293 = arith.constant 0 : index
    %1097 = vector.load %arg17[%c1_291, %c0_292, %c0_293] : memref<2x8x32xf32, #tpu.memory_space<vmem>>, vector<1x8x32xf32>
    %1098 = vector.shape_cast %1097 : vector<1x8x32xf32> to vector<8x32xf32>
    %1099 = vector.shape_cast %1037 : vector<8x32xf32> to vector<1x8x32xf32>
    tpu.vector_store %arg17[%c1_291, %c0_292, %c0_293], %1099 {strides = array<i32>} : memref<2x8x32xf32, #tpu.memory_space<vmem>>, vector<1x8x32xf32>,
    return
  }
  func.func @transform_0(%arg0: i32, %arg1: memref<10xi32, #tpu.memory_space<smem>>) -> (i32, i32, i32) {
    %c0_i32 = arith.constant 0 : i32
    %c0_i32_0 = arith.constant 0 : i32
    %c0_i32_1 = arith.constant 0 : i32
    return %arg0, %c0_i32, %c0_i32_0 : i32, i32, i32
  }
  func.func @transform_1(%arg0: i32, %arg1: memref<10xi32, #tpu.memory_space<smem>>) -> (i32, i32, i32) {
    %c0_i32 = arith.constant 0 : i32
    %c0_i32_0 = arith.constant 0 : i32
    %c0_i32_1 = arith.constant 0 : i32
    return %arg0, %c0_i32, %c0_i32_0 : i32, i32, i32
  }
  func.func @transform_2(%arg0: i32, %arg1: memref<10xi32, #tpu.memory_space<smem>>) -> (i32, i32, i32) {
    %c0_i32 = arith.constant 0 : i32
    %c0_i32_0 = arith.constant 0 : i32
    %c0_i32_1 = arith.constant 0 : i32
    %c0_i32_2 = arith.constant 0 : i32
    return %c0_i32, %c0_i32_0, %c0_i32_1 : i32, i32, i32
  }
  func.func @transform_3(%arg0: i32, %arg1: memref<10xi32, #tpu.memory_space<smem>>) -> (i32, i32, i32) {
    %c0_i32 = arith.constant 0 : i32
    %c0_i32_0 = arith.constant 0 : i32
    %c0_i32_1 = arith.constant 0 : i32
    %c0_i32_2 = arith.constant 0 : i32
    return %c0_i32, %c0_i32_0, %c0_i32_1 : i32, i32, i32
  }
  func.func @transform_4(%arg0: i32, %arg1: memref<10xi32, #tpu.memory_space<smem>>) -> (i32, i32) {
    %c0_i32 = arith.constant 0 : i32
    %c0_i32_0 = arith.constant 0 : i32
    %c0_i32_1 = arith.constant 0 : i32
    return %c0_i32, %c0_i32_0 : i32, i32
  }
  func.func @transform_5(%arg0: i32, %arg1: memref<10xi32, #tpu.memory_space<smem>>) -> (i32, i32) {
    %c0_i32 = arith.constant 0 : i32
    %c0_i32_0 = arith.constant 0 : i32
    %c0_i32_1 = arith.constant 0 : i32
    return %c0_i32, %c0_i32_0 : i32, i32
  }
  func.func @transform_6(%arg0: i32, %arg1: memref<10xi32, #tpu.memory_space<smem>>) -> (i32, i32) {
    %c0_i32 = arith.constant 0 : i32
    %c0_i32_0 = arith.constant 0 : i32
    %c0_i32_1 = arith.constant 0 : i32
    return %c0_i32, %c0_i32_0 : i32, i32
  }
  func.func @transform_7(%arg0: i32, %arg1: memref<10xi32, #tpu.memory_space<smem>>) -> (i32, i32) {
    %c0_i32 = arith.constant 0 : i32
    %c0_i32_0 = arith.constant 0 : i32
    %c0_i32_1 = arith.constant 0 : i32
    return %c0_i32, %c0_i32_0 : i32, i32
  }
  func.func @transform_8(%arg0: i32, %arg1: memref<10xi32, #tpu.memory_space<smem>>) -> (i32, i32) {
    %c0_i32 = arith.constant 0 : i32
    %c0_i32_0 = arith.constant 0 : i32
    %c0_i32_1 = arith.constant 0 : i32
    return %c0_i32, %c0_i32_0 : i32, i32
  }
  func.func @transform_9(%arg0: i32, %arg1: memref<10xi32, #tpu.memory_space<smem>>) -> (i32, i32) {
    %c0_i32 = arith.constant 0 : i32
    %c0_i32_0 = arith.constant 0 : i32
    %c0_i32_1 = arith.constant 0 : i32
    return %c0_i32, %c0_i32_0 : i32, i32
  }
  func.func @transform_10(%arg0: i32, %arg1: memref<10xi32, #tpu.memory_space<smem>>) -> (i32, i32) {
    %c0_i32 = arith.constant 0 : i32
    %c0_i32_0 = arith.constant 0 : i32
    %c0_i32_1 = arith.constant 0 : i32
    return %c0_i32, %c0_i32_0 : i32, i32
  }
  func.func @transform_11(%arg0: i32, %arg1: memref<10xi32, #tpu.memory_space<smem>>) -> (i32, i32) {
    %c0_i32 = arith.constant 0 : i32
    %c0_i32_0 = arith.constant 0 : i32
    %c0_i32_1 = arith.constant 0 : i32
    return %c0_i32, %c0_i32_0 : i32, i32
  }
  func.func @transform_12(%arg0: i32, %arg1: memref<10xi32, #tpu.memory_space<smem>>) -> (i32, i32) {
    %c0_i32 = arith.constant 0 : i32
    %c0_i32_0 = arith.constant 0 : i32
    %c0_i32_1 = arith.constant 0 : i32
    return %c0_i32, %c0_i32_0 : i32, i32
  }
  func.func @transform_13(%arg0: i32, %arg1: memref<10xi32, #tpu.memory_space<smem>>) -> (i32, i32, i32) {
    %c0_i32 = arith.constant 0 : i32
    %c0_i32_0 = arith.constant 0 : i32
    %c0_i32_1 = arith.constant 0 : i32
    return %arg0, %c0_i32, %c0_i32_0 : i32, i32, i32
  }
  func.func @transform_14(%arg0: i32, %arg1: memref<10xi32, #tpu.memory_space<smem>>) -> (i32, i32, i32) {
    %c0_i32 = arith.constant 0 : i32
    %c0_i32_0 = arith.constant 0 : i32
    %c0_i32_1 = arith.constant 0 : i32
    %c0_i32_2 = arith.constant 0 : i32
    return %c0_i32, %c0_i32_0, %c0_i32_1 : i32, i32, i32
  }
  func.func @transform_15(%arg0: i32, %arg1: memref<10xi32, #tpu.memory_space<smem>>) -> (i32, i32, i32) {
    %c0_i32 = arith.constant 0 : i32
    %c0_i32_0 = arith.constant 0 : i32
    %c0_i32_1 = arith.constant 0 : i32
    %c0_i32_2 = arith.constant 0 : i32
    return %c0_i32, %c0_i32_0, %c0_i32_1 : i32, i32, i32
  }
}

</mosaic_0001>

<llo_original>
// kernel: tpu_custom_call.1
$region0: #{tpu_custom_call.1}
  #allocation0 [shape = 'u32[]', space=smem, size = 0x4, offset = 0x4, fixed_abs, tag = 'smem constant byte address 0x4 - core index']
  #allocation1 [shape = 'u32[144,128]{1,0:T(1,128)}', space=vmem, size = 0x12000, scoped, tag = 'internal scratch']
  #allocation2 [shape = 'f32[8,128]{1,0:T(8,128)}', space=vmem, size = 0x1000, scoped, tag = 'scratch operand']
  #allocation3 [shape = 's32[1]{0}', space=sflag, size = 0x4, scoped, tag = 'scoped memory for tpu_custom_call.1']
  #allocation4 [shape = 'u8[512]{0}', space=smem, size = 0x200, scoped, tag = 'prefetched SMEM operand 0']
  %s0 = inlined_call_operand.hbm [shape: s32[10], index: 0, kind: input, shape index: {}]
  %s1 = inlined_call_operand.hbm [shape: f32[10,8,32], index: 1, kind: input, shape index: {}]
  %s2 = inlined_call_operand.hbm [shape: f32[10,8,128], index: 2, kind: input, shape index: {}]
  %s3 = inlined_call_operand.hbm [shape: f32[2,8,32], index: 3, kind: input, shape index: {}]
  %s4 = inlined_call_operand.hbm [shape: f32[2,8,32], index: 4, kind: input, shape index: {}]
  %s5 = inlined_call_operand.hbm [shape: f32[128,128], index: 5, kind: input, shape index: {}]
  %s6 = inlined_call_operand.hbm [shape: f32[32,128], index: 6, kind: input, shape index: {}]
  %s7 = inlined_call_operand.hbm [shape: f32[32,128], index: 7, kind: input, shape index: {}]
  %s8 = inlined_call_operand.vmem [shape: f32[1,128], index: 8, kind: input, shape index: {}]
  %s9 = inlined_call_operand.hbm [shape: f32[32,128], index: 9, kind: input, shape index: {}]
  %s10 = inlined_call_operand.hbm [shape: f32[32,128], index: 10, kind: input, shape index: {}]
  %s11 = inlined_call_operand.vmem [shape: f32[1,128], index: 11, kind: input, shape index: {}]
  %s12 = inlined_call_operand.hbm [shape: f32[32,128], index: 12, kind: input, shape index: {}]
  %s13 = inlined_call_operand.vmem [shape: f32[1,128], index: 13, kind: input, shape index: {}]
  %s14 = inlined_call_operand.hbm [shape: f32[10,8,128], index: 14, kind: output, shape index: {0}]
  %s15 = inlined_call_operand.hbm [shape: f32[2,8,32], index: 15, kind: output, shape index: {1}]
  %s16 = inlined_call_operand.hbm [shape: f32[2,8,32], index: 16, kind: output, shape index: {2}]
  %17 = xla_tuple %s14, %s15, %s16
  %s18 = sld [smem:[#allocation0]]
  $region122: #{tpu_custom_call.1} parent=0
    _
  %s20 = ssub.s32 1, %s18
  %s21 = scalar_select 0, %s20, %s18
  %23 = dma.hbm_to_smem %s0, 16, [#allocation4], [#allocation3]
  %24 = dma.done [#allocation3], 16
  %25 = sfence
  $region1: #{tpu_custom_call.1} parent=0
    #allocation5 [shape = 'u8[40960]{0}', space=vmem, size = 0xa000, scoped, tag = 'input window, operand 1, single buffered']
    #allocation6 [shape = 's32[1]{0}', space=sflag, size = 0x4, scoped, tag = 'scoped memory for tpu_custom_call.1']
    #allocation7 [shape = 's32[1]{0}', space=sflag, size = 0x4, scoped, tag = 'scoped memory for tpu_custom_call.1']
    #allocation8 [shape = 'u8[40960]{0}', space=vmem, size = 0xa000, scoped, tag = 'input window, operand 2, single buffered']
    #allocation9 [shape = 's32[1]{0}', space=sflag, size = 0x4, scoped, tag = 'scoped memory for tpu_custom_call.1']
    #allocation10 [shape = 'u8[8192]{0}', space=vmem, size = 0x2000, scoped, tag = 'input window, operand 3, single buffered']
    #allocation11 [shape = 'u8[8192]{0}', space=vmem, size = 0x2000, scoped, tag = 'input window, operand 4, single buffered']
    #allocation12 [shape = 's32[1]{0}', space=sflag, size = 0x4, scoped, tag = 'scoped memory for tpu_custom_call.1']
    #allocation13 [shape = 'u8[65536]{0}', space=vmem, size = 0x10000, scoped, tag = 'input window, operand 5, single buffered']
    #allocation14 [shape = 'u8[16384]{0}', space=vmem, size = 0x4000, scoped, tag = 'input window, operand 6, single buffered']
    #allocation15 [shape = 's32[1]{0}', space=sflag, size = 0x4, scoped, tag = 'scoped memory for tpu_custom_call.1']
    #allocation16 [shape = 'u8[16384]{0}', space=vmem, size = 0x4000, scoped, tag = 'input window, operand 7, single buffered']
    #allocation17 [shape = 'u8[16384]{0}', space=vmem, size = 0x4000, scoped, tag = 'input window, operand 9, single buffered']
    #allocation18 [shape = 's32[1]{0}', space=sflag, size = 0x4, scoped, tag = 'scoped memory for tpu_custom_call.1']
    #allocation19 [shape = 'u8[16384]{0}', space=vmem, size = 0x4000, scoped, tag = 'input window, operand 10, single buffered']
    #allocation20 [shape = 'u8[16384]{0}', space=vmem, size = 0x4000, scoped, tag = 'input window, operand 12, single buffered']
    #allocation21 [shape = 's32[1]{0}', space=sflag, size = 0x4, scoped, tag = 'scoped memory for tpu_custom_call.1']
    #allocation22 [shape = 'u8[40960]{0}', space=vmem, size = 0xa000, scoped, tag = 'output window, operand 0, single buffered']
    #allocation23 [shape = 'u8[8192]{0}', space=vmem, size = 0x2000, scoped, tag = 'output window, operand 1, single buffered']
    #allocation24 [shape = 's32[1]{0}', space=sflag, size = 0x4, scoped, tag = 'scoped memory for tpu_custom_call.1']
    #allocation25 [shape = 'u8[8192]{0}', space=vmem, size = 0x2000, scoped, tag = 'output window, operand 2, single buffered']
    %26 = vsyncpa [#allocation6], 0
    %27 = vsyncpa [#allocation9], 0
    %28 = vsyncpa [#allocation12], 0
    %29 = vsyncpa [#allocation15], 0
    %30 = vsyncpa [#allocation18], 0
    %31 = vsyncpa [#allocation21], 0
    %32 = vsyncpa [#allocation7], 0
    %33 = vsyncpa [#allocation24], 0
    // Predicated region
    $region2: #{tpu_custom_call.1} parent=1 // pred_check
      _
    $region3: #{tpu_custom_call.1} parent=1 // pred_check_branch
      %35 = sbr.rel (0) target = $region5
    $region4: #{tpu_custom_call.1} parent=1 // pred_region
      %s37 = ssub.s32 1280, 1280
      %38 = vsyncadd [#allocation6], %s37
      %s39 = sshll.u32 [#allocation5], 4
      %s40 = int_to_ptr.vmem [resolvable:$true] %s39
      %45 = dma.hbm_to_vmem [thread:$0]  %s1, 1280, %s40, [#allocation6], 128, 128, 8
    $region5: #{tpu_custom_call.1} parent=1 // pred_fallthru
      _
    // Predicated region
    $region6: #{tpu_custom_call.1} parent=1 // pred_check
      _
    $region7: #{tpu_custom_call.1} parent=1 // pred_check_branch
      %47 = sbr.rel (0) target = $region9
    $region8: #{tpu_custom_call.1} parent=1 // pred_region
      %s49 = ssub.s32 1280, 1280
      %50 = vsyncadd [#allocation9], %s49
      %s51 = sshll.u32 [#allocation8], 4
      %s52 = int_to_ptr.vmem [resolvable:$true] %s51
      %57 = dma.hbm_to_vmem [thread:$0]  %s2, 1280, %s52, [#allocation9], 128, 128, 8
    $region9: #{tpu_custom_call.1} parent=1 // pred_fallthru
      _
    // Predicated region
    $region10: #{tpu_custom_call.1} parent=1 // pred_check
      _
    $region11: #{tpu_custom_call.1} parent=1 // pred_check_branch
      %59 = sbr.rel (0) target = $region13
    $region12: #{tpu_custom_call.1} parent=1 // pred_region
      %s61 = ssub.s32 256, 256
      %62 = vsyncadd [#allocation9], %s61
      %s63 = sshll.u32 [#allocation10], 4
      %s64 = int_to_ptr.vmem [resolvable:$true] %s63
      %69 = dma.hbm_to_vmem [thread:$0]  %s3, 256, %s64, [#allocation9], 128, 128, 8
    $region13: #{tpu_custom_call.1} parent=1 // pred_fallthru
      _
    // Predicated region
    $region14: #{tpu_custom_call.1} parent=1 // pred_check
      _
    $region15: #{tpu_custom_call.1} parent=1 // pred_check_branch
      %71 = sbr.rel (0) target = $region17
    $region16: #{tpu_custom_call.1} parent=1 // pred_region
      %s73 = ssub.s32 256, 256
      %74 = vsyncadd [#allocation12], %s73
      %s75 = sshll.u32 [#allocation11], 4
      %s76 = int_to_ptr.vmem [resolvable:$true] %s75
      %81 = dma.hbm_to_vmem [thread:$0]  %s4, 256, %s76, [#allocation12], 128, 128, 8
    $region17: #{tpu_custom_call.1} parent=1 // pred_fallthru
      _
    // Predicated region
    $region18: #{tpu_custom_call.1} parent=1 // pred_check
      _
    $region19: #{tpu_custom_call.1} parent=1 // pred_check_branch
      %83 = sbr.rel (0) target = $region21
    $region20: #{tpu_custom_call.1} parent=1 // pred_region
      %s85 = ssub.s32 2048, 2048
      %86 = vsyncadd [#allocation12], %s85
      %s87 = sshll.u32 [#allocation13], 4
      %s88 = int_to_ptr.vmem [resolvable:$true] %s87
      %93 = dma.hbm_to_vmem [thread:$0]  %s5, 2048, %s88, [#allocation12], 128, 128, 8
    $region21: #{tpu_custom_call.1} parent=1 // pred_fallthru
      _
    // Predicated region
    $region22: #{tpu_custom_call.1} parent=1 // pred_check
      _
    $region23: #{tpu_custom_call.1} parent=1 // pred_check_branch
      %95 = sbr.rel (0) target = $region25
    $region24: #{tpu_custom_call.1} parent=1 // pred_region
      %s97 = ssub.s32 512, 512
      %98 = vsyncadd [#allocation15], %s97
      %s99 = sshll.u32 [#allocation14], 4
      %s100 = int_to_ptr.vmem [resolvable:$true] %s99
      %105 = dma.hbm_to_vmem [thread:$0]  %s6, 512, %s100, [#allocation15], 128, 128, 8
    $region25: #{tpu_custom_call.1} parent=1 // pred_fallthru
      _
    // Predicated region
    $region26: #{tpu_custom_call.1} parent=1 // pred_check
      _
    $region27: #{tpu_custom_call.1} parent=1 // pred_check_branch
      %107 = sbr.rel (0) target = $region29
    $region28: #{tpu_custom_call.1} parent=1 // pred_region
      %s109 = ssub.s32 512, 512
      %110 = vsyncadd [#allocation15], %s109
      %s111 = sshll.u32 [#allocation16], 4
      %s112 = int_to_ptr.vmem [resolvable:$true] %s111
      %117 = dma.hbm_to_vmem [thread:$0]  %s7, 512, %s112, [#allocation15], 128, 128, 8
    $region29: #{tpu_custom_call.1} parent=1 // pred_fallthru
      _
    // Predicated region
    $region30: #{tpu_custom_call.1} parent=1 // pred_check
      _
    $region31: #{tpu_custom_call.1} parent=1 // pred_check_branch
      %119 = sbr.rel (0) target = $region33
    $region32: #{tpu_custom_call.1} parent=1 // pred_region
      _
    $region33: #{tpu_custom_call.1} parent=1 // pred_fallthru
      _
    // Predicated region
    $region34: #{tpu_custom_call.1} parent=1 // pred_check
      _
    $region35: #{tpu_custom_call.1} parent=1 // pred_check_branch
      %121 = sbr.rel (0) target = $region37
    $region36: #{tpu_custom_call.1} parent=1 // pred_region
      %s123 = ssub.s32 512, 512
      %124 = vsyncadd [#allocation18], %s123
      %s125 = sshll.u32 [#allocation17], 4
      %s126 = int_to_ptr.vmem [resolvable:$true] %s125
      %131 = dma.hbm_to_vmem [thread:$0]  %s9, 512, %s126, [#allocation18], 128, 128, 8
    $region37: #{tpu_custom_call.1} parent=1 // pred_fallthru
      _
    // Predicated region
    $region38: #{tpu_custom_call.1} parent=1 // pred_check
      _
    $region39: #{tpu_custom_call.1} parent=1 // pred_check_branch
      %133 = sbr.rel (0) target = $region41
    $region40: #{tpu_custom_call.1} parent=1 // pred_region
      %s135 = ssub.s32 512, 512
      %136 = vsyncadd [#allocation18], %s135
      %s137 = sshll.u32 [#allocation19], 4
      %s138 = int_to_ptr.vmem [resolvable:$true] %s137
      %143 = dma.hbm_to_vmem [thread:$0]  %s10, 512, %s138, [#allocation18], 128, 128, 8
    $region41: #{tpu_custom_call.1} parent=1 // pred_fallthru
      _
    // Predicated region
    $region42: #{tpu_custom_call.1} parent=1 // pred_check
      _
    $region43: #{tpu_custom_call.1} parent=1 // pred_check_branch
      %145 = sbr.rel (0) target = $region45
    $region44: #{tpu_custom_call.1} parent=1 // pred_region
      _
    $region45: #{tpu_custom_call.1} parent=1 // pred_fallthru
      _
    // Predicated region
    $region46: #{tpu_custom_call.1} parent=1 // pred_check
      _
    $region47: #{tpu_custom_call.1} parent=1 // pred_check_branch
      %147 = sbr.rel (0) target = $region49
    $region48: #{tpu_custom_call.1} parent=1 // pred_region
      %s149 = ssub.s32 512, 512
      %150 = vsyncadd [#allocation21], %s149
      %s151 = sshll.u32 [#allocation20], 4
      %s152 = int_to_ptr.vmem [resolvable:$true] %s151
      %157 = dma.hbm_to_vmem [thread:$0]  %s12, 512, %s152, [#allocation21], 128, 128, 8
    $region49: #{tpu_custom_call.1} parent=1 // pred_fallthru
      _
    // Predicated region
    $region50: #{tpu_custom_call.1} parent=1 // pred_check
      _
    $region51: #{tpu_custom_call.1} parent=1 // pred_check_branch
      %159 = sbr.rel (0) target = $region53
    $region52: #{tpu_custom_call.1} parent=1 // pred_region
      _
    $region53: #{tpu_custom_call.1} parent=1 // pred_fallthru
      _
    // Predicated region
    $region54: #{tpu_custom_call.1} parent=1 // pred_check
      _
    $region55: #{tpu_custom_call.1} parent=1 // pred_check_branch
      %161 = sbr.rel (0) target = $region57
    $region56: #{tpu_custom_call.1} parent=1 // pred_region
      %162 = dma.done [#allocation6], 1280
    $region57: #{tpu_custom_call.1} parent=1 // pred_fallthru
      _
    // Predicated region
    $region58: #{tpu_custom_call.1} parent=1 // pred_check
      _
    $region59: #{tpu_custom_call.1} parent=1 // pred_check_branch
      %164 = sbr.rel (0) target = $region61
    $region60: #{tpu_custom_call.1} parent=1 // pred_region
      %165 = dma.done [#allocation9], 1280
    $region61: #{tpu_custom_call.1} parent=1 // pred_fallthru
      _
    // Predicated region
    $region62: #{tpu_custom_call.1} parent=1 // pred_check
      _
    $region63: #{tpu_custom_call.1} parent=1 // pred_check_branch
      %167 = sbr.rel (0) target = $region65
    $region64: #{tpu_custom_call.1} parent=1 // pred_region
      %168 = dma.done [#allocation9], 256
    $region65: #{tpu_custom_call.1} parent=1 // pred_fallthru
      _
    // Predicated region
    $region66: #{tpu_custom_call.1} parent=1 // pred_check
      _
    $region67: #{tpu_custom_call.1} parent=1 // pred_check_branch
      %170 = sbr.rel (0) target = $region69
    $region68: #{tpu_custom_call.1} parent=1 // pred_region
      %171 = dma.done [#allocation12], 256
    $region69: #{tpu_custom_call.1} parent=1 // pred_fallthru
      _
    // Predicated region
    $region70: #{tpu_custom_call.1} parent=1 // pred_check
      _
    $region71: #{tpu_custom_call.1} parent=1 // pred_check_branch
      %173 = sbr.rel (0) target = $region73
    $region72: #{tpu_custom_call.1} parent=1 // pred_region
      %174 = dma.done [#allocation12], 2048
    $region73: #{tpu_custom_call.1} parent=1 // pred_fallthru
      _
    // Predicated region
    $region74: #{tpu_custom_call.1} parent=1 // pred_check
      _
    $region75: #{tpu_custom_call.1} parent=1 // pred_check_branch
      %176 = sbr.rel (0) target = $region77
    $region76: #{tpu_custom_call.1} parent=1 // pred_region
      %177 = dma.done [#allocation15], 512
    $region77: #{tpu_custom_call.1} parent=1 // pred_fallthru
      _
    // Predicated region
    $region78: #{tpu_custom_call.1} parent=1 // pred_check
      _
    $region79: #{tpu_custom_call.1} parent=1 // pred_check_branch
      %179 = sbr.rel (0) target = $region81
    $region80: #{tpu_custom_call.1} parent=1 // pred_region
      %180 = dma.done [#allocation15], 512
    $region81: #{tpu_custom_call.1} parent=1 // pred_fallthru
      _
    // Predicated region
    $region82: #{tpu_custom_call.1} parent=1 // pred_check
      _
    $region83: #{tpu_custom_call.1} parent=1 // pred_check_branch
      %182 = sbr.rel (0) target = $region85
    $region84: #{tpu_custom_call.1} parent=1 // pred_region
      %183 = dma.done [#allocation18], 512
    $region85: #{tpu_custom_call.1} parent=1 // pred_fallthru
      _
    // Predicated region
    $region86: #{tpu_custom_call.1} parent=1 // pred_check
      _
    $region87: #{tpu_custom_call.1} parent=1 // pred_check_branch
      %185 = sbr.rel (0) target = $region89
    $region88: #{tpu_custom_call.1} parent=1 // pred_region
      %186 = dma.done [#allocation18], 512
    $region89: #{tpu_custom_call.1} parent=1 // pred_fallthru
      _
    // Predicated region
    $region90: #{tpu_custom_call.1} parent=1 // pred_check
      _
    $region91: #{tpu_custom_call.1} parent=1 // pred_check_branch
      %188 = sbr.rel (0) target = $region93
    $region92: #{tpu_custom_call.1} parent=1 // pred_region
      %189 = dma.done [#allocation21], 512
    $region93: #{tpu_custom_call.1} parent=1 // pred_fallthru
      _
    %p190 = scmp.eq.s32.totalorder 0, 0
    // Predicated region
    $region94: #{tpu_custom_call.1} parent=1 // pred_check
      %p191 = pneg %p190
    $region95: #{tpu_custom_call.1} parent=1 // pred_check_branch
      %193 = sbr.rel (%p191) target = $region97
    $region96: #{tpu_custom_call.1} parent=1 // pred_region
      %v194 = vld [vmem:[#allocation10] sm:$0xff]
      %v195 = vld [vmem:[#allocation10 + $0x8] sm:$0xff]
      %vm196 = vcmask 261120
      %197 = vst.msk [vmem:[#allocation23] sm:$0xff] %vm196, %v194
      %198 = vst.msk [vmem:[#allocation23 + $0x8] sm:$0xff] %vm196, %v195
      %v199 = vld [vmem:[#allocation11] sm:$0xff]
      %v200 = vld [vmem:[#allocation11 + $0x8] sm:$0xff]
      %201 = vst.msk [vmem:[#allocation25] sm:$0xff] %vm196, %v199
      %202 = vst.msk [vmem:[#allocation25 + $0x8] sm:$0xff] %vm196, %v200
      %203 = vst [vmem:[#allocation2] sm:$0xff] 0.0
    $region97: #{tpu_custom_call.1} parent=1 // pred_fallthru
      _
    %v204 = vld [vmem:[#allocation13] sm:$0xff]
    %v205 = vld [vmem:[#allocation13 + $0x8] sm:$0xff]
    %v206 = vld [vmem:[#allocation13 + $0x10] sm:$0xff]
    %v207 = vld [vmem:[#allocation13 + $0x18] sm:$0xff]
    %v208 = vld [vmem:[#allocation13 + $0x20] sm:$0xff]
    %v209 = vld [vmem:[#allocation13 + $0x28] sm:$0xff]
    %v210 = vld [vmem:[#allocation13 + $0x30] sm:$0xff]
    %v211 = vld [vmem:[#allocation13 + $0x38] sm:$0xff]
    %v212 = vld [vmem:[#allocation13 + $0x40] sm:$0xff]
    %v213 = vld [vmem:[#allocation13 + $0x48] sm:$0xff]
    %v214 = vld [vmem:[#allocation13 + $0x50] sm:$0xff]
    %v215 = vld [vmem:[#allocation13 + $0x58] sm:$0xff]
    %v216 = vld [vmem:[#allocation13 + $0x60] sm:$0xff]
    %v217 = vld [vmem:[#allocation13 + $0x68] sm:$0xff]
    %v218 = vld [vmem:[#allocation13 + $0x70] sm:$0xff]
    %v219 = vld [vmem:[#allocation13 + $0x78] sm:$0xff]
    %v220 = vld [vmem:[#allocation16] sm:$0xff]
    %v221 = vld [vmem:[#allocation16 + $0x8] sm:$0xff]
    %v222 = vld [vmem:[#allocation16 + $0x10] sm:$0xff]
    %v223 = vld [vmem:[#allocation16 + $0x18] sm:$0xff]
    %v224 = vld [vmem:[#allocation17] sm:$0xff]
    %v225 = vld [vmem:[#allocation17 + $0x8] sm:$0xff]
    %v226 = vld [vmem:[#allocation17 + $0x10] sm:$0xff]
    %v227 = vld [vmem:[#allocation17 + $0x18] sm:$0xff]
    %v228 = vld [vmem:[#allocation19] sm:$0xff]
    %v229 = vld [vmem:[#allocation19 + $0x8] sm:$0xff]
    %v230 = vld [vmem:[#allocation19 + $0x10] sm:$0xff]
    %v231 = vld [vmem:[#allocation19 + $0x18] sm:$0xff]
    %v232 = vld [vmem:[#allocation20] sm:$0xff]
    %v233 = vld [vmem:[#allocation20 + $0x8] sm:$0xff]
    %v234 = vld [vmem:[#allocation20 + $0x10] sm:$0xff]
    %v235 = vld [vmem:[#allocation20 + $0x18] sm:$0xff]
    %v236 = vld [vmem:[%s11] sm:$0x1]
    %v238 = vlaneseq
    %v239 = vshrl.u32 %v238, 7
    %v240 = vsub.s32 0, %v239
    %v241 = vrot.slane %v236, %v240
    %v243 = vld [vmem:[%s13] sm:$0x1]
    %v245 = vlaneseq
    %v246 = vshrl.u32 %v245, 7
    %v247 = vsub.s32 0, %v246
    %v248 = vrot.slane %v243, %v247
    %v250 = vld [vmem:[#allocation5] sm:$0xff]
    %v251 = vld [vmem:[#allocation5 + $0x8] sm:$0xff]
    %v252 = vld [vmem:[#allocation5 + $0x10] sm:$0xff]
    %v253 = vld [vmem:[#allocation5 + $0x18] sm:$0xff]
    %v254 = vld [vmem:[#allocation5 + $0x20] sm:$0xff]
    %v255 = vld [vmem:[#allocation5 + $0x28] sm:$0xff]
    %v256 = vld [vmem:[#allocation5 + $0x30] sm:$0xff]
    %v257 = vld [vmem:[#allocation5 + $0x38] sm:$0xff]
    %v258 = vld [vmem:[#allocation5 + $0x40] sm:$0xff]
    %v259 = vld [vmem:[#allocation5 + $0x48] sm:$0xff]
    %v260 = vld [vmem:[#allocation14] sm:$0xff]
    %v261 = vld [vmem:[#allocation14 + $0x8] sm:$0xff]
    %v262 = vld [vmem:[#allocation14 + $0x10] sm:$0xff]
    %v263 = vld [vmem:[#allocation14 + $0x18] sm:$0xff]
    %v264 = vld [vmem:[%s8] sm:$0x1]
    %v266 = vlaneseq
    %v267 = vshrl.u32 %v266, 7
    %v268 = vsub.s32 0, %v267
    %v269 = vrot.slane %v264, %v268
    %vm271 = vcmask 261120
    %v273 = vsel %vm271, %v250, 0
    %v276 = vsel %vm271, %v251, 0
    %v279 = vsel %vm271, %v252, 0
    %v282 = vsel %vm271, %v253, 0
    %v285 = vsel %vm271, %v254, 0
    %v288 = vsel %vm271, %v255, 0
    %v291 = vsel %vm271, %v256, 0
    %v294 = vsel %vm271, %v257, 0
    %v297 = vsel %vm271, %v258, 0
    %v300 = vsel %vm271, %v259, 0
    %302 = vmatprep.subr.mxu0 0.0
    %303 = vmatpush1.msra.mxu0 0.0
    %304 = vmatprep.subr.mxu0 0.0
    %305 = vmatpush1.msra.mxu0 0.0
    %306 = vmatprep.subr.mxu0 0.0
    %307 = vmatpush1.msra.mxu0 0.0
    %308 = vmatprep.subr.mxu0 0.0
    %309 = vmatpush1.msra.mxu0 0.0
    %310 = vmatprep.subr.mxu0 0.0
    %311 = vmatpush1.msra.mxu0 0.0
    %312 = vmatprep.subr.mxu0 0.0
    %313 = vmatpush1.msra.mxu0 0.0
    %314 = vmatprep.subr.mxu0 0.0
    %315 = vmatpush1.msra.mxu0 0.0
    %316 = vmatprep.subr.mxu0 0.0
    %317 = vmatpush1.msra.mxu0 0.0
    %318 = vmatprep.subr.mxu0 0.0
    %319 = vmatpush1.msra.mxu0 0.0
    %320 = vmatprep.subr.mxu0 0.0
    %321 = vmatpush1.msra.mxu0 0.0
    %322 = vmatprep.subr.mxu0 0.0
    %323 = vmatpush1.msra.mxu0 0.0
    %324 = vmatprep.subr.mxu0 0.0
    %325 = vmatpush1.msra.mxu0 0.0
    %326 = vmatprep.subr.mxu0 0.0
    %327 = vmatpush1.msra.mxu0 %v263
    %328 = vmatprep.subr.mxu0 0.0
    %329 = vmatpush1.msra.mxu0 %v262
    %330 = vmatprep.subr.mxu0 0.0
    %331 = vmatpush1.msra.mxu0 %v261
    %332 = vmatprep.subr.mxu0 0.0
    %333 = vmatpush1.msra.mxu0 %v260
    %334 = vmatprep.subr.mxu0 0.0
    %335 = vmatpush2.msra.mxu0 0.0
    %336 = vmatprep.subr.mxu0 0.0
    %337 = vmatpush2.msra.mxu0 0.0
    %338 = vmatprep.subr.mxu0 0.0
    %339 = vmatpush2.msra.mxu0 0.0
    %340 = vmatprep.subr.mxu0 0.0
    %341 = vmatpush2.msra.mxu0 0.0
    %342 = vmatprep.subr.mxu0 0.0
    %343 = vmatpush2.msra.mxu0 0.0
    %344 = vmatprep.subr.mxu0 0.0
    %345 = vmatpush2.msra.mxu0 0.0
    %346 = vmatprep.subr.mxu0 0.0
    %347 = vmatpush2.msra.mxu0 0.0
    %348 = vmatprep.subr.mxu0 0.0
    %349 = vmatpush2.msra.mxu0 0.0
    %350 = vmatprep.subr.mxu0 0.0
    %351 = vmatpush2.msra.mxu0 0.0
    %352 = vmatprep.subr.mxu0 0.0
    %353 = vmatpush2.msra.mxu0 0.0
    %354 = vmatprep.subr.mxu0 0.0
    %355 = vmatpush2.msra.mxu0 0.0
    %356 = vmatprep.subr.mxu0 0.0
    %357 = vmatpush2.msra.mxu0 0.0
    %358 = vmatprep.subr.mxu0 0.0
    %359 = vmatpush2.msra.mxu0 0.0
    %360 = vmatprep.subr.mxu0 0.0
    %361 = vmatpush2.msra.mxu0 0.0
    %362 = vmatprep.subr.mxu0 0.0
    %363 = vmatpush2.msra.mxu0 0.0
    %364 = vmatprep.subr.mxu0 0.0
    %365 = vmatpush2.msra.mxu0 0.0
    %366 = vmatprep.mubr.f32.mxu0 0.0
    %367 = vmatmul.mubr.f32.gmra.mxu0 %v273
    %v368 = vpop.f32.mrf.mxu0
    %v369 = vadd.f32 %v269, %v368
    %v370 = vpop.f32.mrf.mxu0
    %371 = vmatprep.mubr.f32.mxu0 0.0
    %372 = vmatmul.mubr.f32.gmra.mxu0 %v276
    %v373 = vpop.f32.mrf.mxu0
    %v374 = vadd.f32 %v269, %v373
    %v375 = vpop.f32.mrf.mxu0
    %376 = vmatprep.mubr.f32.mxu0 0.0
    %377 = vmatmul.mubr.f32.gmra.mxu0 %v279
    %v378 = vpop.f32.mrf.mxu0
    %v379 = vadd.f32 %v269, %v378
    %v380 = vpop.f32.mrf.mxu0
    %381 = vmatprep.mubr.f32.mxu0 0.0
    %382 = vmatmul.mubr.f32.gmra.mxu0 %v282
    %v383 = vpop.f32.mrf.mxu0
    %v384 = vadd.f32 %v269, %v383
    %v385 = vpop.f32.mrf.mxu0
    %386 = vmatprep.mubr.f32.mxu0 0.0
    %387 = vmatmul.mubr.f32.gmra.mxu0 %v285
    %v388 = vpop.f32.mrf.mxu0
    %v389 = vadd.f32 %v269, %v388
    %v390 = vpop.f32.mrf.mxu0
    %391 = vmatprep.mubr.f32.mxu0 0.0
    %392 = vmatmul.mubr.f32.gmra.mxu0 %v288
    %v393 = vpop.f32.mrf.mxu0
    %v394 = vadd.f32 %v269, %v393
    %v395 = vpop.f32.mrf.mxu0
    %396 = vmatprep.mubr.f32.mxu0 0.0
    %397 = vmatmul.mubr.f32.gmra.mxu0 %v291
    %v398 = vpop.f32.mrf.mxu0
    %v399 = vadd.f32 %v269, %v398
    %v400 = vpop.f32.mrf.mxu0
    %401 = vmatprep.mubr.f32.mxu0 0.0
    %402 = vmatmul.mubr.f32.gmra.mxu0 %v294
    %v403 = vpop.f32.mrf.mxu0
    %v404 = vadd.f32 %v269, %v403
    %v405 = vpop.f32.mrf.mxu0
    %406 = vmatprep.mubr.f32.mxu0 0.0
    %407 = vmatmul.mubr.f32.gmra.mxu0 %v297
    %v408 = vpop.f32.mrf.mxu0
    %v409 = vadd.f32 %v269, %v408
    %v410 = vpop.f32.mrf.mxu0
    %411 = vmatprep.mubr.f32.mxu0 0.0
    %412 = vmatmul.mubr.f32.gmra.mxu0 %v300
    %v413 = vpop.f32.mrf.mxu0
    %v414 = vadd.f32 %v269, %v413
    %v415 = vpop.f32.mrf.mxu0
    %416 = vdwg.mxu0
    %v417 = vld [vmem:[#allocation8] sm:$0xff]
    %v418 = vld [vmem:[#allocation8 + $0x8] sm:$0xff]
    %v419 = vld [vmem:[#allocation8 + $0x10] sm:$0xff]
    %v420 = vld [vmem:[#allocation8 + $0x18] sm:$0xff]
    %v421 = vld [vmem:[#allocation8 + $0x20] sm:$0xff]
    %v422 = vld [vmem:[#allocation8 + $0x28] sm:$0xff]
    %v423 = vld [vmem:[#allocation8 + $0x30] sm:$0xff]
    %v424 = vld [vmem:[#allocation8 + $0x38] sm:$0xff]
    %v425 = vld [vmem:[#allocation8 + $0x40] sm:$0xff]
    %v426 = vld [vmem:[#allocation8 + $0x48] sm:$0xff]
    %427 = vmatprep.subr.mxu0 0.0
    %428 = vmatpush1.msra.mxu0 %v219
    %429 = vmatprep.subr.mxu0 0.0
    %430 = vmatpush1.msra.mxu0 %v218
    %431 = vmatprep.subr.mxu0 0.0
    %432 = vmatpush1.msra.mxu0 %v217
    %433 = vmatprep.subr.mxu0 0.0
    %434 = vmatpush1.msra.mxu0 %v216
    %435 = vmatprep.subr.mxu0 0.0
    %436 = vmatpush1.msra.mxu0 %v215
    %437 = vmatprep.subr.mxu0 0.0
    %438 = vmatpush1.msra.mxu0 %v214
    %439 = vmatprep.subr.mxu0 0.0
    %440 = vmatpush1.msra.mxu0 %v213
    %441 = vmatprep.subr.mxu0 0.0
    %442 = vmatpush1.msra.mxu0 %v212
    %443 = vmatprep.subr.mxu0 0.0
    %444 = vmatpush1.msra.mxu0 %v211
    %445 = vmatprep.subr.mxu0 0.0
    %446 = vmatpush1.msra.mxu0 %v210
    %447 = vmatprep.subr.mxu0 0.0
    %448 = vmatpush1.msra.mxu0 %v209
    %449 = vmatprep.subr.mxu0 0.0
    %450 = vmatpush1.msra.mxu0 %v208
    %451 = vmatprep.subr.mxu0 0.0
    %452 = vmatpush1.msra.mxu0 %v207
    %453 = vmatprep.subr.mxu0 0.0
    %454 = vmatpush1.msra.mxu0 %v206
    %455 = vmatprep.subr.mxu0 0.0
    %456 = vmatpush1.msra.mxu0 %v205
    %457 = vmatprep.subr.mxu0 0.0
    %458 = vmatpush1.msra.mxu0 %v204
    %459 = vmatprep.subr.mxu0 0.0
    %460 = vmatpush2.msra.mxu0 0.0
    %461 = vmatprep.subr.mxu0 0.0
    %462 = vmatpush2.msra.mxu0 0.0
    %463 = vmatprep.subr.mxu0 0.0
    %464 = vmatpush2.msra.mxu0 0.0
    %465 = vmatprep.subr.mxu0 0.0
    %466 = vmatpush2.msra.mxu0 0.0
    %467 = vmatprep.subr.mxu0 0.0
    %468 = vmatpush2.msra.mxu0 0.0
    %469 = vmatprep.subr.mxu0 0.0
    %470 = vmatpush2.msra.mxu0 0.0
    %471 = vmatprep.subr.mxu0 0.0
    %472 = vmatpush2.msra.mxu0 0.0
    %473 = vmatprep.subr.mxu0 0.0
    %474 = vmatpush2.msra.mxu0 0.0
    %475 = vmatprep.subr.mxu0 0.0
    %476 = vmatpush2.msra.mxu0 0.0
    %477 = vmatprep.subr.mxu0 0.0
    %478 = vmatpush2.msra.mxu0 0.0
    %479 = vmatprep.subr.mxu0 0.0
    %480 = vmatpush2.msra.mxu0 0.0
    %481 = vmatprep.subr.mxu0 0.0
    %482 = vmatpush2.msra.mxu0 0.0
    %483 = vmatprep.subr.mxu0 0.0
    %484 = vmatpush2.msra.mxu0 0.0
    %485 = vmatprep.subr.mxu0 0.0
    %486 = vmatpush2.msra.mxu0 0.0
    %487 = vmatprep.subr.mxu0 0.0
    %488 = vmatpush2.msra.mxu0 0.0
    %489 = vmatprep.subr.mxu0 0.0
    %490 = vmatpush2.msra.mxu0 0.0
    %491 = vmatprep.mubr.f32.mxu0 0.0
    %492 = vmatmul.mubr.f32.gmra.mxu0 %v417
    %v493 = vpop.f32.mrf.mxu0
    %v494 = vadd.f32 0.0, %v493
    %v495 = vpop.f32.mrf.mxu0
    %496 = vmatprep.mubr.f32.mxu0 0.0
    %497 = vmatmul.mubr.f32.gmra.mxu0 %v418
    %v498 = vpop.f32.mrf.mxu0
    %v499 = vadd.f32 0.0, %v498
    %v500 = vpop.f32.mrf.mxu0
    %501 = vmatprep.mubr.f32.mxu0 0.0
    %502 = vmatmul.mubr.f32.gmra.mxu0 %v419
    %v503 = vpop.f32.mrf.mxu0
    %v504 = vadd.f32 0.0, %v503
    %v505 = vpop.f32.mrf.mxu0
    %506 = vmatprep.mubr.f32.mxu0 0.0
    %507 = vmatmul.mubr.f32.gmra.mxu0 %v420
    %v508 = vpop.f32.mrf.mxu0
    %v509 = vadd.f32 0.0, %v508
    %v510 = vpop.f32.mrf.mxu0
    %511 = vmatprep.mubr.f32.mxu0 0.0
    %512 = vmatmul.mubr.f32.gmra.mxu0 %v421
    %v513 = vpop.f32.mrf.mxu0
    %v514 = vadd.f32 0.0, %v513
    %v515 = vpop.f32.mrf.mxu0
    %516 = vmatprep.mubr.f32.mxu0 0.0
    %517 = vmatmul.mubr.f32.gmra.mxu0 %v422
    %v518 = vpop.f32.mrf.mxu0
    %v519 = vadd.f32 0.0, %v518
    %v520 = vpop.f32.mrf.mxu0
    %521 = vmatprep.mubr.f32.mxu0 0.0
    %522 = vmatmul.mubr.f32.gmra.mxu0 %v423
    %v523 = vpop.f32.mrf.mxu0
    %v524 = vadd.f32 0.0, %v523
    %v525 = vpop.f32.mrf.mxu0
    %526 = vmatprep.mubr.f32.mxu0 0.0
    %527 = vmatmul.mubr.f32.gmra.mxu0 %v424
    %v528 = vpop.f32.mrf.mxu0
    %v529 = vadd.f32 0.0, %v528
    %v530 = vpop.f32.mrf.mxu0
    %531 = vmatprep.mubr.f32.mxu0 0.0
    %532 = vmatmul.mubr.f32.gmra.mxu0 %v425
    %v533 = vpop.f32.mrf.mxu0
    %v534 = vadd.f32 0.0, %v533
    %v535 = vpop.f32.mrf.mxu0
    %536 = vmatprep.mubr.f32.mxu0 0.0
    %537 = vmatmul.mubr.f32.gmra.mxu0 %v426
    %v538 = vpop.f32.mrf.mxu0
    %v539 = vadd.f32 0.0, %v538
    %v540 = vpop.f32.mrf.mxu0
    %541 = vdwg.mxu0
    %v542 = vlaneseq
    %v543 = vand.u32 %v542, 127
    %v544 = vlaneseq
    %v545 = vshrl.u32 %v544, 7
    %vm546 = vcmp.lt.s32.totalorder %v545, 4
    %v547 = vld [vmem:[#allocation23] sm:$0xff]
    %v548 = vld [vmem:[#allocation25] sm:$0xff]
    %s549 = scalar_lea.vmem [#allocation23], 8
    %v550 = vld [vmem:[%s549] sm:$0xff]
    %s551 = scalar_lea.vmem [#allocation25], 8
    %v552 = vld [vmem:[%s551] sm:$0xff]
    %v553 = vld [vmem:[#allocation2] sm:$0xff]
    %v554 = vadd.f32 %v553, %v369
    %v556 = vsel %vm271, %v547, 0
    %558 = vmatprep.subr.mxu0 0.0
    %559 = vmatpush1.msra.mxu0 0.0
    %560 = vmatprep.subr.mxu0 0.0
    %561 = vmatpush1.msra.mxu0 0.0
    %562 = vmatprep.subr.mxu0 0.0
    %563 = vmatpush1.msra.mxu0 0.0
    %564 = vmatprep.subr.mxu0 0.0
    %565 = vmatpush1.msra.mxu0 0.0
    %566 = vmatprep.subr.mxu0 0.0
    %567 = vmatpush1.msra.mxu0 0.0
    %568 = vmatprep.subr.mxu0 0.0
    %569 = vmatpush1.msra.mxu0 0.0
    %570 = vmatprep.subr.mxu0 0.0
    %571 = vmatpush1.msra.mxu0 0.0
    %572 = vmatprep.subr.mxu0 0.0
    %573 = vmatpush1.msra.mxu0 0.0
    %574 = vmatprep.subr.mxu0 0.0
    %575 = vmatpush1.msra.mxu0 0.0
    %576 = vmatprep.subr.mxu0 0.0
    %577 = vmatpush1.msra.mxu0 0.0
    %578 = vmatprep.subr.mxu0 0.0
    %579 = vmatpush1.msra.mxu0 0.0
    %580 = vmatprep.subr.mxu0 0.0
    %581 = vmatpush1.msra.mxu0 0.0
    %582 = vmatprep.subr.mxu0 0.0
    %583 = vmatpush1.msra.mxu0 %v223
    %584 = vmatprep.subr.mxu0 0.0
    %585 = vmatpush1.msra.mxu0 %v222
    %586 = vmatprep.subr.mxu0 0.0
    %587 = vmatpush1.msra.mxu0 %v221
    %588 = vmatprep.subr.mxu0 0.0
    %589 = vmatpush1.msra.mxu0 %v220
    %590 = vmatprep.subr.mxu0 0.0
    %591 = vmatpush2.msra.mxu0 0.0
    %592 = vmatprep.subr.mxu0 0.0
    %593 = vmatpush2.msra.mxu0 0.0
    %594 = vmatprep.subr.mxu0 0.0
    %595 = vmatpush2.msra.mxu0 0.0
    %596 = vmatprep.subr.mxu0 0.0
    %597 = vmatpush2.msra.mxu0 0.0
    %598 = vmatprep.subr.mxu0 0.0
    %599 = vmatpush2.msra.mxu0 0.0
    %600 = vmatprep.subr.mxu0 0.0
    %601 = vmatpush2.msra.mxu0 0.0
    %602 = vmatprep.subr.mxu0 0.0
    %603 = vmatpush2.msra.mxu0 0.0
    %604 = vmatprep.subr.mxu0 0.0
    %605 = vmatpush2.msra.mxu0 0.0
    %606 = vmatprep.subr.mxu0 0.0
    %607 = vmatpush2.msra.mxu0 0.0
    %608 = vmatprep.subr.mxu0 0.0
    %609 = vmatpush2.msra.mxu0 0.0
    %610 = vmatprep.subr.mxu0 0.0
    %611 = vmatpush2.msra.mxu0 0.0
    %612 = vmatprep.subr.mxu0 0.0
    %613 = vmatpush2.msra.mxu0 0.0
    %614 = vmatprep.subr.mxu0 0.0
    %615 = vmatpush2.msra.mxu0 0.0
    %616 = vmatprep.subr.mxu0 0.0
    %617 = vmatpush2.msra.mxu0 0.0
    %618 = vmatprep.subr.mxu0 0.0
    %619 = vmatpush2.msra.mxu0 0.0
    %620 = vmatprep.subr.mxu0 0.0
    %621 = vmatpush2.msra.mxu0 0.0
    %622 = vmatprep.mubr.f32.mxu0 0.0
    %623 = vmatmul.mubr.f32.gmra.mxu0 %v556
    %v624 = vpop.f32.mrf.mxu0
    %v625 = vadd.f32 0.0, %v624
    %v626 = vpop.f32.mrf.mxu0
    %627 = vdwg.mxu0
    %v628 = vadd.f32 %v554, %v625
    %v629 = vxor.u32 %v628, 2147483648
    %v630 = vmul.f32 %v629, 1.442695
    %v631 = vpow.pop %v630
    %v632 = vadd.f32 %v631, 1.0
    %v633 = vrcp.pop %v632
    %v634 = vmul.f32 1.0, %v633
    %v635 = vtanh.pop %v628
    %637 = vrot.lane.b32.xlu0 %v548, 32
    %v638 = vpop.permute.xlu0 %637
    %v640 = vmul.f32 %v634, %v638
    %642 = vrot.lane.b32.xlu0 %v635, 64
    %v643 = vpop.permute.xlu0 %642
    %v645 = vmul.f32 %v634, %v643
    %647 = vrot.lane.b32.xlu0 %v645, 32
    %v648 = vpop.permute.xlu0 %647
    %v650 = vadd.f32 %v640, %v648
    %v651 = vtanh.pop %v650
    %653 = vrot.lane.b32.xlu0 %v651, 64
    %v654 = vpop.permute.xlu0 %653
    %v656 = vmul.f32 %v634, %v654
    %v658 = vsel %vm271, %v550, 0
    %660 = vmatprep.subr.mxu0 0.0
    %661 = vmatpush1.msra.mxu0 0.0
    %662 = vmatprep.subr.mxu0 0.0
    %663 = vmatpush1.msra.mxu0 0.0
    %664 = vmatprep.subr.mxu0 0.0
    %665 = vmatpush1.msra.mxu0 0.0
    %666 = vmatprep.subr.mxu0 0.0
    %667 = vmatpush1.msra.mxu0 0.0
    %668 = vmatprep.subr.mxu0 0.0
    %669 = vmatpush1.msra.mxu0 0.0
    %670 = vmatprep.subr.mxu0 0.0
    %671 = vmatpush1.msra.mxu0 0.0
    %672 = vmatprep.subr.mxu0 0.0
    %673 = vmatpush1.msra.mxu0 0.0
    %674 = vmatprep.subr.mxu0 0.0
    %675 = vmatpush1.msra.mxu0 0.0
    %676 = vmatprep.subr.mxu0 0.0
    %677 = vmatpush1.msra.mxu0 0.0
    %678 = vmatprep.subr.mxu0 0.0
    %679 = vmatpush1.msra.mxu0 0.0
    %680 = vmatprep.subr.mxu0 0.0
    %681 = vmatpush1.msra.mxu0 0.0
    %682 = vmatprep.subr.mxu0 0.0
    %683 = vmatpush1.msra.mxu0 0.0
    %684 = vmatprep.subr.mxu0 0.0
    %685 = vmatpush1.msra.mxu0 %v231
    %686 = vmatprep.subr.mxu0 0.0
    %687 = vmatpush1.msra.mxu0 %v230
    %688 = vmatprep.subr.mxu0 0.0
    %689 = vmatpush1.msra.mxu0 %v229
    %690 = vmatprep.subr.mxu0 0.0
    %691 = vmatpush1.msra.mxu0 %v228
    %692 = vmatprep.subr.mxu0 0.0
    %693 = vmatpush2.msra.mxu0 0.0
    %694 = vmatprep.subr.mxu0 0.0
    %695 = vmatpush2.msra.mxu0 0.0
    %696 = vmatprep.subr.mxu0 0.0
    %697 = vmatpush2.msra.mxu0 0.0
    %698 = vmatprep.subr.mxu0 0.0
    %699 = vmatpush2.msra.mxu0 0.0
    %700 = vmatprep.subr.mxu0 0.0
    %701 = vmatpush2.msra.mxu0 0.0
    %702 = vmatprep.subr.mxu0 0.0
    %703 = vmatpush2.msra.mxu0 0.0
    %704 = vmatprep.subr.mxu0 0.0
    %705 = vmatpush2.msra.mxu0 0.0
    %706 = vmatprep.subr.mxu0 0.0
    %707 = vmatpush2.msra.mxu0 0.0
    %708 = vmatprep.subr.mxu0 0.0
    %709 = vmatpush2.msra.mxu0 0.0
    %710 = vmatprep.subr.mxu0 0.0
    %711 = vmatpush2.msra.mxu0 0.0
    %712 = vmatprep.subr.mxu0 0.0
    %713 = vmatpush2.msra.mxu0 0.0
    %714 = vmatprep.subr.mxu0 0.0
    %715 = vmatpush2.msra.mxu0 0.0
    %716 = vmatprep.subr.mxu0 0.0
    %717 = vmatpush2.msra.mxu0 0.0
    %718 = vmatprep.subr.mxu0 0.0
    %719 = vmatpush2.msra.mxu0 0.0
    %720 = vmatprep.subr.mxu0 0.0
    %721 = vmatpush2.msra.mxu0 0.0
    %722 = vmatprep.subr.mxu0 0.0
    %723 = vmatpush2.msra.mxu0 0.0
    %724 = vmatprep.mubr.f32.mxu0 0.0
    %725 = vmatmul.mubr.f32.gmra.mxu0 %v658
    %v726 = vpop.f32.mrf.mxu0
    %v727 = vadd.f32 0.0, %v726
    %v728 = vpop.f32.mrf.mxu0
    %729 = vdwg.mxu0
    %731 = vrot.lane.b32.xlu0 %v656, 32
    %v732 = vpop.permute.xlu0 %731
    %v733 = vsel %vm271, %v732, 0
    %735 = vmatprep.subr.mxu0 0.0
    %736 = vmatpush1.msra.mxu0 0.0
    %737 = vmatprep.subr.mxu0 0.0
    %738 = vmatpush1.msra.mxu0 0.0
    %739 = vmatprep.subr.mxu0 0.0
    %740 = vmatpush1.msra.mxu0 0.0
    %741 = vmatprep.subr.mxu0 0.0
    %742 = vmatpush1.msra.mxu0 0.0
    %743 = vmatprep.subr.mxu0 0.0
    %744 = vmatpush1.msra.mxu0 0.0
    %745 = vmatprep.subr.mxu0 0.0
    %746 = vmatpush1.msra.mxu0 0.0
    %747 = vmatprep.subr.mxu0 0.0
    %748 = vmatpush1.msra.mxu0 0.0
    %749 = vmatprep.subr.mxu0 0.0
    %750 = vmatpush1.msra.mxu0 0.0
    %751 = vmatprep.subr.mxu0 0.0
    %752 = vmatpush1.msra.mxu0 0.0
    %753 = vmatprep.subr.mxu0 0.0
    %754 = vmatpush1.msra.mxu0 0.0
    %755 = vmatprep.subr.mxu0 0.0
    %756 = vmatpush1.msra.mxu0 0.0
    %757 = vmatprep.subr.mxu0 0.0
    %758 = vmatpush1.msra.mxu0 0.0
    %759 = vmatprep.subr.mxu0 0.0
    %760 = vmatpush1.msra.mxu0 %v227
    %761 = vmatprep.subr.mxu0 0.0
    %762 = vmatpush1.msra.mxu0 %v226
    %763 = vmatprep.subr.mxu0 0.0
    %764 = vmatpush1.msra.mxu0 %v225
    %765 = vmatprep.subr.mxu0 0.0
    %766 = vmatpush1.msra.mxu0 %v224
    %767 = vmatprep.subr.mxu0 0.0
    %768 = vmatpush2.msra.mxu0 0.0
    %769 = vmatprep.subr.mxu0 0.0
    %770 = vmatpush2.msra.mxu0 0.0
    %771 = vmatprep.subr.mxu0 0.0
    %772 = vmatpush2.msra.mxu0 0.0
    %773 = vmatprep.subr.mxu0 0.0
    %774 = vmatpush2.msra.mxu0 0.0
    %775 = vmatprep.subr.mxu0 0.0
    %776 = vmatpush2.msra.mxu0 0.0
    %777 = vmatprep.subr.mxu0 0.0
    %778 = vmatpush2.msra.mxu0 0.0
    %779 = vmatprep.subr.mxu0 0.0
    %780 = vmatpush2.msra.mxu0 0.0
    %781 = vmatprep.subr.mxu0 0.0
    %782 = vmatpush2.msra.mxu0 0.0
    %783 = vmatprep.subr.mxu0 0.0
    %784 = vmatpush2.msra.mxu0 0.0
    %785 = vmatprep.subr.mxu0 0.0
    %786 = vmatpush2.msra.mxu0 0.0
    %787 = vmatprep.subr.mxu0 0.0
    %788 = vmatpush2.msra.mxu0 0.0
    %789 = vmatprep.subr.mxu0 0.0
    %790 = vmatpush2.msra.mxu0 0.0
    %791 = vmatprep.subr.mxu0 0.0
    %792 = vmatpush2.msra.mxu0 0.0
    %793 = vmatprep.subr.mxu0 0.0
    %794 = vmatpush2.msra.mxu0 0.0
    %795 = vmatprep.subr.mxu0 0.0
    %796 = vmatpush2.msra.mxu0 0.0
    %797 = vmatprep.subr.mxu0 0.0
    %798 = vmatpush2.msra.mxu0 0.0
    %799 = vmatprep.mubr.f32.mxu0 0.0
    %800 = vmatmul.mubr.f32.gmra.mxu0 %v733
    %v801 = vpop.f32.mrf.mxu0
    %v802 = vadd.f32 %v727, %v801
    %v803 = vpop.f32.mrf.mxu0
    %804 = vdwg.mxu0
    %v805 = vadd.f32 %v802, %v241
    %v806 = vxor.u32 %v805, 2147483648
    %v807 = vmul.f32 %v806, 1.442695
    %v808 = vpow.pop %v807
    %v809 = vadd.f32 %v808, 1.0
    %v810 = vrcp.pop %v809
    %v811 = vmul.f32 1.0, %v810
    %v812 = vtanh.pop %v805
    %814 = vrot.lane.b32.xlu0 %v552, 32
    %v815 = vpop.permute.xlu0 %814
    %v817 = vmul.f32 %v811, %v815
    %819 = vrot.lane.b32.xlu0 %v812, 64
    %v820 = vpop.permute.xlu0 %819
    %v822 = vmul.f32 %v811, %v820
    %824 = vrot.lane.b32.xlu0 %v822, 32
    %v825 = vpop.permute.xlu0 %824
    %v827 = vadd.f32 %v817, %v825
    %v828 = vtanh.pop %v827
    %830 = vrot.lane.b32.xlu0 %v828, 64
    %v831 = vpop.permute.xlu0 %830
    %v833 = vmul.f32 %v811, %v831
    %835 = vrot.lane.b32.xlu0 %v833, 32
    %v836 = vpop.permute.xlu0 %835
    %v837 = vsel %vm271, %v836, 0
    %839 = vmatprep.subr.mxu0 0.0
    %840 = vmatpush1.msra.mxu0 0.0
    %841 = vmatprep.subr.mxu0 0.0
    %842 = vmatpush1.msra.mxu0 0.0
    %843 = vmatprep.subr.mxu0 0.0
    %844 = vmatpush1.msra.mxu0 0.0
    %845 = vmatprep.subr.mxu0 0.0
    %846 = vmatpush1.msra.mxu0 0.0
    %847 = vmatprep.subr.mxu0 0.0
    %848 = vmatpush1.msra.mxu0 0.0
    %849 = vmatprep.subr.mxu0 0.0
    %850 = vmatpush1.msra.mxu0 0.0
    %851 = vmatprep.subr.mxu0 0.0
    %852 = vmatpush1.msra.mxu0 0.0
    %853 = vmatprep.subr.mxu0 0.0
    %854 = vmatpush1.msra.mxu0 0.0
    %855 = vmatprep.subr.mxu0 0.0
    %856 = vmatpush1.msra.mxu0 0.0
    %857 = vmatprep.subr.mxu0 0.0
    %858 = vmatpush1.msra.mxu0 0.0
    %859 = vmatprep.subr.mxu0 0.0
    %860 = vmatpush1.msra.mxu0 0.0
    %861 = vmatprep.subr.mxu0 0.0
    %862 = vmatpush1.msra.mxu0 0.0
    %863 = vmatprep.subr.mxu0 0.0
    %864 = vmatpush1.msra.mxu0 %v235
    %865 = vmatprep.subr.mxu0 0.0
    %866 = vmatpush1.msra.mxu0 %v234
    %867 = vmatprep.subr.mxu0 0.0
    %868 = vmatpush1.msra.mxu0 %v233
    %869 = vmatprep.subr.mxu0 0.0
    %870 = vmatpush1.msra.mxu0 %v232
    %871 = vmatprep.subr.mxu0 0.0
    %872 = vmatpush2.msra.mxu0 0.0
    %873 = vmatprep.subr.mxu0 0.0
    %874 = vmatpush2.msra.mxu0 0.0
    %875 = vmatprep.subr.mxu0 0.0
    %876 = vmatpush2.msra.mxu0 0.0
    %877 = vmatprep.subr.mxu0 0.0
    %878 = vmatpush2.msra.mxu0 0.0
    %879 = vmatprep.subr.mxu0 0.0
    %880 = vmatpush2.msra.mxu0 0.0
    %881 = vmatprep.subr.mxu0 0.0
    %882 = vmatpush2.msra.mxu0 0.0
    %883 = vmatprep.subr.mxu0 0.0
    %884 = vmatpush2.msra.mxu0 0.0
    %885 = vmatprep.subr.mxu0 0.0
    %886 = vmatpush2.msra.mxu0 0.0
    %887 = vmatprep.subr.mxu0 0.0
    %888 = vmatpush2.msra.mxu0 0.0
    %889 = vmatprep.subr.mxu0 0.0
    %890 = vmatpush2.msra.mxu0 0.0
    %891 = vmatprep.subr.mxu0 0.0
    %892 = vmatpush2.msra.mxu0 0.0
    %893 = vmatprep.subr.mxu0 0.0
    %894 = vmatpush2.msra.mxu0 0.0
    %895 = vmatprep.subr.mxu0 0.0
    %896 = vmatpush2.msra.mxu0 0.0
    %897 = vmatprep.subr.mxu0 0.0
    %898 = vmatpush2.msra.mxu0 0.0
    %899 = vmatprep.subr.mxu0 0.0
    %900 = vmatpush2.msra.mxu0 0.0
    %901 = vmatprep.subr.mxu0 0.0
    %902 = vmatpush2.msra.mxu0 0.0
    %903 = vmatprep.mubr.f32.mxu0 0.0
    %904 = vmatmul.mubr.f32.gmra.mxu0 %v837
    %v905 = vpop.f32.mrf.mxu0
    %v906 = vadd.f32 %v248, %v905
    %v907 = vpop.f32.mrf.mxu0
    %908 = vdwg.mxu0
    %909 = vmax.xlane.f32.xlu0 %v906
    %v910 = vpop.xlane.xlu0 %909
    %v911 = vsub.f32 %v906, %v910
    %v912 = vmul.f32 %v911, 1.442695
    %v913 = vpow.pop %v912
    %914 = vadd.xlane.f32.xlu0 %v913
    %v915 = vpop.xlane.xlu0 %914
    %v916 = vlog2.pop %v915
    %v917 = vmul.f32 %v916, 0.6931472
    %v918 = vsub.f32 %v911, %v917
    %919 = vst [vmem:[#allocation22] sm:$0xff] %v918
    %vm920 = vcmp.eq.f32.partialorder %v906, %v910
    %v921 = vsel %vm920, %v543, 128
    %v922 = vand.u32 %v921, 65535
    %v923 = vshra.s32 %v921, 16
    %v924 = vcvt.s32.f32 %v922
    %v925 = vcvt.s32.f32 %v923
    %926 = vmin.xlane.f32.xlu0 %v925
    %v927 = vpop.xlane.xlu0 %926
    %vm928 = vcmp.eq.f32.partialorder %v925, %v927
    %v929 = vsel %vm928, %v924, inf
    %930 = vmin.xlane.f32.xlu0 %v929
    %v931 = vpop.xlane.xlu0 %930
    %v932 = vcvt.f32.s32 %v931
    %v933 = vcvt.f32.s32 %v927
    %v934 = vshll.u32 %v933, 16
    %v935 = vadd.s32 %v934, %v932
    %v936 = vsel %vm546, %v935, 128
    %vm937 = vcmp.eq.s32.totalorder %v543, %v936
    %v938 = vsel %vm937, 1.0, 0.0
    %v939 = vrot.slane %v938, 4
    %v940 = vmax.f32 %v938, %v939
    %v941 = vrot.slane %v940, 2
    %v942 = vmax.f32 %v940, %v941
    %v943 = vrot.slane %v942, 1
    %v944 = vmax.f32 %v942, %v943
    %vm945 = vcmp.gt.f32.partialorder %v944, 0.0
    %v946 = vsel %vm945, 1, 0
    %vm947 = vcmp.eq.s32.totalorder %v946, 1
    %v948 = vsel %vm947, 1, 0
    %v949 = vcvt.s32.f32 %v948
    %vm951 = vcmask 1042434
    %v952 = vsel %vm951, %v949, %v949
    %vm953 = vcmask 1043459
    %v954 = vsel %vm953, %v949, %v952
    %vm955 = vcmask 1044484
    %v956 = vsel %vm955, %v949, %v954
    %vm957 = vcmask 1045509
    %v958 = vsel %vm957, %v949, %v956
    %vm959 = vcmask 1046534
    %v960 = vsel %vm959, %v949, %v958
    %vm961 = vcmask 1047559
    %v962 = vsel %vm961, %v949, %v960
    %964 = vmatprep.subr.mxu0 0.0
    %965 = vmatpush1.msra.mxu0 %v219
    %966 = vmatprep.subr.mxu0 0.0
    %967 = vmatpush1.msra.mxu0 %v218
    %968 = vmatprep.subr.mxu0 0.0
    %969 = vmatpush1.msra.mxu0 %v217
    %970 = vmatprep.subr.mxu0 0.0
    %971 = vmatpush1.msra.mxu0 %v216
    %972 = vmatprep.subr.mxu0 0.0
    %973 = vmatpush1.msra.mxu0 %v215
    %974 = vmatprep.subr.mxu0 0.0
    %975 = vmatpush1.msra.mxu0 %v214
    %976 = vmatprep.subr.mxu0 0.0
    %977 = vmatpush1.msra.mxu0 %v213
    %978 = vmatprep.subr.mxu0 0.0
    %979 = vmatpush1.msra.mxu0 %v212
    %980 = vmatprep.subr.mxu0 0.0
    %981 = vmatpush1.msra.mxu0 %v211
    %982 = vmatprep.subr.mxu0 0.0
    %983 = vmatpush1.msra.mxu0 %v210
    %984 = vmatprep.subr.mxu0 0.0
    %985 = vmatpush1.msra.mxu0 %v209
    %986 = vmatprep.subr.mxu0 0.0
    %987 = vmatpush1.msra.mxu0 %v208
    %988 = vmatprep.subr.mxu0 0.0
    %989 = vmatpush1.msra.mxu0 %v207
    %990 = vmatprep.subr.mxu0 0.0
    %991 = vmatpush1.msra.mxu0 %v206
    %992 = vmatprep.subr.mxu0 0.0
    %993 = vmatpush1.msra.mxu0 %v205
    %994 = vmatprep.subr.mxu0 0.0
    %995 = vmatpush1.msra.mxu0 %v204
    %996 = vmatprep.subr.mxu0 0.0
    %997 = vmatpush2.msra.mxu0 0.0
    %998 = vmatprep.subr.mxu0 0.0
    %999 = vmatpush2.msra.mxu0 0.0
    %1000 = vmatprep.subr.mxu0 0.0
    %1001 = vmatpush2.msra.mxu0 0.0
    %1002 = vmatprep.subr.mxu0 0.0
    %1003 = vmatpush2.msra.mxu0 0.0
    %1004 = vmatprep.subr.mxu0 0.0
    %1005 = vmatpush2.msra.mxu0 0.0
    %1006 = vmatprep.subr.mxu0 0.0
    %1007 = vmatpush2.msra.mxu0 0.0
    %1008 = vmatprep.subr.mxu0 0.0
    %1009 = vmatpush2.msra.mxu0 0.0
    %1010 = vmatprep.subr.mxu0 0.0
    %1011 = vmatpush2.msra.mxu0 0.0
    %1012 = vmatprep.subr.mxu0 0.0
    %1013 = vmatpush2.msra.mxu0 0.0
    %1014 = vmatprep.subr.mxu0 0.0
    %1015 = vmatpush2.msra.mxu0 0.0
    %1016 = vmatprep.subr.mxu0 0.0
    %1017 = vmatpush2.msra.mxu0 0.0
    %1018 = vmatprep.subr.mxu0 0.0
    %1019 = vmatpush2.msra.mxu0 0.0
    %1020 = vmatprep.subr.mxu0 0.0
    %1021 = vmatpush2.msra.mxu0 0.0
    %1022 = vmatprep.subr.mxu0 0.0
    %1023 = vmatpush2.msra.mxu0 0.0
    %1024 = vmatprep.subr.mxu0 0.0
    %1025 = vmatpush2.msra.mxu0 0.0
    %1026 = vmatprep.subr.mxu0 0.0
    %1027 = vmatpush2.msra.mxu0 0.0
    %1028 = vmatprep.mubr.f32.mxu0 0.0
    %1029 = vmatmul.mubr.f32.gmra.mxu0 %v962
    %v1030 = vpop.f32.mrf.mxu0
    %v1031 = vadd.f32 0.0, %v1030
    %v1032 = vpop.f32.mrf.mxu0
    %1033 = vdwg.mxu0
    %s1034 = smul.u32 0, 10
    %s1035 = sld [smem:[#allocation4 + %s1034]]
    %p1036 = scmp.gt.s32.totalorder %s1035, 0
    %v1037 = vlaneseq
    %v1038 = vshrl.u32 %v1037, 7
    %v1039 = vsub.s32 0, %v1038
    %v1040 = vrot.slane %v1031, %v1039
    %s1041 = scalar_select %p1036, 1, 0
    %v1042 = vstv %s1041
    %vm1043 = vcmp.eq.s32.totalorder %v1042, 1
    %v1044 = vsel %vm1043, %v494, %v1040
    %v1045 = vadd.f32 %v1044, %v374
    %1046 = vmatprep.subr.mxu0 0.0
    %1047 = vmatpush1.msra.mxu0 0.0
    %1048 = vmatprep.subr.mxu0 0.0
    %1049 = vmatpush1.msra.mxu0 0.0
    %1050 = vmatprep.subr.mxu0 0.0
    %1051 = vmatpush1.msra.mxu0 0.0
    %1052 = vmatprep.subr.mxu0 0.0
    %1053 = vmatpush1.msra.mxu0 0.0
    %1054 = vmatprep.subr.mxu0 0.0
    %1055 = vmatpush1.msra.mxu0 0.0
    %1056 = vmatprep.subr.mxu0 0.0
    %1057 = vmatpush1.msra.mxu0 0.0
    %1058 = vmatprep.subr.mxu0 0.0
    %1059 = vmatpush1.msra.mxu0 0.0
    %1060 = vmatprep.subr.mxu0 0.0
    %1061 = vmatpush1.msra.mxu0 0.0
    %1062 = vmatprep.subr.mxu0 0.0
    %1063 = vmatpush1.msra.mxu0 0.0
    %1064 = vmatprep.subr.mxu0 0.0
    %1065 = vmatpush1.msra.mxu0 0.0
    %1066 = vmatprep.subr.mxu0 0.0
    %1067 = vmatpush1.msra.mxu0 0.0
    %1068 = vmatprep.subr.mxu0 0.0
    %1069 = vmatpush1.msra.mxu0 0.0
    %1070 = vmatprep.subr.mxu0 0.0
    %1071 = vmatpush1.msra.mxu0 %v223
    %1072 = vmatprep.subr.mxu0 0.0
    %1073 = vmatpush1.msra.mxu0 %v222
    %1074 = vmatprep.subr.mxu0 0.0
    %1075 = vmatpush1.msra.mxu0 %v221
    %1076 = vmatprep.subr.mxu0 0.0
    %1077 = vmatpush1.msra.mxu0 %v220
    %1078 = vmatprep.subr.mxu0 0.0
    %1079 = vmatpush2.msra.mxu0 0.0
    %1080 = vmatprep.subr.mxu0 0.0
    %1081 = vmatpush2.msra.mxu0 0.0
    %1082 = vmatprep.subr.mxu0 0.0
    %1083 = vmatpush2.msra.mxu0 0.0
    %1084 = vmatprep.subr.mxu0 0.0
    %1085 = vmatpush2.msra.mxu0 0.0
    %1086 = vmatprep.subr.mxu0 0.0
    %1087 = vmatpush2.msra.mxu0 0.0
    %1088 = vmatprep.subr.mxu0 0.0
    %1089 = vmatpush2.msra.mxu0 0.0
    %1090 = vmatprep.subr.mxu0 0.0
    %1091 = vmatpush2.msra.mxu0 0.0
    %1092 = vmatprep.subr.mxu0 0.0
    %1093 = vmatpush2.msra.mxu0 0.0
    %1094 = vmatprep.subr.mxu0 0.0
    %1095 = vmatpush2.msra.mxu0 0.0
    %1096 = vmatprep.subr.mxu0 0.0
    %1097 = vmatpush2.msra.mxu0 0.0
    %1098 = vmatprep.subr.mxu0 0.0
    %1099 = vmatpush2.msra.mxu0 0.0
    %1100 = vmatprep.subr.mxu0 0.0
    %1101 = vmatpush2.msra.mxu0 0.0
    %1102 = vmatprep.subr.mxu0 0.0
    %1103 = vmatpush2.msra.mxu0 0.0
    %1104 = vmatprep.subr.mxu0 0.0
    %1105 = vmatpush2.msra.mxu0 0.0
    %1106 = vmatprep.subr.mxu0 0.0
    %1107 = vmatpush2.msra.mxu0 0.0
    %1108 = vmatprep.subr.mxu0 0.0
    %1109 = vmatpush2.msra.mxu0 0.0
    %1110 = vmatprep.mubr.f32.mxu0 0.0
    %1111 = vmatmul.mubr.f32.gmra.mxu0 %v733
    %v1112 = vpop.f32.mrf.mxu0
    %v1113 = vadd.f32 0.0, %v1112
    %v1114 = vpop.f32.mrf.mxu0
    %1115 = vdwg.mxu0
    %v1116 = vadd.f32 %v1045, %v1113
    %v1117 = vxor.u32 %v1116, 2147483648
    %v1118 = vmul.f32 %v1117, 1.442695
    %v1119 = vpow.pop %v1118
    %v1120 = vadd.f32 %v1119, 1.0
    %v1121 = vrcp.pop %v1120
    %v1122 = vmul.f32 1.0, %v1121
    %v1123 = vtanh.pop %v1116
    %v1124 = vmul.f32 %v1122, %v650
    %1126 = vrot.lane.b32.xlu0 %v1123, 64
    %v1127 = vpop.permute.xlu0 %1126
    %v1129 = vmul.f32 %v1122, %v1127
    %1131 = vrot.lane.b32.xlu0 %v1129, 32
    %v1132 = vpop.permute.xlu0 %1131
    %v1134 = vadd.f32 %v1124, %v1132
    %v1135 = vtanh.pop %v1134
    %1137 = vrot.lane.b32.xlu0 %v1135, 64
    %v1138 = vpop.permute.xlu0 %1137
    %v1140 = vmul.f32 %v1122, %v1138
    %1141 = vmatprep.subr.mxu0 0.0
    %1142 = vmatpush1.msra.mxu0 0.0
    %1143 = vmatprep.subr.mxu0 0.0
    %1144 = vmatpush1.msra.mxu0 0.0
    %1145 = vmatprep.subr.mxu0 0.0
    %1146 = vmatpush1.msra.mxu0 0.0
    %1147 = vmatprep.subr.mxu0 0.0
    %1148 = vmatpush1.msra.mxu0 0.0
    %1149 = vmatprep.subr.mxu0 0.0
    %1150 = vmatpush1.msra.mxu0 0.0
    %1151 = vmatprep.subr.mxu0 0.0
    %1152 = vmatpush1.msra.mxu0 0.0
    %1153 = vmatprep.subr.mxu0 0.0
    %1154 = vmatpush1.msra.mxu0 0.0
    %1155 = vmatprep.subr.mxu0 0.0
    %1156 = vmatpush1.msra.mxu0 0.0
    %1157 = vmatprep.subr.mxu0 0.0
    %1158 = vmatpush1.msra.mxu0 0.0
    %1159 = vmatprep.subr.mxu0 0.0
    %1160 = vmatpush1.msra.mxu0 0.0
    %1161 = vmatprep.subr.mxu0 0.0
    %1162 = vmatpush1.msra.mxu0 0.0
    %1163 = vmatprep.subr.mxu0 0.0
    %1164 = vmatpush1.msra.mxu0 0.0
    %1165 = vmatprep.subr.mxu0 0.0
    %1166 = vmatpush1.msra.mxu0 %v231
    %1167 = vmatprep.subr.mxu0 0.0
    %1168 = vmatpush1.msra.mxu0 %v230
    %1169 = vmatprep.subr.mxu0 0.0
    %1170 = vmatpush1.msra.mxu0 %v229
    %1171 = vmatprep.subr.mxu0 0.0
    %1172 = vmatpush1.msra.mxu0 %v228
    %1173 = vmatprep.subr.mxu0 0.0
    %1174 = vmatpush2.msra.mxu0 0.0
    %1175 = vmatprep.subr.mxu0 0.0
    %1176 = vmatpush2.msra.mxu0 0.0
    %1177 = vmatprep.subr.mxu0 0.0
    %1178 = vmatpush2.msra.mxu0 0.0
    %1179 = vmatprep.subr.mxu0 0.0
    %1180 = vmatpush2.msra.mxu0 0.0
    %1181 = vmatprep.subr.mxu0 0.0
    %1182 = vmatpush2.msra.mxu0 0.0
    %1183 = vmatprep.subr.mxu0 0.0
    %1184 = vmatpush2.msra.mxu0 0.0
    %1185 = vmatprep.subr.mxu0 0.0
    %1186 = vmatpush2.msra.mxu0 0.0
    %1187 = vmatprep.subr.mxu0 0.0
    %1188 = vmatpush2.msra.mxu0 0.0
    %1189 = vmatprep.subr.mxu0 0.0
    %1190 = vmatpush2.msra.mxu0 0.0
    %1191 = vmatprep.subr.mxu0 0.0
    %1192 = vmatpush2.msra.mxu0 0.0
    %1193 = vmatprep.subr.mxu0 0.0
    %1194 = vmatpush2.msra.mxu0 0.0
    %1195 = vmatprep.subr.mxu0 0.0
    %1196 = vmatpush2.msra.mxu0 0.0
    %1197 = vmatprep.subr.mxu0 0.0
    %1198 = vmatpush2.msra.mxu0 0.0
    %1199 = vmatprep.subr.mxu0 0.0
    %1200 = vmatpush2.msra.mxu0 0.0
    %1201 = vmatprep.subr.mxu0 0.0
    %1202 = vmatpush2.msra.mxu0 0.0
    %1203 = vmatprep.subr.mxu0 0.0
    %1204 = vmatpush2.msra.mxu0 0.0
    %1205 = vmatprep.mubr.f32.mxu0 0.0
    %1206 = vmatmul.mubr.f32.gmra.mxu0 %v837
    %v1207 = vpop.f32.mrf.mxu0
    %v1208 = vadd.f32 0.0, %v1207
    %v1209 = vpop.f32.mrf.mxu0
    %1210 = vdwg.mxu0
    %1212 = vrot.lane.b32.xlu0 %v1140, 32
    %v1213 = vpop.permute.xlu0 %1212
    %v1214 = vsel %vm271, %v1213, 0
    %1216 = vmatprep.subr.mxu0 0.0
    %1217 = vmatpush1.msra.mxu0 0.0
    %1218 = vmatprep.subr.mxu0 0.0
    %1219 = vmatpush1.msra.mxu0 0.0
    %1220 = vmatprep.subr.mxu0 0.0
    %1221 = vmatpush1.msra.mxu0 0.0
    %1222 = vmatprep.subr.mxu0 0.0
    %1223 = vmatpush1.msra.mxu0 0.0
    %1224 = vmatprep.subr.mxu0 0.0
    %1225 = vmatpush1.msra.mxu0 0.0
    %1226 = vmatprep.subr.mxu0 0.0
    %1227 = vmatpush1.msra.mxu0 0.0
    %1228 = vmatprep.subr.mxu0 0.0
    %1229 = vmatpush1.msra.mxu0 0.0
    %1230 = vmatprep.subr.mxu0 0.0
    %1231 = vmatpush1.msra.mxu0 0.0
    %1232 = vmatprep.subr.mxu0 0.0
    %1233 = vmatpush1.msra.mxu0 0.0
    %1234 = vmatprep.subr.mxu0 0.0
    %1235 = vmatpush1.msra.mxu0 0.0
    %1236 = vmatprep.subr.mxu0 0.0
    %1237 = vmatpush1.msra.mxu0 0.0
    %1238 = vmatprep.subr.mxu0 0.0
    %1239 = vmatpush1.msra.mxu0 0.0
    %1240 = vmatprep.subr.mxu0 0.0
    %1241 = vmatpush1.msra.mxu0 %v227
    %1242 = vmatprep.subr.mxu0 0.0
    %1243 = vmatpush1.msra.mxu0 %v226
    %1244 = vmatprep.subr.mxu0 0.0
    %1245 = vmatpush1.msra.mxu0 %v225
    %1246 = vmatprep.subr.mxu0 0.0
    %1247 = vmatpush1.msra.mxu0 %v224
    %1248 = vmatprep.subr.mxu0 0.0
    %1249 = vmatpush2.msra.mxu0 0.0
    %1250 = vmatprep.subr.mxu0 0.0
    %1251 = vmatpush2.msra.mxu0 0.0
    %1252 = vmatprep.subr.mxu0 0.0
    %1253 = vmatpush2.msra.mxu0 0.0
    %1254 = vmatprep.subr.mxu0 0.0
    %1255 = vmatpush2.msra.mxu0 0.0
    %1256 = vmatprep.subr.mxu0 0.0
    %1257 = vmatpush2.msra.mxu0 0.0
    %1258 = vmatprep.subr.mxu0 0.0
    %1259 = vmatpush2.msra.mxu0 0.0
    %1260 = vmatprep.subr.mxu0 0.0
    %1261 = vmatpush2.msra.mxu0 0.0
    %1262 = vmatprep.subr.mxu0 0.0
    %1263 = vmatpush2.msra.mxu0 0.0
    %1264 = vmatprep.subr.mxu0 0.0
    %1265 = vmatpush2.msra.mxu0 0.0
    %1266 = vmatprep.subr.mxu0 0.0
    %1267 = vmatpush2.msra.mxu0 0.0
    %1268 = vmatprep.subr.mxu0 0.0
    %1269 = vmatpush2.msra.mxu0 0.0
    %1270 = vmatprep.subr.mxu0 0.0
    %1271 = vmatpush2.msra.mxu0 0.0
    %1272 = vmatprep.subr.mxu0 0.0
    %1273 = vmatpush2.msra.mxu0 0.0
    %1274 = vmatprep.subr.mxu0 0.0
    %1275 = vmatpush2.msra.mxu0 0.0
    %1276 = vmatprep.subr.mxu0 0.0
    %1277 = vmatpush2.msra.mxu0 0.0
    %1278 = vmatprep.subr.mxu0 0.0
    %1279 = vmatpush2.msra.mxu0 0.0
    %1280 = vmatprep.mubr.f32.mxu0 0.0
    %1281 = vmatmul.mubr.f32.gmra.mxu0 %v1214
    %v1282 = vpop.f32.mrf.mxu0
    %v1283 = vadd.f32 %v1208, %v1282
    %v1284 = vpop.f32.mrf.mxu0
    %1285 = vdwg.mxu0
    %v1286 = vadd.f32 %v1283, %v241
    %v1287 = vxor.u32 %v1286, 2147483648
    %v1288 = vmul.f32 %v1287, 1.442695
    %v1289 = vpow.pop %v1288
    %v1290 = vadd.f32 %v1289, 1.0
    %v1291 = vrcp.pop %v1290
    %v1292 = vmul.f32 1.0, %v1291
    %v1293 = vtanh.pop %v1286
    %v1294 = vmul.f32 %v1292, %v827
    %1296 = vrot.lane.b32.xlu0 %v1293, 64
    %v1297 = vpop.permute.xlu0 %1296
    %v1299 = vmul.f32 %v1292, %v1297
    %1301 = vrot.lane.b32.xlu0 %v1299, 32
    %v1302 = vpop.permute.xlu0 %1301
    %v1304 = vadd.f32 %v1294, %v1302
    %v1305 = vtanh.pop %v1304
    %1307 = vrot.lane.b32.xlu0 %v1305, 64
    %v1308 = vpop.permute.xlu0 %1307
    %v1310 = vmul.f32 %v1292, %v1308
    %1312 = vrot.lane.b32.xlu0 %v1310, 32
    %v1313 = vpop.permute.xlu0 %1312
    %v1314 = vsel %vm271, %v1313, 0
    %1316 = vmatprep.subr.mxu0 0.0
    %1317 = vmatpush1.msra.mxu0 0.0
    %1318 = vmatprep.subr.mxu0 0.0
    %1319 = vmatpush1.msra.mxu0 0.0
    %1320 = vmatprep.subr.mxu0 0.0
    %1321 = vmatpush1.msra.mxu0 0.0
    %1322 = vmatprep.subr.mxu0 0.0
    %1323 = vmatpush1.msra.mxu0 0.0
    %1324 = vmatprep.subr.mxu0 0.0
    %1325 = vmatpush1.msra.mxu0 0.0
    %1326 = vmatprep.subr.mxu0 0.0
    %1327 = vmatpush1.msra.mxu0 0.0
    %1328 = vmatprep.subr.mxu0 0.0
    %1329 = vmatpush1.msra.mxu0 0.0
    %1330 = vmatprep.subr.mxu0 0.0
    %1331 = vmatpush1.msra.mxu0 0.0
    %1332 = vmatprep.subr.mxu0 0.0
    %1333 = vmatpush1.msra.mxu0 0.0
    %1334 = vmatprep.subr.mxu0 0.0
    %1335 = vmatpush1.msra.mxu0 0.0
    %1336 = vmatprep.subr.mxu0 0.0
    %1337 = vmatpush1.msra.mxu0 0.0
    %1338 = vmatprep.subr.mxu0 0.0
    %1339 = vmatpush1.msra.mxu0 0.0
    %1340 = vmatprep.subr.mxu0 0.0
    %1341 = vmatpush1.msra.mxu0 %v235
    %1342 = vmatprep.subr.mxu0 0.0
    %1343 = vmatpush1.msra.mxu0 %v234
    %1344 = vmatprep.subr.mxu0 0.0
    %1345 = vmatpush1.msra.mxu0 %v233
    %1346 = vmatprep.subr.mxu0 0.0
    %1347 = vmatpush1.msra.mxu0 %v232
    %1348 = vmatprep.subr.mxu0 0.0
    %1349 = vmatpush2.msra.mxu0 0.0
    %1350 = vmatprep.subr.mxu0 0.0
    %1351 = vmatpush2.msra.mxu0 0.0
    %1352 = vmatprep.subr.mxu0 0.0
    %1353 = vmatpush2.msra.mxu0 0.0
    %1354 = vmatprep.subr.mxu0 0.0
    %1355 = vmatpush2.msra.mxu0 0.0
    %1356 = vmatprep.subr.mxu0 0.0
    %1357 = vmatpush2.msra.mxu0 0.0
    %1358 = vmatprep.subr.mxu0 0.0
    %1359 = vmatpush2.msra.mxu0 0.0
    %1360 = vmatprep.subr.mxu0 0.0
    %1361 = vmatpush2.msra.mxu0 0.0
    %1362 = vmatprep.subr.mxu0 0.0
    %1363 = vmatpush2.msra.mxu0 0.0
    %1364 = vmatprep.subr.mxu0 0.0
    %1365 = vmatpush2.msra.mxu0 0.0
    %1366 = vmatprep.subr.mxu0 0.0
    %1367 = vmatpush2.msra.mxu0 0.0
    %1368 = vmatprep.subr.mxu0 0.0
    %1369 = vmatpush2.msra.mxu0 0.0
    %1370 = vmatprep.subr.mxu0 0.0
    %1371 = vmatpush2.msra.mxu0 0.0
    %1372 = vmatprep.subr.mxu0 0.0
    %1373 = vmatpush2.msra.mxu0 0.0
    %1374 = vmatprep.subr.mxu0 0.0
    %1375 = vmatpush2.msra.mxu0 0.0
    %1376 = vmatprep.subr.mxu0 0.0
    %1377 = vmatpush2.msra.mxu0 0.0
    %1378 = vmatprep.subr.mxu0 0.0
    %1379 = vmatpush2.msra.mxu0 0.0
    %1380 = vmatprep.mubr.f32.mxu0 0.0
    %1381 = vmatmul.mubr.f32.gmra.mxu0 %v1314
    %v1382 = vpop.f32.mrf.mxu0
    %v1383 = vadd.f32 %v248, %v1382
    %v1384 = vpop.f32.mrf.mxu0
    %1385 = vdwg.mxu0
    %1386 = vmax.xlane.f32.xlu0 %v1383
    %v1387 = vpop.xlane.xlu0 %1386
    %v1388 = vsub.f32 %v1383, %v1387
    %v1389 = vmul.f32 %v1388, 1.442695
    %v1390 = vpow.pop %v1389
    %1391 = vadd.xlane.f32.xlu0 %v1390
    %v1392 = vpop.xlane.xlu0 %1391
    %v1393 = vlog2.pop %v1392
    %v1394 = vmul.f32 %v1393, 0.6931472
    %v1395 = vsub.f32 %v1388, %v1394
    %s1396 = scalar_lea.vmem [#allocation22], 8
    %1397 = vst [vmem:[%s1396] sm:$0xff] %v1395
    %vm1398 = vcmp.eq.f32.partialorder %v1383, %v1387
    %v1399 = vsel %vm1398, %v543, 128
    %v1400 = vand.u32 %v1399, 65535
    %v1401 = vshra.s32 %v1399, 16
    %v1402 = vcvt.s32.f32 %v1400
    %v1403 = vcvt.s32.f32 %v1401
    %1404 = vmin.xlane.f32.xlu0 %v1403
    %v1405 = vpop.xlane.xlu0 %1404
    %vm1406 = vcmp.eq.f32.partialorder %v1403, %v1405
    %v1407 = vsel %vm1406, %v1402, inf
    %1408 = vmin.xlane.f32.xlu0 %v1407
    %v1409 = vpop.xlane.xlu0 %1408
    %v1410 = vcvt.f32.s32 %v1409
    %v1411 = vcvt.f32.s32 %v1405
    %v1412 = vshll.u32 %v1411, 16
    %v1413 = vadd.s32 %v1412, %v1410
    %v1414 = vsel %vm546, %v1413, 128
    %vm1415 = vcmp.eq.s32.totalorder %v543, %v1414
    %v1416 = vsel %vm1415, 1.0, 0.0
    %v1417 = vrot.slane %v1416, 4
    %v1418 = vmax.f32 %v1416, %v1417
    %v1419 = vrot.slane %v1418, 2
    %v1420 = vmax.f32 %v1418, %v1419
    %v1421 = vrot.slane %v1420, 1
    %v1422 = vmax.f32 %v1420, %v1421
    %vm1423 = vcmp.gt.f32.partialorder %v1422, 0.0
    %v1424 = vsel %vm1423, 1, 0
    %vm1425 = vcmp.eq.s32.totalorder %v1424, 1
    %v1426 = vsel %vm1425, 1, 0
    %v1427 = vcvt.s32.f32 %v1426
    %v1429 = vsel %vm951, %v1427, %v1427
    %v1430 = vsel %vm953, %v1427, %v1429
    %v1431 = vsel %vm955, %v1427, %v1430
    %v1432 = vsel %vm957, %v1427, %v1431
    %v1433 = vsel %vm959, %v1427, %v1432
    %v1434 = vsel %vm961, %v1427, %v1433
    %1436 = vmatprep.subr.mxu0 0.0
    %1437 = vmatpush1.msra.mxu0 %v219
    %1438 = vmatprep.subr.mxu0 0.0
    %1439 = vmatpush1.msra.mxu0 %v218
    %1440 = vmatprep.subr.mxu0 0.0
    %1441 = vmatpush1.msra.mxu0 %v217
    %1442 = vmatprep.subr.mxu0 0.0
    %1443 = vmatpush1.msra.mxu0 %v216
    %1444 = vmatprep.subr.mxu0 0.0
    %1445 = vmatpush1.msra.mxu0 %v215
    %1446 = vmatprep.subr.mxu0 0.0
    %1447 = vmatpush1.msra.mxu0 %v214
    %1448 = vmatprep.subr.mxu0 0.0
    %1449 = vmatpush1.msra.mxu0 %v213
    %1450 = vmatprep.subr.mxu0 0.0
    %1451 = vmatpush1.msra.mxu0 %v212
    %1452 = vmatprep.subr.mxu0 0.0
    %1453 = vmatpush1.msra.mxu0 %v211
    %1454 = vmatprep.subr.mxu0 0.0
    %1455 = vmatpush1.msra.mxu0 %v210
    %1456 = vmatprep.subr.mxu0 0.0
    %1457 = vmatpush1.msra.mxu0 %v209
    %1458 = vmatprep.subr.mxu0 0.0
    %1459 = vmatpush1.msra.mxu0 %v208
    %1460 = vmatprep.subr.mxu0 0.0
    %1461 = vmatpush1.msra.mxu0 %v207
    %1462 = vmatprep.subr.mxu0 0.0
    %1463 = vmatpush1.msra.mxu0 %v206
    %1464 = vmatprep.subr.mxu0 0.0
    %1465 = vmatpush1.msra.mxu0 %v205
    %1466 = vmatprep.subr.mxu0 0.0
    %1467 = vmatpush1.msra.mxu0 %v204
    %1468 = vmatprep.subr.mxu0 0.0
    %1469 = vmatpush2.msra.mxu0 0.0
    %1470 = vmatprep.subr.mxu0 0.0
    %1471 = vmatpush2.msra.mxu0 0.0
    %1472 = vmatprep.subr.mxu0 0.0
    %1473 = vmatpush2.msra.mxu0 0.0
    %1474 = vmatprep.subr.mxu0 0.0
    %1475 = vmatpush2.msra.mxu0 0.0
    %1476 = vmatprep.subr.mxu0 0.0
    %1477 = vmatpush2.msra.mxu0 0.0
    %1478 = vmatprep.subr.mxu0 0.0
    %1479 = vmatpush2.msra.mxu0 0.0
    %1480 = vmatprep.subr.mxu0 0.0
    %1481 = vmatpush2.msra.mxu0 0.0
    %1482 = vmatprep.subr.mxu0 0.0
    %1483 = vmatpush2.msra.mxu0 0.0
    %1484 = vmatprep.subr.mxu0 0.0
    %1485 = vmatpush2.msra.mxu0 0.0
    %1486 = vmatprep.subr.mxu0 0.0
    %1487 = vmatpush2.msra.mxu0 0.0
    %1488 = vmatprep.subr.mxu0 0.0
    %1489 = vmatpush2.msra.mxu0 0.0
    %1490 = vmatprep.subr.mxu0 0.0
    %1491 = vmatpush2.msra.mxu0 0.0
    %1492 = vmatprep.subr.mxu0 0.0
    %1493 = vmatpush2.msra.mxu0 0.0
    %1494 = vmatprep.subr.mxu0 0.0
    %1495 = vmatpush2.msra.mxu0 0.0
    %1496 = vmatprep.subr.mxu0 0.0
    %1497 = vmatpush2.msra.mxu0 0.0
    %1498 = vmatprep.subr.mxu0 0.0
    %1499 = vmatpush2.msra.mxu0 0.0
    %1500 = vmatprep.mubr.f32.mxu0 0.0
    %1501 = vmatmul.mubr.f32.gmra.mxu0 %v1434
    %v1502 = vpop.f32.mrf.mxu0
    %v1503 = vadd.f32 0.0, %v1502
    %v1504 = vpop.f32.mrf.mxu0
    %1505 = vdwg.mxu0
    %s1506 = sadd.s32 %s1034, 1
    %s1507 = sld [smem:[#allocation4 + %s1506]]
    %p1508 = scmp.gt.s32.totalorder %s1507, 0
    %v1509 = vlaneseq
    %v1510 = vshrl.u32 %v1509, 7
    %v1511 = vsub.s32 0, %v1510
    %v1512 = vrot.slane %v1503, %v1511
    %s1513 = scalar_select %p1508, 1, 0
    %v1514 = vstv %s1513
    %vm1515 = vcmp.eq.s32.totalorder %v1514, 1
    %v1516 = vsel %vm1515, %v499, %v1512
    %v1517 = vadd.f32 %v1516, %v379
    %1518 = vmatprep.subr.mxu0 0.0
    %1519 = vmatpush1.msra.mxu0 0.0
    %1520 = vmatprep.subr.mxu0 0.0
    %1521 = vmatpush1.msra.mxu0 0.0
    %1522 = vmatprep.subr.mxu0 0.0
    %1523 = vmatpush1.msra.mxu0 0.0
    %1524 = vmatprep.subr.mxu0 0.0
    %1525 = vmatpush1.msra.mxu0 0.0
    %1526 = vmatprep.subr.mxu0 0.0
    %1527 = vmatpush1.msra.mxu0 0.0
    %1528 = vmatprep.subr.mxu0 0.0
    %1529 = vmatpush1.msra.mxu0 0.0
    %1530 = vmatprep.subr.mxu0 0.0
    %1531 = vmatpush1.msra.mxu0 0.0
    %1532 = vmatprep.subr.mxu0 0.0
    %1533 = vmatpush1.msra.mxu0 0.0
    %1534 = vmatprep.subr.mxu0 0.0
    %1535 = vmatpush1.msra.mxu0 0.0
    %1536 = vmatprep.subr.mxu0 0.0
    %1537 = vmatpush1.msra.mxu0 0.0
    %1538 = vmatprep.subr.mxu0 0.0
    %1539 = vmatpush1.msra.mxu0 0.0
    %1540 = vmatprep.subr.mxu0 0.0
    %1541 = vmatpush1.msra.mxu0 0.0
    %1542 = vmatprep.subr.mxu0 0.0
    %1543 = vmatpush1.msra.mxu0 %v223
    %1544 = vmatprep.subr.mxu0 0.0
    %1545 = vmatpush1.msra.mxu0 %v222
    %1546 = vmatprep.subr.mxu0 0.0
    %1547 = vmatpush1.msra.mxu0 %v221
    %1548 = vmatprep.subr.mxu0 0.0
    %1549 = vmatpush1.msra.mxu0 %v220
    %1550 = vmatprep.subr.mxu0 0.0
    %1551 = vmatpush2.msra.mxu0 0.0
    %1552 = vmatprep.subr.mxu0 0.0
    %1553 = vmatpush2.msra.mxu0 0.0
    %1554 = vmatprep.subr.mxu0 0.0
    %1555 = vmatpush2.msra.mxu0 0.0
    %1556 = vmatprep.subr.mxu0 0.0
    %1557 = vmatpush2.msra.mxu0 0.0
    %1558 = vmatprep.subr.mxu0 0.0
    %1559 = vmatpush2.msra.mxu0 0.0
    %1560 = vmatprep.subr.mxu0 0.0
    %1561 = vmatpush2.msra.mxu0 0.0
    %1562 = vmatprep.subr.mxu0 0.0
    %1563 = vmatpush2.msra.mxu0 0.0
    %1564 = vmatprep.subr.mxu0 0.0
    %1565 = vmatpush2.msra.mxu0 0.0
    %1566 = vmatprep.subr.mxu0 0.0
    %1567 = vmatpush2.msra.mxu0 0.0
    %1568 = vmatprep.subr.mxu0 0.0
    %1569 = vmatpush2.msra.mxu0 0.0
    %1570 = vmatprep.subr.mxu0 0.0
    %1571 = vmatpush2.msra.mxu0 0.0
    %1572 = vmatprep.subr.mxu0 0.0
    %1573 = vmatpush2.msra.mxu0 0.0
    %1574 = vmatprep.subr.mxu0 0.0
    %1575 = vmatpush2.msra.mxu0 0.0
    %1576 = vmatprep.subr.mxu0 0.0
    %1577 = vmatpush2.msra.mxu0 0.0
    %1578 = vmatprep.subr.mxu0 0.0
    %1579 = vmatpush2.msra.mxu0 0.0
    %1580 = vmatprep.subr.mxu0 0.0
    %1581 = vmatpush2.msra.mxu0 0.0
    %1582 = vmatprep.mubr.f32.mxu0 0.0
    %1583 = vmatmul.mubr.f32.gmra.mxu0 %v1214
    %v1584 = vpop.f32.mrf.mxu0
    %v1585 = vadd.f32 0.0, %v1584
    %v1586 = vpop.f32.mrf.mxu0
    %1587 = vdwg.mxu0
    %v1588 = vadd.f32 %v1517, %v1585
    %v1589 = vxor.u32 %v1588, 2147483648
    %v1590 = vmul.f32 %v1589, 1.442695
    %v1591 = vpow.pop %v1590
    %v1592 = vadd.f32 %v1591, 1.0
    %v1593 = vrcp.pop %v1592
    %v1594 = vmul.f32 1.0, %v1593
    %v1595 = vtanh.pop %v1588
    %v1596 = vmul.f32 %v1594, %v1134
    %1598 = vrot.lane.b32.xlu0 %v1595, 64
    %v1599 = vpop.permute.xlu0 %1598
    %v1601 = vmul.f32 %v1594, %v1599
    %1603 = vrot.lane.b32.xlu0 %v1601, 32
    %v1604 = vpop.permute.xlu0 %1603
    %v1606 = vadd.f32 %v1596, %v1604
    %v1607 = vtanh.pop %v1606
    %1609 = vrot.lane.b32.xlu0 %v1607, 64
    %v1610 = vpop.permute.xlu0 %1609
    %v1612 = vmul.f32 %v1594, %v1610
    %1613 = vmatprep.subr.mxu0 0.0
    %1614 = vmatpush1.msra.mxu0 0.0
    %1615 = vmatprep.subr.mxu0 0.0
    %1616 = vmatpush1.msra.mxu0 0.0
    %1617 = vmatprep.subr.mxu0 0.0
    %1618 = vmatpush1.msra.mxu0 0.0
    %1619 = vmatprep.subr.mxu0 0.0
    %1620 = vmatpush1.msra.mxu0 0.0
    %1621 = vmatprep.subr.mxu0 0.0
    %1622 = vmatpush1.msra.mxu0 0.0
    %1623 = vmatprep.subr.mxu0 0.0
    %1624 = vmatpush1.msra.mxu0 0.0
    %1625 = vmatprep.subr.mxu0 0.0
    %1626 = vmatpush1.msra.mxu0 0.0
    %1627 = vmatprep.subr.mxu0 0.0
    %1628 = vmatpush1.msra.mxu0 0.0
    %1629 = vmatprep.subr.mxu0 0.0
    %1630 = vmatpush1.msra.mxu0 0.0
    %1631 = vmatprep.subr.mxu0 0.0
    %1632 = vmatpush1.msra.mxu0 0.0
    %1633 = vmatprep.subr.mxu0 0.0
    %1634 = vmatpush1.msra.mxu0 0.0
    %1635 = vmatprep.subr.mxu0 0.0
    %1636 = vmatpush1.msra.mxu0 0.0
    %1637 = vmatprep.subr.mxu0 0.0
    %1638 = vmatpush1.msra.mxu0 %v231
    %1639 = vmatprep.subr.mxu0 0.0
    %1640 = vmatpush1.msra.mxu0 %v230
    %1641 = vmatprep.subr.mxu0 0.0
    %1642 = vmatpush1.msra.mxu0 %v229
    %1643 = vmatprep.subr.mxu0 0.0
    %1644 = vmatpush1.msra.mxu0 %v228
    %1645 = vmatprep.subr.mxu0 0.0
    %1646 = vmatpush2.msra.mxu0 0.0
    %1647 = vmatprep.subr.mxu0 0.0
    %1648 = vmatpush2.msra.mxu0 0.0
    %1649 = vmatprep.subr.mxu0 0.0
    %1650 = vmatpush2.msra.mxu0 0.0
    %1651 = vmatprep.subr.mxu0 0.0
    %1652 = vmatpush2.msra.mxu0 0.0
    %1653 = vmatprep.subr.mxu0 0.0
    %1654 = vmatpush2.msra.mxu0 0.0
    %1655 = vmatprep.subr.mxu0 0.0
    %1656 = vmatpush2.msra.mxu0 0.0
    %1657 = vmatprep.subr.mxu0 0.0
    %1658 = vmatpush2.msra.mxu0 0.0
    %1659 = vmatprep.subr.mxu0 0.0
    %1660 = vmatpush2.msra.mxu0 0.0
    %1661 = vmatprep.subr.mxu0 0.0
    %1662 = vmatpush2.msra.mxu0 0.0
    %1663 = vmatprep.subr.mxu0 0.0
    %1664 = vmatpush2.msra.mxu0 0.0
    %1665 = vmatprep.subr.mxu0 0.0
    %1666 = vmatpush2.msra.mxu0 0.0
    %1667 = vmatprep.subr.mxu0 0.0
    %1668 = vmatpush2.msra.mxu0 0.0
    %1669 = vmatprep.subr.mxu0 0.0
    %1670 = vmatpush2.msra.mxu0 0.0
    %1671 = vmatprep.subr.mxu0 0.0
    %1672 = vmatpush2.msra.mxu0 0.0
    %1673 = vmatprep.subr.mxu0 0.0
    %1674 = vmatpush2.msra.mxu0 0.0
    %1675 = vmatprep.subr.mxu0 0.0
    %1676 = vmatpush2.msra.mxu0 0.0
    %1677 = vmatprep.mubr.f32.mxu0 0.0
    %1678 = vmatmul.mubr.f32.gmra.mxu0 %v1314
    %v1679 = vpop.f32.mrf.mxu0
    %v1680 = vadd.f32 0.0, %v1679
    %v1681 = vpop.f32.mrf.mxu0
    %1682 = vdwg.mxu0
    %1684 = vrot.lane.b32.xlu0 %v1612, 32
    %v1685 = vpop.permute.xlu0 %1684
    %v1686 = vsel %vm271, %v1685, 0
    %1688 = vmatprep.subr.mxu0 0.0
    %1689 = vmatpush1.msra.mxu0 0.0
    %1690 = vmatprep.subr.mxu0 0.0
    %1691 = vmatpush1.msra.mxu0 0.0
    %1692 = vmatprep.subr.mxu0 0.0
    %1693 = vmatpush1.msra.mxu0 0.0
    %1694 = vmatprep.subr.mxu0 0.0
    %1695 = vmatpush1.msra.mxu0 0.0
    %1696 = vmatprep.subr.mxu0 0.0
    %1697 = vmatpush1.msra.mxu0 0.0
    %1698 = vmatprep.subr.mxu0 0.0
    %1699 = vmatpush1.msra.mxu0 0.0
    %1700 = vmatprep.subr.mxu0 0.0
    %1701 = vmatpush1.msra.mxu0 0.0
    %1702 = vmatprep.subr.mxu0 0.0
    %1703 = vmatpush1.msra.mxu0 0.0
    %1704 = vmatprep.subr.mxu0 0.0
    %1705 = vmatpush1.msra.mxu0 0.0
    %1706 = vmatprep.subr.mxu0 0.0
    %1707 = vmatpush1.msra.mxu0 0.0
    %1708 = vmatprep.subr.mxu0 0.0
    %1709 = vmatpush1.msra.mxu0 0.0
    %1710 = vmatprep.subr.mxu0 0.0
    %1711 = vmatpush1.msra.mxu0 0.0
    %1712 = vmatprep.subr.mxu0 0.0
    %1713 = vmatpush1.msra.mxu0 %v227
    %1714 = vmatprep.subr.mxu0 0.0
    %1715 = vmatpush1.msra.mxu0 %v226
    %1716 = vmatprep.subr.mxu0 0.0
    %1717 = vmatpush1.msra.mxu0 %v225
    %1718 = vmatprep.subr.mxu0 0.0
    %1719 = vmatpush1.msra.mxu0 %v224
    %1720 = vmatprep.subr.mxu0 0.0
    %1721 = vmatpush2.msra.mxu0 0.0
    %1722 = vmatprep.subr.mxu0 0.0
    %1723 = vmatpush2.msra.mxu0 0.0
    %1724 = vmatprep.subr.mxu0 0.0
    %1725 = vmatpush2.msra.mxu0 0.0
    %1726 = vmatprep.subr.mxu0 0.0
    %1727 = vmatpush2.msra.mxu0 0.0
    %1728 = vmatprep.subr.mxu0 0.0
    %1729 = vmatpush2.msra.mxu0 0.0
    %1730 = vmatprep.subr.mxu0 0.0
    %1731 = vmatpush2.msra.mxu0 0.0
    %1732 = vmatprep.subr.mxu0 0.0
    %1733 = vmatpush2.msra.mxu0 0.0
    %1734 = vmatprep.subr.mxu0 0.0
    %1735 = vmatpush2.msra.mxu0 0.0
    %1736 = vmatprep.subr.mxu0 0.0
    %1737 = vmatpush2.msra.mxu0 0.0
    %1738 = vmatprep.subr.mxu0 0.0
    %1739 = vmatpush2.msra.mxu0 0.0
    %1740 = vmatprep.subr.mxu0 0.0
    %1741 = vmatpush2.msra.mxu0 0.0
    %1742 = vmatprep.subr.mxu0 0.0
    %1743 = vmatpush2.msra.mxu0 0.0
    %1744 = vmatprep.subr.mxu0 0.0
    %1745 = vmatpush2.msra.mxu0 0.0
    %1746 = vmatprep.subr.mxu0 0.0
    %1747 = vmatpush2.msra.mxu0 0.0
    %1748 = vmatprep.subr.mxu0 0.0
    %1749 = vmatpush2.msra.mxu0 0.0
    %1750 = vmatprep.subr.mxu0 0.0
    %1751 = vmatpush2.msra.mxu0 0.0
    %1752 = vmatprep.mubr.f32.mxu0 0.0
    %1753 = vmatmul.mubr.f32.gmra.mxu0 %v1686
    %v1754 = vpop.f32.mrf.mxu0
    %v1755 = vadd.f32 %v1680, %v1754
    %v1756 = vpop.f32.mrf.mxu0
    %1757 = vdwg.mxu0
    %v1758 = vadd.f32 %v1755, %v241
    %v1759 = vxor.u32 %v1758, 2147483648
    %v1760 = vmul.f32 %v1759, 1.442695
    %v1761 = vpow.pop %v1760
    %v1762 = vadd.f32 %v1761, 1.0
    %v1763 = vrcp.pop %v1762
    %v1764 = vmul.f32 1.0, %v1763
    %v1765 = vtanh.pop %v1758
    %v1766 = vmul.f32 %v1764, %v1304
    %1768 = vrot.lane.b32.xlu0 %v1765, 64
    %v1769 = vpop.permute.xlu0 %1768
    %v1771 = vmul.f32 %v1764, %v1769
    %1773 = vrot.lane.b32.xlu0 %v1771, 32
    %v1774 = vpop.permute.xlu0 %1773
    %v1776 = vadd.f32 %v1766, %v1774
    %v1777 = vtanh.pop %v1776
    %1779 = vrot.lane.b32.xlu0 %v1777, 64
    %v1780 = vpop.permute.xlu0 %1779
    %v1782 = vmul.f32 %v1764, %v1780
    %1784 = vrot.lane.b32.xlu0 %v1782, 32
    %v1785 = vpop.permute.xlu0 %1784
    %v1786 = vsel %vm271, %v1785, 0
    %1788 = vmatprep.subr.mxu0 0.0
    %1789 = vmatpush1.msra.mxu0 0.0
    %1790 = vmatprep.subr.mxu0 0.0
    %1791 = vmatpush1.msra.mxu0 0.0
    %1792 = vmatprep.subr.mxu0 0.0
    %1793 = vmatpush1.msra.mxu0 0.0
    %1794 = vmatprep.subr.mxu0 0.0
    %1795 = vmatpush1.msra.mxu0 0.0
    %1796 = vmatprep.subr.mxu0 0.0
    %1797 = vmatpush1.msra.mxu0 0.0
    %1798 = vmatprep.subr.mxu0 0.0
    %1799 = vmatpush1.msra.mxu0 0.0
    %1800 = vmatprep.subr.mxu0 0.0
    %1801 = vmatpush1.msra.mxu0 0.0
    %1802 = vmatprep.subr.mxu0 0.0
    %1803 = vmatpush1.msra.mxu0 0.0
    %1804 = vmatprep.subr.mxu0 0.0
    %1805 = vmatpush1.msra.mxu0 0.0
    %1806 = vmatprep.subr.mxu0 0.0
    %1807 = vmatpush1.msra.mxu0 0.0
    %1808 = vmatprep.subr.mxu0 0.0
    %1809 = vmatpush1.msra.mxu0 0.0
    %1810 = vmatprep.subr.mxu0 0.0
    %1811 = vmatpush1.msra.mxu0 0.0
    %1812 = vmatprep.subr.mxu0 0.0
    %1813 = vmatpush1.msra.mxu0 %v235
    %1814 = vmatprep.subr.mxu0 0.0
    %1815 = vmatpush1.msra.mxu0 %v234
    %1816 = vmatprep.subr.mxu0 0.0
    %1817 = vmatpush1.msra.mxu0 %v233
    %1818 = vmatprep.subr.mxu0 0.0
    %1819 = vmatpush1.msra.mxu0 %v232
    %1820 = vmatprep.subr.mxu0 0.0
    %1821 = vmatpush2.msra.mxu0 0.0
    %1822 = vmatprep.subr.mxu0 0.0
    %1823 = vmatpush2.msra.mxu0 0.0
    %1824 = vmatprep.subr.mxu0 0.0
    %1825 = vmatpush2.msra.mxu0 0.0
    %1826 = vmatprep.subr.mxu0 0.0
    %1827 = vmatpush2.msra.mxu0 0.0
    %1828 = vmatprep.subr.mxu0 0.0
    %1829 = vmatpush2.msra.mxu0 0.0
    %1830 = vmatprep.subr.mxu0 0.0
    %1831 = vmatpush2.msra.mxu0 0.0
    %1832 = vmatprep.subr.mxu0 0.0
    %1833 = vmatpush2.msra.mxu0 0.0
    %1834 = vmatprep.subr.mxu0 0.0
    %1835 = vmatpush2.msra.mxu0 0.0
    %1836 = vmatprep.subr.mxu0 0.0
    %1837 = vmatpush2.msra.mxu0 0.0
    %1838 = vmatprep.subr.mxu0 0.0
    %1839 = vmatpush2.msra.mxu0 0.0
    %1840 = vmatprep.subr.mxu0 0.0
    %1841 = vmatpush2.msra.mxu0 0.0
    %1842 = vmatprep.subr.mxu0 0.0
    %1843 = vmatpush2.msra.mxu0 0.0
    %1844 = vmatprep.subr.mxu0 0.0
    %1845 = vmatpush2.msra.mxu0 0.0
    %1846 = vmatprep.subr.mxu0 0.0
    %1847 = vmatpush2.msra.mxu0 0.0
    %1848 = vmatprep.subr.mxu0 0.0
    %1849 = vmatpush2.msra.mxu0 0.0
    %1850 = vmatprep.subr.mxu0 0.0
    %1851 = vmatpush2.msra.mxu0 0.0
    %1852 = vmatprep.mubr.f32.mxu0 0.0
    %1853 = vmatmul.mubr.f32.gmra.mxu0 %v1786
    %v1854 = vpop.f32.mrf.mxu0
    %v1855 = vadd.f32 %v248, %v1854
    %v1856 = vpop.f32.mrf.mxu0
    %1857 = vdwg.mxu0
    %1858 = vmax.xlane.f32.xlu0 %v1855
    %v1859 = vpop.xlane.xlu0 %1858
    %v1860 = vsub.f32 %v1855, %v1859
    %v1861 = vmul.f32 %v1860, 1.442695
    %v1862 = vpow.pop %v1861
    %1863 = vadd.xlane.f32.xlu0 %v1862
    %v1864 = vpop.xlane.xlu0 %1863
    %v1865 = vlog2.pop %v1864
    %v1866 = vmul.f32 %v1865, 0.6931472
    %v1867 = vsub.f32 %v1860, %v1866
    %s1868 = scalar_lea.vmem [#allocation22], 16
    %1869 = vst [vmem:[%s1868] sm:$0xff] %v1867
    %vm1870 = vcmp.eq.f32.partialorder %v1855, %v1859
    %v1871 = vsel %vm1870, %v543, 128
    %v1872 = vand.u32 %v1871, 65535
    %v1873 = vshra.s32 %v1871, 16
    %v1874 = vcvt.s32.f32 %v1872
    %v1875 = vcvt.s32.f32 %v1873
    %1876 = vmin.xlane.f32.xlu0 %v1875
    %v1877 = vpop.xlane.xlu0 %1876
    %vm1878 = vcmp.eq.f32.partialorder %v1875, %v1877
    %v1879 = vsel %vm1878, %v1874, inf
    %1880 = vmin.xlane.f32.xlu0 %v1879
    %v1881 = vpop.xlane.xlu0 %1880
    %v1882 = vcvt.f32.s32 %v1881
    %v1883 = vcvt.f32.s32 %v1877
    %v1884 = vshll.u32 %v1883, 16
    %v1885 = vadd.s32 %v1884, %v1882
    %v1886 = vsel %vm546, %v1885, 128
    %vm1887 = vcmp.eq.s32.totalorder %v543, %v1886
    %v1888 = vsel %vm1887, 1.0, 0.0
    %v1889 = vrot.slane %v1888, 4
    %v1890 = vmax.f32 %v1888, %v1889
    %v1891 = vrot.slane %v1890, 2
    %v1892 = vmax.f32 %v1890, %v1891
    %v1893 = vrot.slane %v1892, 1
    %v1894 = vmax.f32 %v1892, %v1893
    %vm1895 = vcmp.gt.f32.partialorder %v1894, 0.0
    %v1896 = vsel %vm1895, 1, 0
    %vm1897 = vcmp.eq.s32.totalorder %v1896, 1
    %v1898 = vsel %vm1897, 1, 0
    %v1899 = vcvt.s32.f32 %v1898
    %v1901 = vsel %vm951, %v1899, %v1899
    %v1902 = vsel %vm953, %v1899, %v1901
    %v1903 = vsel %vm955, %v1899, %v1902
    %v1904 = vsel %vm957, %v1899, %v1903
    %v1905 = vsel %vm959, %v1899, %v1904
    %v1906 = vsel %vm961, %v1899, %v1905
    %1908 = vmatprep.subr.mxu0 0.0
    %1909 = vmatpush1.msra.mxu0 %v219
    %1910 = vmatprep.subr.mxu0 0.0
    %1911 = vmatpush1.msra.mxu0 %v218
    %1912 = vmatprep.subr.mxu0 0.0
    %1913 = vmatpush1.msra.mxu0 %v217
    %1914 = vmatprep.subr.mxu0 0.0
    %1915 = vmatpush1.msra.mxu0 %v216
    %1916 = vmatprep.subr.mxu0 0.0
    %1917 = vmatpush1.msra.mxu0 %v215
    %1918 = vmatprep.subr.mxu0 0.0
    %1919 = vmatpush1.msra.mxu0 %v214
    %1920 = vmatprep.subr.mxu0 0.0
    %1921 = vmatpush1.msra.mxu0 %v213
    %1922 = vmatprep.subr.mxu0 0.0
    %1923 = vmatpush1.msra.mxu0 %v212
    %1924 = vmatprep.subr.mxu0 0.0
    %1925 = vmatpush1.msra.mxu0 %v211
    %1926 = vmatprep.subr.mxu0 0.0
    %1927 = vmatpush1.msra.mxu0 %v210
    %1928 = vmatprep.subr.mxu0 0.0
    %1929 = vmatpush1.msra.mxu0 %v209
    %1930 = vmatprep.subr.mxu0 0.0
    %1931 = vmatpush1.msra.mxu0 %v208
    %1932 = vmatprep.subr.mxu0 0.0
    %1933 = vmatpush1.msra.mxu0 %v207
    %1934 = vmatprep.subr.mxu0 0.0
    %1935 = vmatpush1.msra.mxu0 %v206
    %1936 = vmatprep.subr.mxu0 0.0
    %1937 = vmatpush1.msra.mxu0 %v205
    %1938 = vmatprep.subr.mxu0 0.0
    %1939 = vmatpush1.msra.mxu0 %v204
    %1940 = vmatprep.subr.mxu0 0.0
    %1941 = vmatpush2.msra.mxu0 0.0
    %1942 = vmatprep.subr.mxu0 0.0
    %1943 = vmatpush2.msra.mxu0 0.0
    %1944 = vmatprep.subr.mxu0 0.0
    %1945 = vmatpush2.msra.mxu0 0.0
    %1946 = vmatprep.subr.mxu0 0.0
    %1947 = vmatpush2.msra.mxu0 0.0
    %1948 = vmatprep.subr.mxu0 0.0
    %1949 = vmatpush2.msra.mxu0 0.0
    %1950 = vmatprep.subr.mxu0 0.0
    %1951 = vmatpush2.msra.mxu0 0.0
    %1952 = vmatprep.subr.mxu0 0.0
    %1953 = vmatpush2.msra.mxu0 0.0
    %1954 = vmatprep.subr.mxu0 0.0
    %1955 = vmatpush2.msra.mxu0 0.0
    %1956 = vmatprep.subr.mxu0 0.0
    %1957 = vmatpush2.msra.mxu0 0.0
    %1958 = vmatprep.subr.mxu0 0.0
    %1959 = vmatpush2.msra.mxu0 0.0
    %1960 = vmatprep.subr.mxu0 0.0
    %1961 = vmatpush2.msra.mxu0 0.0
    %1962 = vmatprep.subr.mxu0 0.0
    %1963 = vmatpush2.msra.mxu0 0.0
    %1964 = vmatprep.subr.mxu0 0.0
    %1965 = vmatpush2.msra.mxu0 0.0
    %1966 = vmatprep.subr.mxu0 0.0
    %1967 = vmatpush2.msra.mxu0 0.0
    %1968 = vmatprep.subr.mxu0 0.0
    %1969 = vmatpush2.msra.mxu0 0.0
    %1970 = vmatprep.subr.mxu0 0.0
    %1971 = vmatpush2.msra.mxu0 0.0
    %1972 = vmatprep.mubr.f32.mxu0 0.0
    %1973 = vmatmul.mubr.f32.gmra.mxu0 %v1906
    %v1974 = vpop.f32.mrf.mxu0
    %v1975 = vadd.f32 0.0, %v1974
    %v1976 = vpop.f32.mrf.mxu0
    %1977 = vdwg.mxu0
    %s1978 = sadd.s32 %s1034, 2
    %s1979 = sld [smem:[#allocation4 + %s1978]]
    %p1980 = scmp.gt.s32.totalorder %s1979, 0
    %v1981 = vlaneseq
    %v1982 = vshrl.u32 %v1981, 7
    %v1983 = vsub.s32 0, %v1982
    %v1984 = vrot.slane %v1975, %v1983
    %s1985 = scalar_select %p1980, 1, 0
    %v1986 = vstv %s1985
    %vm1987 = vcmp.eq.s32.totalorder %v1986, 1
    %v1988 = vsel %vm1987, %v504, %v1984
    %v1989 = vadd.f32 %v1988, %v384
    %1990 = vmatprep.subr.mxu0 0.0
    %1991 = vmatpush1.msra.mxu0 0.0
    %1992 = vmatprep.subr.mxu0 0.0
    %1993 = vmatpush1.msra.mxu0 0.0
    %1994 = vmatprep.subr.mxu0 0.0
    %1995 = vmatpush1.msra.mxu0 0.0
    %1996 = vmatprep.subr.mxu0 0.0
    %1997 = vmatpush1.msra.mxu0 0.0
    %1998 = vmatprep.subr.mxu0 0.0
    %1999 = vmatpush1.msra.mxu0 0.0
    %2000 = vmatprep.subr.mxu0 0.0
    %2001 = vmatpush1.msra.mxu0 0.0
    %2002 = vmatprep.subr.mxu0 0.0
    %2003 = vmatpush1.msra.mxu0 0.0
    %2004 = vmatprep.subr.mxu0 0.0
    %2005 = vmatpush1.msra.mxu0 0.0
    %2006 = vmatprep.subr.mxu0 0.0
    %2007 = vmatpush1.msra.mxu0 0.0
    %2008 = vmatprep.subr.mxu0 0.0
    %2009 = vmatpush1.msra.mxu0 0.0
    %2010 = vmatprep.subr.mxu0 0.0
    %2011 = vmatpush1.msra.mxu0 0.0
    %2012 = vmatprep.subr.mxu0 0.0
    %2013 = vmatpush1.msra.mxu0 0.0
    %2014 = vmatprep.subr.mxu0 0.0
    %2015 = vmatpush1.msra.mxu0 %v223
    %2016 = vmatprep.subr.mxu0 0.0
    %2017 = vmatpush1.msra.mxu0 %v222
    %2018 = vmatprep.subr.mxu0 0.0
    %2019 = vmatpush1.msra.mxu0 %v221
    %2020 = vmatprep.subr.mxu0 0.0
    %2021 = vmatpush1.msra.mxu0 %v220
    %2022 = vmatprep.subr.mxu0 0.0
    %2023 = vmatpush2.msra.mxu0 0.0
    %2024 = vmatprep.subr.mxu0 0.0
    %2025 = vmatpush2.msra.mxu0 0.0
    %2026 = vmatprep.subr.mxu0 0.0
    %2027 = vmatpush2.msra.mxu0 0.0
    %2028 = vmatprep.subr.mxu0 0.0
    %2029 = vmatpush2.msra.mxu0 0.0
    %2030 = vmatprep.subr.mxu0 0.0
    %2031 = vmatpush2.msra.mxu0 0.0
    %2032 = vmatprep.subr.mxu0 0.0
    %2033 = vmatpush2.msra.mxu0 0.0
    %2034 = vmatprep.subr.mxu0 0.0
    %2035 = vmatpush2.msra.mxu0 0.0
    %2036 = vmatprep.subr.mxu0 0.0
    %2037 = vmatpush2.msra.mxu0 0.0
    %2038 = vmatprep.subr.mxu0 0.0
    %2039 = vmatpush2.msra.mxu0 0.0
    %2040 = vmatprep.subr.mxu0 0.0
    %2041 = vmatpush2.msra.mxu0 0.0
    %2042 = vmatprep.subr.mxu0 0.0
    %2043 = vmatpush2.msra.mxu0 0.0
    %2044 = vmatprep.subr.mxu0 0.0
    %2045 = vmatpush2.msra.mxu0 0.0
    %2046 = vmatprep.subr.mxu0 0.0
    %2047 = vmatpush2.msra.mxu0 0.0
    %2048 = vmatprep.subr.mxu0 0.0
    %2049 = vmatpush2.msra.mxu0 0.0
    %2050 = vmatprep.subr.mxu0 0.0
    %2051 = vmatpush2.msra.mxu0 0.0
    %2052 = vmatprep.subr.mxu0 0.0
    %2053 = vmatpush2.msra.mxu0 0.0
    %2054 = vmatprep.mubr.f32.mxu0 0.0
    %2055 = vmatmul.mubr.f32.gmra.mxu0 %v1686
    %v2056 = vpop.f32.mrf.mxu0
    %v2057 = vadd.f32 0.0, %v2056
    %v2058 = vpop.f32.mrf.mxu0
    %2059 = vdwg.mxu0
    %v2060 = vadd.f32 %v1989, %v2057
    %v2061 = vxor.u32 %v2060, 2147483648
    %v2062 = vmul.f32 %v2061, 1.442695
    %v2063 = vpow.pop %v2062
    %v2064 = vadd.f32 %v2063, 1.0
    %v2065 = vrcp.pop %v2064
    %v2066 = vmul.f32 1.0, %v2065
    %v2067 = vtanh.pop %v2060
    %v2068 = vmul.f32 %v2066, %v1606
    %2070 = vrot.lane.b32.xlu0 %v2067, 64
    %v2071 = vpop.permute.xlu0 %2070
    %v2073 = vmul.f32 %v2066, %v2071
    %2075 = vrot.lane.b32.xlu0 %v2073, 32
    %v2076 = vpop.permute.xlu0 %2075
    %v2078 = vadd.f32 %v2068, %v2076
    %v2079 = vtanh.pop %v2078
    %2081 = vrot.lane.b32.xlu0 %v2079, 64
    %v2082 = vpop.permute.xlu0 %2081
    %v2084 = vmul.f32 %v2066, %v2082
    %2085 = vmatprep.subr.mxu0 0.0
    %2086 = vmatpush1.msra.mxu0 0.0
    %2087 = vmatprep.subr.mxu0 0.0
    %2088 = vmatpush1.msra.mxu0 0.0
    %2089 = vmatprep.subr.mxu0 0.0
    %2090 = vmatpush1.msra.mxu0 0.0
    %2091 = vmatprep.subr.mxu0 0.0
    %2092 = vmatpush1.msra.mxu0 0.0
    %2093 = vmatprep.subr.mxu0 0.0
    %2094 = vmatpush1.msra.mxu0 0.0
    %2095 = vmatprep.subr.mxu0 0.0
    %2096 = vmatpush1.msra.mxu0 0.0
    %2097 = vmatprep.subr.mxu0 0.0
    %2098 = vmatpush1.msra.mxu0 0.0
    %2099 = vmatprep.subr.mxu0 0.0
    %2100 = vmatpush1.msra.mxu0 0.0
    %2101 = vmatprep.subr.mxu0 0.0
    %2102 = vmatpush1.msra.mxu0 0.0
    %2103 = vmatprep.subr.mxu0 0.0
    %2104 = vmatpush1.msra.mxu0 0.0
    %2105 = vmatprep.subr.mxu0 0.0
    %2106 = vmatpush1.msra.mxu0 0.0
    %2107 = vmatprep.subr.mxu0 0.0
    %2108 = vmatpush1.msra.mxu0 0.0
    %2109 = vmatprep.subr.mxu0 0.0
    %2110 = vmatpush1.msra.mxu0 %v231
    %2111 = vmatprep.subr.mxu0 0.0
    %2112 = vmatpush1.msra.mxu0 %v230
    %2113 = vmatprep.subr.mxu0 0.0
    %2114 = vmatpush1.msra.mxu0 %v229
    %2115 = vmatprep.subr.mxu0 0.0
    %2116 = vmatpush1.msra.mxu0 %v228
    %2117 = vmatprep.subr.mxu0 0.0
    %2118 = vmatpush2.msra.mxu0 0.0
    %2119 = vmatprep.subr.mxu0 0.0
    %2120 = vmatpush2.msra.mxu0 0.0
    %2121 = vmatprep.subr.mxu0 0.0
    %2122 = vmatpush2.msra.mxu0 0.0
    %2123 = vmatprep.subr.mxu0 0.0
    %2124 = vmatpush2.msra.mxu0 0.0
    %2125 = vmatprep.subr.mxu0 0.0
    %2126 = vmatpush2.msra.mxu0 0.0
    %2127 = vmatprep.subr.mxu0 0.0
    %2128 = vmatpush2.msra.mxu0 0.0
    %2129 = vmatprep.subr.mxu0 0.0
    %2130 = vmatpush2.msra.mxu0 0.0
    %2131 = vmatprep.subr.mxu0 0.0
    %2132 = vmatpush2.msra.mxu0 0.0
    %2133 = vmatprep.subr.mxu0 0.0
    %2134 = vmatpush2.msra.mxu0 0.0
    %2135 = vmatprep.subr.mxu0 0.0
    %2136 = vmatpush2.msra.mxu0 0.0
    %2137 = vmatprep.subr.mxu0 0.0
    %2138 = vmatpush2.msra.mxu0 0.0
    %2139 = vmatprep.subr.mxu0 0.0
    %2140 = vmatpush2.msra.mxu0 0.0
    %2141 = vmatprep.subr.mxu0 0.0
    %2142 = vmatpush2.msra.mxu0 0.0
    %2143 = vmatprep.subr.mxu0 0.0
    %2144 = vmatpush2.msra.mxu0 0.0
    %2145 = vmatprep.subr.mxu0 0.0
    %2146 = vmatpush2.msra.mxu0 0.0
    %2147 = vmatprep.subr.mxu0 0.0
    %2148 = vmatpush2.msra.mxu0 0.0
    %2149 = vmatprep.mubr.f32.mxu0 0.0
    %2150 = vmatmul.mubr.f32.gmra.mxu0 %v1786
    %v2151 = vpop.f32.mrf.mxu0
    %v2152 = vadd.f32 0.0, %v2151
    %v2153 = vpop.f32.mrf.mxu0
    %2154 = vdwg.mxu0
    %2156 = vrot.lane.b32.xlu0 %v2084, 32
    %v2157 = vpop.permute.xlu0 %2156
    %v2158 = vsel %vm271, %v2157, 0
    %2160 = vmatprep.subr.mxu0 0.0
    %2161 = vmatpush1.msra.mxu0 0.0
    %2162 = vmatprep.subr.mxu0 0.0
    %2163 = vmatpush1.msra.mxu0 0.0
    %2164 = vmatprep.subr.mxu0 0.0
    %2165 = vmatpush1.msra.mxu0 0.0
    %2166 = vmatprep.subr.mxu0 0.0
    %2167 = vmatpush1.msra.mxu0 0.0
    %2168 = vmatprep.subr.mxu0 0.0
    %2169 = vmatpush1.msra.mxu0 0.0
    %2170 = vmatprep.subr.mxu0 0.0
    %2171 = vmatpush1.msra.mxu0 0.0
    %2172 = vmatprep.subr.mxu0 0.0
    %2173 = vmatpush1.msra.mxu0 0.0
    %2174 = vmatprep.subr.mxu0 0.0
    %2175 = vmatpush1.msra.mxu0 0.0
    %2176 = vmatprep.subr.mxu0 0.0
    %2177 = vmatpush1.msra.mxu0 0.0
    %2178 = vmatprep.subr.mxu0 0.0
    %2179 = vmatpush1.msra.mxu0 0.0
    %2180 = vmatprep.subr.mxu0 0.0
    %2181 = vmatpush1.msra.mxu0 0.0
    %2182 = vmatprep.subr.mxu0 0.0
    %2183 = vmatpush1.msra.mxu0 0.0
    %2184 = vmatprep.subr.mxu0 0.0
    %2185 = vmatpush1.msra.mxu0 %v227
    %2186 = vmatprep.subr.mxu0 0.0
    %2187 = vmatpush1.msra.mxu0 %v226
    %2188 = vmatprep.subr.mxu0 0.0
    %2189 = vmatpush1.msra.mxu0 %v225
    %2190 = vmatprep.subr.mxu0 0.0
    %2191 = vmatpush1.msra.mxu0 %v224
    %2192 = vmatprep.subr.mxu0 0.0
    %2193 = vmatpush2.msra.mxu0 0.0
    %2194 = vmatprep.subr.mxu0 0.0
    %2195 = vmatpush2.msra.mxu0 0.0
    %2196 = vmatprep.subr.mxu0 0.0
    %2197 = vmatpush2.msra.mxu0 0.0
    %2198 = vmatprep.subr.mxu0 0.0
    %2199 = vmatpush2.msra.mxu0 0.0
    %2200 = vmatprep.subr.mxu0 0.0
    %2201 = vmatpush2.msra.mxu0 0.0
    %2202 = vmatprep.subr.mxu0 0.0
    %2203 = vmatpush2.msra.mxu0 0.0
    %2204 = vmatprep.subr.mxu0 0.0
    %2205 = vmatpush2.msra.mxu0 0.0
    %2206 = vmatprep.subr.mxu0 0.0
    %2207 = vmatpush2.msra.mxu0 0.0
    %2208 = vmatprep.subr.mxu0 0.0
    %2209 = vmatpush2.msra.mxu0 0.0
    %2210 = vmatprep.subr.mxu0 0.0
    %2211 = vmatpush2.msra.mxu0 0.0
    %2212 = vmatprep.subr.mxu0 0.0
    %2213 = vmatpush2.msra.mxu0 0.0
    %2214 = vmatprep.subr.mxu0 0.0
    %2215 = vmatpush2.msra.mxu0 0.0
    %2216 = vmatprep.subr.mxu0 0.0
    %2217 = vmatpush2.msra.mxu0 0.0
    %2218 = vmatprep.subr.mxu0 0.0
    %2219 = vmatpush2.msra.mxu0 0.0
    %2220 = vmatprep.subr.mxu0 0.0
    %2221 = vmatpush2.msra.mxu0 0.0
    %2222 = vmatprep.subr.mxu0 0.0
    %2223 = vmatpush2.msra.mxu0 0.0
    %2224 = vmatprep.mubr.f32.mxu0 0.0
    %2225 = vmatmul.mubr.f32.gmra.mxu0 %v2158
    %v2226 = vpop.f32.mrf.mxu0
    %v2227 = vadd.f32 %v2152, %v2226
    %v2228 = vpop.f32.mrf.mxu0
    %2229 = vdwg.mxu0
    %v2230 = vadd.f32 %v2227, %v241
    %v2231 = vxor.u32 %v2230, 2147483648
    %v2232 = vmul.f32 %v2231, 1.442695
    %v2233 = vpow.pop %v2232
    %v2234 = vadd.f32 %v2233, 1.0
    %v2235 = vrcp.pop %v2234
    %v2236 = vmul.f32 1.0, %v2235
    %v2237 = vtanh.pop %v2230
    %v2238 = vmul.f32 %v2236, %v1776
    %2240 = vrot.lane.b32.xlu0 %v2237, 64
    %v2241 = vpop.permute.xlu0 %2240
    %v2243 = vmul.f32 %v2236, %v2241
    %2245 = vrot.lane.b32.xlu0 %v2243, 32
    %v2246 = vpop.permute.xlu0 %2245
    %v2248 = vadd.f32 %v2238, %v2246
    %v2249 = vtanh.pop %v2248
    %2251 = vrot.lane.b32.xlu0 %v2249, 64
    %v2252 = vpop.permute.xlu0 %2251
    %v2254 = vmul.f32 %v2236, %v2252
    %2256 = vrot.lane.b32.xlu0 %v2254, 32
    %v2257 = vpop.permute.xlu0 %2256
    %v2258 = vsel %vm271, %v2257, 0
    %2260 = vmatprep.subr.mxu0 0.0
    %2261 = vmatpush1.msra.mxu0 0.0
    %2262 = vmatprep.subr.mxu0 0.0
    %2263 = vmatpush1.msra.mxu0 0.0
    %2264 = vmatprep.subr.mxu0 0.0
    %2265 = vmatpush1.msra.mxu0 0.0
    %2266 = vmatprep.subr.mxu0 0.0
    %2267 = vmatpush1.msra.mxu0 0.0
    %2268 = vmatprep.subr.mxu0 0.0
    %2269 = vmatpush1.msra.mxu0 0.0
    %2270 = vmatprep.subr.mxu0 0.0
    %2271 = vmatpush1.msra.mxu0 0.0
    %2272 = vmatprep.subr.mxu0 0.0
    %2273 = vmatpush1.msra.mxu0 0.0
    %2274 = vmatprep.subr.mxu0 0.0
    %2275 = vmatpush1.msra.mxu0 0.0
    %2276 = vmatprep.subr.mxu0 0.0
    %2277 = vmatpush1.msra.mxu0 0.0
    %2278 = vmatprep.subr.mxu0 0.0
    %2279 = vmatpush1.msra.mxu0 0.0
    %2280 = vmatprep.subr.mxu0 0.0
    %2281 = vmatpush1.msra.mxu0 0.0
    %2282 = vmatprep.subr.mxu0 0.0
    %2283 = vmatpush1.msra.mxu0 0.0
    %2284 = vmatprep.subr.mxu0 0.0
    %2285 = vmatpush1.msra.mxu0 %v235
    %2286 = vmatprep.subr.mxu0 0.0
    %2287 = vmatpush1.msra.mxu0 %v234
    %2288 = vmatprep.subr.mxu0 0.0
    %2289 = vmatpush1.msra.mxu0 %v233
    %2290 = vmatprep.subr.mxu0 0.0
    %2291 = vmatpush1.msra.mxu0 %v232
    %2292 = vmatprep.subr.mxu0 0.0
    %2293 = vmatpush2.msra.mxu0 0.0
    %2294 = vmatprep.subr.mxu0 0.0
    %2295 = vmatpush2.msra.mxu0 0.0
    %2296 = vmatprep.subr.mxu0 0.0
    %2297 = vmatpush2.msra.mxu0 0.0
    %2298 = vmatprep.subr.mxu0 0.0
    %2299 = vmatpush2.msra.mxu0 0.0
    %2300 = vmatprep.subr.mxu0 0.0
    %2301 = vmatpush2.msra.mxu0 0.0
    %2302 = vmatprep.subr.mxu0 0.0
    %2303 = vmatpush2.msra.mxu0 0.0
    %2304 = vmatprep.subr.mxu0 0.0
    %2305 = vmatpush2.msra.mxu0 0.0
    %2306 = vmatprep.subr.mxu0 0.0
    %2307 = vmatpush2.msra.mxu0 0.0
    %2308 = vmatprep.subr.mxu0 0.0
    %2309 = vmatpush2.msra.mxu0 0.0
    %2310 = vmatprep.subr.mxu0 0.0
    %2311 = vmatpush2.msra.mxu0 0.0
    %2312 = vmatprep.subr.mxu0 0.0
    %2313 = vmatpush2.msra.mxu0 0.0
    %2314 = vmatprep.subr.mxu0 0.0
    %2315 = vmatpush2.msra.mxu0 0.0
    %2316 = vmatprep.subr.mxu0 0.0
    %2317 = vmatpush2.msra.mxu0 0.0
    %2318 = vmatprep.subr.mxu0 0.0
    %2319 = vmatpush2.msra.mxu0 0.0
    %2320 = vmatprep.subr.mxu0 0.0
    %2321 = vmatpush2.msra.mxu0 0.0
    %2322 = vmatprep.subr.mxu0 0.0
    %2323 = vmatpush2.msra.mxu0 0.0
    %2324 = vmatprep.mubr.f32.mxu0 0.0
    %2325 = vmatmul.mubr.f32.gmra.mxu0 %v2258
    %v2326 = vpop.f32.mrf.mxu0
    %v2327 = vadd.f32 %v248, %v2326
    %v2328 = vpop.f32.mrf.mxu0
    %2329 = vdwg.mxu0
    %2330 = vmax.xlane.f32.xlu0 %v2327
    %v2331 = vpop.xlane.xlu0 %2330
    %v2332 = vsub.f32 %v2327, %v2331
    %v2333 = vmul.f32 %v2332, 1.442695
    %v2334 = vpow.pop %v2333
    %2335 = vadd.xlane.f32.xlu0 %v2334
    %v2336 = vpop.xlane.xlu0 %2335
    %v2337 = vlog2.pop %v2336
    %v2338 = vmul.f32 %v2337, 0.6931472
    %v2339 = vsub.f32 %v2332, %v2338
    %s2340 = scalar_lea.vmem [#allocation22], 24
    %2341 = vst [vmem:[%s2340] sm:$0xff] %v2339
    %vm2342 = vcmp.eq.f32.partialorder %v2327, %v2331
    %v2343 = vsel %vm2342, %v543, 128
    %v2344 = vand.u32 %v2343, 65535
    %v2345 = vshra.s32 %v2343, 16
    %v2346 = vcvt.s32.f32 %v2344
    %v2347 = vcvt.s32.f32 %v2345
    %2348 = vmin.xlane.f32.xlu0 %v2347
    %v2349 = vpop.xlane.xlu0 %2348
    %vm2350 = vcmp.eq.f32.partialorder %v2347, %v2349
    %v2351 = vsel %vm2350, %v2346, inf
    %2352 = vmin.xlane.f32.xlu0 %v2351
    %v2353 = vpop.xlane.xlu0 %2352
    %v2354 = vcvt.f32.s32 %v2353
    %v2355 = vcvt.f32.s32 %v2349
    %v2356 = vshll.u32 %v2355, 16
    %v2357 = vadd.s32 %v2356, %v2354
    %v2358 = vsel %vm546, %v2357, 128
    %vm2359 = vcmp.eq.s32.totalorder %v543, %v2358
    %v2360 = vsel %vm2359, 1.0, 0.0
    %v2361 = vrot.slane %v2360, 4
    %v2362 = vmax.f32 %v2360, %v2361
    %v2363 = vrot.slane %v2362, 2
    %v2364 = vmax.f32 %v2362, %v2363
    %v2365 = vrot.slane %v2364, 1
    %v2366 = vmax.f32 %v2364, %v2365
    %vm2367 = vcmp.gt.f32.partialorder %v2366, 0.0
    %v2368 = vsel %vm2367, 1, 0
    %vm2369 = vcmp.eq.s32.totalorder %v2368, 1
    %v2370 = vsel %vm2369, 1, 0
    %v2371 = vcvt.s32.f32 %v2370
    %v2373 = vsel %vm951, %v2371, %v2371
    %v2374 = vsel %vm953, %v2371, %v2373
    %v2375 = vsel %vm955, %v2371, %v2374
    %v2376 = vsel %vm957, %v2371, %v2375
    %v2377 = vsel %vm959, %v2371, %v2376
    %v2378 = vsel %vm961, %v2371, %v2377
    %2380 = vmatprep.subr.mxu0 0.0
    %2381 = vmatpush1.msra.mxu0 %v219
    %2382 = vmatprep.subr.mxu0 0.0
    %2383 = vmatpush1.msra.mxu0 %v218
    %2384 = vmatprep.subr.mxu0 0.0
    %2385 = vmatpush1.msra.mxu0 %v217
    %2386 = vmatprep.subr.mxu0 0.0
    %2387 = vmatpush1.msra.mxu0 %v216
    %2388 = vmatprep.subr.mxu0 0.0
    %2389 = vmatpush1.msra.mxu0 %v215
    %2390 = vmatprep.subr.mxu0 0.0
    %2391 = vmatpush1.msra.mxu0 %v214
    %2392 = vmatprep.subr.mxu0 0.0
    %2393 = vmatpush1.msra.mxu0 %v213
    %2394 = vmatprep.subr.mxu0 0.0
    %2395 = vmatpush1.msra.mxu0 %v212
    %2396 = vmatprep.subr.mxu0 0.0
    %2397 = vmatpush1.msra.mxu0 %v211
    %2398 = vmatprep.subr.mxu0 0.0
    %2399 = vmatpush1.msra.mxu0 %v210
    %2400 = vmatprep.subr.mxu0 0.0
    %2401 = vmatpush1.msra.mxu0 %v209
    %2402 = vmatprep.subr.mxu0 0.0
    %2403 = vmatpush1.msra.mxu0 %v208
    %2404 = vmatprep.subr.mxu0 0.0
    %2405 = vmatpush1.msra.mxu0 %v207
    %2406 = vmatprep.subr.mxu0 0.0
    %2407 = vmatpush1.msra.mxu0 %v206
    %2408 = vmatprep.subr.mxu0 0.0
    %2409 = vmatpush1.msra.mxu0 %v205
    %2410 = vmatprep.subr.mxu0 0.0
    %2411 = vmatpush1.msra.mxu0 %v204
    %2412 = vmatprep.subr.mxu0 0.0
    %2413 = vmatpush2.msra.mxu0 0.0
    %2414 = vmatprep.subr.mxu0 0.0
    %2415 = vmatpush2.msra.mxu0 0.0
    %2416 = vmatprep.subr.mxu0 0.0
    %2417 = vmatpush2.msra.mxu0 0.0
    %2418 = vmatprep.subr.mxu0 0.0
    %2419 = vmatpush2.msra.mxu0 0.0
    %2420 = vmatprep.subr.mxu0 0.0
    %2421 = vmatpush2.msra.mxu0 0.0
    %2422 = vmatprep.subr.mxu0 0.0
    %2423 = vmatpush2.msra.mxu0 0.0
    %2424 = vmatprep.subr.mxu0 0.0
    %2425 = vmatpush2.msra.mxu0 0.0
    %2426 = vmatprep.subr.mxu0 0.0
    %2427 = vmatpush2.msra.mxu0 0.0
    %2428 = vmatprep.subr.mxu0 0.0
    %2429 = vmatpush2.msra.mxu0 0.0
    %2430 = vmatprep.subr.mxu0 0.0
    %2431 = vmatpush2.msra.mxu0 0.0
    %2432 = vmatprep.subr.mxu0 0.0
    %2433 = vmatpush2.msra.mxu0 0.0
    %2434 = vmatprep.subr.mxu0 0.0
    %2435 = vmatpush2.msra.mxu0 0.0
    %2436 = vmatprep.subr.mxu0 0.0
    %2437 = vmatpush2.msra.mxu0 0.0
    %2438 = vmatprep.subr.mxu0 0.0
    %2439 = vmatpush2.msra.mxu0 0.0
    %2440 = vmatprep.subr.mxu0 0.0
    %2441 = vmatpush2.msra.mxu0 0.0
    %2442 = vmatprep.subr.mxu0 0.0
    %2443 = vmatpush2.msra.mxu0 0.0
    %2444 = vmatprep.mubr.f32.mxu0 0.0
    %2445 = vmatmul.mubr.f32.gmra.mxu0 %v2378
    %v2446 = vpop.f32.mrf.mxu0
    %v2447 = vadd.f32 0.0, %v2446
    %v2448 = vpop.f32.mrf.mxu0
    %2449 = vdwg.mxu0
    %s2450 = sadd.s32 %s1034, 3
    %s2451 = sld [smem:[#allocation4 + %s2450]]
    %p2452 = scmp.gt.s32.totalorder %s2451, 0
    %v2453 = vlaneseq
    %v2454 = vshrl.u32 %v2453, 7
    %v2455 = vsub.s32 0, %v2454
    %v2456 = vrot.slane %v2447, %v2455
    %s2457 = scalar_select %p2452, 1, 0
    %v2458 = vstv %s2457
    %vm2459 = vcmp.eq.s32.totalorder %v2458, 1
    %v2460 = vsel %vm2459, %v509, %v2456
    %v2461 = vadd.f32 %v2460, %v389
    %2462 = vmatprep.subr.mxu0 0.0
    %2463 = vmatpush1.msra.mxu0 0.0
    %2464 = vmatprep.subr.mxu0 0.0
    %2465 = vmatpush1.msra.mxu0 0.0
    %2466 = vmatprep.subr.mxu0 0.0
    %2467 = vmatpush1.msra.mxu0 0.0
    %2468 = vmatprep.subr.mxu0 0.0
    %2469 = vmatpush1.msra.mxu0 0.0
    %2470 = vmatprep.subr.mxu0 0.0
    %2471 = vmatpush1.msra.mxu0 0.0
    %2472 = vmatprep.subr.mxu0 0.0
    %2473 = vmatpush1.msra.mxu0 0.0
    %2474 = vmatprep.subr.mxu0 0.0
    %2475 = vmatpush1.msra.mxu0 0.0
    %2476 = vmatprep.subr.mxu0 0.0
    %2477 = vmatpush1.msra.mxu0 0.0
    %2478 = vmatprep.subr.mxu0 0.0
    %2479 = vmatpush1.msra.mxu0 0.0
    %2480 = vmatprep.subr.mxu0 0.0
    %2481 = vmatpush1.msra.mxu0 0.0
    %2482 = vmatprep.subr.mxu0 0.0
    %2483 = vmatpush1.msra.mxu0 0.0
    %2484 = vmatprep.subr.mxu0 0.0
    %2485 = vmatpush1.msra.mxu0 0.0
    %2486 = vmatprep.subr.mxu0 0.0
    %2487 = vmatpush1.msra.mxu0 %v223
    %2488 = vmatprep.subr.mxu0 0.0
    %2489 = vmatpush1.msra.mxu0 %v222
    %2490 = vmatprep.subr.mxu0 0.0
    %2491 = vmatpush1.msra.mxu0 %v221
    %2492 = vmatprep.subr.mxu0 0.0
    %2493 = vmatpush1.msra.mxu0 %v220
    %2494 = vmatprep.subr.mxu0 0.0
    %2495 = vmatpush2.msra.mxu0 0.0
    %2496 = vmatprep.subr.mxu0 0.0
    %2497 = vmatpush2.msra.mxu0 0.0
    %2498 = vmatprep.subr.mxu0 0.0
    %2499 = vmatpush2.msra.mxu0 0.0
    %2500 = vmatprep.subr.mxu0 0.0
    %2501 = vmatpush2.msra.mxu0 0.0
    %2502 = vmatprep.subr.mxu0 0.0
    %2503 = vmatpush2.msra.mxu0 0.0
    %2504 = vmatprep.subr.mxu0 0.0
    %2505 = vmatpush2.msra.mxu0 0.0
    %2506 = vmatprep.subr.mxu0 0.0
    %2507 = vmatpush2.msra.mxu0 0.0
    %2508 = vmatprep.subr.mxu0 0.0
    %2509 = vmatpush2.msra.mxu0 0.0
    %2510 = vmatprep.subr.mxu0 0.0
    %2511 = vmatpush2.msra.mxu0 0.0
    %2512 = vmatprep.subr.mxu0 0.0
    %2513 = vmatpush2.msra.mxu0 0.0
    %2514 = vmatprep.subr.mxu0 0.0
    %2515 = vmatpush2.msra.mxu0 0.0
    %2516 = vmatprep.subr.mxu0 0.0
    %2517 = vmatpush2.msra.mxu0 0.0
    %2518 = vmatprep.subr.mxu0 0.0
    %2519 = vmatpush2.msra.mxu0 0.0
    %2520 = vmatprep.subr.mxu0 0.0
    %2521 = vmatpush2.msra.mxu0 0.0
    %2522 = vmatprep.subr.mxu0 0.0
    %2523 = vmatpush2.msra.mxu0 0.0
    %2524 = vmatprep.subr.mxu0 0.0
    %2525 = vmatpush2.msra.mxu0 0.0
    %2526 = vmatprep.mubr.f32.mxu0 0.0
    %2527 = vmatmul.mubr.f32.gmra.mxu0 %v2158
    %v2528 = vpop.f32.mrf.mxu0
    %v2529 = vadd.f32 0.0, %v2528
    %v2530 = vpop.f32.mrf.mxu0
    %2531 = vdwg.mxu0
    %v2532 = vadd.f32 %v2461, %v2529
    %v2533 = vxor.u32 %v2532, 2147483648
    %v2534 = vmul.f32 %v2533, 1.442695
    %v2535 = vpow.pop %v2534
    %v2536 = vadd.f32 %v2535, 1.0
    %v2537 = vrcp.pop %v2536
    %v2538 = vmul.f32 1.0, %v2537
    %v2539 = vtanh.pop %v2532
    %v2540 = vmul.f32 %v2538, %v2078
    %2542 = vrot.lane.b32.xlu0 %v2539, 64
    %v2543 = vpop.permute.xlu0 %2542
    %v2545 = vmul.f32 %v2538, %v2543
    %2547 = vrot.lane.b32.xlu0 %v2545, 32
    %v2548 = vpop.permute.xlu0 %2547
    %v2550 = vadd.f32 %v2540, %v2548
    %v2551 = vtanh.pop %v2550
    %2553 = vrot.lane.b32.xlu0 %v2551, 64
    %v2554 = vpop.permute.xlu0 %2553
    %v2556 = vmul.f32 %v2538, %v2554
    %2557 = vmatprep.subr.mxu0 0.0
    %2558 = vmatpush1.msra.mxu0 0.0
    %2559 = vmatprep.subr.mxu0 0.0
    %2560 = vmatpush1.msra.mxu0 0.0
    %2561 = vmatprep.subr.mxu0 0.0
    %2562 = vmatpush1.msra.mxu0 0.0
    %2563 = vmatprep.subr.mxu0 0.0
    %2564 = vmatpush1.msra.mxu0 0.0
    %2565 = vmatprep.subr.mxu0 0.0
    %2566 = vmatpush1.msra.mxu0 0.0
    %2567 = vmatprep.subr.mxu0 0.0
    %2568 = vmatpush1.msra.mxu0 0.0
    %2569 = vmatprep.subr.mxu0 0.0
    %2570 = vmatpush1.msra.mxu0 0.0
    %2571 = vmatprep.subr.mxu0 0.0
    %2572 = vmatpush1.msra.mxu0 0.0
    %2573 = vmatprep.subr.mxu0 0.0
    %2574 = vmatpush1.msra.mxu0 0.0
    %2575 = vmatprep.subr.mxu0 0.0
    %2576 = vmatpush1.msra.mxu0 0.0
    %2577 = vmatprep.subr.mxu0 0.0
    %2578 = vmatpush1.msra.mxu0 0.0
    %2579 = vmatprep.subr.mxu0 0.0
    %2580 = vmatpush1.msra.mxu0 0.0
    %2581 = vmatprep.subr.mxu0 0.0
    %2582 = vmatpush1.msra.mxu0 %v231
    %2583 = vmatprep.subr.mxu0 0.0
    %2584 = vmatpush1.msra.mxu0 %v230
    %2585 = vmatprep.subr.mxu0 0.0
    %2586 = vmatpush1.msra.mxu0 %v229
    %2587 = vmatprep.subr.mxu0 0.0
    %2588 = vmatpush1.msra.mxu0 %v228
    %2589 = vmatprep.subr.mxu0 0.0
    %2590 = vmatpush2.msra.mxu0 0.0
    %2591 = vmatprep.subr.mxu0 0.0
    %2592 = vmatpush2.msra.mxu0 0.0
    %2593 = vmatprep.subr.mxu0 0.0
    %2594 = vmatpush2.msra.mxu0 0.0
    %2595 = vmatprep.subr.mxu0 0.0
    %2596 = vmatpush2.msra.mxu0 0.0
    %2597 = vmatprep.subr.mxu0 0.0
    %2598 = vmatpush2.msra.mxu0 0.0
    %2599 = vmatprep.subr.mxu0 0.0
    %2600 = vmatpush2.msra.mxu0 0.0
    %2601 = vmatprep.subr.mxu0 0.0
    %2602 = vmatpush2.msra.mxu0 0.0
    %2603 = vmatprep.subr.mxu0 0.0
    %2604 = vmatpush2.msra.mxu0 0.0
    %2605 = vmatprep.subr.mxu0 0.0
    %2606 = vmatpush2.msra.mxu0 0.0
    %2607 = vmatprep.subr.mxu0 0.0
    %2608 = vmatpush2.msra.mxu0 0.0
    %2609 = vmatprep.subr.mxu0 0.0
    %2610 = vmatpush2.msra.mxu0 0.0
    %2611 = vmatprep.subr.mxu0 0.0
    %2612 = vmatpush2.msra.mxu0 0.0
    %2613 = vmatprep.subr.mxu0 0.0
    %2614 = vmatpush2.msra.mxu0 0.0
    %2615 = vmatprep.subr.mxu0 0.0
    %2616 = vmatpush2.msra.mxu0 0.0
    %2617 = vmatprep.subr.mxu0 0.0
    %2618 = vmatpush2.msra.mxu0 0.0
    %2619 = vmatprep.subr.mxu0 0.0
    %2620 = vmatpush2.msra.mxu0 0.0
    %2621 = vmatprep.mubr.f32.mxu0 0.0
    %2622 = vmatmul.mubr.f32.gmra.mxu0 %v2258
    %v2623 = vpop.f32.mrf.mxu0
    %v2624 = vadd.f32 0.0, %v2623
    %v2625 = vpop.f32.mrf.mxu0
    %2626 = vdwg.mxu0
    %2628 = vrot.lane.b32.xlu0 %v2556, 32
    %v2629 = vpop.permute.xlu0 %2628
    %v2630 = vsel %vm271, %v2629, 0
    %2632 = vmatprep.subr.mxu0 0.0
    %2633 = vmatpush1.msra.mxu0 0.0
    %2634 = vmatprep.subr.mxu0 0.0
    %2635 = vmatpush1.msra.mxu0 0.0
    %2636 = vmatprep.subr.mxu0 0.0
    %2637 = vmatpush1.msra.mxu0 0.0
    %2638 = vmatprep.subr.mxu0 0.0
    %2639 = vmatpush1.msra.mxu0 0.0
    %2640 = vmatprep.subr.mxu0 0.0
    %2641 = vmatpush1.msra.mxu0 0.0
    %2642 = vmatprep.subr.mxu0 0.0
    %2643 = vmatpush1.msra.mxu0 0.0
    %2644 = vmatprep.subr.mxu0 0.0
    %2645 = vmatpush1.msra.mxu0 0.0
    %2646 = vmatprep.subr.mxu0 0.0
    %2647 = vmatpush1.msra.mxu0 0.0
    %2648 = vmatprep.subr.mxu0 0.0
    %2649 = vmatpush1.msra.mxu0 0.0
    %2650 = vmatprep.subr.mxu0 0.0
    %2651 = vmatpush1.msra.mxu0 0.0
    %2652 = vmatprep.subr.mxu0 0.0
    %2653 = vmatpush1.msra.mxu0 0.0
    %2654 = vmatprep.subr.mxu0 0.0
    %2655 = vmatpush1.msra.mxu0 0.0
    %2656 = vmatprep.subr.mxu0 0.0
    %2657 = vmatpush1.msra.mxu0 %v227
    %2658 = vmatprep.subr.mxu0 0.0
    %2659 = vmatpush1.msra.mxu0 %v226
    %2660 = vmatprep.subr.mxu0 0.0
    %2661 = vmatpush1.msra.mxu0 %v225
    %2662 = vmatprep.subr.mxu0 0.0
    %2663 = vmatpush1.msra.mxu0 %v224
    %2664 = vmatprep.subr.mxu0 0.0
    %2665 = vmatpush2.msra.mxu0 0.0
    %2666 = vmatprep.subr.mxu0 0.0
    %2667 = vmatpush2.msra.mxu0 0.0
    %2668 = vmatprep.subr.mxu0 0.0
    %2669 = vmatpush2.msra.mxu0 0.0
    %2670 = vmatprep.subr.mxu0 0.0
    %2671 = vmatpush2.msra.mxu0 0.0
    %2672 = vmatprep.subr.mxu0 0.0
    %2673 = vmatpush2.msra.mxu0 0.0
    %2674 = vmatprep.subr.mxu0 0.0
    %2675 = vmatpush2.msra.mxu0 0.0
    %2676 = vmatprep.subr.mxu0 0.0
    %2677 = vmatpush2.msra.mxu0 0.0
    %2678 = vmatprep.subr.mxu0 0.0
    %2679 = vmatpush2.msra.mxu0 0.0
    %2680 = vmatprep.subr.mxu0 0.0
    %2681 = vmatpush2.msra.mxu0 0.0
    %2682 = vmatprep.subr.mxu0 0.0
    %2683 = vmatpush2.msra.mxu0 0.0
    %2684 = vmatprep.subr.mxu0 0.0
    %2685 = vmatpush2.msra.mxu0 0.0
    %2686 = vmatprep.subr.mxu0 0.0
    %2687 = vmatpush2.msra.mxu0 0.0
    %2688 = vmatprep.subr.mxu0 0.0
    %2689 = vmatpush2.msra.mxu0 0.0
    %2690 = vmatprep.subr.mxu0 0.0
    %2691 = vmatpush2.msra.mxu0 0.0
    %2692 = vmatprep.subr.mxu0 0.0
    %2693 = vmatpush2.msra.mxu0 0.0
    %2694 = vmatprep.subr.mxu0 0.0
    %2695 = vmatpush2.msra.mxu0 0.0
    %2696 = vmatprep.mubr.f32.mxu0 0.0
    %2697 = vmatmul.mubr.f32.gmra.mxu0 %v2630
    %v2698 = vpop.f32.mrf.mxu0
    %v2699 = vadd.f32 %v2624, %v2698
    %v2700 = vpop.f32.mrf.mxu0
    %2701 = vdwg.mxu0
    %v2702 = vadd.f32 %v2699, %v241
    %v2703 = vxor.u32 %v2702, 2147483648
    %v2704 = vmul.f32 %v2703, 1.442695
    %v2705 = vpow.pop %v2704
    %v2706 = vadd.f32 %v2705, 1.0
    %v2707 = vrcp.pop %v2706
    %v2708 = vmul.f32 1.0, %v2707
    %v2709 = vtanh.pop %v2702
    %v2710 = vmul.f32 %v2708, %v2248
    %2712 = vrot.lane.b32.xlu0 %v2709, 64
    %v2713 = vpop.permute.xlu0 %2712
    %v2715 = vmul.f32 %v2708, %v2713
    %2717 = vrot.lane.b32.xlu0 %v2715, 32
    %v2718 = vpop.permute.xlu0 %2717
    %v2720 = vadd.f32 %v2710, %v2718
    %v2721 = vtanh.pop %v2720
    %2723 = vrot.lane.b32.xlu0 %v2721, 64
    %v2724 = vpop.permute.xlu0 %2723
    %v2726 = vmul.f32 %v2708, %v2724
    %2728 = vrot.lane.b32.xlu0 %v2726, 32
    %v2729 = vpop.permute.xlu0 %2728
    %v2730 = vsel %vm271, %v2729, 0
    %2732 = vmatprep.subr.mxu0 0.0
    %2733 = vmatpush1.msra.mxu0 0.0
    %2734 = vmatprep.subr.mxu0 0.0
    %2735 = vmatpush1.msra.mxu0 0.0
    %2736 = vmatprep.subr.mxu0 0.0
    %2737 = vmatpush1.msra.mxu0 0.0
    %2738 = vmatprep.subr.mxu0 0.0
    %2739 = vmatpush1.msra.mxu0 0.0
    %2740 = vmatprep.subr.mxu0 0.0
    %2741 = vmatpush1.msra.mxu0 0.0
    %2742 = vmatprep.subr.mxu0 0.0
    %2743 = vmatpush1.msra.mxu0 0.0
    %2744 = vmatprep.subr.mxu0 0.0
    %2745 = vmatpush1.msra.mxu0 0.0
    %2746 = vmatprep.subr.mxu0 0.0
    %2747 = vmatpush1.msra.mxu0 0.0
    %2748 = vmatprep.subr.mxu0 0.0
    %2749 = vmatpush1.msra.mxu0 0.0
    %2750 = vmatprep.subr.mxu0 0.0
    %2751 = vmatpush1.msra.mxu0 0.0
    %2752 = vmatprep.subr.mxu0 0.0
    %2753 = vmatpush1.msra.mxu0 0.0
    %2754 = vmatprep.subr.mxu0 0.0
    %2755 = vmatpush1.msra.mxu0 0.0
    %2756 = vmatprep.subr.mxu0 0.0
    %2757 = vmatpush1.msra.mxu0 %v235
    %2758 = vmatprep.subr.mxu0 0.0
    %2759 = vmatpush1.msra.mxu0 %v234
    %2760 = vmatprep.subr.mxu0 0.0
    %2761 = vmatpush1.msra.mxu0 %v233
    %2762 = vmatprep.subr.mxu0 0.0
    %2763 = vmatpush1.msra.mxu0 %v232
    %2764 = vmatprep.subr.mxu0 0.0
    %2765 = vmatpush2.msra.mxu0 0.0
    %2766 = vmatprep.subr.mxu0 0.0
    %2767 = vmatpush2.msra.mxu0 0.0
    %2768 = vmatprep.subr.mxu0 0.0
    %2769 = vmatpush2.msra.mxu0 0.0
    %2770 = vmatprep.subr.mxu0 0.0
    %2771 = vmatpush2.msra.mxu0 0.0
    %2772 = vmatprep.subr.mxu0 0.0
    %2773 = vmatpush2.msra.mxu0 0.0
    %2774 = vmatprep.subr.mxu0 0.0
    %2775 = vmatpush2.msra.mxu0 0.0
    %2776 = vmatprep.subr.mxu0 0.0
    %2777 = vmatpush2.msra.mxu0 0.0
    %2778 = vmatprep.subr.mxu0 0.0
    %2779 = vmatpush2.msra.mxu0 0.0
    %2780 = vmatprep.subr.mxu0 0.0
    %2781 = vmatpush2.msra.mxu0 0.0
    %2782 = vmatprep.subr.mxu0 0.0
    %2783 = vmatpush2.msra.mxu0 0.0
    %2784 = vmatprep.subr.mxu0 0.0
    %2785 = vmatpush2.msra.mxu0 0.0
    %2786 = vmatprep.subr.mxu0 0.0
    %2787 = vmatpush2.msra.mxu0 0.0
    %2788 = vmatprep.subr.mxu0 0.0
    %2789 = vmatpush2.msra.mxu0 0.0
    %2790 = vmatprep.subr.mxu0 0.0
    %2791 = vmatpush2.msra.mxu0 0.0
    %2792 = vmatprep.subr.mxu0 0.0
    %2793 = vmatpush2.msra.mxu0 0.0
    %2794 = vmatprep.subr.mxu0 0.0
    %2795 = vmatpush2.msra.mxu0 0.0
    %2796 = vmatprep.mubr.f32.mxu0 0.0
    %2797 = vmatmul.mubr.f32.gmra.mxu0 %v2730
    %v2798 = vpop.f32.mrf.mxu0
    %v2799 = vadd.f32 %v248, %v2798
    %v2800 = vpop.f32.mrf.mxu0
    %2801 = vdwg.mxu0
    %2802 = vmax.xlane.f32.xlu0 %v2799
    %v2803 = vpop.xlane.xlu0 %2802
    %v2804 = vsub.f32 %v2799, %v2803
    %v2805 = vmul.f32 %v2804, 1.442695
    %v2806 = vpow.pop %v2805
    %2807 = vadd.xlane.f32.xlu0 %v2806
    %v2808 = vpop.xlane.xlu0 %2807
    %v2809 = vlog2.pop %v2808
    %v2810 = vmul.f32 %v2809, 0.6931472
    %v2811 = vsub.f32 %v2804, %v2810
    %s2812 = scalar_lea.vmem [#allocation22], 32
    %2813 = vst [vmem:[%s2812] sm:$0xff] %v2811
    %vm2814 = vcmp.eq.f32.partialorder %v2799, %v2803
    %v2815 = vsel %vm2814, %v543, 128
    %v2816 = vand.u32 %v2815, 65535
    %v2817 = vshra.s32 %v2815, 16
    %v2818 = vcvt.s32.f32 %v2816
    %v2819 = vcvt.s32.f32 %v2817
    %2820 = vmin.xlane.f32.xlu0 %v2819
    %v2821 = vpop.xlane.xlu0 %2820
    %vm2822 = vcmp.eq.f32.partialorder %v2819, %v2821
    %v2823 = vsel %vm2822, %v2818, inf
    %2824 = vmin.xlane.f32.xlu0 %v2823
    %v2825 = vpop.xlane.xlu0 %2824
    %v2826 = vcvt.f32.s32 %v2825
    %v2827 = vcvt.f32.s32 %v2821
    %v2828 = vshll.u32 %v2827, 16
    %v2829 = vadd.s32 %v2828, %v2826
    %v2830 = vsel %vm546, %v2829, 128
    %vm2831 = vcmp.eq.s32.totalorder %v543, %v2830
    %v2832 = vsel %vm2831, 1.0, 0.0
    %v2833 = vrot.slane %v2832, 4
    %v2834 = vmax.f32 %v2832, %v2833
    %v2835 = vrot.slane %v2834, 2
    %v2836 = vmax.f32 %v2834, %v2835
    %v2837 = vrot.slane %v2836, 1
    %v2838 = vmax.f32 %v2836, %v2837
    %vm2839 = vcmp.gt.f32.partialorder %v2838, 0.0
    %v2840 = vsel %vm2839, 1, 0
    %vm2841 = vcmp.eq.s32.totalorder %v2840, 1
    %v2842 = vsel %vm2841, 1, 0
    %v2843 = vcvt.s32.f32 %v2842
    %v2845 = vsel %vm951, %v2843, %v2843
    %v2846 = vsel %vm953, %v2843, %v2845
    %v2847 = vsel %vm955, %v2843, %v2846
    %v2848 = vsel %vm957, %v2843, %v2847
    %v2849 = vsel %vm959, %v2843, %v2848
    %v2850 = vsel %vm961, %v2843, %v2849
    %2852 = vmatprep.subr.mxu0 0.0
    %2853 = vmatpush1.msra.mxu0 %v219
    %2854 = vmatprep.subr.mxu0 0.0
    %2855 = vmatpush1.msra.mxu0 %v218
    %2856 = vmatprep.subr.mxu0 0.0
    %2857 = vmatpush1.msra.mxu0 %v217
    %2858 = vmatprep.subr.mxu0 0.0
    %2859 = vmatpush1.msra.mxu0 %v216
    %2860 = vmatprep.subr.mxu0 0.0
    %2861 = vmatpush1.msra.mxu0 %v215
    %2862 = vmatprep.subr.mxu0 0.0
    %2863 = vmatpush1.msra.mxu0 %v214
    %2864 = vmatprep.subr.mxu0 0.0
    %2865 = vmatpush1.msra.mxu0 %v213
    %2866 = vmatprep.subr.mxu0 0.0
    %2867 = vmatpush1.msra.mxu0 %v212
    %2868 = vmatprep.subr.mxu0 0.0
    %2869 = vmatpush1.msra.mxu0 %v211
    %2870 = vmatprep.subr.mxu0 0.0
    %2871 = vmatpush1.msra.mxu0 %v210
    %2872 = vmatprep.subr.mxu0 0.0
    %2873 = vmatpush1.msra.mxu0 %v209
    %2874 = vmatprep.subr.mxu0 0.0
    %2875 = vmatpush1.msra.mxu0 %v208
    %2876 = vmatprep.subr.mxu0 0.0
    %2877 = vmatpush1.msra.mxu0 %v207
    %2878 = vmatprep.subr.mxu0 0.0
    %2879 = vmatpush1.msra.mxu0 %v206
    %2880 = vmatprep.subr.mxu0 0.0
    %2881 = vmatpush1.msra.mxu0 %v205
    %2882 = vmatprep.subr.mxu0 0.0
    %2883 = vmatpush1.msra.mxu0 %v204
    %2884 = vmatprep.subr.mxu0 0.0
    %2885 = vmatpush2.msra.mxu0 0.0
    %2886 = vmatprep.subr.mxu0 0.0
    %2887 = vmatpush2.msra.mxu0 0.0
    %2888 = vmatprep.subr.mxu0 0.0
    %2889 = vmatpush2.msra.mxu0 0.0
    %2890 = vmatprep.subr.mxu0 0.0
    %2891 = vmatpush2.msra.mxu0 0.0
    %2892 = vmatprep.subr.mxu0 0.0
    %2893 = vmatpush2.msra.mxu0 0.0
    %2894 = vmatprep.subr.mxu0 0.0
    %2895 = vmatpush2.msra.mxu0 0.0
    %2896 = vmatprep.subr.mxu0 0.0
    %2897 = vmatpush2.msra.mxu0 0.0
    %2898 = vmatprep.subr.mxu0 0.0
    %2899 = vmatpush2.msra.mxu0 0.0
    %2900 = vmatprep.subr.mxu0 0.0
    %2901 = vmatpush2.msra.mxu0 0.0
    %2902 = vmatprep.subr.mxu0 0.0
    %2903 = vmatpush2.msra.mxu0 0.0
    %2904 = vmatprep.subr.mxu0 0.0
    %2905 = vmatpush2.msra.mxu0 0.0
    %2906 = vmatprep.subr.mxu0 0.0
    %2907 = vmatpush2.msra.mxu0 0.0
    %2908 = vmatprep.subr.mxu0 0.0
    %2909 = vmatpush2.msra.mxu0 0.0
    %2910 = vmatprep.subr.mxu0 0.0
    %2911 = vmatpush2.msra.mxu0 0.0
    %2912 = vmatprep.subr.mxu0 0.0
    %2913 = vmatpush2.msra.mxu0 0.0
    %2914 = vmatprep.subr.mxu0 0.0
    %2915 = vmatpush2.msra.mxu0 0.0
    %2916 = vmatprep.mubr.f32.mxu0 0.0
    %2917 = vmatmul.mubr.f32.gmra.mxu0 %v2850
    %v2918 = vpop.f32.mrf.mxu0
    %v2919 = vadd.f32 0.0, %v2918
    %v2920 = vpop.f32.mrf.mxu0
    %2921 = vdwg.mxu0
    %s2922 = sadd.s32 %s1034, 4
    %s2923 = sld [smem:[#allocation4 + %s2922]]
    %p2924 = scmp.gt.s32.totalorder %s2923, 0
    %v2925 = vlaneseq
    %v2926 = vshrl.u32 %v2925, 7
    %v2927 = vsub.s32 0, %v2926
    %v2928 = vrot.slane %v2919, %v2927
    %s2929 = scalar_select %p2924, 1, 0
    %v2930 = vstv %s2929
    %vm2931 = vcmp.eq.s32.totalorder %v2930, 1
    %v2932 = vsel %vm2931, %v514, %v2928
    %v2933 = vadd.f32 %v2932, %v394
    %2934 = vmatprep.subr.mxu0 0.0
    %2935 = vmatpush1.msra.mxu0 0.0
    %2936 = vmatprep.subr.mxu0 0.0
    %2937 = vmatpush1.msra.mxu0 0.0
    %2938 = vmatprep.subr.mxu0 0.0
    %2939 = vmatpush1.msra.mxu0 0.0
    %2940 = vmatprep.subr.mxu0 0.0
    %2941 = vmatpush1.msra.mxu0 0.0
    %2942 = vmatprep.subr.mxu0 0.0
    %2943 = vmatpush1.msra.mxu0 0.0
    %2944 = vmatprep.subr.mxu0 0.0
    %2945 = vmatpush1.msra.mxu0 0.0
    %2946 = vmatprep.subr.mxu0 0.0
    %2947 = vmatpush1.msra.mxu0 0.0
    %2948 = vmatprep.subr.mxu0 0.0
    %2949 = vmatpush1.msra.mxu0 0.0
    %2950 = vmatprep.subr.mxu0 0.0
    %2951 = vmatpush1.msra.mxu0 0.0
    %2952 = vmatprep.subr.mxu0 0.0
    %2953 = vmatpush1.msra.mxu0 0.0
    %2954 = vmatprep.subr.mxu0 0.0
    %2955 = vmatpush1.msra.mxu0 0.0
    %2956 = vmatprep.subr.mxu0 0.0
    %2957 = vmatpush1.msra.mxu0 0.0
    %2958 = vmatprep.subr.mxu0 0.0
    %2959 = vmatpush1.msra.mxu0 %v223
    %2960 = vmatprep.subr.mxu0 0.0
    %2961 = vmatpush1.msra.mxu0 %v222
    %2962 = vmatprep.subr.mxu0 0.0
    %2963 = vmatpush1.msra.mxu0 %v221
    %2964 = vmatprep.subr.mxu0 0.0
    %2965 = vmatpush1.msra.mxu0 %v220
    %2966 = vmatprep.subr.mxu0 0.0
    %2967 = vmatpush2.msra.mxu0 0.0
    %2968 = vmatprep.subr.mxu0 0.0
    %2969 = vmatpush2.msra.mxu0 0.0
    %2970 = vmatprep.subr.mxu0 0.0
    %2971 = vmatpush2.msra.mxu0 0.0
    %2972 = vmatprep.subr.mxu0 0.0
    %2973 = vmatpush2.msra.mxu0 0.0
    %2974 = vmatprep.subr.mxu0 0.0
    %2975 = vmatpush2.msra.mxu0 0.0
    %2976 = vmatprep.subr.mxu0 0.0
    %2977 = vmatpush2.msra.mxu0 0.0
    %2978 = vmatprep.subr.mxu0 0.0
    %2979 = vmatpush2.msra.mxu0 0.0
    %2980 = vmatprep.subr.mxu0 0.0
    %2981 = vmatpush2.msra.mxu0 0.0
    %2982 = vmatprep.subr.mxu0 0.0
    %2983 = vmatpush2.msra.mxu0 0.0
    %2984 = vmatprep.subr.mxu0 0.0
    %2985 = vmatpush2.msra.mxu0 0.0
    %2986 = vmatprep.subr.mxu0 0.0
    %2987 = vmatpush2.msra.mxu0 0.0
    %2988 = vmatprep.subr.mxu0 0.0
    %2989 = vmatpush2.msra.mxu0 0.0
    %2990 = vmatprep.subr.mxu0 0.0
    %2991 = vmatpush2.msra.mxu0 0.0
    %2992 = vmatprep.subr.mxu0 0.0
    %2993 = vmatpush2.msra.mxu0 0.0
    %2994 = vmatprep.subr.mxu0 0.0
    %2995 = vmatpush2.msra.mxu0 0.0
    %2996 = vmatprep.subr.mxu0 0.0
    %2997 = vmatpush2.msra.mxu0 0.0
    %2998 = vmatprep.mubr.f32.mxu0 0.0
    %2999 = vmatmul.mubr.f32.gmra.mxu0 %v2630
    %v3000 = vpop.f32.mrf.mxu0
    %v3001 = vadd.f32 0.0, %v3000
    %v3002 = vpop.f32.mrf.mxu0
    %3003 = vdwg.mxu0
    %v3004 = vadd.f32 %v2933, %v3001
    %v3005 = vxor.u32 %v3004, 2147483648
    %v3006 = vmul.f32 %v3005, 1.442695
    %v3007 = vpow.pop %v3006
    %v3008 = vadd.f32 %v3007, 1.0
    %v3009 = vrcp.pop %v3008
    %v3010 = vmul.f32 1.0, %v3009
    %v3011 = vtanh.pop %v3004
    %v3012 = vmul.f32 %v3010, %v2550
    %3014 = vrot.lane.b32.xlu0 %v3011, 64
    %v3015 = vpop.permute.xlu0 %3014
    %v3017 = vmul.f32 %v3010, %v3015
    %3019 = vrot.lane.b32.xlu0 %v3017, 32
    %v3020 = vpop.permute.xlu0 %3019
    %v3022 = vadd.f32 %v3012, %v3020
    %v3023 = vtanh.pop %v3022
    %3025 = vrot.lane.b32.xlu0 %v3023, 64
    %v3026 = vpop.permute.xlu0 %3025
    %v3028 = vmul.f32 %v3010, %v3026
    %3029 = vmatprep.subr.mxu0 0.0
    %3030 = vmatpush1.msra.mxu0 0.0
    %3031 = vmatprep.subr.mxu0 0.0
    %3032 = vmatpush1.msra.mxu0 0.0
    %3033 = vmatprep.subr.mxu0 0.0
    %3034 = vmatpush1.msra.mxu0 0.0
    %3035 = vmatprep.subr.mxu0 0.0
    %3036 = vmatpush1.msra.mxu0 0.0
    %3037 = vmatprep.subr.mxu0 0.0
    %3038 = vmatpush1.msra.mxu0 0.0
    %3039 = vmatprep.subr.mxu0 0.0
    %3040 = vmatpush1.msra.mxu0 0.0
    %3041 = vmatprep.subr.mxu0 0.0
    %3042 = vmatpush1.msra.mxu0 0.0
    %3043 = vmatprep.subr.mxu0 0.0
    %3044 = vmatpush1.msra.mxu0 0.0
    %3045 = vmatprep.subr.mxu0 0.0
    %3046 = vmatpush1.msra.mxu0 0.0
    %3047 = vmatprep.subr.mxu0 0.0
    %3048 = vmatpush1.msra.mxu0 0.0
    %3049 = vmatprep.subr.mxu0 0.0
    %3050 = vmatpush1.msra.mxu0 0.0
    %3051 = vmatprep.subr.mxu0 0.0
    %3052 = vmatpush1.msra.mxu0 0.0
    %3053 = vmatprep.subr.mxu0 0.0
    %3054 = vmatpush1.msra.mxu0 %v231
    %3055 = vmatprep.subr.mxu0 0.0
    %3056 = vmatpush1.msra.mxu0 %v230
    %3057 = vmatprep.subr.mxu0 0.0
    %3058 = vmatpush1.msra.mxu0 %v229
    %3059 = vmatprep.subr.mxu0 0.0
    %3060 = vmatpush1.msra.mxu0 %v228
    %3061 = vmatprep.subr.mxu0 0.0
    %3062 = vmatpush2.msra.mxu0 0.0
    %3063 = vmatprep.subr.mxu0 0.0
    %3064 = vmatpush2.msra.mxu0 0.0
    %3065 = vmatprep.subr.mxu0 0.0
    %3066 = vmatpush2.msra.mxu0 0.0
    %3067 = vmatprep.subr.mxu0 0.0
    %3068 = vmatpush2.msra.mxu0 0.0
    %3069 = vmatprep.subr.mxu0 0.0
    %3070 = vmatpush2.msra.mxu0 0.0
    %3071 = vmatprep.subr.mxu0 0.0
    %3072 = vmatpush2.msra.mxu0 0.0
    %3073 = vmatprep.subr.mxu0 0.0
    %3074 = vmatpush2.msra.mxu0 0.0
    %3075 = vmatprep.subr.mxu0 0.0
    %3076 = vmatpush2.msra.mxu0 0.0
    %3077 = vmatprep.subr.mxu0 0.0
    %3078 = vmatpush2.msra.mxu0 0.0
    %3079 = vmatprep.subr.mxu0 0.0
    %3080 = vmatpush2.msra.mxu0 0.0
    %3081 = vmatprep.subr.mxu0 0.0
    %3082 = vmatpush2.msra.mxu0 0.0
    %3083 = vmatprep.subr.mxu0 0.0
    %3084 = vmatpush2.msra.mxu0 0.0
    %3085 = vmatprep.subr.mxu0 0.0
    %3086 = vmatpush2.msra.mxu0 0.0
    %3087 = vmatprep.subr.mxu0 0.0
    %3088 = vmatpush2.msra.mxu0 0.0
    %3089 = vmatprep.subr.mxu0 0.0
    %3090 = vmatpush2.msra.mxu0 0.0
    %3091 = vmatprep.subr.mxu0 0.0
    %3092 = vmatpush2.msra.mxu0 0.0
    %3093 = vmatprep.mubr.f32.mxu0 0.0
    %3094 = vmatmul.mubr.f32.gmra.mxu0 %v2730
    %v3095 = vpop.f32.mrf.mxu0
    %v3096 = vadd.f32 0.0, %v3095
    %v3097 = vpop.f32.mrf.mxu0
    %3098 = vdwg.mxu0
    %3100 = vrot.lane.b32.xlu0 %v3028, 32
    %v3101 = vpop.permute.xlu0 %3100
    %v3102 = vsel %vm271, %v3101, 0
    %3104 = vmatprep.subr.mxu0 0.0
    %3105 = vmatpush1.msra.mxu0 0.0
    %3106 = vmatprep.subr.mxu0 0.0
    %3107 = vmatpush1.msra.mxu0 0.0
    %3108 = vmatprep.subr.mxu0 0.0
    %3109 = vmatpush1.msra.mxu0 0.0
    %3110 = vmatprep.subr.mxu0 0.0
    %3111 = vmatpush1.msra.mxu0 0.0
    %3112 = vmatprep.subr.mxu0 0.0
    %3113 = vmatpush1.msra.mxu0 0.0
    %3114 = vmatprep.subr.mxu0 0.0
    %3115 = vmatpush1.msra.mxu0 0.0
    %3116 = vmatprep.subr.mxu0 0.0
    %3117 = vmatpush1.msra.mxu0 0.0
    %3118 = vmatprep.subr.mxu0 0.0
    %3119 = vmatpush1.msra.mxu0 0.0
    %3120 = vmatprep.subr.mxu0 0.0
    %3121 = vmatpush1.msra.mxu0 0.0
    %3122 = vmatprep.subr.mxu0 0.0
    %3123 = vmatpush1.msra.mxu0 0.0
    %3124 = vmatprep.subr.mxu0 0.0
    %3125 = vmatpush1.msra.mxu0 0.0
    %3126 = vmatprep.subr.mxu0 0.0
    %3127 = vmatpush1.msra.mxu0 0.0
    %3128 = vmatprep.subr.mxu0 0.0
    %3129 = vmatpush1.msra.mxu0 %v227
    %3130 = vmatprep.subr.mxu0 0.0
    %3131 = vmatpush1.msra.mxu0 %v226
    %3132 = vmatprep.subr.mxu0 0.0
    %3133 = vmatpush1.msra.mxu0 %v225
    %3134 = vmatprep.subr.mxu0 0.0
    %3135 = vmatpush1.msra.mxu0 %v224
    %3136 = vmatprep.subr.mxu0 0.0
    %3137 = vmatpush2.msra.mxu0 0.0
    %3138 = vmatprep.subr.mxu0 0.0
    %3139 = vmatpush2.msra.mxu0 0.0
    %3140 = vmatprep.subr.mxu0 0.0
    %3141 = vmatpush2.msra.mxu0 0.0
    %3142 = vmatprep.subr.mxu0 0.0
    %3143 = vmatpush2.msra.mxu0 0.0
    %3144 = vmatprep.subr.mxu0 0.0
    %3145 = vmatpush2.msra.mxu0 0.0
    %3146 = vmatprep.subr.mxu0 0.0
    %3147 = vmatpush2.msra.mxu0 0.0
    %3148 = vmatprep.subr.mxu0 0.0
    %3149 = vmatpush2.msra.mxu0 0.0
    %3150 = vmatprep.subr.mxu0 0.0
    %3151 = vmatpush2.msra.mxu0 0.0
    %3152 = vmatprep.subr.mxu0 0.0
    %3153 = vmatpush2.msra.mxu0 0.0
    %3154 = vmatprep.subr.mxu0 0.0
    %3155 = vmatpush2.msra.mxu0 0.0
    %3156 = vmatprep.subr.mxu0 0.0
    %3157 = vmatpush2.msra.mxu0 0.0
    %3158 = vmatprep.subr.mxu0 0.0
    %3159 = vmatpush2.msra.mxu0 0.0
    %3160 = vmatprep.subr.mxu0 0.0
    %3161 = vmatpush2.msra.mxu0 0.0
    %3162 = vmatprep.subr.mxu0 0.0
    %3163 = vmatpush2.msra.mxu0 0.0
    %3164 = vmatprep.subr.mxu0 0.0
    %3165 = vmatpush2.msra.mxu0 0.0
    %3166 = vmatprep.subr.mxu0 0.0
    %3167 = vmatpush2.msra.mxu0 0.0
    %3168 = vmatprep.mubr.f32.mxu0 0.0
    %3169 = vmatmul.mubr.f32.gmra.mxu0 %v3102
    %v3170 = vpop.f32.mrf.mxu0
    %v3171 = vadd.f32 %v3096, %v3170
    %v3172 = vpop.f32.mrf.mxu0
    %3173 = vdwg.mxu0
    %v3174 = vadd.f32 %v3171, %v241
    %v3175 = vxor.u32 %v3174, 2147483648
    %v3176 = vmul.f32 %v3175, 1.442695
    %v3177 = vpow.pop %v3176
    %v3178 = vadd.f32 %v3177, 1.0
    %v3179 = vrcp.pop %v3178
    %v3180 = vmul.f32 1.0, %v3179
    %v3181 = vtanh.pop %v3174
    %v3182 = vmul.f32 %v3180, %v2720
    %3184 = vrot.lane.b32.xlu0 %v3181, 64
    %v3185 = vpop.permute.xlu0 %3184
    %v3187 = vmul.f32 %v3180, %v3185
    %3189 = vrot.lane.b32.xlu0 %v3187, 32
    %v3190 = vpop.permute.xlu0 %3189
    %v3192 = vadd.f32 %v3182, %v3190
    %v3193 = vtanh.pop %v3192
    %3195 = vrot.lane.b32.xlu0 %v3193, 64
    %v3196 = vpop.permute.xlu0 %3195
    %v3198 = vmul.f32 %v3180, %v3196
    %3200 = vrot.lane.b32.xlu0 %v3198, 32
    %v3201 = vpop.permute.xlu0 %3200
    %v3202 = vsel %vm271, %v3201, 0
    %3204 = vmatprep.subr.mxu0 0.0
    %3205 = vmatpush1.msra.mxu0 0.0
    %3206 = vmatprep.subr.mxu0 0.0
    %3207 = vmatpush1.msra.mxu0 0.0
    %3208 = vmatprep.subr.mxu0 0.0
    %3209 = vmatpush1.msra.mxu0 0.0
    %3210 = vmatprep.subr.mxu0 0.0
    %3211 = vmatpush1.msra.mxu0 0.0
    %3212 = vmatprep.subr.mxu0 0.0
    %3213 = vmatpush1.msra.mxu0 0.0
    %3214 = vmatprep.subr.mxu0 0.0
    %3215 = vmatpush1.msra.mxu0 0.0
    %3216 = vmatprep.subr.mxu0 0.0
    %3217 = vmatpush1.msra.mxu0 0.0
    %3218 = vmatprep.subr.mxu0 0.0
    %3219 = vmatpush1.msra.mxu0 0.0
    %3220 = vmatprep.subr.mxu0 0.0
    %3221 = vmatpush1.msra.mxu0 0.0
    %3222 = vmatprep.subr.mxu0 0.0
    %3223 = vmatpush1.msra.mxu0 0.0
    %3224 = vmatprep.subr.mxu0 0.0
    %3225 = vmatpush1.msra.mxu0 0.0
    %3226 = vmatprep.subr.mxu0 0.0
    %3227 = vmatpush1.msra.mxu0 0.0
    %3228 = vmatprep.subr.mxu0 0.0
    %3229 = vmatpush1.msra.mxu0 %v235
    %3230 = vmatprep.subr.mxu0 0.0
    %3231 = vmatpush1.msra.mxu0 %v234
    %3232 = vmatprep.subr.mxu0 0.0
    %3233 = vmatpush1.msra.mxu0 %v233
    %3234 = vmatprep.subr.mxu0 0.0
    %3235 = vmatpush1.msra.mxu0 %v232
    %3236 = vmatprep.subr.mxu0 0.0
    %3237 = vmatpush2.msra.mxu0 0.0
    %3238 = vmatprep.subr.mxu0 0.0
    %3239 = vmatpush2.msra.mxu0 0.0
    %3240 = vmatprep.subr.mxu0 0.0
    %3241 = vmatpush2.msra.mxu0 0.0
    %3242 = vmatprep.subr.mxu0 0.0
    %3243 = vmatpush2.msra.mxu0 0.0
    %3244 = vmatprep.subr.mxu0 0.0
    %3245 = vmatpush2.msra.mxu0 0.0
    %3246 = vmatprep.subr.mxu0 0.0
    %3247 = vmatpush2.msra.mxu0 0.0
    %3248 = vmatprep.subr.mxu0 0.0
    %3249 = vmatpush2.msra.mxu0 0.0
    %3250 = vmatprep.subr.mxu0 0.0
    %3251 = vmatpush2.msra.mxu0 0.0
    %3252 = vmatprep.subr.mxu0 0.0
    %3253 = vmatpush2.msra.mxu0 0.0
    %3254 = vmatprep.subr.mxu0 0.0
    %3255 = vmatpush2.msra.mxu0 0.0
    %3256 = vmatprep.subr.mxu0 0.0
    %3257 = vmatpush2.msra.mxu0 0.0
    %3258 = vmatprep.subr.mxu0 0.0
    %3259 = vmatpush2.msra.mxu0 0.0
    %3260 = vmatprep.subr.mxu0 0.0
    %3261 = vmatpush2.msra.mxu0 0.0
    %3262 = vmatprep.subr.mxu0 0.0
    %3263 = vmatpush2.msra.mxu0 0.0
    %3264 = vmatprep.subr.mxu0 0.0
    %3265 = vmatpush2.msra.mxu0 0.0
    %3266 = vmatprep.subr.mxu0 0.0
    %3267 = vmatpush2.msra.mxu0 0.0
    %3268 = vmatprep.mubr.f32.mxu0 0.0
    %3269 = vmatmul.mubr.f32.gmra.mxu0 %v3202
    %v3270 = vpop.f32.mrf.mxu0
    %v3271 = vadd.f32 %v248, %v3270
    %v3272 = vpop.f32.mrf.mxu0
    %3273 = vdwg.mxu0
    %3274 = vmax.xlane.f32.xlu0 %v3271
    %v3275 = vpop.xlane.xlu0 %3274
    %v3276 = vsub.f32 %v3271, %v3275
    %v3277 = vmul.f32 %v3276, 1.442695
    %v3278 = vpow.pop %v3277
    %3279 = vadd.xlane.f32.xlu0 %v3278
    %v3280 = vpop.xlane.xlu0 %3279
    %v3281 = vlog2.pop %v3280
    %v3282 = vmul.f32 %v3281, 0.6931472
    %v3283 = vsub.f32 %v3276, %v3282
    %s3284 = scalar_lea.vmem [#allocation22], 40
    %3285 = vst [vmem:[%s3284] sm:$0xff] %v3283
    %vm3286 = vcmp.eq.f32.partialorder %v3271, %v3275
    %v3287 = vsel %vm3286, %v543, 128
    %v3288 = vand.u32 %v3287, 65535
    %v3289 = vshra.s32 %v3287, 16
    %v3290 = vcvt.s32.f32 %v3288
    %v3291 = vcvt.s32.f32 %v3289
    %3292 = vmin.xlane.f32.xlu0 %v3291
    %v3293 = vpop.xlane.xlu0 %3292
    %vm3294 = vcmp.eq.f32.partialorder %v3291, %v3293
    %v3295 = vsel %vm3294, %v3290, inf
    %3296 = vmin.xlane.f32.xlu0 %v3295
    %v3297 = vpop.xlane.xlu0 %3296
    %v3298 = vcvt.f32.s32 %v3297
    %v3299 = vcvt.f32.s32 %v3293
    %v3300 = vshll.u32 %v3299, 16
    %v3301 = vadd.s32 %v3300, %v3298
    %v3302 = vsel %vm546, %v3301, 128
    %vm3303 = vcmp.eq.s32.totalorder %v543, %v3302
    %v3304 = vsel %vm3303, 1.0, 0.0
    %v3305 = vrot.slane %v3304, 4
    %v3306 = vmax.f32 %v3304, %v3305
    %v3307 = vrot.slane %v3306, 2
    %v3308 = vmax.f32 %v3306, %v3307
    %v3309 = vrot.slane %v3308, 1
    %v3310 = vmax.f32 %v3308, %v3309
    %vm3311 = vcmp.gt.f32.partialorder %v3310, 0.0
    %v3312 = vsel %vm3311, 1, 0
    %vm3313 = vcmp.eq.s32.totalorder %v3312, 1
    %v3314 = vsel %vm3313, 1, 0
    %v3315 = vcvt.s32.f32 %v3314
    %v3317 = vsel %vm951, %v3315, %v3315
    %v3318 = vsel %vm953, %v3315, %v3317
    %v3319 = vsel %vm955, %v3315, %v3318
    %v3320 = vsel %vm957, %v3315, %v3319
    %v3321 = vsel %vm959, %v3315, %v3320
    %v3322 = vsel %vm961, %v3315, %v3321
    %3324 = vmatprep.subr.mxu0 0.0
    %3325 = vmatpush1.msra.mxu0 %v219
    %3326 = vmatprep.subr.mxu0 0.0
    %3327 = vmatpush1.msra.mxu0 %v218
    %3328 = vmatprep.subr.mxu0 0.0
    %3329 = vmatpush1.msra.mxu0 %v217
    %3330 = vmatprep.subr.mxu0 0.0
    %3331 = vmatpush1.msra.mxu0 %v216
    %3332 = vmatprep.subr.mxu0 0.0
    %3333 = vmatpush1.msra.mxu0 %v215
    %3334 = vmatprep.subr.mxu0 0.0
    %3335 = vmatpush1.msra.mxu0 %v214
    %3336 = vmatprep.subr.mxu0 0.0
    %3337 = vmatpush1.msra.mxu0 %v213
    %3338 = vmatprep.subr.mxu0 0.0
    %3339 = vmatpush1.msra.mxu0 %v212
    %3340 = vmatprep.subr.mxu0 0.0
    %3341 = vmatpush1.msra.mxu0 %v211
    %3342 = vmatprep.subr.mxu0 0.0
    %3343 = vmatpush1.msra.mxu0 %v210
    %3344 = vmatprep.subr.mxu0 0.0
    %3345 = vmatpush1.msra.mxu0 %v209
    %3346 = vmatprep.subr.mxu0 0.0
    %3347 = vmatpush1.msra.mxu0 %v208
    %3348 = vmatprep.subr.mxu0 0.0
    %3349 = vmatpush1.msra.mxu0 %v207
    %3350 = vmatprep.subr.mxu0 0.0
    %3351 = vmatpush1.msra.mxu0 %v206
    %3352 = vmatprep.subr.mxu0 0.0
    %3353 = vmatpush1.msra.mxu0 %v205
    %3354 = vmatprep.subr.mxu0 0.0
    %3355 = vmatpush1.msra.mxu0 %v204
    %3356 = vmatprep.subr.mxu0 0.0
    %3357 = vmatpush2.msra.mxu0 0.0
    %3358 = vmatprep.subr.mxu0 0.0
    %3359 = vmatpush2.msra.mxu0 0.0
    %3360 = vmatprep.subr.mxu0 0.0
    %3361 = vmatpush2.msra.mxu0 0.0
    %3362 = vmatprep.subr.mxu0 0.0
    %3363 = vmatpush2.msra.mxu0 0.0
    %3364 = vmatprep.subr.mxu0 0.0
    %3365 = vmatpush2.msra.mxu0 0.0
    %3366 = vmatprep.subr.mxu0 0.0
    %3367 = vmatpush2.msra.mxu0 0.0
    %3368 = vmatprep.subr.mxu0 0.0
    %3369 = vmatpush2.msra.mxu0 0.0
    %3370 = vmatprep.subr.mxu0 0.0
    %3371 = vmatpush2.msra.mxu0 0.0
    %3372 = vmatprep.subr.mxu0 0.0
    %3373 = vmatpush2.msra.mxu0 0.0
    %3374 = vmatprep.subr.mxu0 0.0
    %3375 = vmatpush2.msra.mxu0 0.0
    %3376 = vmatprep.subr.mxu0 0.0
    %3377 = vmatpush2.msra.mxu0 0.0
    %3378 = vmatprep.subr.mxu0 0.0
    %3379 = vmatpush2.msra.mxu0 0.0
    %3380 = vmatprep.subr.mxu0 0.0
    %3381 = vmatpush2.msra.mxu0 0.0
    %3382 = vmatprep.subr.mxu0 0.0
    %3383 = vmatpush2.msra.mxu0 0.0
    %3384 = vmatprep.subr.mxu0 0.0
    %3385 = vmatpush2.msra.mxu0 0.0
    %3386 = vmatprep.subr.mxu0 0.0
    %3387 = vmatpush2.msra.mxu0 0.0
    %3388 = vmatprep.mubr.f32.mxu0 0.0
    %3389 = vmatmul.mubr.f32.gmra.mxu0 %v3322
    %v3390 = vpop.f32.mrf.mxu0
    %v3391 = vadd.f32 0.0, %v3390
    %v3392 = vpop.f32.mrf.mxu0
    %3393 = vdwg.mxu0
    %s3394 = sadd.s32 %s1034, 5
    %s3395 = sld [smem:[#allocation4 + %s3394]]
    %p3396 = scmp.gt.s32.totalorder %s3395, 0
    %v3397 = vlaneseq
    %v3398 = vshrl.u32 %v3397, 7
    %v3399 = vsub.s32 0, %v3398
    %v3400 = vrot.slane %v3391, %v3399
    %s3401 = scalar_select %p3396, 1, 0
    %v3402 = vstv %s3401
    %vm3403 = vcmp.eq.s32.totalorder %v3402, 1
    %v3404 = vsel %vm3403, %v519, %v3400
    %v3405 = vadd.f32 %v3404, %v399
    %3406 = vmatprep.subr.mxu0 0.0
    %3407 = vmatpush1.msra.mxu0 0.0
    %3408 = vmatprep.subr.mxu0 0.0
    %3409 = vmatpush1.msra.mxu0 0.0
    %3410 = vmatprep.subr.mxu0 0.0
    %3411 = vmatpush1.msra.mxu0 0.0
    %3412 = vmatprep.subr.mxu0 0.0
    %3413 = vmatpush1.msra.mxu0 0.0
    %3414 = vmatprep.subr.mxu0 0.0
    %3415 = vmatpush1.msra.mxu0 0.0
    %3416 = vmatprep.subr.mxu0 0.0
    %3417 = vmatpush1.msra.mxu0 0.0
    %3418 = vmatprep.subr.mxu0 0.0
    %3419 = vmatpush1.msra.mxu0 0.0
    %3420 = vmatprep.subr.mxu0 0.0
    %3421 = vmatpush1.msra.mxu0 0.0
    %3422 = vmatprep.subr.mxu0 0.0
    %3423 = vmatpush1.msra.mxu0 0.0
    %3424 = vmatprep.subr.mxu0 0.0
    %3425 = vmatpush1.msra.mxu0 0.0
    %3426 = vmatprep.subr.mxu0 0.0
    %3427 = vmatpush1.msra.mxu0 0.0
    %3428 = vmatprep.subr.mxu0 0.0
    %3429 = vmatpush1.msra.mxu0 0.0
    %3430 = vmatprep.subr.mxu0 0.0
    %3431 = vmatpush1.msra.mxu0 %v223
    %3432 = vmatprep.subr.mxu0 0.0
    %3433 = vmatpush1.msra.mxu0 %v222
    %3434 = vmatprep.subr.mxu0 0.0
    %3435 = vmatpush1.msra.mxu0 %v221
    %3436 = vmatprep.subr.mxu0 0.0
    %3437 = vmatpush1.msra.mxu0 %v220
    %3438 = vmatprep.subr.mxu0 0.0
    %3439 = vmatpush2.msra.mxu0 0.0
    %3440 = vmatprep.subr.mxu0 0.0
    %3441 = vmatpush2.msra.mxu0 0.0
    %3442 = vmatprep.subr.mxu0 0.0
    %3443 = vmatpush2.msra.mxu0 0.0
    %3444 = vmatprep.subr.mxu0 0.0
    %3445 = vmatpush2.msra.mxu0 0.0
    %3446 = vmatprep.subr.mxu0 0.0
    %3447 = vmatpush2.msra.mxu0 0.0
    %3448 = vmatprep.subr.mxu0 0.0
    %3449 = vmatpush2.msra.mxu0 0.0
    %3450 = vmatprep.subr.mxu0 0.0
    %3451 = vmatpush2.msra.mxu0 0.0
    %3452 = vmatprep.subr.mxu0 0.0
    %3453 = vmatpush2.msra.mxu0 0.0
    %3454 = vmatprep.subr.mxu0 0.0
    %3455 = vmatpush2.msra.mxu0 0.0
    %3456 = vmatprep.subr.mxu0 0.0
    %3457 = vmatpush2.msra.mxu0 0.0
    %3458 = vmatprep.subr.mxu0 0.0
    %3459 = vmatpush2.msra.mxu0 0.0
    %3460 = vmatprep.subr.mxu0 0.0
    %3461 = vmatpush2.msra.mxu0 0.0
    %3462 = vmatprep.subr.mxu0 0.0
    %3463 = vmatpush2.msra.mxu0 0.0
    %3464 = vmatprep.subr.mxu0 0.0
    %3465 = vmatpush2.msra.mxu0 0.0
    %3466 = vmatprep.subr.mxu0 0.0
    %3467 = vmatpush2.msra.mxu0 0.0
    %3468 = vmatprep.subr.mxu0 0.0
    %3469 = vmatpush2.msra.mxu0 0.0
    %3470 = vmatprep.mubr.f32.mxu0 0.0
    %3471 = vmatmul.mubr.f32.gmra.mxu0 %v3102
    %v3472 = vpop.f32.mrf.mxu0
    %v3473 = vadd.f32 0.0, %v3472
    %v3474 = vpop.f32.mrf.mxu0
    %3475 = vdwg.mxu0
    %v3476 = vadd.f32 %v3405, %v3473
    %v3477 = vxor.u32 %v3476, 2147483648
    %v3478 = vmul.f32 %v3477, 1.442695
    %v3479 = vpow.pop %v3478
    %v3480 = vadd.f32 %v3479, 1.0
    %v3481 = vrcp.pop %v3480
    %v3482 = vmul.f32 1.0, %v3481
    %v3483 = vtanh.pop %v3476
    %v3484 = vmul.f32 %v3482, %v3022
    %3486 = vrot.lane.b32.xlu0 %v3483, 64
    %v3487 = vpop.permute.xlu0 %3486
    %v3489 = vmul.f32 %v3482, %v3487
    %3491 = vrot.lane.b32.xlu0 %v3489, 32
    %v3492 = vpop.permute.xlu0 %3491
    %v3494 = vadd.f32 %v3484, %v3492
    %v3495 = vtanh.pop %v3494
    %3497 = vrot.lane.b32.xlu0 %v3495, 64
    %v3498 = vpop.permute.xlu0 %3497
    %v3500 = vmul.f32 %v3482, %v3498
    %3501 = vmatprep.subr.mxu0 0.0
    %3502 = vmatpush1.msra.mxu0 0.0
    %3503 = vmatprep.subr.mxu0 0.0
    %3504 = vmatpush1.msra.mxu0 0.0
    %3505 = vmatprep.subr.mxu0 0.0
    %3506 = vmatpush1.msra.mxu0 0.0
    %3507 = vmatprep.subr.mxu0 0.0
    %3508 = vmatpush1.msra.mxu0 0.0
    %3509 = vmatprep.subr.mxu0 0.0
    %3510 = vmatpush1.msra.mxu0 0.0
    %3511 = vmatprep.subr.mxu0 0.0
    %3512 = vmatpush1.msra.mxu0 0.0
    %3513 = vmatprep.subr.mxu0 0.0
    %3514 = vmatpush1.msra.mxu0 0.0
    %3515 = vmatprep.subr.mxu0 0.0
    %3516 = vmatpush1.msra.mxu0 0.0
    %3517 = vmatprep.subr.mxu0 0.0
    %3518 = vmatpush1.msra.mxu0 0.0
    %3519 = vmatprep.subr.mxu0 0.0
    %3520 = vmatpush1.msra.mxu0 0.0
    %3521 = vmatprep.subr.mxu0 0.0
    %3522 = vmatpush1.msra.mxu0 0.0
    %3523 = vmatprep.subr.mxu0 0.0
    %3524 = vmatpush1.msra.mxu0 0.0
    %3525 = vmatprep.subr.mxu0 0.0
    %3526 = vmatpush1.msra.mxu0 %v231
    %3527 = vmatprep.subr.mxu0 0.0
    %3528 = vmatpush1.msra.mxu0 %v230
    %3529 = vmatprep.subr.mxu0 0.0
    %3530 = vmatpush1.msra.mxu0 %v229
    %3531 = vmatprep.subr.mxu0 0.0
    %3532 = vmatpush1.msra.mxu0 %v228
    %3533 = vmatprep.subr.mxu0 0.0
    %3534 = vmatpush2.msra.mxu0 0.0
    %3535 = vmatprep.subr.mxu0 0.0
    %3536 = vmatpush2.msra.mxu0 0.0
    %3537 = vmatprep.subr.mxu0 0.0
    %3538 = vmatpush2.msra.mxu0 0.0
    %3539 = vmatprep.subr.mxu0 0.0
    %3540 = vmatpush2.msra.mxu0 0.0
    %3541 = vmatprep.subr.mxu0 0.0
    %3542 = vmatpush2.msra.mxu0 0.0
    %3543 = vmatprep.subr.mxu0 0.0
    %3544 = vmatpush2.msra.mxu0 0.0
    %3545 = vmatprep.subr.mxu0 0.0
    %3546 = vmatpush2.msra.mxu0 0.0
    %3547 = vmatprep.subr.mxu0 0.0
    %3548 = vmatpush2.msra.mxu0 0.0
    %3549 = vmatprep.subr.mxu0 0.0
    %3550 = vmatpush2.msra.mxu0 0.0
    %3551 = vmatprep.subr.mxu0 0.0
    %3552 = vmatpush2.msra.mxu0 0.0
    %3553 = vmatprep.subr.mxu0 0.0
    %3554 = vmatpush2.msra.mxu0 0.0
    %3555 = vmatprep.subr.mxu0 0.0
    %3556 = vmatpush2.msra.mxu0 0.0
    %3557 = vmatprep.subr.mxu0 0.0
    %3558 = vmatpush2.msra.mxu0 0.0
    %3559 = vmatprep.subr.mxu0 0.0
    %3560 = vmatpush2.msra.mxu0 0.0
    %3561 = vmatprep.subr.mxu0 0.0
    %3562 = vmatpush2.msra.mxu0 0.0
    %3563 = vmatprep.subr.mxu0 0.0
    %3564 = vmatpush2.msra.mxu0 0.0
    %3565 = vmatprep.mubr.f32.mxu0 0.0
    %3566 = vmatmul.mubr.f32.gmra.mxu0 %v3202
    %v3567 = vpop.f32.mrf.mxu0
    %v3568 = vadd.f32 0.0, %v3567
    %v3569 = vpop.f32.mrf.mxu0
    %3570 = vdwg.mxu0
    %3572 = vrot.lane.b32.xlu0 %v3500, 32
    %v3573 = vpop.permute.xlu0 %3572
    %v3574 = vsel %vm271, %v3573, 0
    %3576 = vmatprep.subr.mxu0 0.0
    %3577 = vmatpush1.msra.mxu0 0.0
    %3578 = vmatprep.subr.mxu0 0.0
    %3579 = vmatpush1.msra.mxu0 0.0
    %3580 = vmatprep.subr.mxu0 0.0
    %3581 = vmatpush1.msra.mxu0 0.0
    %3582 = vmatprep.subr.mxu0 0.0
    %3583 = vmatpush1.msra.mxu0 0.0
    %3584 = vmatprep.subr.mxu0 0.0
    %3585 = vmatpush1.msra.mxu0 0.0
    %3586 = vmatprep.subr.mxu0 0.0
    %3587 = vmatpush1.msra.mxu0 0.0
    %3588 = vmatprep.subr.mxu0 0.0
    %3589 = vmatpush1.msra.mxu0 0.0
    %3590 = vmatprep.subr.mxu0 0.0
    %3591 = vmatpush1.msra.mxu0 0.0
    %3592 = vmatprep.subr.mxu0 0.0
    %3593 = vmatpush1.msra.mxu0 0.0
    %3594 = vmatprep.subr.mxu0 0.0
    %3595 = vmatpush1.msra.mxu0 0.0
    %3596 = vmatprep.subr.mxu0 0.0
    %3597 = vmatpush1.msra.mxu0 0.0
    %3598 = vmatprep.subr.mxu0 0.0
    %3599 = vmatpush1.msra.mxu0 0.0
    %3600 = vmatprep.subr.mxu0 0.0
    %3601 = vmatpush1.msra.mxu0 %v227
    %3602 = vmatprep.subr.mxu0 0.0
    %3603 = vmatpush1.msra.mxu0 %v226
    %3604 = vmatprep.subr.mxu0 0.0
    %3605 = vmatpush1.msra.mxu0 %v225
    %3606 = vmatprep.subr.mxu0 0.0
    %3607 = vmatpush1.msra.mxu0 %v224
    %3608 = vmatprep.subr.mxu0 0.0
    %3609 = vmatpush2.msra.mxu0 0.0
    %3610 = vmatprep.subr.mxu0 0.0
    %3611 = vmatpush2.msra.mxu0 0.0
    %3612 = vmatprep.subr.mxu0 0.0
    %3613 = vmatpush2.msra.mxu0 0.0
    %3614 = vmatprep.subr.mxu0 0.0
    %3615 = vmatpush2.msra.mxu0 0.0
    %3616 = vmatprep.subr.mxu0 0.0
    %3617 = vmatpush2.msra.mxu0 0.0
    %3618 = vmatprep.subr.mxu0 0.0
    %3619 = vmatpush2.msra.mxu0 0.0
    %3620 = vmatprep.subr.mxu0 0.0
    %3621 = vmatpush2.msra.mxu0 0.0
    %3622 = vmatprep.subr.mxu0 0.0
    %3623 = vmatpush2.msra.mxu0 0.0
    %3624 = vmatprep.subr.mxu0 0.0
    %3625 = vmatpush2.msra.mxu0 0.0
    %3626 = vmatprep.subr.mxu0 0.0
    %3627 = vmatpush2.msra.mxu0 0.0
    %3628 = vmatprep.subr.mxu0 0.0
    %3629 = vmatpush2.msra.mxu0 0.0
    %3630 = vmatprep.subr.mxu0 0.0
    %3631 = vmatpush2.msra.mxu0 0.0
    %3632 = vmatprep.subr.mxu0 0.0
    %3633 = vmatpush2.msra.mxu0 0.0
    %3634 = vmatprep.subr.mxu0 0.0
    %3635 = vmatpush2.msra.mxu0 0.0
    %3636 = vmatprep.subr.mxu0 0.0
    %3637 = vmatpush2.msra.mxu0 0.0
    %3638 = vmatprep.subr.mxu0 0.0
    %3639 = vmatpush2.msra.mxu0 0.0
    %3640 = vmatprep.mubr.f32.mxu0 0.0
    %3641 = vmatmul.mubr.f32.gmra.mxu0 %v3574
    %v3642 = vpop.f32.mrf.mxu0
    %v3643 = vadd.f32 %v3568, %v3642
    %v3644 = vpop.f32.mrf.mxu0
    %3645 = vdwg.mxu0
    %v3646 = vadd.f32 %v3643, %v241
    %v3647 = vxor.u32 %v3646, 2147483648
    %v3648 = vmul.f32 %v3647, 1.442695
    %v3649 = vpow.pop %v3648
    %v3650 = vadd.f32 %v3649, 1.0
    %v3651 = vrcp.pop %v3650
    %v3652 = vmul.f32 1.0, %v3651
    %v3653 = vtanh.pop %v3646
    %v3654 = vmul.f32 %v3652, %v3192
    %3656 = vrot.lane.b32.xlu0 %v3653, 64
    %v3657 = vpop.permute.xlu0 %3656
    %v3659 = vmul.f32 %v3652, %v3657
    %3661 = vrot.lane.b32.xlu0 %v3659, 32
    %v3662 = vpop.permute.xlu0 %3661
    %v3664 = vadd.f32 %v3654, %v3662
    %v3665 = vtanh.pop %v3664
    %3667 = vrot.lane.b32.xlu0 %v3665, 64
    %v3668 = vpop.permute.xlu0 %3667
    %v3670 = vmul.f32 %v3652, %v3668
    %3672 = vrot.lane.b32.xlu0 %v3670, 32
    %v3673 = vpop.permute.xlu0 %3672
    %v3674 = vsel %vm271, %v3673, 0
    %3676 = vmatprep.subr.mxu0 0.0
    %3677 = vmatpush1.msra.mxu0 0.0
    %3678 = vmatprep.subr.mxu0 0.0
    %3679 = vmatpush1.msra.mxu0 0.0
    %3680 = vmatprep.subr.mxu0 0.0
    %3681 = vmatpush1.msra.mxu0 0.0
    %3682 = vmatprep.subr.mxu0 0.0
    %3683 = vmatpush1.msra.mxu0 0.0
    %3684 = vmatprep.subr.mxu0 0.0
    %3685 = vmatpush1.msra.mxu0 0.0
    %3686 = vmatprep.subr.mxu0 0.0
    %3687 = vmatpush1.msra.mxu0 0.0
    %3688 = vmatprep.subr.mxu0 0.0
    %3689 = vmatpush1.msra.mxu0 0.0
    %3690 = vmatprep.subr.mxu0 0.0
    %3691 = vmatpush1.msra.mxu0 0.0
    %3692 = vmatprep.subr.mxu0 0.0
    %3693 = vmatpush1.msra.mxu0 0.0
    %3694 = vmatprep.subr.mxu0 0.0
    %3695 = vmatpush1.msra.mxu0 0.0
    %3696 = vmatprep.subr.mxu0 0.0
    %3697 = vmatpush1.msra.mxu0 0.0
    %3698 = vmatprep.subr.mxu0 0.0
    %3699 = vmatpush1.msra.mxu0 0.0
    %3700 = vmatprep.subr.mxu0 0.0
    %3701 = vmatpush1.msra.mxu0 %v235
    %3702 = vmatprep.subr.mxu0 0.0
    %3703 = vmatpush1.msra.mxu0 %v234
    %3704 = vmatprep.subr.mxu0 0.0
    %3705 = vmatpush1.msra.mxu0 %v233
    %3706 = vmatprep.subr.mxu0 0.0
    %3707 = vmatpush1.msra.mxu0 %v232
    %3708 = vmatprep.subr.mxu0 0.0
    %3709 = vmatpush2.msra.mxu0 0.0
    %3710 = vmatprep.subr.mxu0 0.0
    %3711 = vmatpush2.msra.mxu0 0.0
    %3712 = vmatprep.subr.mxu0 0.0
    %3713 = vmatpush2.msra.mxu0 0.0
    %3714 = vmatprep.subr.mxu0 0.0
    %3715 = vmatpush2.msra.mxu0 0.0
    %3716 = vmatprep.subr.mxu0 0.0
    %3717 = vmatpush2.msra.mxu0 0.0
    %3718 = vmatprep.subr.mxu0 0.0
    %3719 = vmatpush2.msra.mxu0 0.0
    %3720 = vmatprep.subr.mxu0 0.0
    %3721 = vmatpush2.msra.mxu0 0.0
    %3722 = vmatprep.subr.mxu0 0.0
    %3723 = vmatpush2.msra.mxu0 0.0
    %3724 = vmatprep.subr.mxu0 0.0
    %3725 = vmatpush2.msra.mxu0 0.0
    %3726 = vmatprep.subr.mxu0 0.0
    %3727 = vmatpush2.msra.mxu0 0.0
    %3728 = vmatprep.subr.mxu0 0.0
    %3729 = vmatpush2.msra.mxu0 0.0
    %3730 = vmatprep.subr.mxu0 0.0
    %3731 = vmatpush2.msra.mxu0 0.0
    %3732 = vmatprep.subr.mxu0 0.0
    %3733 = vmatpush2.msra.mxu0 0.0
    %3734 = vmatprep.subr.mxu0 0.0
    %3735 = vmatpush2.msra.mxu0 0.0
    %3736 = vmatprep.subr.mxu0 0.0
    %3737 = vmatpush2.msra.mxu0 0.0
    %3738 = vmatprep.subr.mxu0 0.0
    %3739 = vmatpush2.msra.mxu0 0.0
    %3740 = vmatprep.mubr.f32.mxu0 0.0
    %3741 = vmatmul.mubr.f32.gmra.mxu0 %v3674
    %v3742 = vpop.f32.mrf.mxu0
    %v3743 = vadd.f32 %v248, %v3742
    %v3744 = vpop.f32.mrf.mxu0
    %3745 = vdwg.mxu0
    %3746 = vmax.xlane.f32.xlu0 %v3743
    %v3747 = vpop.xlane.xlu0 %3746
    %v3748 = vsub.f32 %v3743, %v3747
    %v3749 = vmul.f32 %v3748, 1.442695
    %v3750 = vpow.pop %v3749
    %3751 = vadd.xlane.f32.xlu0 %v3750
    %v3752 = vpop.xlane.xlu0 %3751
    %v3753 = vlog2.pop %v3752
    %v3754 = vmul.f32 %v3753, 0.6931472
    %v3755 = vsub.f32 %v3748, %v3754
    %s3756 = scalar_lea.vmem [#allocation22], 48
    %3757 = vst [vmem:[%s3756] sm:$0xff] %v3755
    %vm3758 = vcmp.eq.f32.partialorder %v3743, %v3747
    %v3759 = vsel %vm3758, %v543, 128
    %v3760 = vand.u32 %v3759, 65535
    %v3761 = vshra.s32 %v3759, 16
    %v3762 = vcvt.s32.f32 %v3760
    %v3763 = vcvt.s32.f32 %v3761
    %3764 = vmin.xlane.f32.xlu0 %v3763
    %v3765 = vpop.xlane.xlu0 %3764
    %vm3766 = vcmp.eq.f32.partialorder %v3763, %v3765
    %v3767 = vsel %vm3766, %v3762, inf
    %3768 = vmin.xlane.f32.xlu0 %v3767
    %v3769 = vpop.xlane.xlu0 %3768
    %v3770 = vcvt.f32.s32 %v3769
    %v3771 = vcvt.f32.s32 %v3765
    %v3772 = vshll.u32 %v3771, 16
    %v3773 = vadd.s32 %v3772, %v3770
    %v3774 = vsel %vm546, %v3773, 128
    %vm3775 = vcmp.eq.s32.totalorder %v543, %v3774
    %v3776 = vsel %vm3775, 1.0, 0.0
    %v3777 = vrot.slane %v3776, 4
    %v3778 = vmax.f32 %v3776, %v3777
    %v3779 = vrot.slane %v3778, 2
    %v3780 = vmax.f32 %v3778, %v3779
    %v3781 = vrot.slane %v3780, 1
    %v3782 = vmax.f32 %v3780, %v3781
    %vm3783 = vcmp.gt.f32.partialorder %v3782, 0.0
    %v3784 = vsel %vm3783, 1, 0
    %vm3785 = vcmp.eq.s32.totalorder %v3784, 1
    %v3786 = vsel %vm3785, 1, 0
    %v3787 = vcvt.s32.f32 %v3786
    %v3789 = vsel %vm951, %v3787, %v3787
    %v3790 = vsel %vm953, %v3787, %v3789
    %v3791 = vsel %vm955, %v3787, %v3790
    %v3792 = vsel %vm957, %v3787, %v3791
    %v3793 = vsel %vm959, %v3787, %v3792
    %v3794 = vsel %vm961, %v3787, %v3793
    %3796 = vmatprep.subr.mxu0 0.0
    %3797 = vmatpush1.msra.mxu0 %v219
    %3798 = vmatprep.subr.mxu0 0.0
    %3799 = vmatpush1.msra.mxu0 %v218
    %3800 = vmatprep.subr.mxu0 0.0
    %3801 = vmatpush1.msra.mxu0 %v217
    %3802 = vmatprep.subr.mxu0 0.0
    %3803 = vmatpush1.msra.mxu0 %v216
    %3804 = vmatprep.subr.mxu0 0.0
    %3805 = vmatpush1.msra.mxu0 %v215
    %3806 = vmatprep.subr.mxu0 0.0
    %3807 = vmatpush1.msra.mxu0 %v214
    %3808 = vmatprep.subr.mxu0 0.0
    %3809 = vmatpush1.msra.mxu0 %v213
    %3810 = vmatprep.subr.mxu0 0.0
    %3811 = vmatpush1.msra.mxu0 %v212
    %3812 = vmatprep.subr.mxu0 0.0
    %3813 = vmatpush1.msra.mxu0 %v211
    %3814 = vmatprep.subr.mxu0 0.0
    %3815 = vmatpush1.msra.mxu0 %v210
    %3816 = vmatprep.subr.mxu0 0.0
    %3817 = vmatpush1.msra.mxu0 %v209
    %3818 = vmatprep.subr.mxu0 0.0
    %3819 = vmatpush1.msra.mxu0 %v208
    %3820 = vmatprep.subr.mxu0 0.0
    %3821 = vmatpush1.msra.mxu0 %v207
    %3822 = vmatprep.subr.mxu0 0.0
    %3823 = vmatpush1.msra.mxu0 %v206
    %3824 = vmatprep.subr.mxu0 0.0
    %3825 = vmatpush1.msra.mxu0 %v205
    %3826 = vmatprep.subr.mxu0 0.0
    %3827 = vmatpush1.msra.mxu0 %v204
    %3828 = vmatprep.subr.mxu0 0.0
    %3829 = vmatpush2.msra.mxu0 0.0
    %3830 = vmatprep.subr.mxu0 0.0
    %3831 = vmatpush2.msra.mxu0 0.0
    %3832 = vmatprep.subr.mxu0 0.0
    %3833 = vmatpush2.msra.mxu0 0.0
    %3834 = vmatprep.subr.mxu0 0.0
    %3835 = vmatpush2.msra.mxu0 0.0
    %3836 = vmatprep.subr.mxu0 0.0
    %3837 = vmatpush2.msra.mxu0 0.0
    %3838 = vmatprep.subr.mxu0 0.0
    %3839 = vmatpush2.msra.mxu0 0.0
    %3840 = vmatprep.subr.mxu0 0.0
    %3841 = vmatpush2.msra.mxu0 0.0
    %3842 = vmatprep.subr.mxu0 0.0
    %3843 = vmatpush2.msra.mxu0 0.0
    %3844 = vmatprep.subr.mxu0 0.0
    %3845 = vmatpush2.msra.mxu0 0.0
    %3846 = vmatprep.subr.mxu0 0.0
    %3847 = vmatpush2.msra.mxu0 0.0
    %3848 = vmatprep.subr.mxu0 0.0
    %3849 = vmatpush2.msra.mxu0 0.0
    %3850 = vmatprep.subr.mxu0 0.0
    %3851 = vmatpush2.msra.mxu0 0.0
    %3852 = vmatprep.subr.mxu0 0.0
    %3853 = vmatpush2.msra.mxu0 0.0
    %3854 = vmatprep.subr.mxu0 0.0
    %3855 = vmatpush2.msra.mxu0 0.0
    %3856 = vmatprep.subr.mxu0 0.0
    %3857 = vmatpush2.msra.mxu0 0.0
    %3858 = vmatprep.subr.mxu0 0.0
    %3859 = vmatpush2.msra.mxu0 0.0
    %3860 = vmatprep.mubr.f32.mxu0 0.0
    %3861 = vmatmul.mubr.f32.gmra.mxu0 %v3794
    %v3862 = vpop.f32.mrf.mxu0
    %v3863 = vadd.f32 0.0, %v3862
    %v3864 = vpop.f32.mrf.mxu0
    %3865 = vdwg.mxu0
    %s3866 = sadd.s32 %s1034, 6
    %s3867 = sld [smem:[#allocation4 + %s3866]]
    %p3868 = scmp.gt.s32.totalorder %s3867, 0
    %v3869 = vlaneseq
    %v3870 = vshrl.u32 %v3869, 7
    %v3871 = vsub.s32 0, %v3870
    %v3872 = vrot.slane %v3863, %v3871
    %s3873 = scalar_select %p3868, 1, 0
    %v3874 = vstv %s3873
    %vm3875 = vcmp.eq.s32.totalorder %v3874, 1
    %v3876 = vsel %vm3875, %v524, %v3872
    %v3877 = vadd.f32 %v3876, %v404
    %3878 = vmatprep.subr.mxu0 0.0
    %3879 = vmatpush1.msra.mxu0 0.0
    %3880 = vmatprep.subr.mxu0 0.0
    %3881 = vmatpush1.msra.mxu0 0.0
    %3882 = vmatprep.subr.mxu0 0.0
    %3883 = vmatpush1.msra.mxu0 0.0
    %3884 = vmatprep.subr.mxu0 0.0
    %3885 = vmatpush1.msra.mxu0 0.0
    %3886 = vmatprep.subr.mxu0 0.0
    %3887 = vmatpush1.msra.mxu0 0.0
    %3888 = vmatprep.subr.mxu0 0.0
    %3889 = vmatpush1.msra.mxu0 0.0
    %3890 = vmatprep.subr.mxu0 0.0
    %3891 = vmatpush1.msra.mxu0 0.0
    %3892 = vmatprep.subr.mxu0 0.0
    %3893 = vmatpush1.msra.mxu0 0.0
    %3894 = vmatprep.subr.mxu0 0.0
    %3895 = vmatpush1.msra.mxu0 0.0
    %3896 = vmatprep.subr.mxu0 0.0
    %3897 = vmatpush1.msra.mxu0 0.0
    %3898 = vmatprep.subr.mxu0 0.0
    %3899 = vmatpush1.msra.mxu0 0.0
    %3900 = vmatprep.subr.mxu0 0.0
    %3901 = vmatpush1.msra.mxu0 0.0
    %3902 = vmatprep.subr.mxu0 0.0
    %3903 = vmatpush1.msra.mxu0 %v223
    %3904 = vmatprep.subr.mxu0 0.0
    %3905 = vmatpush1.msra.mxu0 %v222
    %3906 = vmatprep.subr.mxu0 0.0
    %3907 = vmatpush1.msra.mxu0 %v221
    %3908 = vmatprep.subr.mxu0 0.0
    %3909 = vmatpush1.msra.mxu0 %v220
    %3910 = vmatprep.subr.mxu0 0.0
    %3911 = vmatpush2.msra.mxu0 0.0
    %3912 = vmatprep.subr.mxu0 0.0
    %3913 = vmatpush2.msra.mxu0 0.0
    %3914 = vmatprep.subr.mxu0 0.0
    %3915 = vmatpush2.msra.mxu0 0.0
    %3916 = vmatprep.subr.mxu0 0.0
    %3917 = vmatpush2.msra.mxu0 0.0
    %3918 = vmatprep.subr.mxu0 0.0
    %3919 = vmatpush2.msra.mxu0 0.0
    %3920 = vmatprep.subr.mxu0 0.0
    %3921 = vmatpush2.msra.mxu0 0.0
    %3922 = vmatprep.subr.mxu0 0.0
    %3923 = vmatpush2.msra.mxu0 0.0
    %3924 = vmatprep.subr.mxu0 0.0
    %3925 = vmatpush2.msra.mxu0 0.0
    %3926 = vmatprep.subr.mxu0 0.0
    %3927 = vmatpush2.msra.mxu0 0.0
    %3928 = vmatprep.subr.mxu0 0.0
    %3929 = vmatpush2.msra.mxu0 0.0
    %3930 = vmatprep.subr.mxu0 0.0
    %3931 = vmatpush2.msra.mxu0 0.0
    %3932 = vmatprep.subr.mxu0 0.0
    %3933 = vmatpush2.msra.mxu0 0.0
    %3934 = vmatprep.subr.mxu0 0.0
    %3935 = vmatpush2.msra.mxu0 0.0
    %3936 = vmatprep.subr.mxu0 0.0
    %3937 = vmatpush2.msra.mxu0 0.0
    %3938 = vmatprep.subr.mxu0 0.0
    %3939 = vmatpush2.msra.mxu0 0.0
    %3940 = vmatprep.subr.mxu0 0.0
    %3941 = vmatpush2.msra.mxu0 0.0
    %3942 = vmatprep.mubr.f32.mxu0 0.0
    %3943 = vmatmul.mubr.f32.gmra.mxu0 %v3574
    %v3944 = vpop.f32.mrf.mxu0
    %v3945 = vadd.f32 0.0, %v3944
    %v3946 = vpop.f32.mrf.mxu0
    %3947 = vdwg.mxu0
    %v3948 = vadd.f32 %v3877, %v3945
    %v3949 = vxor.u32 %v3948, 2147483648
    %v3950 = vmul.f32 %v3949, 1.442695
    %v3951 = vpow.pop %v3950
    %v3952 = vadd.f32 %v3951, 1.0
    %v3953 = vrcp.pop %v3952
    %v3954 = vmul.f32 1.0, %v3953
    %v3955 = vtanh.pop %v3948
    %v3956 = vmul.f32 %v3954, %v3494
    %3958 = vrot.lane.b32.xlu0 %v3955, 64
    %v3959 = vpop.permute.xlu0 %3958
    %v3961 = vmul.f32 %v3954, %v3959
    %3963 = vrot.lane.b32.xlu0 %v3961, 32
    %v3964 = vpop.permute.xlu0 %3963
    %v3966 = vadd.f32 %v3956, %v3964
    %v3967 = vtanh.pop %v3966
    %3969 = vrot.lane.b32.xlu0 %v3967, 64
    %v3970 = vpop.permute.xlu0 %3969
    %v3972 = vmul.f32 %v3954, %v3970
    %3973 = vmatprep.subr.mxu0 0.0
    %3974 = vmatpush1.msra.mxu0 0.0
    %3975 = vmatprep.subr.mxu0 0.0
    %3976 = vmatpush1.msra.mxu0 0.0
    %3977 = vmatprep.subr.mxu0 0.0
    %3978 = vmatpush1.msra.mxu0 0.0
    %3979 = vmatprep.subr.mxu0 0.0
    %3980 = vmatpush1.msra.mxu0 0.0
    %3981 = vmatprep.subr.mxu0 0.0
    %3982 = vmatpush1.msra.mxu0 0.0
    %3983 = vmatprep.subr.mxu0 0.0
    %3984 = vmatpush1.msra.mxu0 0.0
    %3985 = vmatprep.subr.mxu0 0.0
    %3986 = vmatpush1.msra.mxu0 0.0
    %3987 = vmatprep.subr.mxu0 0.0
    %3988 = vmatpush1.msra.mxu0 0.0
    %3989 = vmatprep.subr.mxu0 0.0
    %3990 = vmatpush1.msra.mxu0 0.0
    %3991 = vmatprep.subr.mxu0 0.0
    %3992 = vmatpush1.msra.mxu0 0.0
    %3993 = vmatprep.subr.mxu0 0.0
    %3994 = vmatpush1.msra.mxu0 0.0
    %3995 = vmatprep.subr.mxu0 0.0
    %3996 = vmatpush1.msra.mxu0 0.0
    %3997 = vmatprep.subr.mxu0 0.0
    %3998 = vmatpush1.msra.mxu0 %v231
    %3999 = vmatprep.subr.mxu0 0.0
    %4000 = vmatpush1.msra.mxu0 %v230
    %4001 = vmatprep.subr.mxu0 0.0
    %4002 = vmatpush1.msra.mxu0 %v229
    %4003 = vmatprep.subr.mxu0 0.0
    %4004 = vmatpush1.msra.mxu0 %v228
    %4005 = vmatprep.subr.mxu0 0.0
    %4006 = vmatpush2.msra.mxu0 0.0
    %4007 = vmatprep.subr.mxu0 0.0
    %4008 = vmatpush2.msra.mxu0 0.0
    %4009 = vmatprep.subr.mxu0 0.0
    %4010 = vmatpush2.msra.mxu0 0.0
    %4011 = vmatprep.subr.mxu0 0.0
    %4012 = vmatpush2.msra.mxu0 0.0
    %4013 = vmatprep.subr.mxu0 0.0
    %4014 = vmatpush2.msra.mxu0 0.0
    %4015 = vmatprep.subr.mxu0 0.0
    %4016 = vmatpush2.msra.mxu0 0.0
    %4017 = vmatprep.subr.mxu0 0.0
    %4018 = vmatpush2.msra.mxu0 0.0
    %4019 = vmatprep.subr.mxu0 0.0
    %4020 = vmatpush2.msra.mxu0 0.0
    %4021 = vmatprep.subr.mxu0 0.0
    %4022 = vmatpush2.msra.mxu0 0.0
    %4023 = vmatprep.subr.mxu0 0.0
    %4024 = vmatpush2.msra.mxu0 0.0
    %4025 = vmatprep.subr.mxu0 0.0
    %4026 = vmatpush2.msra.mxu0 0.0
    %4027 = vmatprep.subr.mxu0 0.0
    %4028 = vmatpush2.msra.mxu0 0.0
    %4029 = vmatprep.subr.mxu0 0.0
    %4030 = vmatpush2.msra.mxu0 0.0
    %4031 = vmatprep.subr.mxu0 0.0
    %4032 = vmatpush2.msra.mxu0 0.0
    %4033 = vmatprep.subr.mxu0 0.0
    %4034 = vmatpush2.msra.mxu0 0.0
    %4035 = vmatprep.subr.mxu0 0.0
    %4036 = vmatpush2.msra.mxu0 0.0
    %4037 = vmatprep.mubr.f32.mxu0 0.0
    %4038 = vmatmul.mubr.f32.gmra.mxu0 %v3674
    %v4039 = vpop.f32.mrf.mxu0
    %v4040 = vadd.f32 0.0, %v4039
    %v4041 = vpop.f32.mrf.mxu0
    %4042 = vdwg.mxu0
    %4044 = vrot.lane.b32.xlu0 %v3972, 32
    %v4045 = vpop.permute.xlu0 %4044
    %v4046 = vsel %vm271, %v4045, 0
    %4048 = vmatprep.subr.mxu0 0.0
    %4049 = vmatpush1.msra.mxu0 0.0
    %4050 = vmatprep.subr.mxu0 0.0
    %4051 = vmatpush1.msra.mxu0 0.0
    %4052 = vmatprep.subr.mxu0 0.0
    %4053 = vmatpush1.msra.mxu0 0.0
    %4054 = vmatprep.subr.mxu0 0.0
    %4055 = vmatpush1.msra.mxu0 0.0
    %4056 = vmatprep.subr.mxu0 0.0
    %4057 = vmatpush1.msra.mxu0 0.0
    %4058 = vmatprep.subr.mxu0 0.0
    %4059 = vmatpush1.msra.mxu0 0.0
    %4060 = vmatprep.subr.mxu0 0.0
    %4061 = vmatpush1.msra.mxu0 0.0
    %4062 = vmatprep.subr.mxu0 0.0
    %4063 = vmatpush1.msra.mxu0 0.0
    %4064 = vmatprep.subr.mxu0 0.0
    %4065 = vmatpush1.msra.mxu0 0.0
    %4066 = vmatprep.subr.mxu0 0.0
    %4067 = vmatpush1.msra.mxu0 0.0
    %4068 = vmatprep.subr.mxu0 0.0
    %4069 = vmatpush1.msra.mxu0 0.0
    %4070 = vmatprep.subr.mxu0 0.0
    %4071 = vmatpush1.msra.mxu0 0.0
    %4072 = vmatprep.subr.mxu0 0.0
    %4073 = vmatpush1.msra.mxu0 %v227
    %4074 = vmatprep.subr.mxu0 0.0
    %4075 = vmatpush1.msra.mxu0 %v226
    %4076 = vmatprep.subr.mxu0 0.0
    %4077 = vmatpush1.msra.mxu0 %v225
    %4078 = vmatprep.subr.mxu0 0.0
    %4079 = vmatpush1.msra.mxu0 %v224
    %4080 = vmatprep.subr.mxu0 0.0
    %4081 = vmatpush2.msra.mxu0 0.0
    %4082 = vmatprep.subr.mxu0 0.0
    %4083 = vmatpush2.msra.mxu0 0.0
    %4084 = vmatprep.subr.mxu0 0.0
    %4085 = vmatpush2.msra.mxu0 0.0
    %4086 = vmatprep.subr.mxu0 0.0
    %4087 = vmatpush2.msra.mxu0 0.0
    %4088 = vmatprep.subr.mxu0 0.0
    %4089 = vmatpush2.msra.mxu0 0.0
    %4090 = vmatprep.subr.mxu0 0.0
    %4091 = vmatpush2.msra.mxu0 0.0
    %4092 = vmatprep.subr.mxu0 0.0
    %4093 = vmatpush2.msra.mxu0 0.0
    %4094 = vmatprep.subr.mxu0 0.0
    %4095 = vmatpush2.msra.mxu0 0.0
    %4096 = vmatprep.subr.mxu0 0.0
    %4097 = vmatpush2.msra.mxu0 0.0
    %4098 = vmatprep.subr.mxu0 0.0
    %4099 = vmatpush2.msra.mxu0 0.0
    %4100 = vmatprep.subr.mxu0 0.0
    %4101 = vmatpush2.msra.mxu0 0.0
    %4102 = vmatprep.subr.mxu0 0.0
    %4103 = vmatpush2.msra.mxu0 0.0
    %4104 = vmatprep.subr.mxu0 0.0
    %4105 = vmatpush2.msra.mxu0 0.0
    %4106 = vmatprep.subr.mxu0 0.0
    %4107 = vmatpush2.msra.mxu0 0.0
    %4108 = vmatprep.subr.mxu0 0.0
    %4109 = vmatpush2.msra.mxu0 0.0
    %4110 = vmatprep.subr.mxu0 0.0
    %4111 = vmatpush2.msra.mxu0 0.0
    %4112 = vmatprep.mubr.f32.mxu0 0.0
    %4113 = vmatmul.mubr.f32.gmra.mxu0 %v4046
    %v4114 = vpop.f32.mrf.mxu0
    %v4115 = vadd.f32 %v4040, %v4114
    %v4116 = vpop.f32.mrf.mxu0
    %4117 = vdwg.mxu0
    %v4118 = vadd.f32 %v4115, %v241
    %v4119 = vxor.u32 %v4118, 2147483648
    %v4120 = vmul.f32 %v4119, 1.442695
    %v4121 = vpow.pop %v4120
    %v4122 = vadd.f32 %v4121, 1.0
    %v4123 = vrcp.pop %v4122
    %v4124 = vmul.f32 1.0, %v4123
    %v4125 = vtanh.pop %v4118
    %v4126 = vmul.f32 %v4124, %v3664
    %4128 = vrot.lane.b32.xlu0 %v4125, 64
    %v4129 = vpop.permute.xlu0 %4128
    %v4131 = vmul.f32 %v4124, %v4129
    %4133 = vrot.lane.b32.xlu0 %v4131, 32
    %v4134 = vpop.permute.xlu0 %4133
    %v4136 = vadd.f32 %v4126, %v4134
    %v4137 = vtanh.pop %v4136
    %4139 = vrot.lane.b32.xlu0 %v4137, 64
    %v4140 = vpop.permute.xlu0 %4139
    %v4142 = vmul.f32 %v4124, %v4140
    %4144 = vrot.lane.b32.xlu0 %v4142, 32
    %v4145 = vpop.permute.xlu0 %4144
    %v4146 = vsel %vm271, %v4145, 0
    %4148 = vmatprep.subr.mxu0 0.0
    %4149 = vmatpush1.msra.mxu0 0.0
    %4150 = vmatprep.subr.mxu0 0.0
    %4151 = vmatpush1.msra.mxu0 0.0
    %4152 = vmatprep.subr.mxu0 0.0
    %4153 = vmatpush1.msra.mxu0 0.0
    %4154 = vmatprep.subr.mxu0 0.0
    %4155 = vmatpush1.msra.mxu0 0.0
    %4156 = vmatprep.subr.mxu0 0.0
    %4157 = vmatpush1.msra.mxu0 0.0
    %4158 = vmatprep.subr.mxu0 0.0
    %4159 = vmatpush1.msra.mxu0 0.0
    %4160 = vmatprep.subr.mxu0 0.0
    %4161 = vmatpush1.msra.mxu0 0.0
    %4162 = vmatprep.subr.mxu0 0.0
    %4163 = vmatpush1.msra.mxu0 0.0
    %4164 = vmatprep.subr.mxu0 0.0
    %4165 = vmatpush1.msra.mxu0 0.0
    %4166 = vmatprep.subr.mxu0 0.0
    %4167 = vmatpush1.msra.mxu0 0.0
    %4168 = vmatprep.subr.mxu0 0.0
    %4169 = vmatpush1.msra.mxu0 0.0
    %4170 = vmatprep.subr.mxu0 0.0
    %4171 = vmatpush1.msra.mxu0 0.0
    %4172 = vmatprep.subr.mxu0 0.0
    %4173 = vmatpush1.msra.mxu0 %v235
    %4174 = vmatprep.subr.mxu0 0.0
    %4175 = vmatpush1.msra.mxu0 %v234
    %4176 = vmatprep.subr.mxu0 0.0
    %4177 = vmatpush1.msra.mxu0 %v233
    %4178 = vmatprep.subr.mxu0 0.0
    %4179 = vmatpush1.msra.mxu0 %v232
    %4180 = vmatprep.subr.mxu0 0.0
    %4181 = vmatpush2.msra.mxu0 0.0
    %4182 = vmatprep.subr.mxu0 0.0
    %4183 = vmatpush2.msra.mxu0 0.0
    %4184 = vmatprep.subr.mxu0 0.0
    %4185 = vmatpush2.msra.mxu0 0.0
    %4186 = vmatprep.subr.mxu0 0.0
    %4187 = vmatpush2.msra.mxu0 0.0
    %4188 = vmatprep.subr.mxu0 0.0
    %4189 = vmatpush2.msra.mxu0 0.0
    %4190 = vmatprep.subr.mxu0 0.0
    %4191 = vmatpush2.msra.mxu0 0.0
    %4192 = vmatprep.subr.mxu0 0.0
    %4193 = vmatpush2.msra.mxu0 0.0
    %4194 = vmatprep.subr.mxu0 0.0
    %4195 = vmatpush2.msra.mxu0 0.0
    %4196 = vmatprep.subr.mxu0 0.0
    %4197 = vmatpush2.msra.mxu0 0.0
    %4198 = vmatprep.subr.mxu0 0.0
    %4199 = vmatpush2.msra.mxu0 0.0
    %4200 = vmatprep.subr.mxu0 0.0
    %4201 = vmatpush2.msra.mxu0 0.0
    %4202 = vmatprep.subr.mxu0 0.0
    %4203 = vmatpush2.msra.mxu0 0.0
    %4204 = vmatprep.subr.mxu0 0.0
    %4205 = vmatpush2.msra.mxu0 0.0
    %4206 = vmatprep.subr.mxu0 0.0
    %4207 = vmatpush2.msra.mxu0 0.0
    %4208 = vmatprep.subr.mxu0 0.0
    %4209 = vmatpush2.msra.mxu0 0.0
    %4210 = vmatprep.subr.mxu0 0.0
    %4211 = vmatpush2.msra.mxu0 0.0
    %4212 = vmatprep.mubr.f32.mxu0 0.0
    %4213 = vmatmul.mubr.f32.gmra.mxu0 %v4146
    %v4214 = vpop.f32.mrf.mxu0
    %v4215 = vadd.f32 %v248, %v4214
    %v4216 = vpop.f32.mrf.mxu0
    %4217 = vdwg.mxu0
    %4218 = vmax.xlane.f32.xlu0 %v4215
    %v4219 = vpop.xlane.xlu0 %4218
    %v4220 = vsub.f32 %v4215, %v4219
    %v4221 = vmul.f32 %v4220, 1.442695
    %v4222 = vpow.pop %v4221
    %4223 = vadd.xlane.f32.xlu0 %v4222
    %v4224 = vpop.xlane.xlu0 %4223
    %v4225 = vlog2.pop %v4224
    %v4226 = vmul.f32 %v4225, 0.6931472
    %v4227 = vsub.f32 %v4220, %v4226
    %s4228 = scalar_lea.vmem [#allocation22], 56
    %4229 = vst [vmem:[%s4228] sm:$0xff] %v4227
    %vm4230 = vcmp.eq.f32.partialorder %v4215, %v4219
    %v4231 = vsel %vm4230, %v543, 128
    %v4232 = vand.u32 %v4231, 65535
    %v4233 = vshra.s32 %v4231, 16
    %v4234 = vcvt.s32.f32 %v4232
    %v4235 = vcvt.s32.f32 %v4233
    %4236 = vmin.xlane.f32.xlu0 %v4235
    %v4237 = vpop.xlane.xlu0 %4236
    %vm4238 = vcmp.eq.f32.partialorder %v4235, %v4237
    %v4239 = vsel %vm4238, %v4234, inf
    %4240 = vmin.xlane.f32.xlu0 %v4239
    %v4241 = vpop.xlane.xlu0 %4240
    %v4242 = vcvt.f32.s32 %v4241
    %v4243 = vcvt.f32.s32 %v4237
    %v4244 = vshll.u32 %v4243, 16
    %v4245 = vadd.s32 %v4244, %v4242
    %v4246 = vsel %vm546, %v4245, 128
    %vm4247 = vcmp.eq.s32.totalorder %v543, %v4246
    %v4248 = vsel %vm4247, 1.0, 0.0
    %v4249 = vrot.slane %v4248, 4
    %v4250 = vmax.f32 %v4248, %v4249
    %v4251 = vrot.slane %v4250, 2
    %v4252 = vmax.f32 %v4250, %v4251
    %v4253 = vrot.slane %v4252, 1
    %v4254 = vmax.f32 %v4252, %v4253
    %vm4255 = vcmp.gt.f32.partialorder %v4254, 0.0
    %v4256 = vsel %vm4255, 1, 0
    %vm4257 = vcmp.eq.s32.totalorder %v4256, 1
    %v4258 = vsel %vm4257, 1, 0
    %v4259 = vcvt.s32.f32 %v4258
    %v4261 = vsel %vm951, %v4259, %v4259
    %v4262 = vsel %vm953, %v4259, %v4261
    %v4263 = vsel %vm955, %v4259, %v4262
    %v4264 = vsel %vm957, %v4259, %v4263
    %v4265 = vsel %vm959, %v4259, %v4264
    %v4266 = vsel %vm961, %v4259, %v4265
    %4268 = vmatprep.subr.mxu0 0.0
    %4269 = vmatpush1.msra.mxu0 %v219
    %4270 = vmatprep.subr.mxu0 0.0
    %4271 = vmatpush1.msra.mxu0 %v218
    %4272 = vmatprep.subr.mxu0 0.0
    %4273 = vmatpush1.msra.mxu0 %v217
    %4274 = vmatprep.subr.mxu0 0.0
    %4275 = vmatpush1.msra.mxu0 %v216
    %4276 = vmatprep.subr.mxu0 0.0
    %4277 = vmatpush1.msra.mxu0 %v215
    %4278 = vmatprep.subr.mxu0 0.0
    %4279 = vmatpush1.msra.mxu0 %v214
    %4280 = vmatprep.subr.mxu0 0.0
    %4281 = vmatpush1.msra.mxu0 %v213
    %4282 = vmatprep.subr.mxu0 0.0
    %4283 = vmatpush1.msra.mxu0 %v212
    %4284 = vmatprep.subr.mxu0 0.0
    %4285 = vmatpush1.msra.mxu0 %v211
    %4286 = vmatprep.subr.mxu0 0.0
    %4287 = vmatpush1.msra.mxu0 %v210
    %4288 = vmatprep.subr.mxu0 0.0
    %4289 = vmatpush1.msra.mxu0 %v209
    %4290 = vmatprep.subr.mxu0 0.0
    %4291 = vmatpush1.msra.mxu0 %v208
    %4292 = vmatprep.subr.mxu0 0.0
    %4293 = vmatpush1.msra.mxu0 %v207
    %4294 = vmatprep.subr.mxu0 0.0
    %4295 = vmatpush1.msra.mxu0 %v206
    %4296 = vmatprep.subr.mxu0 0.0
    %4297 = vmatpush1.msra.mxu0 %v205
    %4298 = vmatprep.subr.mxu0 0.0
    %4299 = vmatpush1.msra.mxu0 %v204
    %4300 = vmatprep.subr.mxu0 0.0
    %4301 = vmatpush2.msra.mxu0 0.0
    %4302 = vmatprep.subr.mxu0 0.0
    %4303 = vmatpush2.msra.mxu0 0.0
    %4304 = vmatprep.subr.mxu0 0.0
    %4305 = vmatpush2.msra.mxu0 0.0
    %4306 = vmatprep.subr.mxu0 0.0
    %4307 = vmatpush2.msra.mxu0 0.0
    %4308 = vmatprep.subr.mxu0 0.0
    %4309 = vmatpush2.msra.mxu0 0.0
    %4310 = vmatprep.subr.mxu0 0.0
    %4311 = vmatpush2.msra.mxu0 0.0
    %4312 = vmatprep.subr.mxu0 0.0
    %4313 = vmatpush2.msra.mxu0 0.0
    %4314 = vmatprep.subr.mxu0 0.0
    %4315 = vmatpush2.msra.mxu0 0.0
    %4316 = vmatprep.subr.mxu0 0.0
    %4317 = vmatpush2.msra.mxu0 0.0
    %4318 = vmatprep.subr.mxu0 0.0
    %4319 = vmatpush2.msra.mxu0 0.0
    %4320 = vmatprep.subr.mxu0 0.0
    %4321 = vmatpush2.msra.mxu0 0.0
    %4322 = vmatprep.subr.mxu0 0.0
    %4323 = vmatpush2.msra.mxu0 0.0
    %4324 = vmatprep.subr.mxu0 0.0
    %4325 = vmatpush2.msra.mxu0 0.0
    %4326 = vmatprep.subr.mxu0 0.0
    %4327 = vmatpush2.msra.mxu0 0.0
    %4328 = vmatprep.subr.mxu0 0.0
    %4329 = vmatpush2.msra.mxu0 0.0
    %4330 = vmatprep.subr.mxu0 0.0
    %4331 = vmatpush2.msra.mxu0 0.0
    %4332 = vmatprep.mubr.f32.mxu0 0.0
    %4333 = vmatmul.mubr.f32.gmra.mxu0 %v4266
    %v4334 = vpop.f32.mrf.mxu0
    %v4335 = vadd.f32 0.0, %v4334
    %v4336 = vpop.f32.mrf.mxu0
    %4337 = vdwg.mxu0
    %s4338 = sadd.s32 %s1034, 7
    %s4339 = sld [smem:[#allocation4 + %s4338]]
    %p4340 = scmp.gt.s32.totalorder %s4339, 0
    %v4341 = vlaneseq
    %v4342 = vshrl.u32 %v4341, 7
    %v4343 = vsub.s32 0, %v4342
    %v4344 = vrot.slane %v4335, %v4343
    %s4345 = scalar_select %p4340, 1, 0
    %v4346 = vstv %s4345
    %vm4347 = vcmp.eq.s32.totalorder %v4346, 1
    %v4348 = vsel %vm4347, %v529, %v4344
    %v4349 = vadd.f32 %v4348, %v409
    %4350 = vmatprep.subr.mxu0 0.0
    %4351 = vmatpush1.msra.mxu0 0.0
    %4352 = vmatprep.subr.mxu0 0.0
    %4353 = vmatpush1.msra.mxu0 0.0
    %4354 = vmatprep.subr.mxu0 0.0
    %4355 = vmatpush1.msra.mxu0 0.0
    %4356 = vmatprep.subr.mxu0 0.0
    %4357 = vmatpush1.msra.mxu0 0.0
    %4358 = vmatprep.subr.mxu0 0.0
    %4359 = vmatpush1.msra.mxu0 0.0
    %4360 = vmatprep.subr.mxu0 0.0
    %4361 = vmatpush1.msra.mxu0 0.0
    %4362 = vmatprep.subr.mxu0 0.0
    %4363 = vmatpush1.msra.mxu0 0.0
    %4364 = vmatprep.subr.mxu0 0.0
    %4365 = vmatpush1.msra.mxu0 0.0
    %4366 = vmatprep.subr.mxu0 0.0
    %4367 = vmatpush1.msra.mxu0 0.0
    %4368 = vmatprep.subr.mxu0 0.0
    %4369 = vmatpush1.msra.mxu0 0.0
    %4370 = vmatprep.subr.mxu0 0.0
    %4371 = vmatpush1.msra.mxu0 0.0
    %4372 = vmatprep.subr.mxu0 0.0
    %4373 = vmatpush1.msra.mxu0 0.0
    %4374 = vmatprep.subr.mxu0 0.0
    %4375 = vmatpush1.msra.mxu0 %v223
    %4376 = vmatprep.subr.mxu0 0.0
    %4377 = vmatpush1.msra.mxu0 %v222
    %4378 = vmatprep.subr.mxu0 0.0
    %4379 = vmatpush1.msra.mxu0 %v221
    %4380 = vmatprep.subr.mxu0 0.0
    %4381 = vmatpush1.msra.mxu0 %v220
    %4382 = vmatprep.subr.mxu0 0.0
    %4383 = vmatpush2.msra.mxu0 0.0
    %4384 = vmatprep.subr.mxu0 0.0
    %4385 = vmatpush2.msra.mxu0 0.0
    %4386 = vmatprep.subr.mxu0 0.0
    %4387 = vmatpush2.msra.mxu0 0.0
    %4388 = vmatprep.subr.mxu0 0.0
    %4389 = vmatpush2.msra.mxu0 0.0
    %4390 = vmatprep.subr.mxu0 0.0
    %4391 = vmatpush2.msra.mxu0 0.0
    %4392 = vmatprep.subr.mxu0 0.0
    %4393 = vmatpush2.msra.mxu0 0.0
    %4394 = vmatprep.subr.mxu0 0.0
    %4395 = vmatpush2.msra.mxu0 0.0
    %4396 = vmatprep.subr.mxu0 0.0
    %4397 = vmatpush2.msra.mxu0 0.0
    %4398 = vmatprep.subr.mxu0 0.0
    %4399 = vmatpush2.msra.mxu0 0.0
    %4400 = vmatprep.subr.mxu0 0.0
    %4401 = vmatpush2.msra.mxu0 0.0
    %4402 = vmatprep.subr.mxu0 0.0
    %4403 = vmatpush2.msra.mxu0 0.0
    %4404 = vmatprep.subr.mxu0 0.0
    %4405 = vmatpush2.msra.mxu0 0.0
    %4406 = vmatprep.subr.mxu0 0.0
    %4407 = vmatpush2.msra.mxu0 0.0
    %4408 = vmatprep.subr.mxu0 0.0
    %4409 = vmatpush2.msra.mxu0 0.0
    %4410 = vmatprep.subr.mxu0 0.0
    %4411 = vmatpush2.msra.mxu0 0.0
    %4412 = vmatprep.subr.mxu0 0.0
    %4413 = vmatpush2.msra.mxu0 0.0
    %4414 = vmatprep.mubr.f32.mxu0 0.0
    %4415 = vmatmul.mubr.f32.gmra.mxu0 %v4046
    %v4416 = vpop.f32.mrf.mxu0
    %v4417 = vadd.f32 0.0, %v4416
    %v4418 = vpop.f32.mrf.mxu0
    %4419 = vdwg.mxu0
    %v4420 = vadd.f32 %v4349, %v4417
    %v4421 = vxor.u32 %v4420, 2147483648
    %v4422 = vmul.f32 %v4421, 1.442695
    %v4423 = vpow.pop %v4422
    %v4424 = vadd.f32 %v4423, 1.0
    %v4425 = vrcp.pop %v4424
    %v4426 = vmul.f32 1.0, %v4425
    %v4427 = vtanh.pop %v4420
    %v4428 = vmul.f32 %v4426, %v3966
    %4430 = vrot.lane.b32.xlu0 %v4427, 64
    %v4431 = vpop.permute.xlu0 %4430
    %v4433 = vmul.f32 %v4426, %v4431
    %4435 = vrot.lane.b32.xlu0 %v4433, 32
    %v4436 = vpop.permute.xlu0 %4435
    %v4438 = vadd.f32 %v4428, %v4436
    %v4439 = vtanh.pop %v4438
    %4441 = vrot.lane.b32.xlu0 %v4439, 64
    %v4442 = vpop.permute.xlu0 %4441
    %v4444 = vmul.f32 %v4426, %v4442
    %4445 = vmatprep.subr.mxu0 0.0
    %4446 = vmatpush1.msra.mxu0 0.0
    %4447 = vmatprep.subr.mxu0 0.0
    %4448 = vmatpush1.msra.mxu0 0.0
    %4449 = vmatprep.subr.mxu0 0.0
    %4450 = vmatpush1.msra.mxu0 0.0
    %4451 = vmatprep.subr.mxu0 0.0
    %4452 = vmatpush1.msra.mxu0 0.0
    %4453 = vmatprep.subr.mxu0 0.0
    %4454 = vmatpush1.msra.mxu0 0.0
    %4455 = vmatprep.subr.mxu0 0.0
    %4456 = vmatpush1.msra.mxu0 0.0
    %4457 = vmatprep.subr.mxu0 0.0
    %4458 = vmatpush1.msra.mxu0 0.0
    %4459 = vmatprep.subr.mxu0 0.0
    %4460 = vmatpush1.msra.mxu0 0.0
    %4461 = vmatprep.subr.mxu0 0.0
    %4462 = vmatpush1.msra.mxu0 0.0
    %4463 = vmatprep.subr.mxu0 0.0
    %4464 = vmatpush1.msra.mxu0 0.0
    %4465 = vmatprep.subr.mxu0 0.0
    %4466 = vmatpush1.msra.mxu0 0.0
    %4467 = vmatprep.subr.mxu0 0.0
    %4468 = vmatpush1.msra.mxu0 0.0
    %4469 = vmatprep.subr.mxu0 0.0
    %4470 = vmatpush1.msra.mxu0 %v231
    %4471 = vmatprep.subr.mxu0 0.0
    %4472 = vmatpush1.msra.mxu0 %v230
    %4473 = vmatprep.subr.mxu0 0.0
    %4474 = vmatpush1.msra.mxu0 %v229
    %4475 = vmatprep.subr.mxu0 0.0
    %4476 = vmatpush1.msra.mxu0 %v228
    %4477 = vmatprep.subr.mxu0 0.0
    %4478 = vmatpush2.msra.mxu0 0.0
    %4479 = vmatprep.subr.mxu0 0.0
    %4480 = vmatpush2.msra.mxu0 0.0
    %4481 = vmatprep.subr.mxu0 0.0
    %4482 = vmatpush2.msra.mxu0 0.0
    %4483 = vmatprep.subr.mxu0 0.0
    %4484 = vmatpush2.msra.mxu0 0.0
    %4485 = vmatprep.subr.mxu0 0.0
    %4486 = vmatpush2.msra.mxu0 0.0
    %4487 = vmatprep.subr.mxu0 0.0
    %4488 = vmatpush2.msra.mxu0 0.0
    %4489 = vmatprep.subr.mxu0 0.0
    %4490 = vmatpush2.msra.mxu0 0.0
    %4491 = vmatprep.subr.mxu0 0.0
    %4492 = vmatpush2.msra.mxu0 0.0
    %4493 = vmatprep.subr.mxu0 0.0
    %4494 = vmatpush2.msra.mxu0 0.0
    %4495 = vmatprep.subr.mxu0 0.0
    %4496 = vmatpush2.msra.mxu0 0.0
    %4497 = vmatprep.subr.mxu0 0.0
    %4498 = vmatpush2.msra.mxu0 0.0
    %4499 = vmatprep.subr.mxu0 0.0
    %4500 = vmatpush2.msra.mxu0 0.0
    %4501 = vmatprep.subr.mxu0 0.0
    %4502 = vmatpush2.msra.mxu0 0.0
    %4503 = vmatprep.subr.mxu0 0.0
    %4504 = vmatpush2.msra.mxu0 0.0
    %4505 = vmatprep.subr.mxu0 0.0
    %4506 = vmatpush2.msra.mxu0 0.0
    %4507 = vmatprep.subr.mxu0 0.0
    %4508 = vmatpush2.msra.mxu0 0.0
    %4509 = vmatprep.mubr.f32.mxu0 0.0
    %4510 = vmatmul.mubr.f32.gmra.mxu0 %v4146
    %v4511 = vpop.f32.mrf.mxu0
    %v4512 = vadd.f32 0.0, %v4511
    %v4513 = vpop.f32.mrf.mxu0
    %4514 = vdwg.mxu0
    %4516 = vrot.lane.b32.xlu0 %v4444, 32
    %v4517 = vpop.permute.xlu0 %4516
    %v4518 = vsel %vm271, %v4517, 0
    %4520 = vmatprep.subr.mxu0 0.0
    %4521 = vmatpush1.msra.mxu0 0.0
    %4522 = vmatprep.subr.mxu0 0.0
    %4523 = vmatpush1.msra.mxu0 0.0
    %4524 = vmatprep.subr.mxu0 0.0
    %4525 = vmatpush1.msra.mxu0 0.0
    %4526 = vmatprep.subr.mxu0 0.0
    %4527 = vmatpush1.msra.mxu0 0.0
    %4528 = vmatprep.subr.mxu0 0.0
    %4529 = vmatpush1.msra.mxu0 0.0
    %4530 = vmatprep.subr.mxu0 0.0
    %4531 = vmatpush1.msra.mxu0 0.0
    %4532 = vmatprep.subr.mxu0 0.0
    %4533 = vmatpush1.msra.mxu0 0.0
    %4534 = vmatprep.subr.mxu0 0.0
    %4535 = vmatpush1.msra.mxu0 0.0
    %4536 = vmatprep.subr.mxu0 0.0
    %4537 = vmatpush1.msra.mxu0 0.0
    %4538 = vmatprep.subr.mxu0 0.0
    %4539 = vmatpush1.msra.mxu0 0.0
    %4540 = vmatprep.subr.mxu0 0.0
    %4541 = vmatpush1.msra.mxu0 0.0
    %4542 = vmatprep.subr.mxu0 0.0
    %4543 = vmatpush1.msra.mxu0 0.0
    %4544 = vmatprep.subr.mxu0 0.0
    %4545 = vmatpush1.msra.mxu0 %v227
    %4546 = vmatprep.subr.mxu0 0.0
    %4547 = vmatpush1.msra.mxu0 %v226
    %4548 = vmatprep.subr.mxu0 0.0
    %4549 = vmatpush1.msra.mxu0 %v225
    %4550 = vmatprep.subr.mxu0 0.0
    %4551 = vmatpush1.msra.mxu0 %v224
    %4552 = vmatprep.subr.mxu0 0.0
    %4553 = vmatpush2.msra.mxu0 0.0
    %4554 = vmatprep.subr.mxu0 0.0
    %4555 = vmatpush2.msra.mxu0 0.0
    %4556 = vmatprep.subr.mxu0 0.0
    %4557 = vmatpush2.msra.mxu0 0.0
    %4558 = vmatprep.subr.mxu0 0.0
    %4559 = vmatpush2.msra.mxu0 0.0
    %4560 = vmatprep.subr.mxu0 0.0
    %4561 = vmatpush2.msra.mxu0 0.0
    %4562 = vmatprep.subr.mxu0 0.0
    %4563 = vmatpush2.msra.mxu0 0.0
    %4564 = vmatprep.subr.mxu0 0.0
    %4565 = vmatpush2.msra.mxu0 0.0
    %4566 = vmatprep.subr.mxu0 0.0
    %4567 = vmatpush2.msra.mxu0 0.0
    %4568 = vmatprep.subr.mxu0 0.0
    %4569 = vmatpush2.msra.mxu0 0.0
    %4570 = vmatprep.subr.mxu0 0.0
    %4571 = vmatpush2.msra.mxu0 0.0
    %4572 = vmatprep.subr.mxu0 0.0
    %4573 = vmatpush2.msra.mxu0 0.0
    %4574 = vmatprep.subr.mxu0 0.0
    %4575 = vmatpush2.msra.mxu0 0.0
    %4576 = vmatprep.subr.mxu0 0.0
    %4577 = vmatpush2.msra.mxu0 0.0
    %4578 = vmatprep.subr.mxu0 0.0
    %4579 = vmatpush2.msra.mxu0 0.0
    %4580 = vmatprep.subr.mxu0 0.0
    %4581 = vmatpush2.msra.mxu0 0.0
    %4582 = vmatprep.subr.mxu0 0.0
    %4583 = vmatpush2.msra.mxu0 0.0
    %4584 = vmatprep.mubr.f32.mxu0 0.0
    %4585 = vmatmul.mubr.f32.gmra.mxu0 %v4518
    %v4586 = vpop.f32.mrf.mxu0
    %v4587 = vadd.f32 %v4512, %v4586
    %v4588 = vpop.f32.mrf.mxu0
    %4589 = vdwg.mxu0
    %v4590 = vadd.f32 %v4587, %v241
    %v4591 = vxor.u32 %v4590, 2147483648
    %v4592 = vmul.f32 %v4591, 1.442695
    %v4593 = vpow.pop %v4592
    %v4594 = vadd.f32 %v4593, 1.0
    %v4595 = vrcp.pop %v4594
    %v4596 = vmul.f32 1.0, %v4595
    %v4597 = vtanh.pop %v4590
    %v4598 = vmul.f32 %v4596, %v4136
    %4600 = vrot.lane.b32.xlu0 %v4597, 64
    %v4601 = vpop.permute.xlu0 %4600
    %v4603 = vmul.f32 %v4596, %v4601
    %4605 = vrot.lane.b32.xlu0 %v4603, 32
    %v4606 = vpop.permute.xlu0 %4605
    %v4608 = vadd.f32 %v4598, %v4606
    %v4609 = vtanh.pop %v4608
    %4611 = vrot.lane.b32.xlu0 %v4609, 64
    %v4612 = vpop.permute.xlu0 %4611
    %v4614 = vmul.f32 %v4596, %v4612
    %4616 = vrot.lane.b32.xlu0 %v4614, 32
    %v4617 = vpop.permute.xlu0 %4616
    %v4618 = vsel %vm271, %v4617, 0
    %4620 = vmatprep.subr.mxu0 0.0
    %4621 = vmatpush1.msra.mxu0 0.0
    %4622 = vmatprep.subr.mxu0 0.0
    %4623 = vmatpush1.msra.mxu0 0.0
    %4624 = vmatprep.subr.mxu0 0.0
    %4625 = vmatpush1.msra.mxu0 0.0
    %4626 = vmatprep.subr.mxu0 0.0
    %4627 = vmatpush1.msra.mxu0 0.0
    %4628 = vmatprep.subr.mxu0 0.0
    %4629 = vmatpush1.msra.mxu0 0.0
    %4630 = vmatprep.subr.mxu0 0.0
    %4631 = vmatpush1.msra.mxu0 0.0
    %4632 = vmatprep.subr.mxu0 0.0
    %4633 = vmatpush1.msra.mxu0 0.0
    %4634 = vmatprep.subr.mxu0 0.0
    %4635 = vmatpush1.msra.mxu0 0.0
    %4636 = vmatprep.subr.mxu0 0.0
    %4637 = vmatpush1.msra.mxu0 0.0
    %4638 = vmatprep.subr.mxu0 0.0
    %4639 = vmatpush1.msra.mxu0 0.0
    %4640 = vmatprep.subr.mxu0 0.0
    %4641 = vmatpush1.msra.mxu0 0.0
    %4642 = vmatprep.subr.mxu0 0.0
    %4643 = vmatpush1.msra.mxu0 0.0
    %4644 = vmatprep.subr.mxu0 0.0
    %4645 = vmatpush1.msra.mxu0 %v235
    %4646 = vmatprep.subr.mxu0 0.0
    %4647 = vmatpush1.msra.mxu0 %v234
    %4648 = vmatprep.subr.mxu0 0.0
    %4649 = vmatpush1.msra.mxu0 %v233
    %4650 = vmatprep.subr.mxu0 0.0
    %4651 = vmatpush1.msra.mxu0 %v232
    %4652 = vmatprep.subr.mxu0 0.0
    %4653 = vmatpush2.msra.mxu0 0.0
    %4654 = vmatprep.subr.mxu0 0.0
    %4655 = vmatpush2.msra.mxu0 0.0
    %4656 = vmatprep.subr.mxu0 0.0
    %4657 = vmatpush2.msra.mxu0 0.0
    %4658 = vmatprep.subr.mxu0 0.0
    %4659 = vmatpush2.msra.mxu0 0.0
    %4660 = vmatprep.subr.mxu0 0.0
    %4661 = vmatpush2.msra.mxu0 0.0
    %4662 = vmatprep.subr.mxu0 0.0
    %4663 = vmatpush2.msra.mxu0 0.0
    %4664 = vmatprep.subr.mxu0 0.0
    %4665 = vmatpush2.msra.mxu0 0.0
    %4666 = vmatprep.subr.mxu0 0.0
    %4667 = vmatpush2.msra.mxu0 0.0
    %4668 = vmatprep.subr.mxu0 0.0
    %4669 = vmatpush2.msra.mxu0 0.0
    %4670 = vmatprep.subr.mxu0 0.0
    %4671 = vmatpush2.msra.mxu0 0.0
    %4672 = vmatprep.subr.mxu0 0.0
    %4673 = vmatpush2.msra.mxu0 0.0
    %4674 = vmatprep.subr.mxu0 0.0
    %4675 = vmatpush2.msra.mxu0 0.0
    %4676 = vmatprep.subr.mxu0 0.0
    %4677 = vmatpush2.msra.mxu0 0.0
    %4678 = vmatprep.subr.mxu0 0.0
    %4679 = vmatpush2.msra.mxu0 0.0
    %4680 = vmatprep.subr.mxu0 0.0
    %4681 = vmatpush2.msra.mxu0 0.0
    %4682 = vmatprep.subr.mxu0 0.0
    %4683 = vmatpush2.msra.mxu0 0.0
    %4684 = vmatprep.mubr.f32.mxu0 0.0
    %4685 = vmatmul.mubr.f32.gmra.mxu0 %v4618
    %v4686 = vpop.f32.mrf.mxu0
    %v4687 = vadd.f32 %v248, %v4686
    %v4688 = vpop.f32.mrf.mxu0
    %4689 = vdwg.mxu0
    %4690 = vmax.xlane.f32.xlu0 %v4687
    %v4691 = vpop.xlane.xlu0 %4690
    %v4692 = vsub.f32 %v4687, %v4691
    %v4693 = vmul.f32 %v4692, 1.442695
    %v4694 = vpow.pop %v4693
    %4695 = vadd.xlane.f32.xlu0 %v4694
    %v4696 = vpop.xlane.xlu0 %4695
    %v4697 = vlog2.pop %v4696
    %v4698 = vmul.f32 %v4697, 0.6931472
    %v4699 = vsub.f32 %v4692, %v4698
    %s4700 = scalar_lea.vmem [#allocation22], 64
    %4701 = vst [vmem:[%s4700] sm:$0xff] %v4699
    %vm4702 = vcmp.eq.f32.partialorder %v4687, %v4691
    %v4703 = vsel %vm4702, %v543, 128
    %v4704 = vand.u32 %v4703, 65535
    %v4705 = vshra.s32 %v4703, 16
    %v4706 = vcvt.s32.f32 %v4704
    %v4707 = vcvt.s32.f32 %v4705
    %4708 = vmin.xlane.f32.xlu0 %v4707
    %v4709 = vpop.xlane.xlu0 %4708
    %vm4710 = vcmp.eq.f32.partialorder %v4707, %v4709
    %v4711 = vsel %vm4710, %v4706, inf
    %4712 = vmin.xlane.f32.xlu0 %v4711
    %v4713 = vpop.xlane.xlu0 %4712
    %v4714 = vcvt.f32.s32 %v4713
    %v4715 = vcvt.f32.s32 %v4709
    %v4716 = vshll.u32 %v4715, 16
    %v4717 = vadd.s32 %v4716, %v4714
    %v4718 = vsel %vm546, %v4717, 128
    %vm4719 = vcmp.eq.s32.totalorder %v543, %v4718
    %v4720 = vsel %vm4719, 1.0, 0.0
    %v4721 = vrot.slane %v4720, 4
    %v4722 = vmax.f32 %v4720, %v4721
    %v4723 = vrot.slane %v4722, 2
    %v4724 = vmax.f32 %v4722, %v4723
    %v4725 = vrot.slane %v4724, 1
    %v4726 = vmax.f32 %v4724, %v4725
    %vm4727 = vcmp.gt.f32.partialorder %v4726, 0.0
    %v4728 = vsel %vm4727, 1, 0
    %vm4729 = vcmp.eq.s32.totalorder %v4728, 1
    %v4730 = vsel %vm4729, 1, 0
    %v4731 = vcvt.s32.f32 %v4730
    %v4733 = vsel %vm951, %v4731, %v4731
    %v4734 = vsel %vm953, %v4731, %v4733
    %v4735 = vsel %vm955, %v4731, %v4734
    %v4736 = vsel %vm957, %v4731, %v4735
    %v4737 = vsel %vm959, %v4731, %v4736
    %v4738 = vsel %vm961, %v4731, %v4737
    %4740 = vmatprep.subr.mxu0 0.0
    %4741 = vmatpush1.msra.mxu0 %v219
    %4742 = vmatprep.subr.mxu0 0.0
    %4743 = vmatpush1.msra.mxu0 %v218
    %4744 = vmatprep.subr.mxu0 0.0
    %4745 = vmatpush1.msra.mxu0 %v217
    %4746 = vmatprep.subr.mxu0 0.0
    %4747 = vmatpush1.msra.mxu0 %v216
    %4748 = vmatprep.subr.mxu0 0.0
    %4749 = vmatpush1.msra.mxu0 %v215
    %4750 = vmatprep.subr.mxu0 0.0
    %4751 = vmatpush1.msra.mxu0 %v214
    %4752 = vmatprep.subr.mxu0 0.0
    %4753 = vmatpush1.msra.mxu0 %v213
    %4754 = vmatprep.subr.mxu0 0.0
    %4755 = vmatpush1.msra.mxu0 %v212
    %4756 = vmatprep.subr.mxu0 0.0
    %4757 = vmatpush1.msra.mxu0 %v211
    %4758 = vmatprep.subr.mxu0 0.0
    %4759 = vmatpush1.msra.mxu0 %v210
    %4760 = vmatprep.subr.mxu0 0.0
    %4761 = vmatpush1.msra.mxu0 %v209
    %4762 = vmatprep.subr.mxu0 0.0
    %4763 = vmatpush1.msra.mxu0 %v208
    %4764 = vmatprep.subr.mxu0 0.0
    %4765 = vmatpush1.msra.mxu0 %v207
    %4766 = vmatprep.subr.mxu0 0.0
    %4767 = vmatpush1.msra.mxu0 %v206
    %4768 = vmatprep.subr.mxu0 0.0
    %4769 = vmatpush1.msra.mxu0 %v205
    %4770 = vmatprep.subr.mxu0 0.0
    %4771 = vmatpush1.msra.mxu0 %v204
    %4772 = vmatprep.subr.mxu0 0.0
    %4773 = vmatpush2.msra.mxu0 0.0
    %4774 = vmatprep.subr.mxu0 0.0
    %4775 = vmatpush2.msra.mxu0 0.0
    %4776 = vmatprep.subr.mxu0 0.0
    %4777 = vmatpush2.msra.mxu0 0.0
    %4778 = vmatprep.subr.mxu0 0.0
    %4779 = vmatpush2.msra.mxu0 0.0
    %4780 = vmatprep.subr.mxu0 0.0
    %4781 = vmatpush2.msra.mxu0 0.0
    %4782 = vmatprep.subr.mxu0 0.0
    %4783 = vmatpush2.msra.mxu0 0.0
    %4784 = vmatprep.subr.mxu0 0.0
    %4785 = vmatpush2.msra.mxu0 0.0
    %4786 = vmatprep.subr.mxu0 0.0
    %4787 = vmatpush2.msra.mxu0 0.0
    %4788 = vmatprep.subr.mxu0 0.0
    %4789 = vmatpush2.msra.mxu0 0.0
    %4790 = vmatprep.subr.mxu0 0.0
    %4791 = vmatpush2.msra.mxu0 0.0
    %4792 = vmatprep.subr.mxu0 0.0
    %4793 = vmatpush2.msra.mxu0 0.0
    %4794 = vmatprep.subr.mxu0 0.0
    %4795 = vmatpush2.msra.mxu0 0.0
    %4796 = vmatprep.subr.mxu0 0.0
    %4797 = vmatpush2.msra.mxu0 0.0
    %4798 = vmatprep.subr.mxu0 0.0
    %4799 = vmatpush2.msra.mxu0 0.0
    %4800 = vmatprep.subr.mxu0 0.0
    %4801 = vmatpush2.msra.mxu0 0.0
    %4802 = vmatprep.subr.mxu0 0.0
    %4803 = vmatpush2.msra.mxu0 0.0
    %4804 = vmatprep.mubr.f32.mxu0 0.0
    %4805 = vmatmul.mubr.f32.gmra.mxu0 %v4738
    %v4806 = vpop.f32.mrf.mxu0
    %v4807 = vadd.f32 0.0, %v4806
    %v4808 = vpop.f32.mrf.mxu0
    %4809 = vdwg.mxu0
    %s4810 = sadd.s32 %s1034, 8
    %s4811 = sld [smem:[#allocation4 + %s4810]]
    %p4812 = scmp.gt.s32.totalorder %s4811, 0
    %v4813 = vlaneseq
    %v4814 = vshrl.u32 %v4813, 7
    %v4815 = vsub.s32 0, %v4814
    %v4816 = vrot.slane %v4807, %v4815
    %s4817 = scalar_select %p4812, 1, 0
    %v4818 = vstv %s4817
    %vm4819 = vcmp.eq.s32.totalorder %v4818, 1
    %v4820 = vsel %vm4819, %v534, %v4816
    %v4821 = vadd.f32 %v4820, %v414
    %4822 = vmatprep.subr.mxu0 0.0
    %4823 = vmatpush1.msra.mxu0 0.0
    %4824 = vmatprep.subr.mxu0 0.0
    %4825 = vmatpush1.msra.mxu0 0.0
    %4826 = vmatprep.subr.mxu0 0.0
    %4827 = vmatpush1.msra.mxu0 0.0
    %4828 = vmatprep.subr.mxu0 0.0
    %4829 = vmatpush1.msra.mxu0 0.0
    %4830 = vmatprep.subr.mxu0 0.0
    %4831 = vmatpush1.msra.mxu0 0.0
    %4832 = vmatprep.subr.mxu0 0.0
    %4833 = vmatpush1.msra.mxu0 0.0
    %4834 = vmatprep.subr.mxu0 0.0
    %4835 = vmatpush1.msra.mxu0 0.0
    %4836 = vmatprep.subr.mxu0 0.0
    %4837 = vmatpush1.msra.mxu0 0.0
    %4838 = vmatprep.subr.mxu0 0.0
    %4839 = vmatpush1.msra.mxu0 0.0
    %4840 = vmatprep.subr.mxu0 0.0
    %4841 = vmatpush1.msra.mxu0 0.0
    %4842 = vmatprep.subr.mxu0 0.0
    %4843 = vmatpush1.msra.mxu0 0.0
    %4844 = vmatprep.subr.mxu0 0.0
    %4845 = vmatpush1.msra.mxu0 0.0
    %4846 = vmatprep.subr.mxu0 0.0
    %4847 = vmatpush1.msra.mxu0 %v223
    %4848 = vmatprep.subr.mxu0 0.0
    %4849 = vmatpush1.msra.mxu0 %v222
    %4850 = vmatprep.subr.mxu0 0.0
    %4851 = vmatpush1.msra.mxu0 %v221
    %4852 = vmatprep.subr.mxu0 0.0
    %4853 = vmatpush1.msra.mxu0 %v220
    %4854 = vmatprep.subr.mxu0 0.0
    %4855 = vmatpush2.msra.mxu0 0.0
    %4856 = vmatprep.subr.mxu0 0.0
    %4857 = vmatpush2.msra.mxu0 0.0
    %4858 = vmatprep.subr.mxu0 0.0
    %4859 = vmatpush2.msra.mxu0 0.0
    %4860 = vmatprep.subr.mxu0 0.0
    %4861 = vmatpush2.msra.mxu0 0.0
    %4862 = vmatprep.subr.mxu0 0.0
    %4863 = vmatpush2.msra.mxu0 0.0
    %4864 = vmatprep.subr.mxu0 0.0
    %4865 = vmatpush2.msra.mxu0 0.0
    %4866 = vmatprep.subr.mxu0 0.0
    %4867 = vmatpush2.msra.mxu0 0.0
    %4868 = vmatprep.subr.mxu0 0.0
    %4869 = vmatpush2.msra.mxu0 0.0
    %4870 = vmatprep.subr.mxu0 0.0
    %4871 = vmatpush2.msra.mxu0 0.0
    %4872 = vmatprep.subr.mxu0 0.0
    %4873 = vmatpush2.msra.mxu0 0.0
    %4874 = vmatprep.subr.mxu0 0.0
    %4875 = vmatpush2.msra.mxu0 0.0
    %4876 = vmatprep.subr.mxu0 0.0
    %4877 = vmatpush2.msra.mxu0 0.0
    %4878 = vmatprep.subr.mxu0 0.0
    %4879 = vmatpush2.msra.mxu0 0.0
    %4880 = vmatprep.subr.mxu0 0.0
    %4881 = vmatpush2.msra.mxu0 0.0
    %4882 = vmatprep.subr.mxu0 0.0
    %4883 = vmatpush2.msra.mxu0 0.0
    %4884 = vmatprep.subr.mxu0 0.0
    %4885 = vmatpush2.msra.mxu0 0.0
    %4886 = vmatprep.mubr.f32.mxu0 0.0
    %4887 = vmatmul.mubr.f32.gmra.mxu0 %v4518
    %v4888 = vpop.f32.mrf.mxu0
    %v4889 = vadd.f32 0.0, %v4888
    %v4890 = vpop.f32.mrf.mxu0
    %4891 = vdwg.mxu0
    %v4892 = vadd.f32 %v4821, %v4889
    %v4893 = vxor.u32 %v4892, 2147483648
    %v4894 = vmul.f32 %v4893, 1.442695
    %v4895 = vpow.pop %v4894
    %v4896 = vadd.f32 %v4895, 1.0
    %v4897 = vrcp.pop %v4896
    %v4898 = vmul.f32 1.0, %v4897
    %v4899 = vtanh.pop %v4892
    %v4900 = vmul.f32 %v4898, %v4438
    %4902 = vrot.lane.b32.xlu0 %v4899, 64
    %v4903 = vpop.permute.xlu0 %4902
    %v4905 = vmul.f32 %v4898, %v4903
    %4907 = vrot.lane.b32.xlu0 %v4905, 32
    %v4908 = vpop.permute.xlu0 %4907
    %v4910 = vadd.f32 %v4900, %v4908
    %v4911 = vtanh.pop %v4910
    %4913 = vrot.lane.b32.xlu0 %v4911, 64
    %v4914 = vpop.permute.xlu0 %4913
    %v4916 = vmul.f32 %v4898, %v4914
    %4917 = vmatprep.subr.mxu0 0.0
    %4918 = vmatpush1.msra.mxu0 0.0
    %4919 = vmatprep.subr.mxu0 0.0
    %4920 = vmatpush1.msra.mxu0 0.0
    %4921 = vmatprep.subr.mxu0 0.0
    %4922 = vmatpush1.msra.mxu0 0.0
    %4923 = vmatprep.subr.mxu0 0.0
    %4924 = vmatpush1.msra.mxu0 0.0
    %4925 = vmatprep.subr.mxu0 0.0
    %4926 = vmatpush1.msra.mxu0 0.0
    %4927 = vmatprep.subr.mxu0 0.0
    %4928 = vmatpush1.msra.mxu0 0.0
    %4929 = vmatprep.subr.mxu0 0.0
    %4930 = vmatpush1.msra.mxu0 0.0
    %4931 = vmatprep.subr.mxu0 0.0
    %4932 = vmatpush1.msra.mxu0 0.0
    %4933 = vmatprep.subr.mxu0 0.0
    %4934 = vmatpush1.msra.mxu0 0.0
    %4935 = vmatprep.subr.mxu0 0.0
    %4936 = vmatpush1.msra.mxu0 0.0
    %4937 = vmatprep.subr.mxu0 0.0
    %4938 = vmatpush1.msra.mxu0 0.0
    %4939 = vmatprep.subr.mxu0 0.0
    %4940 = vmatpush1.msra.mxu0 0.0
    %4941 = vmatprep.subr.mxu0 0.0
    %4942 = vmatpush1.msra.mxu0 %v231
    %4943 = vmatprep.subr.mxu0 0.0
    %4944 = vmatpush1.msra.mxu0 %v230
    %4945 = vmatprep.subr.mxu0 0.0
    %4946 = vmatpush1.msra.mxu0 %v229
    %4947 = vmatprep.subr.mxu0 0.0
    %4948 = vmatpush1.msra.mxu0 %v228
    %4949 = vmatprep.subr.mxu0 0.0
    %4950 = vmatpush2.msra.mxu0 0.0
    %4951 = vmatprep.subr.mxu0 0.0
    %4952 = vmatpush2.msra.mxu0 0.0
    %4953 = vmatprep.subr.mxu0 0.0
    %4954 = vmatpush2.msra.mxu0 0.0
    %4955 = vmatprep.subr.mxu0 0.0
    %4956 = vmatpush2.msra.mxu0 0.0
    %4957 = vmatprep.subr.mxu0 0.0
    %4958 = vmatpush2.msra.mxu0 0.0
    %4959 = vmatprep.subr.mxu0 0.0
    %4960 = vmatpush2.msra.mxu0 0.0
    %4961 = vmatprep.subr.mxu0 0.0
    %4962 = vmatpush2.msra.mxu0 0.0
    %4963 = vmatprep.subr.mxu0 0.0
    %4964 = vmatpush2.msra.mxu0 0.0
    %4965 = vmatprep.subr.mxu0 0.0
    %4966 = vmatpush2.msra.mxu0 0.0
    %4967 = vmatprep.subr.mxu0 0.0
    %4968 = vmatpush2.msra.mxu0 0.0
    %4969 = vmatprep.subr.mxu0 0.0
    %4970 = vmatpush2.msra.mxu0 0.0
    %4971 = vmatprep.subr.mxu0 0.0
    %4972 = vmatpush2.msra.mxu0 0.0
    %4973 = vmatprep.subr.mxu0 0.0
    %4974 = vmatpush2.msra.mxu0 0.0
    %4975 = vmatprep.subr.mxu0 0.0
    %4976 = vmatpush2.msra.mxu0 0.0
    %4977 = vmatprep.subr.mxu0 0.0
    %4978 = vmatpush2.msra.mxu0 0.0
    %4979 = vmatprep.subr.mxu0 0.0
    %4980 = vmatpush2.msra.mxu0 0.0
    %4981 = vmatprep.mubr.f32.mxu0 0.0
    %4982 = vmatmul.mubr.f32.gmra.mxu0 %v4618
    %v4983 = vpop.f32.mrf.mxu0
    %v4984 = vadd.f32 0.0, %v4983
    %v4985 = vpop.f32.mrf.mxu0
    %4986 = vdwg.mxu0
    %4988 = vrot.lane.b32.xlu0 %v4916, 32
    %v4989 = vpop.permute.xlu0 %4988
    %v4990 = vsel %vm271, %v4989, 0
    %4992 = vmatprep.subr.mxu0 0.0
    %4993 = vmatpush1.msra.mxu0 0.0
    %4994 = vmatprep.subr.mxu0 0.0
    %4995 = vmatpush1.msra.mxu0 0.0
    %4996 = vmatprep.subr.mxu0 0.0
    %4997 = vmatpush1.msra.mxu0 0.0
    %4998 = vmatprep.subr.mxu0 0.0
    %4999 = vmatpush1.msra.mxu0 0.0
    %5000 = vmatprep.subr.mxu0 0.0
    %5001 = vmatpush1.msra.mxu0 0.0
    %5002 = vmatprep.subr.mxu0 0.0
    %5003 = vmatpush1.msra.mxu0 0.0
    %5004 = vmatprep.subr.mxu0 0.0
    %5005 = vmatpush1.msra.mxu0 0.0
    %5006 = vmatprep.subr.mxu0 0.0
    %5007 = vmatpush1.msra.mxu0 0.0
    %5008 = vmatprep.subr.mxu0 0.0
    %5009 = vmatpush1.msra.mxu0 0.0
    %5010 = vmatprep.subr.mxu0 0.0
    %5011 = vmatpush1.msra.mxu0 0.0
    %5012 = vmatprep.subr.mxu0 0.0
    %5013 = vmatpush1.msra.mxu0 0.0
    %5014 = vmatprep.subr.mxu0 0.0
    %5015 = vmatpush1.msra.mxu0 0.0
    %5016 = vmatprep.subr.mxu0 0.0
    %5017 = vmatpush1.msra.mxu0 %v227
    %5018 = vmatprep.subr.mxu0 0.0
    %5019 = vmatpush1.msra.mxu0 %v226
    %5020 = vmatprep.subr.mxu0 0.0
    %5021 = vmatpush1.msra.mxu0 %v225
    %5022 = vmatprep.subr.mxu0 0.0
    %5023 = vmatpush1.msra.mxu0 %v224
    %5024 = vmatprep.subr.mxu0 0.0
    %5025 = vmatpush2.msra.mxu0 0.0
    %5026 = vmatprep.subr.mxu0 0.0
    %5027 = vmatpush2.msra.mxu0 0.0
    %5028 = vmatprep.subr.mxu0 0.0
    %5029 = vmatpush2.msra.mxu0 0.0
    %5030 = vmatprep.subr.mxu0 0.0
    %5031 = vmatpush2.msra.mxu0 0.0
    %5032 = vmatprep.subr.mxu0 0.0
    %5033 = vmatpush2.msra.mxu0 0.0
    %5034 = vmatprep.subr.mxu0 0.0
    %5035 = vmatpush2.msra.mxu0 0.0
    %5036 = vmatprep.subr.mxu0 0.0
    %5037 = vmatpush2.msra.mxu0 0.0
    %5038 = vmatprep.subr.mxu0 0.0
    %5039 = vmatpush2.msra.mxu0 0.0
    %5040 = vmatprep.subr.mxu0 0.0
    %5041 = vmatpush2.msra.mxu0 0.0
    %5042 = vmatprep.subr.mxu0 0.0
    %5043 = vmatpush2.msra.mxu0 0.0
    %5044 = vmatprep.subr.mxu0 0.0
    %5045 = vmatpush2.msra.mxu0 0.0
    %5046 = vmatprep.subr.mxu0 0.0
    %5047 = vmatpush2.msra.mxu0 0.0
    %5048 = vmatprep.subr.mxu0 0.0
    %5049 = vmatpush2.msra.mxu0 0.0
    %5050 = vmatprep.subr.mxu0 0.0
    %5051 = vmatpush2.msra.mxu0 0.0
    %5052 = vmatprep.subr.mxu0 0.0
    %5053 = vmatpush2.msra.mxu0 0.0
    %5054 = vmatprep.subr.mxu0 0.0
    %5055 = vmatpush2.msra.mxu0 0.0
    %5056 = vmatprep.mubr.f32.mxu0 0.0
    %5057 = vmatmul.mubr.f32.gmra.mxu0 %v4990
    %v5058 = vpop.f32.mrf.mxu0
    %v5059 = vadd.f32 %v4984, %v5058
    %v5060 = vpop.f32.mrf.mxu0
    %5061 = vdwg.mxu0
    %v5062 = vadd.f32 %v5059, %v241
    %v5063 = vxor.u32 %v5062, 2147483648
    %v5064 = vmul.f32 %v5063, 1.442695
    %v5065 = vpow.pop %v5064
    %v5066 = vadd.f32 %v5065, 1.0
    %v5067 = vrcp.pop %v5066
    %v5068 = vmul.f32 1.0, %v5067
    %v5069 = vtanh.pop %v5062
    %v5070 = vmul.f32 %v5068, %v4608
    %5072 = vrot.lane.b32.xlu0 %v5069, 64
    %v5073 = vpop.permute.xlu0 %5072
    %v5075 = vmul.f32 %v5068, %v5073
    %5077 = vrot.lane.b32.xlu0 %v5075, 32
    %v5078 = vpop.permute.xlu0 %5077
    %v5080 = vadd.f32 %v5070, %v5078
    %v5081 = vtanh.pop %v5080
    %5083 = vrot.lane.b32.xlu0 %v5081, 64
    %v5084 = vpop.permute.xlu0 %5083
    %v5086 = vmul.f32 %v5068, %v5084
    %5088 = vrot.lane.b32.xlu0 %v5086, 32
    %v5089 = vpop.permute.xlu0 %5088
    %v5090 = vsel %vm271, %v5089, 0
    %5092 = vmatprep.subr.mxu0 0.0
    %5093 = vmatpush1.msra.mxu0 0.0
    %5094 = vmatprep.subr.mxu0 0.0
    %5095 = vmatpush1.msra.mxu0 0.0
    %5096 = vmatprep.subr.mxu0 0.0
    %5097 = vmatpush1.msra.mxu0 0.0
    %5098 = vmatprep.subr.mxu0 0.0
    %5099 = vmatpush1.msra.mxu0 0.0
    %5100 = vmatprep.subr.mxu0 0.0
    %5101 = vmatpush1.msra.mxu0 0.0
    %5102 = vmatprep.subr.mxu0 0.0
    %5103 = vmatpush1.msra.mxu0 0.0
    %5104 = vmatprep.subr.mxu0 0.0
    %5105 = vmatpush1.msra.mxu0 0.0
    %5106 = vmatprep.subr.mxu0 0.0
    %5107 = vmatpush1.msra.mxu0 0.0
    %5108 = vmatprep.subr.mxu0 0.0
    %5109 = vmatpush1.msra.mxu0 0.0
    %5110 = vmatprep.subr.mxu0 0.0
    %5111 = vmatpush1.msra.mxu0 0.0
    %5112 = vmatprep.subr.mxu0 0.0
    %5113 = vmatpush1.msra.mxu0 0.0
    %5114 = vmatprep.subr.mxu0 0.0
    %5115 = vmatpush1.msra.mxu0 0.0
    %5116 = vmatprep.subr.mxu0 0.0
    %5117 = vmatpush1.msra.mxu0 %v235
    %5118 = vmatprep.subr.mxu0 0.0
    %5119 = vmatpush1.msra.mxu0 %v234
    %5120 = vmatprep.subr.mxu0 0.0
    %5121 = vmatpush1.msra.mxu0 %v233
    %5122 = vmatprep.subr.mxu0 0.0
    %5123 = vmatpush1.msra.mxu0 %v232
    %5124 = vmatprep.subr.mxu0 0.0
    %5125 = vmatpush2.msra.mxu0 0.0
    %5126 = vmatprep.subr.mxu0 0.0
    %5127 = vmatpush2.msra.mxu0 0.0
    %5128 = vmatprep.subr.mxu0 0.0
    %5129 = vmatpush2.msra.mxu0 0.0
    %5130 = vmatprep.subr.mxu0 0.0
    %5131 = vmatpush2.msra.mxu0 0.0
    %5132 = vmatprep.subr.mxu0 0.0
    %5133 = vmatpush2.msra.mxu0 0.0
    %5134 = vmatprep.subr.mxu0 0.0
    %5135 = vmatpush2.msra.mxu0 0.0
    %5136 = vmatprep.subr.mxu0 0.0
    %5137 = vmatpush2.msra.mxu0 0.0
    %5138 = vmatprep.subr.mxu0 0.0
    %5139 = vmatpush2.msra.mxu0 0.0
    %5140 = vmatprep.subr.mxu0 0.0
    %5141 = vmatpush2.msra.mxu0 0.0
    %5142 = vmatprep.subr.mxu0 0.0
    %5143 = vmatpush2.msra.mxu0 0.0
    %5144 = vmatprep.subr.mxu0 0.0
    %5145 = vmatpush2.msra.mxu0 0.0
    %5146 = vmatprep.subr.mxu0 0.0
    %5147 = vmatpush2.msra.mxu0 0.0
    %5148 = vmatprep.subr.mxu0 0.0
    %5149 = vmatpush2.msra.mxu0 0.0
    %5150 = vmatprep.subr.mxu0 0.0
    %5151 = vmatpush2.msra.mxu0 0.0
    %5152 = vmatprep.subr.mxu0 0.0
    %5153 = vmatpush2.msra.mxu0 0.0
    %5154 = vmatprep.subr.mxu0 0.0
    %5155 = vmatpush2.msra.mxu0 0.0
    %5156 = vmatprep.mubr.f32.mxu0 0.0
    %5157 = vmatmul.mubr.f32.gmra.mxu0 %v5090
    %v5158 = vpop.f32.mrf.mxu0
    %v5159 = vadd.f32 %v248, %v5158
    %v5160 = vpop.f32.mrf.mxu0
    %5161 = vdwg.mxu0
    %5162 = vmax.xlane.f32.xlu0 %v5159
    %v5163 = vpop.xlane.xlu0 %5162
    %v5164 = vsub.f32 %v5159, %v5163
    %v5165 = vmul.f32 %v5164, 1.442695
    %v5166 = vpow.pop %v5165
    %5167 = vadd.xlane.f32.xlu0 %v5166
    %v5168 = vpop.xlane.xlu0 %5167
    %v5169 = vlog2.pop %v5168
    %v5170 = vmul.f32 %v5169, 0.6931472
    %v5171 = vsub.f32 %v5164, %v5170
    %s5172 = scalar_lea.vmem [#allocation22], 72
    %5173 = vst [vmem:[%s5172] sm:$0xff] %v5171
    %vm5174 = vcmp.eq.f32.partialorder %v5159, %v5163
    %v5175 = vsel %vm5174, %v543, 128
    %v5176 = vand.u32 %v5175, 65535
    %v5177 = vshra.s32 %v5175, 16
    %v5178 = vcvt.s32.f32 %v5176
    %v5179 = vcvt.s32.f32 %v5177
    %5180 = vmin.xlane.f32.xlu0 %v5179
    %v5181 = vpop.xlane.xlu0 %5180
    %vm5182 = vcmp.eq.f32.partialorder %v5179, %v5181
    %v5183 = vsel %vm5182, %v5178, inf
    %5184 = vmin.xlane.f32.xlu0 %v5183
    %v5185 = vpop.xlane.xlu0 %5184
    %v5186 = vcvt.f32.s32 %v5185
    %v5187 = vcvt.f32.s32 %v5181
    %v5188 = vshll.u32 %v5187, 16
    %v5189 = vadd.s32 %v5188, %v5186
    %v5190 = vsel %vm546, %v5189, 128
    %vm5191 = vcmp.eq.s32.totalorder %v543, %v5190
    %v5192 = vsel %vm5191, 1.0, 0.0
    %v5193 = vrot.slane %v5192, 4
    %v5194 = vmax.f32 %v5192, %v5193
    %v5195 = vrot.slane %v5194, 2
    %v5196 = vmax.f32 %v5194, %v5195
    %v5197 = vrot.slane %v5196, 1
    %v5198 = vmax.f32 %v5196, %v5197
    %vm5199 = vcmp.gt.f32.partialorder %v5198, 0.0
    %v5200 = vsel %vm5199, 1, 0
    %vm5201 = vcmp.eq.s32.totalorder %v5200, 1
    %v5202 = vsel %vm5201, 1, 0
    %v5203 = vcvt.s32.f32 %v5202
    %v5205 = vsel %vm951, %v5203, %v5203
    %v5206 = vsel %vm953, %v5203, %v5205
    %v5207 = vsel %vm955, %v5203, %v5206
    %v5208 = vsel %vm957, %v5203, %v5207
    %v5209 = vsel %vm959, %v5203, %v5208
    %v5210 = vsel %vm961, %v5203, %v5209
    %5212 = vmatprep.subr.mxu0 0.0
    %5213 = vmatpush1.msra.mxu0 %v219
    %5214 = vmatprep.subr.mxu0 0.0
    %5215 = vmatpush1.msra.mxu0 %v218
    %5216 = vmatprep.subr.mxu0 0.0
    %5217 = vmatpush1.msra.mxu0 %v217
    %5218 = vmatprep.subr.mxu0 0.0
    %5219 = vmatpush1.msra.mxu0 %v216
    %5220 = vmatprep.subr.mxu0 0.0
    %5221 = vmatpush1.msra.mxu0 %v215
    %5222 = vmatprep.subr.mxu0 0.0
    %5223 = vmatpush1.msra.mxu0 %v214
    %5224 = vmatprep.subr.mxu0 0.0
    %5225 = vmatpush1.msra.mxu0 %v213
    %5226 = vmatprep.subr.mxu0 0.0
    %5227 = vmatpush1.msra.mxu0 %v212
    %5228 = vmatprep.subr.mxu0 0.0
    %5229 = vmatpush1.msra.mxu0 %v211
    %5230 = vmatprep.subr.mxu0 0.0
    %5231 = vmatpush1.msra.mxu0 %v210
    %5232 = vmatprep.subr.mxu0 0.0
    %5233 = vmatpush1.msra.mxu0 %v209
    %5234 = vmatprep.subr.mxu0 0.0
    %5235 = vmatpush1.msra.mxu0 %v208
    %5236 = vmatprep.subr.mxu0 0.0
    %5237 = vmatpush1.msra.mxu0 %v207
    %5238 = vmatprep.subr.mxu0 0.0
    %5239 = vmatpush1.msra.mxu0 %v206
    %5240 = vmatprep.subr.mxu0 0.0
    %5241 = vmatpush1.msra.mxu0 %v205
    %5242 = vmatprep.subr.mxu0 0.0
    %5243 = vmatpush1.msra.mxu0 %v204
    %5244 = vmatprep.subr.mxu0 0.0
    %5245 = vmatpush2.msra.mxu0 0.0
    %5246 = vmatprep.subr.mxu0 0.0
    %5247 = vmatpush2.msra.mxu0 0.0
    %5248 = vmatprep.subr.mxu0 0.0
    %5249 = vmatpush2.msra.mxu0 0.0
    %5250 = vmatprep.subr.mxu0 0.0
    %5251 = vmatpush2.msra.mxu0 0.0
    %5252 = vmatprep.subr.mxu0 0.0
    %5253 = vmatpush2.msra.mxu0 0.0
    %5254 = vmatprep.subr.mxu0 0.0
    %5255 = vmatpush2.msra.mxu0 0.0
    %5256 = vmatprep.subr.mxu0 0.0
    %5257 = vmatpush2.msra.mxu0 0.0
    %5258 = vmatprep.subr.mxu0 0.0
    %5259 = vmatpush2.msra.mxu0 0.0
    %5260 = vmatprep.subr.mxu0 0.0
    %5261 = vmatpush2.msra.mxu0 0.0
    %5262 = vmatprep.subr.mxu0 0.0
    %5263 = vmatpush2.msra.mxu0 0.0
    %5264 = vmatprep.subr.mxu0 0.0
    %5265 = vmatpush2.msra.mxu0 0.0
    %5266 = vmatprep.subr.mxu0 0.0
    %5267 = vmatpush2.msra.mxu0 0.0
    %5268 = vmatprep.subr.mxu0 0.0
    %5269 = vmatpush2.msra.mxu0 0.0
    %5270 = vmatprep.subr.mxu0 0.0
    %5271 = vmatpush2.msra.mxu0 0.0
    %5272 = vmatprep.subr.mxu0 0.0
    %5273 = vmatpush2.msra.mxu0 0.0
    %5274 = vmatprep.subr.mxu0 0.0
    %5275 = vmatpush2.msra.mxu0 0.0
    %5276 = vmatprep.mubr.f32.mxu0 0.0
    %5277 = vmatmul.mubr.f32.gmra.mxu0 %v5210
    %v5278 = vpop.f32.mrf.mxu0
    %v5279 = vadd.f32 0.0, %v5278
    %v5280 = vpop.f32.mrf.mxu0
    %5281 = vdwg.mxu0
    %s5282 = sadd.s32 %s1034, 9
    %s5283 = sld [smem:[#allocation4 + %s5282]]
    %p5284 = scmp.gt.s32.totalorder %s5283, 0
    %v5285 = vlaneseq
    %v5286 = vshrl.u32 %v5285, 7
    %v5287 = vsub.s32 0, %v5286
    %v5288 = vrot.slane %v5279, %v5287
    %s5289 = scalar_select %p5284, 1, 0
    %v5290 = vstv %s5289
    %vm5291 = vcmp.eq.s32.totalorder %v5290, 1
    %v5292 = vsel %vm5291, %v539, %v5288
    %5293 = vst [vmem:[#allocation2] sm:$0xff] %v5292
    %5295 = vst.msk [vmem:[#allocation23] sm:$0xff] %vm271, %v4989
    %5297 = vst.msk [vmem:[%s549] sm:$0xff] %vm271, %v5089
    %5299 = vrot.lane.b32.xlu0 %v4910, 96
    %v5300 = vpop.permute.xlu0 %5299
    %5302 = vst.msk [vmem:[#allocation25] sm:$0xff] %vm271, %v5300
    %5304 = vrot.lane.b32.xlu0 %v5080, 96
    %v5305 = vpop.permute.xlu0 %5304
    %5307 = vst.msk [vmem:[%s551] sm:$0xff] %vm271, %v5305
    // Predicated region
    $region98: #{tpu_custom_call.1} parent=1 // pred_check
      _
    $region99: #{tpu_custom_call.1} parent=1 // pred_check_branch
      %5309 = sbr.rel (0) target = $region101
    $region100: #{tpu_custom_call.1} parent=1 // pred_region
      %s5311 = ssub.s32 1280, 1280
      %5312 = vsyncadd [#allocation7], %s5311
      %s5313 = sshll.u32 [#allocation22], 4
      %s5314 = int_to_ptr.vmem [resolvable:$true] %s5313
      %5319 = dma.vmem_to_hbm [thread:$0]  %s5314, 1280, %s14, [#allocation7], 128, 128, 8
    $region101: #{tpu_custom_call.1} parent=1 // pred_fallthru
      _
    // Predicated region
    $region102: #{tpu_custom_call.1} parent=1 // pred_check
      _
    $region103: #{tpu_custom_call.1} parent=1 // pred_check_branch
      %5321 = sbr.rel (0) target = $region105
    $region104: #{tpu_custom_call.1} parent=1 // pred_region
      %s5323 = ssub.s32 256, 256
      %5324 = vsyncadd [#allocation24], %s5323
      %s5325 = sshll.u32 [#allocation23], 4
      %s5326 = int_to_ptr.vmem [resolvable:$true] %s5325
      %5331 = dma.vmem_to_hbm [thread:$0]  %s5326, 256, %s15, [#allocation24], 128, 128, 8
    $region105: #{tpu_custom_call.1} parent=1 // pred_fallthru
      _
    // Predicated region
    $region106: #{tpu_custom_call.1} parent=1 // pred_check
      _
    $region107: #{tpu_custom_call.1} parent=1 // pred_check_branch
      %5333 = sbr.rel (0) target = $region109
    $region108: #{tpu_custom_call.1} parent=1 // pred_region
      %s5335 = ssub.s32 256, 256
      %5336 = vsyncadd [#allocation24], %s5335
      %s5337 = sshll.u32 [#allocation25], 4
      %s5338 = int_to_ptr.vmem [resolvable:$true] %s5337
      %5343 = dma.vmem_to_hbm [thread:$0]  %s5338, 256, %s16, [#allocation24], 128, 128, 8
    $region109: #{tpu_custom_call.1} parent=1 // pred_fallthru
      _
    // Predicated region
    $region110: #{tpu_custom_call.1} parent=1 // pred_check
      _
    $region111: #{tpu_custom_call.1} parent=1 // pred_check_branch
      %5345 = sbr.rel (0) target = $region113
    $region112: #{tpu_custom_call.1} parent=1 // pred_region
      %5346 = dma.done [#allocation7], 1280
    $region113: #{tpu_custom_call.1} parent=1 // pred_fallthru
      _
    // Predicated region
    $region114: #{tpu_custom_call.1} parent=1 // pred_check
      _
    $region115: #{tpu_custom_call.1} parent=1 // pred_check_branch
      %5348 = sbr.rel (0) target = $region117
    $region116: #{tpu_custom_call.1} parent=1 // pred_region
      %5349 = dma.done [#allocation24], 256
    $region117: #{tpu_custom_call.1} parent=1 // pred_fallthru
      _
    // Predicated region
    $region118: #{tpu_custom_call.1} parent=1 // pred_check
      _
    $region119: #{tpu_custom_call.1} parent=1 // pred_check_branch
      %5351 = sbr.rel (0) target = $region121
    $region120: #{tpu_custom_call.1} parent=1 // pred_region
      %5352 = dma.done [#allocation24], 256
    $region121: #{tpu_custom_call.1} parent=1 // pred_fallthru
      _
    %5353 = vsyncpa [#allocation6], 1
    %5354 = vsyncpa [#allocation9], 1
    %5355 = vsyncpa [#allocation12], 1
    %5356 = vsyncpa [#allocation15], 1
    %5357 = vsyncpa [#allocation18], 1
    %5358 = vsyncpa [#allocation21], 1
    %5359 = vsyncpa [#allocation7], 1
    %5360 = vsyncpa [#allocation24], 1

</llo_original>
